<compile_context>
chip_gen: v7x
topology: tpu7x:2x2x1
jax: 0.10.0
libtpu: 0.0.40
codegen_flags: <defaults>
</compile_context>

<pallas_src>
import jax
import jax.numpy as jnp
from jax.experimental import pallas as pl
from jax.experimental.pallas import tpu as pltpu


# --------------------------------------------------------------------------
# Pallas kernels
# --------------------------------------------------------------------------

def _matmul_bias_kernel(a_ref, w_ref, b_ref, o_ref):
    # bf16 MXU operands, f32 accumulate / bias; store in o_ref's dtype.
    acc = jnp.dot(a_ref[...].astype(jnp.bfloat16), w_ref[...],
                  preferred_element_type=jnp.float32)
    o_ref[...] = (acc + b_ref[...]).astype(o_ref.dtype)


def pallas_matmul_bias(a, w, b, *, out_dtype=jnp.float32, tile_n=512):
    """a: (N, K) @ w: (K, M) + b: (1, M) -> (N, M), tiled over N.

    Output channels are zero-padded to a multiple of 128 so every store is
    lane-dense (no masked vst); the pad is sliced off in the wrapper.
    a/w are fed to the kernel in bf16 (MXU-native) to halve input HBM traffic.
    """
    N, K = a.shape
    M = w.shape[1]
    MP = ((M + 127) // 128) * 128
    n_pad = pl.cdiv(N, tile_n) * tile_n
    a_p = jnp.pad(a, ((0, n_pad - N), (0, 0))).astype(jnp.bfloat16)
    w_p = jnp.pad(w, ((0, 0), (0, MP - M))).astype(jnp.bfloat16)
    b_p = jnp.pad(b, ((0, 0), (0, MP - M)))
    out = pl.pallas_call(
        _matmul_bias_kernel,
        out_shape=jax.ShapeDtypeStruct((n_pad, MP), out_dtype),
        grid_spec=pltpu.PrefetchScalarGridSpec(
            num_scalar_prefetch=0,
            grid=(n_pad // tile_n,),
            in_specs=[
                pl.BlockSpec((tile_n, K), lambda i: (i, 0)),
                pl.BlockSpec((K, MP), lambda i: (0, 0)),
                pl.BlockSpec((1, MP), lambda i: (0, 0)),
            ],
            out_specs=pl.BlockSpec((tile_n, MP), lambda i: (i, 0)),
        ),
        compiler_params=pltpu.CompilerParams(
            dimension_semantics=("parallel",)),
    )(a_p, w_p, b_p)
    return out[:N, :M]


def _liif_query_kernel(x_ref, ar_ref, w1_ref, b1_ref, w2_ref, b2_ref,
                       w3_ref, b3_ref, o_ref):
    """Per tile of query points: fused 4-branch imnet MLP + local-ensemble
    area-swapped weighting.

    x_ref : (4, TN, D) bf16, D = 9*C + 2 (rel_coord) + 2 (rel_cell)
    ar_ref: (TN, 4) f32 raw |rel_x*rel_y| areas, one column per ensemble branch
    w*_ref: bf16 weights (grid-resident), b*_ref: f32 biases
    o_ref : (TN, OUT_PAD) f32 lane-dense output; real channels are [:, :OUT]
    """
    tn = x_ref.shape[1]
    D = x_ref.shape[-1]
    # Fuse the 4 ensemble branches into one row-batched matmul chain so the
    # narrow (<=128 column) MLP layers amortize MXU weight push/drain and bias
    # broadcasts over 4*TN rows instead of 4 separate under-filled matmuls.
    xb = x_ref[...].reshape(4 * tn, D)                         # bf16
    h = jnp.dot(xb, w1_ref[...], preferred_element_type=jnp.float32) + b1_ref[...]
    h = jnp.maximum(h, 0.0)
    h = jnp.dot(h.astype(jnp.bfloat16), w2_ref[...],
                preferred_element_type=jnp.float32) + b2_ref[...]
    h = jnp.maximum(h, 0.0)
    p = jnp.dot(h.astype(jnp.bfloat16), w3_ref[...],
                preferred_element_type=jnp.float32) + b3_ref[...]   # (4*TN, OUT_PAD)

    # f32 areas from the side channel (eps matches torch's `area + 1e-09`).
    ar = ar_ref[...] + 1e-9                                    # (TN, 4)
    a0 = ar[:, 0:1]
    a1 = ar[:, 1:2]
    a2 = ar[:, 2:3]
    a3 = ar[:, 3:4]
    # Single EUP reciprocal instead of 4 VPU divides.
    inv_tot = pl.reciprocal(a0 + a1 + a2 + a3, approx=True)
    # local_ensemble diagonal swap: branch j weighted by area of branch 3-j.
    o_ref[...] = (p[0 * tn:1 * tn] * (a3 * inv_tot)
                  + p[1 * tn:2 * tn] * (a2 * inv_tot)
                  + p[2 * tn:3 * tn] * (a1 * inv_tot)
                  + p[3 * tn:4 * tn] * (a0 * inv_tot))


def pallas_liif_query(x4, areas, w1, b1, w2, b2, w3, b3, tile_n=512):
    """x4: (4, N, D) bf16, areas: (N, 4) f32 -> (N, OUT) f32."""
    _, N, D = x4.shape
    H1 = w1.shape[1]
    H2 = w2.shape[1]
    OUT = w3.shape[1]
    OUT_PAD = ((OUT + 127) // 128) * 128
    n_pad = pl.cdiv(N, tile_n) * tile_n
    x4_p = jnp.pad(x4, ((0, 0), (0, n_pad - N), (0, 0)))
    ar_p = jnp.pad(areas, ((0, n_pad - N), (0, 0)))

    # Weights cast to bf16 once in the wrapper (MXU-native); biases stay f32.
    w1b = w1.astype(jnp.bfloat16)
    w2b = w2.astype(jnp.bfloat16)
    w3b = jnp.pad(w3, ((0, 0), (0, OUT_PAD - OUT))).astype(jnp.bfloat16)
    b3p = jnp.pad(b3, ((0, 0), (0, OUT_PAD - OUT)))

    flops = 2 * 4 * n_pad * (D * H1 + H1 * H2 + H2 * OUT_PAD)
    bytes_accessed = (x4_p.size * 2 + ar_p.size * 4
                      + w1b.size * 2 + w2b.size * 2 + w3b.size * 2
                      + b1.size * 4 + b2.size * 4 + b3p.size * 4
                      + n_pad * OUT_PAD * 4)

    out = pl.pallas_call(
        _liif_query_kernel,
        out_shape=jax.ShapeDtypeStruct((n_pad, OUT_PAD), jnp.float32),
        grid_spec=pltpu.PrefetchScalarGridSpec(
            num_scalar_prefetch=0,
            grid=(n_pad // tile_n,),
            in_specs=[
                pl.BlockSpec((4, tile_n, D), lambda i: (0, i, 0)),
                pl.BlockSpec((tile_n, 4), lambda i: (i, 0)),
                pl.BlockSpec((D, H1), lambda i: (0, 0)),
                pl.BlockSpec((1, H1), lambda i: (0, 0)),
                pl.BlockSpec((H1, H2), lambda i: (0, 0)),
                pl.BlockSpec((1, H2), lambda i: (0, 0)),
                pl.BlockSpec((H2, OUT_PAD), lambda i: (0, 0)),
                pl.BlockSpec((1, OUT_PAD), lambda i: (0, 0)),
            ],
            out_specs=pl.BlockSpec((tile_n, OUT_PAD), lambda i: (i, 0)),
        ),
        compiler_params=pltpu.CompilerParams(
            dimension_semantics=("parallel",)),
        cost_estimate=pl.CostEstimate(
            flops=flops, transcendentals=n_pad, bytes_accessed=bytes_accessed),
    )(x4_p, ar_p, w1b, b1, w2b, b2, w3b, b3p)
    return out[:N, :OUT]


# --------------------------------------------------------------------------
# JAX glue (shape plumbing, gathers, coordinate generation)
# --------------------------------------------------------------------------

def make_coord(shape):
    """Pixel-center coordinates in [-1, 1], shape (*shape, 2). Matches LIIF's
    make_coord with meshgrid 'ij' indexing."""
    seqs = []
    for n in shape:
        r = 1.0 / n
        seqs.append(-1.0 + r + 2.0 * r * jnp.arange(n, dtype=jnp.float32))
    return jnp.stack(jnp.meshgrid(*seqs, indexing='ij'), axis=-1)


def unfold3x3(x):
    """F.unfold(x, 3, padding=1) reshaped back to (B, C*9, H, W).
    Channel order = c*9 + kh*3 + kw, matching torch."""
    B, C, H, W = x.shape
    xp = jnp.pad(x, ((0, 0), (0, 0), (1, 1), (1, 1)))
    patches = []
    for kh in range(3):
        for kw in range(3):
            patches.append(xp[:, :, kh:kh + H, kw:kw + W])
    return jnp.stack(patches, axis=2).reshape(B, C * 9, H, W)


def nearest_indices(coord_, Hf, Wf):
    """Nearest-neighbour flat spatial indices for grid_sample(..., mode='nearest',
    align_corners=False) with grid = coord_.flip(-1).
    coord_: (B, Q, 2) -- channel 0 -> feat dim -2 (Hf), channel 1 -> dim -1 (Wf)."""
    iy = ((coord_[..., 0] + 1.0) * Hf - 1.0) * 0.5
    ix = ((coord_[..., 1] + 1.0) * Wf - 1.0) * 0.5
    # TODO(synk): torch grid_sample uses round-half-to-even; floor(x+0.5) may
    #             differ only at exact .5 ties (avoided by eps_shift anyway).
    iy = jnp.clip(jnp.floor(iy + 0.5).astype(jnp.int32), 0, Hf - 1)
    ix = jnp.clip(jnp.floor(ix + 0.5).astype(jnp.int32), 0, Wf - 1)
    return iy * Wf + ix  # (B, Q)


def init_params(key, c_in=3, c_feat=8, hidden=32, out_dim=3):
    """Deterministic synthetic parameters."""
    d_in = c_feat * 9 + 2 + 2   # feat_unfold * 9  + rel_coord + rel_cell
    ks = jax.random.split(key, 8)
    s = 0.1
    return {
        'enc_w': s * jax.random.normal(ks[0], (c_in * 9, c_feat), jnp.float32),
        'enc_b': s * jax.random.normal(ks[1], (1, c_feat), jnp.float32),
        'w1': s * jax.random.normal(ks[2], (d_in, hidden), jnp.float32),
        'b1': s * jax.random.normal(ks[3], (1, hidden), jnp.float32),
        'w2': s * jax.random.normal(ks[4], (hidden, hidden), jnp.float32),
        'b2': s * jax.random.normal(ks[5], (1, hidden), jnp.float32),
        'w3': s * jax.random.normal(ks[6], (hidden, out_dim), jnp.float32),
        'b3': s * jax.random.normal(ks[7], (1, out_dim), jnp.float32),
    }


def liif_forward(params, inp, target_shape):
    """LIIF.forward: inp (B, 3, H, W) NCHW -> img (B, 3, target_h, target_w)."""
    target_width, target_height = target_shape
    B, Cin, H, W = inp.shape

    # coord / cell (same for the whole batch), matching the PyTorch forward.
    coord = make_coord((target_width, target_height)).reshape(-1, 2)   # (Q, 2)
    Q = coord.shape[0]
    coord = jnp.broadcast_to(coord[None], (B, Q, 2))
    cell = jnp.ones((B, Q, 2), jnp.float32) * jnp.array(
        [2.0 / target_width, 2.0 / target_height], jnp.float32)

    # ---------------- encoder: 3x3 conv via im2col + Pallas matmul ----------
    cols = unfold3x3(inp)                                   # (B, 27, H, W)
    cols = cols.reshape(B, Cin * 9, H * W).transpose(0, 2, 1).reshape(B * H * W, Cin * 9)
    C = params['enc_w'].shape[1]
    feat = pallas_matmul_bias(cols, params['enc_w'], params['enc_b'],
                              out_dtype=jnp.bfloat16)       # bf16 feature map
    feat = feat.reshape(B, H * W, C).transpose(0, 2, 1).reshape(B, C, H, W)
    Hf, Wf = H, W

    # ---------------- query_rgb glue -----------------------------------------
    feat_unf = unfold3x3(feat)                              # (B, 9C, Hf, Wf) bf16
    feat_flat = feat_unf.reshape(B, 9 * C, Hf * Wf).transpose(0, 2, 1)  # (B, HW, 9C)
    feat_coord = make_coord((Hf, Wf)).reshape(Hf * Wf, 2)   # (HW, 2) f32
    feat_coord = jnp.broadcast_to(feat_coord[None], (B, Hf * Wf, 2))

    rx = 2.0 / Hf / 2.0
    ry = 2.0 / Wf / 2.0
    eps_shift = 1e-6
    scale = jnp.array([float(Hf), float(Wf)], jnp.float32)

    rel_cell = cell * scale                                 # f32
    rel_cell_b = rel_cell.astype(jnp.bfloat16)

    branch_inputs = []
    branch_areas = []
    for vx in (-1, 1):
        for vy in (-1, 1):
            shift = jnp.array([vx * rx + eps_shift, vy * ry + eps_shift], jnp.float32)
            coord_ = jnp.clip(coord + shift, -1.0 + 1e-6, 1.0 - 1e-6)
            idx = nearest_indices(coord_, Hf, Wf)           # (B, Q)
            q_feat = jnp.take_along_axis(feat_flat, idx[..., None], axis=1)   # (B, Q, 9C) bf16
            q_coord = jnp.take_along_axis(feat_coord, idx[..., None], axis=1) # (B, Q, 2) f32
            rel_coord = (coord - q_coord) * scale                             # f32
            branch_inputs.append(jnp.concatenate(
                [q_feat, rel_coord.astype(jnp.bfloat16), rel_cell_b], axis=-1))
            branch_areas.append(jnp.abs(rel_coord[..., 0] * rel_coord[..., 1]))

    d_in = 9 * C + 4
    x4 = jnp.stack(branch_inputs, axis=0).reshape(4, B * Q, d_in)   # bf16
    areas = jnp.stack(branch_areas, axis=-1).reshape(B * Q, 4)       # f32

    # ---------------- hot path: imnet MLP + ensemble weighting (Pallas) -----
    pred = pallas_liif_query(
        x4, areas, params['w1'], params['b1'], params['w2'], params['b2'],
        params['w3'], params['b3'])                          # (B*Q, 3)

    pred = pred.reshape(B, Q, 3)
    img = pred.transpose(0, 2, 1).reshape(B, 3, target_height, target_width)
    return img


# --------------------------------------------------------------------------

if __name__ == "__main__":
    key = jax.random.PRNGKey(0)
    k_inp, k_par = jax.random.split(key)

    B, Cin, H, W = 2, 3, 16, 16
    inp = jax.random.normal(k_inp, (B, Cin, H, W), jnp.float32)
    params = init_params(k_par, c_in=Cin, c_feat=8, hidden=32, out_dim=3)

    target_shape = (24, 24)   # (target_width, target_height)

    fwd = jax.jit(liif_forward, static_argnums=(2,))
    img = fwd(params, inp, target_shape)
    img = jax.block_until_ready(img)

    assert img.shape == (B, 3, target_shape[1], target_shape[0]), img.shape
    assert bool(jnp.all(jnp.isfinite(img)))
    print("KERNEL_OK")
</pallas_src>

<mosaic_0001>
module attributes {stable_mosaic.version = 11 : i64} {
  func.func @_matmul_bias_kernel(%arg0: i32, %arg1: memref<512x27xbf16, #tpu.memory_space<vmem>>, %arg2: memref<27x128xbf16, #tpu.memory_space<vmem>>, %arg3: memref<1x128xf32, #tpu.memory_space<vmem>>, %arg4: memref<512x128xbf16, #tpu.memory_space<vmem>>) attributes {dimension_semantics = [#tpu.dimension_semantics<parallel>], iteration_bounds = array<i64: 1>, scalar_prefetch = 0 : i64, scratch_operands = 0 : i64, tpu.core_type = #tpu.core_type<tc>, window_params = [{transform_indices = @transform_0, window_bounds = array<i64: 512, 27>}, {pipeline_mode = #tpu.pipeline_mode<synchronous>, transform_indices = @transform_1, window_bounds = array<i64: 27, 128>}, {pipeline_mode = #tpu.pipeline_mode<synchronous>, transform_indices = @transform_2, window_bounds = array<i64: 1, 128>}, {transform_indices = @transform_3, window_bounds = array<i64: 512, 128>}]} {
    %c0 = arith.constant 0 : index
    %c0_0 = arith.constant 0 : index
    %0 = vector.load %arg1[%c0, %c0_0] : memref<512x27xbf16, #tpu.memory_space<vmem>>, vector<512x27xbf16>
    %c0_1 = arith.constant 0 : index
    %c0_2 = arith.constant 0 : index
    %1 = vector.load %arg2[%c0_1, %c0_2] : memref<27x128xbf16, #tpu.memory_space<vmem>>, vector<27x128xbf16>
    %cst = arith.constant dense<0.000000e+00> : vector<512x128xf32>
    %2 = tpu.matmul %0, %1, %cst {dimension_numbers = #tpu.dot_dimension_numbers<[1], [0], [0], [1], [0, 0, 1, 1], [], []>} : vector<512x27xbf16>, vector<27x128xbf16>, vector<512x128xf32> -> vector<512x128xf32>
    %c0_3 = arith.constant 0 : index
    %c0_4 = arith.constant 0 : index
    %3 = vector.load %arg3[%c0_3, %c0_4] : memref<1x128xf32, #tpu.memory_space<vmem>>, vector<1x128xf32>
    %4 = vector.broadcast %3 : vector<1x128xf32> to vector<512x128xf32>
    %5 = arith.addf %2, %4 : vector<512x128xf32>
    %6 = arith.truncf %5 : vector<512x128xf32> to vector<512x128xbf16>
    %c0_5 = arith.constant 0 : index
    %c0_6 = arith.constant 0 : index
    %7 = vector.load %arg4[%c0_5, %c0_6] : memref<512x128xbf16, #tpu.memory_space<vmem>>, vector<512x128xbf16>
    tpu.vector_store %arg4[%c0_5, %c0_6], %6 {strides = array<i32>} : memref<512x128xbf16, #tpu.memory_space<vmem>>, vector<512x128xbf16>,
    return
  }
  func.func @transform_0(%arg0: i32) -> (i32, i32) {
    %c0_i32 = arith.constant 0 : i32
    %c0_i32_0 = arith.constant 0 : i32
    return %arg0, %c0_i32 : i32, i32
  }
  func.func @transform_1(%arg0: i32) -> (i32, i32) {
    %c0_i32 = arith.constant 0 : i32
    %c0_i32_0 = arith.constant 0 : i32
    %c0_i32_1 = arith.constant 0 : i32
    return %c0_i32, %c0_i32_0 : i32, i32
  }
  func.func @transform_2(%arg0: i32) -> (i32, i32) {
    %c0_i32 = arith.constant 0 : i32
    %c0_i32_0 = arith.constant 0 : i32
    %c0_i32_1 = arith.constant 0 : i32
    return %c0_i32, %c0_i32_0 : i32, i32
  }
  func.func @transform_3(%arg0: i32) -> (i32, i32) {
    %c0_i32 = arith.constant 0 : i32
    %c0_i32_0 = arith.constant 0 : i32
    return %arg0, %c0_i32 : i32, i32
  }
}

module attributes {stable_mosaic.version = 11 : i64} {
  func.func @_liif_query_kernel(%arg0: i32, %arg1: memref<4x512x76xbf16, #tpu.memory_space<vmem>>, %arg2: memref<512x4xf32, #tpu.memory_space<vmem>>, %arg3: memref<76x32xbf16, #tpu.memory_space<vmem>>, %arg4: memref<1x32xf32, #tpu.memory_space<vmem>>, %arg5: memref<32x32xbf16, #tpu.memory_space<vmem>>, %arg6: memref<1x32xf32, #tpu.memory_space<vmem>>, %arg7: memref<32x128xbf16, #tpu.memory_space<vmem>>, %arg8: memref<1x128xf32, #tpu.memory_space<vmem>>, %arg9: memref<512x128xf32, #tpu.memory_space<vmem>>) attributes {dimension_semantics = [#tpu.dimension_semantics<parallel>], iteration_bounds = array<i64: 3>, scalar_prefetch = 0 : i64, scratch_operands = 0 : i64, tpu.core_type = #tpu.core_type<tc>, window_params = [{transform_indices = @transform_0, window_bounds = array<i64: 4, 512, 76>}, {transform_indices = @transform_1, window_bounds = array<i64: 512, 4>}, {pipeline_mode = #tpu.pipeline_mode<synchronous>, transform_indices = @transform_2, window_bounds = array<i64: 76, 32>}, {pipeline_mode = #tpu.pipeline_mode<synchronous>, transform_indices = @transform_3, window_bounds = array<i64: 1, 32>}, {pipeline_mode = #tpu.pipeline_mode<synchronous>, transform_indices = @transform_4, window_bounds = array<i64: 32, 32>}, {pipeline_mode = #tpu.pipeline_mode<synchronous>, transform_indices = @transform_5, window_bounds = array<i64: 1, 32>}, {pipeline_mode = #tpu.pipeline_mode<synchronous>, transform_indices = @transform_6, window_bounds = array<i64: 32, 128>}, {pipeline_mode = #tpu.pipeline_mode<synchronous>, transform_indices = @transform_7, window_bounds = array<i64: 1, 128>}, {transform_indices = @transform_8, window_bounds = array<i64: 512, 128>}]} {
    %c0 = arith.constant 0 : index
    %c0_0 = arith.constant 0 : index
    %c0_1 = arith.constant 0 : index
    %0 = vector.load %arg1[%c0, %c0_0, %c0_1] : memref<4x512x76xbf16, #tpu.memory_space<vmem>>, vector<4x512x76xbf16>
    %1 = vector.shape_cast %0 : vector<4x512x76xbf16> to vector<2048x76xbf16>
    %c0_2 = arith.constant 0 : index
    %c0_3 = arith.constant 0 : index
    %2 = vector.load %arg3[%c0_2, %c0_3] : memref<76x32xbf16, #tpu.memory_space<vmem>>, vector<76x32xbf16>
    %cst = arith.constant dense<0.000000e+00> : vector<2048x32xf32>
    %3 = tpu.matmul %1, %2, %cst {dimension_numbers = #tpu.dot_dimension_numbers<[1], [0], [0], [1], [0, 0, 1, 1], [], []>} : vector<2048x76xbf16>, vector<76x32xbf16>, vector<2048x32xf32> -> vector<2048x32xf32>
    %c0_4 = arith.constant 0 : index
    %c0_5 = arith.constant 0 : index
    %4 = vector.load %arg4[%c0_4, %c0_5] : memref<1x32xf32, #tpu.memory_space<vmem>>, vector<1x32xf32>
    %5 = vector.broadcast %4 : vector<1x32xf32> to vector<2048x32xf32>
    %6 = arith.addf %3, %5 : vector<2048x32xf32>
    %cst_6 = arith.constant 0.000000e+00 : f32
    %7 = vector.broadcast %cst_6 : f32 to vector<2048x32xf32>
    %8 = arith.maximumf %6, %7 : vector<2048x32xf32>
    %9 = arith.truncf %8 : vector<2048x32xf32> to vector<2048x32xbf16>
    %c0_7 = arith.constant 0 : index
    %c0_8 = arith.constant 0 : index
    %10 = vector.load %arg5[%c0_7, %c0_8] : memref<32x32xbf16, #tpu.memory_space<vmem>>, vector<32x32xbf16>
    %cst_9 = arith.constant dense<0.000000e+00> : vector<2048x32xf32>
    %11 = tpu.matmul %9, %10, %cst_9 {dimension_numbers = #tpu.dot_dimension_numbers<[1], [0], [0], [1], [0, 0, 1, 1], [], []>} : vector<2048x32xbf16>, vector<32x32xbf16>, vector<2048x32xf32> -> vector<2048x32xf32>
    %c0_10 = arith.constant 0 : index
    %c0_11 = arith.constant 0 : index
    %12 = vector.load %arg6[%c0_10, %c0_11] : memref<1x32xf32, #tpu.memory_space<vmem>>, vector<1x32xf32>
    %13 = vector.broadcast %12 : vector<1x32xf32> to vector<2048x32xf32>
    %14 = arith.addf %11, %13 : vector<2048x32xf32>
    %cst_12 = arith.constant 0.000000e+00 : f32
    %15 = vector.broadcast %cst_12 : f32 to vector<2048x32xf32>
    %16 = arith.maximumf %14, %15 : vector<2048x32xf32>
    %17 = arith.truncf %16 : vector<2048x32xf32> to vector<2048x32xbf16>
    %c0_13 = arith.constant 0 : index
    %c0_14 = arith.constant 0 : index
    %18 = vector.load %arg7[%c0_13, %c0_14] : memref<32x128xbf16, #tpu.memory_space<vmem>>, vector<32x128xbf16>
    %cst_15 = arith.constant dense<0.000000e+00> : vector<2048x128xf32>
    %19 = tpu.matmul %17, %18, %cst_15 {dimension_numbers = #tpu.dot_dimension_numbers<[1], [0], [0], [1], [0, 0, 1, 1], [], []>} : vector<2048x32xbf16>, vector<32x128xbf16>, vector<2048x128xf32> -> vector<2048x128xf32>
    %c0_16 = arith.constant 0 : index
    %c0_17 = arith.constant 0 : index
    %20 = vector.load %arg8[%c0_16, %c0_17] : memref<1x128xf32, #tpu.memory_space<vmem>>, vector<1x128xf32>
    %21 = vector.broadcast %20 : vector<1x128xf32> to vector<2048x128xf32>
    %22 = arith.addf %19, %21 : vector<2048x128xf32>
    %c0_18 = arith.constant 0 : index
    %c0_19 = arith.constant 0 : index
    %23 = vector.load %arg2[%c0_18, %c0_19] : memref<512x4xf32, #tpu.memory_space<vmem>>, vector<512x4xf32>
    %cst_20 = arith.constant 9.99999971E-10 : f32
    %24 = vector.broadcast %cst_20 : f32 to vector<512x4xf32>
    %25 = arith.addf %23, %24 : vector<512x4xf32>
    %26 = vector.extract_strided_slice %25 {offsets = [0, 0], sizes = [512, 1], strides = [1, 1]} : vector<512x4xf32> to vector<512x1xf32>
    %27 = vector.extract_strided_slice %25 {offsets = [0, 1], sizes = [512, 1], strides = [1, 1]} : vector<512x4xf32> to vector<512x1xf32>
    %28 = vector.extract_strided_slice %25 {offsets = [0, 2], sizes = [512, 1], strides = [1, 1]} : vector<512x4xf32> to vector<512x1xf32>
    %29 = vector.extract_strided_slice %25 {offsets = [0, 3], sizes = [512, 1], strides = [1, 1]} : vector<512x4xf32> to vector<512x1xf32>
    %30 = arith.addf %26, %27 : vector<512x1xf32>
    %31 = arith.addf %30, %28 : vector<512x1xf32>
    %32 = arith.addf %31, %29 : vector<512x1xf32>
    %33 = tpu.reciprocal %32 {approx = true} : vector<512x1xf32> -> vector<512x1xf32>
    %34 = vector.extract_strided_slice %22 {offsets = [0, 0], sizes = [512, 128], strides = [1, 1]} : vector<2048x128xf32> to vector<512x128xf32>
    %35 = arith.mulf %29, %33 : vector<512x1xf32>
    %36 = vector.broadcast %35 : vector<512x1xf32> to vector<512x128xf32>
    %37 = arith.mulf %34, %36 : vector<512x128xf32>
    %38 = vector.extract_strided_slice %22 {offsets = [512, 0], sizes = [512, 128], strides = [1, 1]} : vector<2048x128xf32> to vector<512x128xf32>
    %39 = arith.mulf %28, %33 : vector<512x1xf32>
    %40 = vector.broadcast %39 : vector<512x1xf32> to vector<512x128xf32>
    %41 = arith.mulf %38, %40 : vector<512x128xf32>
    %42 = arith.addf %37, %41 : vector<512x128xf32>
    %43 = vector.extract_strided_slice %22 {offsets = [1024, 0], sizes = [512, 128], strides = [1, 1]} : vector<2048x128xf32> to vector<512x128xf32>
    %44 = arith.mulf %27, %33 : vector<512x1xf32>
    %45 = vector.broadcast %44 : vector<512x1xf32> to vector<512x128xf32>
    %46 = arith.mulf %43, %45 : vector<512x128xf32>
    %47 = arith.addf %42, %46 : vector<512x128xf32>
    %48 = vector.extract_strided_slice %22 {offsets = [1536, 0], sizes = [512, 128], strides = [1, 1]} : vector<2048x128xf32> to vector<512x128xf32>
    %49 = arith.mulf %26, %33 : vector<512x1xf32>
    %50 = vector.broadcast %49 : vector<512x1xf32> to vector<512x128xf32>
    %51 = arith.mulf %48, %50 : vector<512x128xf32>
    %52 = arith.addf %47, %51 : vector<512x128xf32>
    %c0_21 = arith.constant 0 : index
    %c0_22 = arith.constant 0 : index
    %53 = vector.load %arg9[%c0_21, %c0_22] : memref<512x128xf32, #tpu.memory_space<vmem>>, vector<512x128xf32>
    tpu.vector_store %arg9[%c0_21, %c0_22], %52 {strides = array<i32>} : memref<512x128xf32, #tpu.memory_space<vmem>>, vector<512x128xf32>,
    return
  }
  func.func @transform_0(%arg0: i32) -> (i32, i32, i32) {
    %c0_i32 = arith.constant 0 : i32
    %c0_i32_0 = arith.constant 0 : i32
    %c0_i32_1 = arith.constant 0 : i32
    return %c0_i32, %arg0, %c0_i32_0 : i32, i32, i32
  }
  func.func @transform_1(%arg0: i32) -> (i32, i32) {
    %c0_i32 = arith.constant 0 : i32
    %c0_i32_0 = arith.constant 0 : i32
    return %arg0, %c0_i32 : i32, i32
  }
  func.func @transform_2(%arg0: i32) -> (i32, i32) {
    %c0_i32 = arith.constant 0 : i32
    %c0_i32_0 = arith.constant 0 : i32
    %c0_i32_1 = arith.constant 0 : i32
    return %c0_i32, %c0_i32_0 : i32, i32
  }
  func.func @transform_3(%arg0: i32) -> (i32, i32) {
    %c0_i32 = arith.constant 0 : i32
    %c0_i32_0 = arith.constant 0 : i32
    %c0_i32_1 = arith.constant 0 : i32
    return %c0_i32, %c0_i32_0 : i32, i32
  }
  func.func @transform_4(%arg0: i32) -> (i32, i32) {
    %c0_i32 = arith.constant 0 : i32
    %c0_i32_0 = arith.constant 0 : i32
    %c0_i32_1 = arith.constant 0 : i32
    return %c0_i32, %c0_i32_0 : i32, i32
  }
  func.func @transform_5(%arg0: i32) -> (i32, i32) {
    %c0_i32 = arith.constant 0 : i32
    %c0_i32_0 = arith.constant 0 : i32
    %c0_i32_1 = arith.constant 0 : i32
    return %c0_i32, %c0_i32_0 : i32, i32
  }
  func.func @transform_6(%arg0: i32) -> (i32, i32) {
    %c0_i32 = arith.constant 0 : i32
    %c0_i32_0 = arith.constant 0 : i32
    %c0_i32_1 = arith.constant 0 : i32
    return %c0_i32, %c0_i32_0 : i32, i32
  }
  func.func @transform_7(%arg0: i32) -> (i32, i32) {
    %c0_i32 = arith.constant 0 : i32
    %c0_i32_0 = arith.constant 0 : i32
    %c0_i32_1 = arith.constant 0 : i32
    return %c0_i32, %c0_i32_0 : i32, i32
  }
  func.func @transform_8(%arg0: i32) -> (i32, i32) {
    %c0_i32 = arith.constant 0 : i32
    %c0_i32_0 = arith.constant 0 : i32
    return %arg0, %c0_i32 : i32, i32
  }
}

</mosaic_0001>

<llo_original>
// kernel: liif_forward.2
$region0: #{liif_forward.2}
  #allocation0 [shape = 'u32[]', space=smem, size = 0x4, offset = 0x4, fixed_abs, tag = 'smem constant byte address 0x4 - core index']
  #allocation1 [shape = 'u32[144,128]{1,0:T(1,128)}', space=vmem, size = 0x12000, scoped, tag = 'internal scratch']
  %s0 = inlined_call_operand.vmem [shape: bf16[512,27], index: 0, kind: input, shape index: {}]
  %s1 = inlined_call_operand.vmem [shape: bf16[27,128], index: 1, kind: input, shape index: {}]
  %s2 = inlined_call_operand.vmem [shape: f32[1,128], index: 2, kind: input, shape index: {}]
  %s3 = inlined_call_operand.vmem [shape: bf16[512,128], index: 3, kind: output, shape index: {}]
  %s4 = sld [smem:[#allocation0]]
  $region22: #{liif_forward.2} parent=0
    _
  %s6 = ssub.s32 1, %s4
  %s7 = scalar_select 0, %s6, %s4
  // Predicated region
  $region2: #{liif_forward.2} parent=0 // pred_check
    _
  $region3: #{liif_forward.2} parent=0 // pred_check_branch
    %9 = sbr.rel (0) target = $region5
  $region4: #{liif_forward.2} parent=0 // pred_region
    _
  $region5: #{liif_forward.2} parent=0 // pred_fallthru
    _
  // Predicated region
  $region6: #{liif_forward.2} parent=0 // pred_check
    _
  $region7: #{liif_forward.2} parent=0 // pred_check_branch
    %11 = sbr.rel (0) target = $region9
  $region8: #{liif_forward.2} parent=0 // pred_region
    _
  $region9: #{liif_forward.2} parent=0 // pred_fallthru
    _
  // Predicated region
  $region10: #{liif_forward.2} parent=0 // pred_check
    _
  $region11: #{liif_forward.2} parent=0 // pred_check_branch
    %13 = sbr.rel (0) target = $region13
  $region12: #{liif_forward.2} parent=0 // pred_region
    _
  $region13: #{liif_forward.2} parent=0 // pred_fallthru
    _
  %v15 = vld [vmem:[%s0] sm:$0xf]
  %v16 = vld [vmem:[%s0 + $0x4] sm:$0xf]
  %v17 = vld [vmem:[%s0 + $0x8] sm:$0xf]
  %v18 = vld [vmem:[%s0 + $0xc] sm:$0xf]
  %v19 = vld [vmem:[%s0 + $0x10] sm:$0xf]
  %v20 = vld [vmem:[%s0 + $0x14] sm:$0xf]
  %v21 = vld [vmem:[%s0 + $0x18] sm:$0xf]
  %v22 = vld [vmem:[%s0 + $0x1c] sm:$0xf]
  %v23 = vld [vmem:[%s0 + $0x20] sm:$0xf]
  %v24 = vld [vmem:[%s0 + $0x24] sm:$0xf]
  %v25 = vld [vmem:[%s0 + $0x28] sm:$0xf]
  %v26 = vld [vmem:[%s0 + $0x2c] sm:$0xf]
  %v27 = vld [vmem:[%s0 + $0x30] sm:$0xf]
  %v28 = vld [vmem:[%s0 + $0x34] sm:$0xf]
  %v29 = vld [vmem:[%s0 + $0x38] sm:$0xf]
  %v30 = vld [vmem:[%s0 + $0x3c] sm:$0xf]
  %v31 = vld [vmem:[%s0 + $0x40] sm:$0xf]
  %v32 = vld [vmem:[%s0 + $0x44] sm:$0xf]
  %v33 = vld [vmem:[%s0 + $0x48] sm:$0xf]
  %v34 = vld [vmem:[%s0 + $0x4c] sm:$0xf]
  %v35 = vld [vmem:[%s0 + $0x50] sm:$0xf]
  %v36 = vld [vmem:[%s0 + $0x54] sm:$0xf]
  %v37 = vld [vmem:[%s0 + $0x58] sm:$0xf]
  %v38 = vld [vmem:[%s0 + $0x5c] sm:$0xf]
  %v39 = vld [vmem:[%s0 + $0x60] sm:$0xf]
  %v40 = vld [vmem:[%s0 + $0x64] sm:$0xf]
  %v41 = vld [vmem:[%s0 + $0x68] sm:$0xf]
  %v42 = vld [vmem:[%s0 + $0x6c] sm:$0xf]
  %v43 = vld [vmem:[%s0 + $0x70] sm:$0xf]
  %v44 = vld [vmem:[%s0 + $0x74] sm:$0xf]
  %v45 = vld [vmem:[%s0 + $0x78] sm:$0xf]
  %v46 = vld [vmem:[%s0 + $0x7c] sm:$0xf]
  %v47 = vld [vmem:[%s0 + $0x80] sm:$0xf]
  %v48 = vld [vmem:[%s0 + $0x84] sm:$0xf]
  %v49 = vld [vmem:[%s0 + $0x88] sm:$0xf]
  %v50 = vld [vmem:[%s0 + $0x8c] sm:$0xf]
  %v51 = vld [vmem:[%s0 + $0x90] sm:$0xf]
  %v52 = vld [vmem:[%s0 + $0x94] sm:$0xf]
  %v53 = vld [vmem:[%s0 + $0x98] sm:$0xf]
  %v54 = vld [vmem:[%s0 + $0x9c] sm:$0xf]
  %v55 = vld [vmem:[%s0 + $0xa0] sm:$0xf]
  %v56 = vld [vmem:[%s0 + $0xa4] sm:$0xf]
  %v57 = vld [vmem:[%s0 + $0xa8] sm:$0xf]
  %v58 = vld [vmem:[%s0 + $0xac] sm:$0xf]
  %v59 = vld [vmem:[%s0 + $0xb0] sm:$0xf]
  %v60 = vld [vmem:[%s0 + $0xb4] sm:$0xf]
  %v61 = vld [vmem:[%s0 + $0xb8] sm:$0xf]
  %v62 = vld [vmem:[%s0 + $0xbc] sm:$0xf]
  %v63 = vld [vmem:[%s0 + $0xc0] sm:$0xf]
  %v64 = vld [vmem:[%s0 + $0xc4] sm:$0xf]
  %v65 = vld [vmem:[%s0 + $0xc8] sm:$0xf]
  %v66 = vld [vmem:[%s0 + $0xcc] sm:$0xf]
  %v67 = vld [vmem:[%s0 + $0xd0] sm:$0xf]
  %v68 = vld [vmem:[%s0 + $0xd4] sm:$0xf]
  %v69 = vld [vmem:[%s0 + $0xd8] sm:$0xf]
  %v70 = vld [vmem:[%s0 + $0xdc] sm:$0xf]
  %v71 = vld [vmem:[%s0 + $0xe0] sm:$0xf]
  %v72 = vld [vmem:[%s0 + $0xe4] sm:$0xf]
  %v73 = vld [vmem:[%s0 + $0xe8] sm:$0xf]
  %v74 = vld [vmem:[%s0 + $0xec] sm:$0xf]
  %v75 = vld [vmem:[%s0 + $0xf0] sm:$0xf]
  %v76 = vld [vmem:[%s0 + $0xf4] sm:$0xf]
  %v77 = vld [vmem:[%s0 + $0xf8] sm:$0xf]
  %v78 = vld [vmem:[%s0 + $0xfc] sm:$0xf]
  %v79 = vld [vmem:[%s1] sm:$0xf]
  %v80 = vld [vmem:[%s1 + $0x4] sm:$0xf]
  %v81 = vld [vmem:[%s1 + $0x8] sm:$0xf]
  %v82 = vld [vmem:[%s1 + $0xc] sm:$0x3]
  %v83 = vld [vmem:[%s2] sm:$0x1]
  %v85 = vlaneseq
  %v86 = vshrl.u32 %v85, 7
  %v87 = vsub.s32 0, %v86
  %v88 = vrot.slane %v83, %v87
  %v154 = vunpack.c.l.b16 %v15
  %v155 = vunpack.c.l.b16 %v16
  %v156 = vunpack.c.l.b16 %v17
  %v157 = vunpack.c.l.b16 %v18
  %v158 = vunpack.c.l.b16 %v19
  %v159 = vunpack.c.l.b16 %v20
  %v160 = vunpack.c.l.b16 %v21
  %v161 = vunpack.c.l.b16 %v22
  %v162 = vunpack.c.l.b16 %v23
  %v163 = vunpack.c.l.b16 %v24
  %v164 = vunpack.c.l.b16 %v25
  %v165 = vunpack.c.l.b16 %v26
  %v166 = vunpack.c.l.b16 %v27
  %v167 = vunpack.c.l.b16 %v28
  %v168 = vunpack.c.l.b16 %v29
  %v169 = vunpack.c.l.b16 %v30
  %v170 = vunpack.c.l.b16 %v31
  %v171 = vunpack.c.l.b16 %v32
  %v172 = vunpack.c.l.b16 %v33
  %v173 = vunpack.c.l.b16 %v34
  %v174 = vunpack.c.l.b16 %v35
  %v175 = vunpack.c.l.b16 %v36
  %v176 = vunpack.c.l.b16 %v37
  %v177 = vunpack.c.l.b16 %v38
  %v178 = vunpack.c.l.b16 %v39
  %v179 = vunpack.c.l.b16 %v40
  %v180 = vunpack.c.l.b16 %v41
  %v181 = vunpack.c.l.b16 %v42
  %v182 = vunpack.c.l.b16 %v43
  %v183 = vunpack.c.l.b16 %v44
  %v184 = vunpack.c.l.b16 %v45
  %v185 = vunpack.c.l.b16 %v46
  %v186 = vunpack.c.l.b16 %v47
  %v187 = vunpack.c.l.b16 %v48
  %v188 = vunpack.c.l.b16 %v49
  %v189 = vunpack.c.l.b16 %v50
  %v190 = vunpack.c.l.b16 %v51
  %v191 = vunpack.c.l.b16 %v52
  %v192 = vunpack.c.l.b16 %v53
  %v193 = vunpack.c.l.b16 %v54
  %v194 = vunpack.c.l.b16 %v55
  %v195 = vunpack.c.l.b16 %v56
  %v196 = vunpack.c.l.b16 %v57
  %v197 = vunpack.c.l.b16 %v58
  %v198 = vunpack.c.l.b16 %v59
  %v199 = vunpack.c.l.b16 %v60
  %v200 = vunpack.c.l.b16 %v61
  %v201 = vunpack.c.l.b16 %v62
  %v202 = vunpack.c.l.b16 %v63
  %v203 = vunpack.c.l.b16 %v64
  %v204 = vunpack.c.l.b16 %v65
  %v205 = vunpack.c.l.b16 %v66
  %v206 = vunpack.c.l.b16 %v67
  %v207 = vunpack.c.l.b16 %v68
  %v208 = vunpack.c.l.b16 %v69
  %v209 = vunpack.c.l.b16 %v70
  %v210 = vunpack.c.l.b16 %v71
  %v211 = vunpack.c.l.b16 %v72
  %v212 = vunpack.c.l.b16 %v73
  %v213 = vunpack.c.l.b16 %v74
  %v214 = vunpack.c.l.b16 %v75
  %v215 = vunpack.c.l.b16 %v76
  %v216 = vunpack.c.l.b16 %v77
  %v217 = vunpack.c.l.b16 %v78
  %v218 = vpack.c.b16 %v155, %v154
  %v219 = vpack.c.b16 %v157, %v156
  %v220 = vpack.c.b16 %v159, %v158
  %v221 = vpack.c.b16 %v161, %v160
  %v222 = vpack.c.b16 %v163, %v162
  %v223 = vpack.c.b16 %v165, %v164
  %v224 = vpack.c.b16 %v167, %v166
  %v225 = vpack.c.b16 %v169, %v168
  %v226 = vpack.c.b16 %v171, %v170
  %v227 = vpack.c.b16 %v173, %v172
  %v228 = vpack.c.b16 %v175, %v174
  %v229 = vpack.c.b16 %v177, %v176
  %v230 = vpack.c.b16 %v179, %v178
  %v231 = vpack.c.b16 %v181, %v180
  %v232 = vpack.c.b16 %v183, %v182
  %v233 = vpack.c.b16 %v185, %v184
  %v234 = vpack.c.b16 %v187, %v186
  %v235 = vpack.c.b16 %v189, %v188
  %v236 = vpack.c.b16 %v191, %v190
  %v237 = vpack.c.b16 %v193, %v192
  %v238 = vpack.c.b16 %v195, %v194
  %v239 = vpack.c.b16 %v197, %v196
  %v240 = vpack.c.b16 %v199, %v198
  %v241 = vpack.c.b16 %v201, %v200
  %v242 = vpack.c.b16 %v203, %v202
  %v243 = vpack.c.b16 %v205, %v204
  %v244 = vpack.c.b16 %v207, %v206
  %v245 = vpack.c.b16 %v209, %v208
  %v246 = vpack.c.b16 %v211, %v210
  %v247 = vpack.c.b16 %v213, %v212
  %v248 = vpack.c.b16 %v215, %v214
  %v249 = vpack.c.b16 %v217, %v216
  %v254 = vunpack.c.l.b16 %v79
  %v255 = vunpack.c.l.b16 %v80
  %v256 = vunpack.c.l.b16 %v81
  %v257 = vunpack.c.l.b16 %v82
  %v258 = vpack.c.b16 %v255, %v254
  %v259 = vpack.c.b16 %v257, %v256
  %vm261 = vcmask 220160
  %v263 = vsel %vm261, %v218, 0
  %v266 = vsel %vm261, %v219, 0
  %v269 = vsel %vm261, %v220, 0
  %v272 = vsel %vm261, %v221, 0
  %v275 = vsel %vm261, %v222, 0
  %v278 = vsel %vm261, %v223, 0
  %v281 = vsel %vm261, %v224, 0
  %v284 = vsel %vm261, %v225, 0
  %v287 = vsel %vm261, %v226, 0
  %v290 = vsel %vm261, %v227, 0
  %v293 = vsel %vm261, %v228, 0
  %v296 = vsel %vm261, %v229, 0
  %v299 = vsel %vm261, %v230, 0
  %v302 = vsel %vm261, %v231, 0
  %v305 = vsel %vm261, %v232, 0
  %v308 = vsel %vm261, %v233, 0
  %v311 = vsel %vm261, %v234, 0
  %v314 = vsel %vm261, %v235, 0
  %v317 = vsel %vm261, %v236, 0
  %v320 = vsel %vm261, %v237, 0
  %v323 = vsel %vm261, %v238, 0
  %v326 = vsel %vm261, %v239, 0
  %v329 = vsel %vm261, %v240, 0
  %v332 = vsel %vm261, %v241, 0
  %v335 = vsel %vm261, %v242, 0
  %v338 = vsel %vm261, %v243, 0
  %v341 = vsel %vm261, %v244, 0
  %v344 = vsel %vm261, %v245, 0
  %v347 = vsel %vm261, %v246, 0
  %v350 = vsel %vm261, %v247, 0
  %v353 = vsel %vm261, %v248, 0
  %v356 = vsel %vm261, %v249, 0
  %vm358 = vcmask 1044480
  %vm359 = vcmask 1045504
  %v360 = vsel %vm358, 4294967295, 65535
  %v361 = vsel %vm359, %v360, 0
  %v363 = vand.u32 %v259, %v361
  %365 = vmatprep.subr.bf16.mxu0 0
  %366 = vmatpush1.bf16.msra.mxu0 %v258
  %367 = vmatprep.subr.bf16.mxu0 0
  %368 = vmatpush1.bf16.msra.mxu0 %v363
  %369 = vmatprep.subr.bf16.mxu0 0
  %370 = vmatpush1.bf16.msra.mxu0 0
  %371 = vmatprep.subr.bf16.mxu0 0
  %372 = vmatpush1.bf16.msra.mxu0 0
  %373 = vmatprep.subr.bf16.mxu0 0
  %374 = vmatpush1.bf16.msra.mxu0 0
  %375 = vmatprep.subr.bf16.mxu0 0
  %376 = vmatpush1.bf16.msra.mxu0 0
  %377 = vmatprep.subr.bf16.mxu0 0
  %378 = vmatpush1.bf16.msra.mxu0 0
  %379 = vmatprep.subr.bf16.mxu0 0
  %380 = vmatpush1.bf16.msra.mxu0 0
  %381 = vmatprep.subr.bf16.mxu0 0
  %382 = vmatpush1.bf16.msra.mxu0 0
  %383 = vmatprep.subr.bf16.mxu0 0
  %384 = vmatpush1.bf16.msra.mxu0 0
  %385 = vmatprep.subr.bf16.mxu0 0
  %386 = vmatpush1.bf16.msra.mxu0 0
  %387 = vmatprep.subr.bf16.mxu0 0
  %388 = vmatpush1.bf16.msra.mxu0 0
  %389 = vmatprep.subr.bf16.mxu0 0
  %390 = vmatpush1.bf16.msra.mxu0 0
  %391 = vmatprep.subr.bf16.mxu0 0
  %392 = vmatpush1.bf16.msra.mxu0 0
  %393 = vmatprep.subr.bf16.mxu0 0
  %394 = vmatpush1.bf16.msra.mxu0 0
  %395 = vmatprep.subr.bf16.mxu0 0
  %396 = vmatpush1.bf16.msra.mxu0 0
  %397 = vmatprep.mubr.bf16.mxu0 0
  %398 = vmatmul.mubr.bf16.gmra.mrb[0].mxu0 %v263
  %v399 = vpop.f32.mrb[0].mxu0
  %v400 = vadd.f32 %v88, %v399
  %v401 = vpop.f32.mrb[0].mxu0
  %v402 = vpop.f32.mrb[0].mxu0
  %v403 = vadd.f32 %v88, %v402
  %v404 = vpop.f32.mrb[0].mxu0
  %405 = vmatprep.mubr.bf16.mxu0 0
  %406 = vmatmul.mubr.bf16.gmra.mrb[0].mxu0 %v266
  %v407 = vpop.f32.mrb[0].mxu0
  %v408 = vadd.f32 %v88, %v407
  %v409 = vpop.f32.mrb[0].mxu0
  %v410 = vpop.f32.mrb[0].mxu0
  %v411 = vadd.f32 %v88, %v410
  %v412 = vpop.f32.mrb[0].mxu0
  %413 = vmatprep.mubr.bf16.mxu0 0
  %414 = vmatmul.mubr.bf16.gmra.mrb[0].mxu0 %v269
  %v415 = vpop.f32.mrb[0].mxu0
  %v416 = vadd.f32 %v88, %v415
  %v417 = vpop.f32.mrb[0].mxu0
  %v418 = vpop.f32.mrb[0].mxu0
  %v419 = vadd.f32 %v88, %v418
  %v420 = vpop.f32.mrb[0].mxu0
  %421 = vmatprep.mubr.bf16.mxu0 0
  %422 = vmatmul.mubr.bf16.gmra.mrb[0].mxu0 %v272
  %v423 = vpop.f32.mrb[0].mxu0
  %v424 = vadd.f32 %v88, %v423
  %v425 = vpop.f32.mrb[0].mxu0
  %v426 = vpop.f32.mrb[0].mxu0
  %v427 = vadd.f32 %v88, %v426
  %v428 = vpop.f32.mrb[0].mxu0
  %429 = vmatprep.mubr.bf16.mxu0 0
  %430 = vmatmul.mubr.bf16.gmra.mrb[0].mxu0 %v275
  %v431 = vpop.f32.mrb[0].mxu0
  %v432 = vadd.f32 %v88, %v431
  %v433 = vpop.f32.mrb[0].mxu0
  %v434 = vpop.f32.mrb[0].mxu0
  %v435 = vadd.f32 %v88, %v434
  %v436 = vpop.f32.mrb[0].mxu0
  %437 = vmatprep.mubr.bf16.mxu0 0
  %438 = vmatmul.mubr.bf16.gmra.mrb[0].mxu0 %v278
  %v439 = vpop.f32.mrb[0].mxu0
  %v440 = vadd.f32 %v88, %v439
  %v441 = vpop.f32.mrb[0].mxu0
  %v442 = vpop.f32.mrb[0].mxu0
  %v443 = vadd.f32 %v88, %v442
  %v444 = vpop.f32.mrb[0].mxu0
  %445 = vmatprep.mubr.bf16.mxu0 0
  %446 = vmatmul.mubr.bf16.gmra.mrb[0].mxu0 %v281
  %v447 = vpop.f32.mrb[0].mxu0
  %v448 = vadd.f32 %v88, %v447
  %v449 = vpop.f32.mrb[0].mxu0
  %v450 = vpop.f32.mrb[0].mxu0
  %v451 = vadd.f32 %v88, %v450
  %v452 = vpop.f32.mrb[0].mxu0
  %453 = vmatprep.mubr.bf16.mxu0 0
  %454 = vmatmul.mubr.bf16.gmra.mrb[0].mxu0 %v284
  %v455 = vpop.f32.mrb[0].mxu0
  %v456 = vadd.f32 %v88, %v455
  %v457 = vpop.f32.mrb[0].mxu0
  %v458 = vpop.f32.mrb[0].mxu0
  %v459 = vadd.f32 %v88, %v458
  %v460 = vpop.f32.mrb[0].mxu0
  %461 = vmatprep.mubr.bf16.mxu0 0
  %462 = vmatmul.mubr.bf16.gmra.mrb[0].mxu0 %v287
  %v463 = vpop.f32.mrb[0].mxu0
  %v464 = vadd.f32 %v88, %v463
  %v465 = vpop.f32.mrb[0].mxu0
  %v466 = vpop.f32.mrb[0].mxu0
  %v467 = vadd.f32 %v88, %v466
  %v468 = vpop.f32.mrb[0].mxu0
  %469 = vmatprep.mubr.bf16.mxu0 0
  %470 = vmatmul.mubr.bf16.gmra.mrb[0].mxu0 %v290
  %v471 = vpop.f32.mrb[0].mxu0
  %v472 = vadd.f32 %v88, %v471
  %v473 = vpop.f32.mrb[0].mxu0
  %v474 = vpop.f32.mrb[0].mxu0
  %v475 = vadd.f32 %v88, %v474
  %v476 = vpop.f32.mrb[0].mxu0
  %477 = vmatprep.mubr.bf16.mxu0 0
  %478 = vmatmul.mubr.bf16.gmra.mrb[0].mxu0 %v293
  %v479 = vpop.f32.mrb[0].mxu0
  %v480 = vadd.f32 %v88, %v479
  %v481 = vpop.f32.mrb[0].mxu0
  %v482 = vpop.f32.mrb[0].mxu0
  %v483 = vadd.f32 %v88, %v482
  %v484 = vpop.f32.mrb[0].mxu0
  %485 = vmatprep.mubr.bf16.mxu0 0
  %486 = vmatmul.mubr.bf16.gmra.mrb[0].mxu0 %v296
  %v487 = vpop.f32.mrb[0].mxu0
  %v488 = vadd.f32 %v88, %v487
  %v489 = vpop.f32.mrb[0].mxu0
  %v490 = vpop.f32.mrb[0].mxu0
  %v491 = vadd.f32 %v88, %v490
  %v492 = vpop.f32.mrb[0].mxu0
  %493 = vmatprep.mubr.bf16.mxu0 0
  %494 = vmatmul.mubr.bf16.gmra.mrb[0].mxu0 %v299
  %v495 = vpop.f32.mrb[0].mxu0
  %v496 = vadd.f32 %v88, %v495
  %v497 = vpop.f32.mrb[0].mxu0
  %v498 = vpop.f32.mrb[0].mxu0
  %v499 = vadd.f32 %v88, %v498
  %v500 = vpop.f32.mrb[0].mxu0
  %501 = vmatprep.mubr.bf16.mxu0 0
  %502 = vmatmul.mubr.bf16.gmra.mrb[0].mxu0 %v302
  %v503 = vpop.f32.mrb[0].mxu0
  %v504 = vadd.f32 %v88, %v503
  %v505 = vpop.f32.mrb[0].mxu0
  %v506 = vpop.f32.mrb[0].mxu0
  %v507 = vadd.f32 %v88, %v506
  %v508 = vpop.f32.mrb[0].mxu0
  %509 = vmatprep.mubr.bf16.mxu0 0
  %510 = vmatmul.mubr.bf16.gmra.mrb[0].mxu0 %v305
  %v511 = vpop.f32.mrb[0].mxu0
  %v512 = vadd.f32 %v88, %v511
  %v513 = vpop.f32.mrb[0].mxu0
  %v514 = vpop.f32.mrb[0].mxu0
  %v515 = vadd.f32 %v88, %v514
  %v516 = vpop.f32.mrb[0].mxu0
  %517 = vmatprep.mubr.bf16.mxu0 0
  %518 = vmatmul.mubr.bf16.gmra.mrb[0].mxu0 %v308
  %v519 = vpop.f32.mrb[0].mxu0
  %v520 = vadd.f32 %v88, %v519
  %v521 = vpop.f32.mrb[0].mxu0
  %v522 = vpop.f32.mrb[0].mxu0
  %v523 = vadd.f32 %v88, %v522
  %v524 = vpop.f32.mrb[0].mxu0
  %525 = vmatprep.mubr.bf16.mxu0 0
  %526 = vmatmul.mubr.bf16.gmra.mrb[0].mxu0 %v311
  %v527 = vpop.f32.mrb[0].mxu0
  %v528 = vadd.f32 %v88, %v527
  %v529 = vpop.f32.mrb[0].mxu0
  %v530 = vpop.f32.mrb[0].mxu0
  %v531 = vadd.f32 %v88, %v530
  %v532 = vpop.f32.mrb[0].mxu0
  %533 = vmatprep.mubr.bf16.mxu0 0
  %534 = vmatmul.mubr.bf16.gmra.mrb[0].mxu0 %v314
  %v535 = vpop.f32.mrb[0].mxu0
  %v536 = vadd.f32 %v88, %v535
  %v537 = vpop.f32.mrb[0].mxu0
  %v538 = vpop.f32.mrb[0].mxu0
  %v539 = vadd.f32 %v88, %v538
  %v540 = vpop.f32.mrb[0].mxu0
  %541 = vmatprep.mubr.bf16.mxu0 0
  %542 = vmatmul.mubr.bf16.gmra.mrb[0].mxu0 %v317
  %v543 = vpop.f32.mrb[0].mxu0
  %v544 = vadd.f32 %v88, %v543
  %v545 = vpop.f32.mrb[0].mxu0
  %v546 = vpop.f32.mrb[0].mxu0
  %v547 = vadd.f32 %v88, %v546
  %v548 = vpop.f32.mrb[0].mxu0
  %549 = vmatprep.mubr.bf16.mxu0 0
  %550 = vmatmul.mubr.bf16.gmra.mrb[0].mxu0 %v320
  %v551 = vpop.f32.mrb[0].mxu0
  %v552 = vadd.f32 %v88, %v551
  %v553 = vpop.f32.mrb[0].mxu0
  %v554 = vpop.f32.mrb[0].mxu0
  %v555 = vadd.f32 %v88, %v554
  %v556 = vpop.f32.mrb[0].mxu0
  %557 = vmatprep.mubr.bf16.mxu0 0
  %558 = vmatmul.mubr.bf16.gmra.mrb[0].mxu0 %v323
  %v559 = vpop.f32.mrb[0].mxu0
  %v560 = vadd.f32 %v88, %v559
  %v561 = vpop.f32.mrb[0].mxu0
  %v562 = vpop.f32.mrb[0].mxu0
  %v563 = vadd.f32 %v88, %v562
  %v564 = vpop.f32.mrb[0].mxu0
  %565 = vmatprep.mubr.bf16.mxu0 0
  %566 = vmatmul.mubr.bf16.gmra.mrb[0].mxu0 %v326
  %v567 = vpop.f32.mrb[0].mxu0
  %v568 = vadd.f32 %v88, %v567
  %v569 = vpop.f32.mrb[0].mxu0
  %v570 = vpop.f32.mrb[0].mxu0
  %v571 = vadd.f32 %v88, %v570
  %v572 = vpop.f32.mrb[0].mxu0
  %573 = vmatprep.mubr.bf16.mxu0 0
  %574 = vmatmul.mubr.bf16.gmra.mrb[0].mxu0 %v329
  %v575 = vpop.f32.mrb[0].mxu0
  %v576 = vadd.f32 %v88, %v575
  %v577 = vpop.f32.mrb[0].mxu0
  %v578 = vpop.f32.mrb[0].mxu0
  %v579 = vadd.f32 %v88, %v578
  %v580 = vpop.f32.mrb[0].mxu0
  %581 = vmatprep.mubr.bf16.mxu0 0
  %582 = vmatmul.mubr.bf16.gmra.mrb[0].mxu0 %v332
  %v583 = vpop.f32.mrb[0].mxu0
  %v584 = vadd.f32 %v88, %v583
  %v585 = vpop.f32.mrb[0].mxu0
  %v586 = vpop.f32.mrb[0].mxu0
  %v587 = vadd.f32 %v88, %v586
  %v588 = vpop.f32.mrb[0].mxu0
  %589 = vmatprep.mubr.bf16.mxu0 0
  %590 = vmatmul.mubr.bf16.gmra.mrb[0].mxu0 %v335
  %v591 = vpop.f32.mrb[0].mxu0
  %v592 = vadd.f32 %v88, %v591
  %v593 = vpop.f32.mrb[0].mxu0
  %v594 = vpop.f32.mrb[0].mxu0
  %v595 = vadd.f32 %v88, %v594
  %v596 = vpop.f32.mrb[0].mxu0
  %597 = vmatprep.mubr.bf16.mxu0 0
  %598 = vmatmul.mubr.bf16.gmra.mrb[0].mxu0 %v338
  %v599 = vpop.f32.mrb[0].mxu0
  %v600 = vadd.f32 %v88, %v599
  %v601 = vpop.f32.mrb[0].mxu0
  %v602 = vpop.f32.mrb[0].mxu0
  %v603 = vadd.f32 %v88, %v602
  %v604 = vpop.f32.mrb[0].mxu0
  %605 = vmatprep.mubr.bf16.mxu0 0
  %606 = vmatmul.mubr.bf16.gmra.mrb[0].mxu0 %v341
  %v607 = vpop.f32.mrb[0].mxu0
  %v608 = vadd.f32 %v88, %v607
  %v609 = vpop.f32.mrb[0].mxu0
  %v610 = vpop.f32.mrb[0].mxu0
  %v611 = vadd.f32 %v88, %v610
  %v612 = vpop.f32.mrb[0].mxu0
  %613 = vmatprep.mubr.bf16.mxu0 0
  %614 = vmatmul.mubr.bf16.gmra.mrb[0].mxu0 %v344
  %v615 = vpop.f32.mrb[0].mxu0
  %v616 = vadd.f32 %v88, %v615
  %v617 = vpop.f32.mrb[0].mxu0
  %v618 = vpop.f32.mrb[0].mxu0
  %v619 = vadd.f32 %v88, %v618
  %v620 = vpop.f32.mrb[0].mxu0
  %621 = vmatprep.mubr.bf16.mxu0 0
  %622 = vmatmul.mubr.bf16.gmra.mrb[0].mxu0 %v347
  %v623 = vpop.f32.mrb[0].mxu0
  %v624 = vadd.f32 %v88, %v623
  %v625 = vpop.f32.mrb[0].mxu0
  %v626 = vpop.f32.mrb[0].mxu0
  %v627 = vadd.f32 %v88, %v626
  %v628 = vpop.f32.mrb[0].mxu0
  %629 = vmatprep.mubr.bf16.mxu0 0
  %630 = vmatmul.mubr.bf16.gmra.mrb[0].mxu0 %v350
  %v631 = vpop.f32.mrb[0].mxu0
  %v632 = vadd.f32 %v88, %v631
  %v633 = vpop.f32.mrb[0].mxu0
  %v634 = vpop.f32.mrb[0].mxu0
  %v635 = vadd.f32 %v88, %v634
  %v636 = vpop.f32.mrb[0].mxu0
  %637 = vmatprep.mubr.bf16.mxu0 0
  %638 = vmatmul.mubr.bf16.gmra.mrb[0].mxu0 %v353
  %v639 = vpop.f32.mrb[0].mxu0
  %v640 = vadd.f32 %v88, %v639
  %v641 = vpop.f32.mrb[0].mxu0
  %v642 = vpop.f32.mrb[0].mxu0
  %v643 = vadd.f32 %v88, %v642
  %v644 = vpop.f32.mrb[0].mxu0
  %645 = vmatprep.mubr.bf16.mxu0 0
  %646 = vmatmul.mubr.bf16.gmra.mrb[0].mxu0 %v356
  %v647 = vpop.f32.mrb[0].mxu0
  %v648 = vadd.f32 %v88, %v647
  %v649 = vpop.f32.mrb[0].mxu0
  %v650 = vpop.f32.mrb[0].mxu0
  %v651 = vadd.f32 %v88, %v650
  %v652 = vpop.f32.mrb[0].mxu0
  %653 = vdwg.mxu0
  %v654 = vpack.c.bf16 %v403, %v400
  %v655 = vpack.c.bf16 %v411, %v408
  %v656 = vpack.c.bf16 %v419, %v416
  %v657 = vpack.c.bf16 %v427, %v424
  %v658 = vpack.c.bf16 %v435, %v432
  %v659 = vpack.c.bf16 %v443, %v440
  %v660 = vpack.c.bf16 %v451, %v448
  %v661 = vpack.c.bf16 %v459, %v456
  %v662 = vpack.c.bf16 %v467, %v464
  %v663 = vpack.c.bf16 %v475, %v472
  %v664 = vpack.c.bf16 %v483, %v480
  %v665 = vpack.c.bf16 %v491, %v488
  %v666 = vpack.c.bf16 %v499, %v496
  %v667 = vpack.c.bf16 %v507, %v504
  %v668 = vpack.c.bf16 %v515, %v512
  %v669 = vpack.c.bf16 %v523, %v520
  %v670 = vpack.c.bf16 %v531, %v528
  %v671 = vpack.c.bf16 %v539, %v536
  %v672 = vpack.c.bf16 %v547, %v544
  %v673 = vpack.c.bf16 %v555, %v552
  %v674 = vpack.c.bf16 %v563, %v560
  %v675 = vpack.c.bf16 %v571, %v568
  %v676 = vpack.c.bf16 %v579, %v576
  %v677 = vpack.c.bf16 %v587, %v584
  %v678 = vpack.c.bf16 %v595, %v592
  %v679 = vpack.c.bf16 %v603, %v600
  %v680 = vpack.c.bf16 %v611, %v608
  %v681 = vpack.c.bf16 %v619, %v616
  %v682 = vpack.c.bf16 %v627, %v624
  %v683 = vpack.c.bf16 %v635, %v632
  %v684 = vpack.c.bf16 %v643, %v640
  %v685 = vpack.c.bf16 %v651, %v648
  %v718 = vunpack.c.l.b16 %v654
  %v719 = vunpack.c.h.b16 %v654
  %v720 = vunpack.c.l.b16 %v655
  %v721 = vunpack.c.h.b16 %v655
  %v722 = vunpack.c.l.b16 %v656
  %v723 = vunpack.c.h.b16 %v656
  %v724 = vunpack.c.l.b16 %v657
  %v725 = vunpack.c.h.b16 %v657
  %v726 = vunpack.c.l.b16 %v658
  %v727 = vunpack.c.h.b16 %v658
  %v728 = vunpack.c.l.b16 %v659
  %v729 = vunpack.c.h.b16 %v659
  %v730 = vunpack.c.l.b16 %v660
  %v731 = vunpack.c.h.b16 %v660
  %v732 = vunpack.c.l.b16 %v661
  %v733 = vunpack.c.h.b16 %v661
  %v734 = vunpack.c.l.b16 %v662
  %v735 = vunpack.c.h.b16 %v662
  %v736 = vunpack.c.l.b16 %v663
  %v737 = vunpack.c.h.b16 %v663
  %v738 = vunpack.c.l.b16 %v664
  %v739 = vunpack.c.h.b16 %v664
  %v740 = vunpack.c.l.b16 %v665
  %v741 = vunpack.c.h.b16 %v665
  %v742 = vunpack.c.l.b16 %v666
  %v743 = vunpack.c.h.b16 %v666
  %v744 = vunpack.c.l.b16 %v667
  %v745 = vunpack.c.h.b16 %v667
  %v746 = vunpack.c.l.b16 %v668
  %v747 = vunpack.c.h.b16 %v668
  %v748 = vunpack.c.l.b16 %v669
  %v749 = vunpack.c.h.b16 %v669
  %v750 = vunpack.c.l.b16 %v670
  %v751 = vunpack.c.h.b16 %v670
  %v752 = vunpack.c.l.b16 %v671
  %v753 = vunpack.c.h.b16 %v671
  %v754 = vunpack.c.l.b16 %v672
  %v755 = vunpack.c.h.b16 %v672
  %v756 = vunpack.c.l.b16 %v673
  %v757 = vunpack.c.h.b16 %v673
  %v758 = vunpack.c.l.b16 %v674
  %v759 = vunpack.c.h.b16 %v674
  %v760 = vunpack.c.l.b16 %v675
  %v761 = vunpack.c.h.b16 %v675
  %v762 = vunpack.c.l.b16 %v676
  %v763 = vunpack.c.h.b16 %v676
  %v764 = vunpack.c.l.b16 %v677
  %v765 = vunpack.c.h.b16 %v677
  %v766 = vunpack.c.l.b16 %v678
  %v767 = vunpack.c.h.b16 %v678
  %v768 = vunpack.c.l.b16 %v679
  %v769 = vunpack.c.h.b16 %v679
  %v770 = vunpack.c.l.b16 %v680
  %v771 = vunpack.c.h.b16 %v680
  %v772 = vunpack.c.l.b16 %v681
  %v773 = vunpack.c.h.b16 %v681
  %v774 = vunpack.c.l.b16 %v682
  %v775 = vunpack.c.h.b16 %v682
  %v776 = vunpack.c.l.b16 %v683
  %v777 = vunpack.c.h.b16 %v683
  %v778 = vunpack.c.l.b16 %v684
  %v779 = vunpack.c.h.b16 %v684
  %v780 = vunpack.c.l.b16 %v685
  %v781 = vunpack.c.h.b16 %v685
  %v782 = vpack.c.b16 %v718, %v718
  %v783 = vpack.c.b16 %v719, %v719
  %v784 = vpack.c.b16 %v720, %v720
  %v785 = vpack.c.b16 %v721, %v721
  %v786 = vpack.c.b16 %v722, %v722
  %v787 = vpack.c.b16 %v723, %v723
  %v788 = vpack.c.b16 %v724, %v724
  %v789 = vpack.c.b16 %v725, %v725
  %v790 = vpack.c.b16 %v726, %v726
  %v791 = vpack.c.b16 %v727, %v727
  %v792 = vpack.c.b16 %v728, %v728
  %v793 = vpack.c.b16 %v729, %v729
  %v794 = vpack.c.b16 %v730, %v730
  %v795 = vpack.c.b16 %v731, %v731
  %v796 = vpack.c.b16 %v732, %v732
  %v797 = vpack.c.b16 %v733, %v733
  %v798 = vpack.c.b16 %v734, %v734
  %v799 = vpack.c.b16 %v735, %v735
  %v800 = vpack.c.b16 %v736, %v736
  %v801 = vpack.c.b16 %v737, %v737
  %v802 = vpack.c.b16 %v738, %v738
  %v803 = vpack.c.b16 %v739, %v739
  %v804 = vpack.c.b16 %v740, %v740
  %v805 = vpack.c.b16 %v741, %v741
  %v806 = vpack.c.b16 %v742, %v742
  %v807 = vpack.c.b16 %v743, %v743
  %v808 = vpack.c.b16 %v744, %v744
  %v809 = vpack.c.b16 %v745, %v745
  %v810 = vpack.c.b16 %v746, %v746
  %v811 = vpack.c.b16 %v747, %v747
  %v812 = vpack.c.b16 %v748, %v748
  %v813 = vpack.c.b16 %v749, %v749
  %v814 = vpack.c.b16 %v750, %v750
  %v815 = vpack.c.b16 %v751, %v751
  %v816 = vpack.c.b16 %v752, %v752
  %v817 = vpack.c.b16 %v753, %v753
  %v818 = vpack.c.b16 %v754, %v754
  %v819 = vpack.c.b16 %v755, %v755
  %v820 = vpack.c.b16 %v756, %v756
  %v821 = vpack.c.b16 %v757, %v757
  %v822 = vpack.c.b16 %v758, %v758
  %v823 = vpack.c.b16 %v759, %v759
  %v824 = vpack.c.b16 %v760, %v760
  %v825 = vpack.c.b16 %v761, %v761
  %v826 = vpack.c.b16 %v762, %v762
  %v827 = vpack.c.b16 %v763, %v763
  %v828 = vpack.c.b16 %v764, %v764
  %v829 = vpack.c.b16 %v765, %v765
  %v830 = vpack.c.b16 %v766, %v766
  %v831 = vpack.c.b16 %v767, %v767
  %v832 = vpack.c.b16 %v768, %v768
  %v833 = vpack.c.b16 %v769, %v769
  %v834 = vpack.c.b16 %v770, %v770
  %v835 = vpack.c.b16 %v771, %v771
  %v836 = vpack.c.b16 %v772, %v772
  %v837 = vpack.c.b16 %v773, %v773
  %v838 = vpack.c.b16 %v774, %v774
  %v839 = vpack.c.b16 %v775, %v775
  %v840 = vpack.c.b16 %v776, %v776
  %v841 = vpack.c.b16 %v777, %v777
  %v842 = vpack.c.b16 %v778, %v778
  %v843 = vpack.c.b16 %v779, %v779
  %v844 = vpack.c.b16 %v780, %v780
  %v845 = vpack.c.b16 %v781, %v781
  %910 = vst [vmem:[%s3] sm:$0xf] %v782
  %911 = vst [vmem:[%s3 + $0x4] sm:$0xf] %v783
  %912 = vst [vmem:[%s3 + $0x8] sm:$0xf] %v784
  %913 = vst [vmem:[%s3 + $0xc] sm:$0xf] %v785
  %914 = vst [vmem:[%s3 + $0x10] sm:$0xf] %v786
  %915 = vst [vmem:[%s3 + $0x14] sm:$0xf] %v787
  %916 = vst [vmem:[%s3 + $0x18] sm:$0xf] %v788
  %917 = vst [vmem:[%s3 + $0x1c] sm:$0xf] %v789
  %918 = vst [vmem:[%s3 + $0x20] sm:$0xf] %v790
  %919 = vst [vmem:[%s3 + $0x24] sm:$0xf] %v791
  %920 = vst [vmem:[%s3 + $0x28] sm:$0xf] %v792
  %921 = vst [vmem:[%s3 + $0x2c] sm:$0xf] %v793
  %922 = vst [vmem:[%s3 + $0x30] sm:$0xf] %v794
  %923 = vst [vmem:[%s3 + $0x34] sm:$0xf] %v795
  %924 = vst [vmem:[%s3 + $0x38] sm:$0xf] %v796
  %925 = vst [vmem:[%s3 + $0x3c] sm:$0xf] %v797
  %926 = vst [vmem:[%s3 + $0x40] sm:$0xf] %v798
  %927 = vst [vmem:[%s3 + $0x44] sm:$0xf] %v799
  %928 = vst [vmem:[%s3 + $0x48] sm:$0xf] %v800
  %929 = vst [vmem:[%s3 + $0x4c] sm:$0xf] %v801
  %930 = vst [vmem:[%s3 + $0x50] sm:$0xf] %v802
  %931 = vst [vmem:[%s3 + $0x54] sm:$0xf] %v803
  %932 = vst [vmem:[%s3 + $0x58] sm:$0xf] %v804
  %933 = vst [vmem:[%s3 + $0x5c] sm:$0xf] %v805
  %934 = vst [vmem:[%s3 + $0x60] sm:$0xf] %v806
  %935 = vst [vmem:[%s3 + $0x64] sm:$0xf] %v807
  %936 = vst [vmem:[%s3 + $0x68] sm:$0xf] %v808
  %937 = vst [vmem:[%s3 + $0x6c] sm:$0xf] %v809
  %938 = vst [vmem:[%s3 + $0x70] sm:$0xf] %v810
  %939 = vst [vmem:[%s3 + $0x74] sm:$0xf] %v811
  %940 = vst [vmem:[%s3 + $0x78] sm:$0xf] %v812
  %941 = vst [vmem:[%s3 + $0x7c] sm:$0xf] %v813
  %942 = vst [vmem:[%s3 + $0x80] sm:$0xf] %v814
  %943 = vst [vmem:[%s3 + $0x84] sm:$0xf] %v815
  %944 = vst [vmem:[%s3 + $0x88] sm:$0xf] %v816
  %945 = vst [vmem:[%s3 + $0x8c] sm:$0xf] %v817
  %946 = vst [vmem:[%s3 + $0x90] sm:$0xf] %v818
  %947 = vst [vmem:[%s3 + $0x94] sm:$0xf] %v819
  %948 = vst [vmem:[%s3 + $0x98] sm:$0xf] %v820
  %949 = vst [vmem:[%s3 + $0x9c] sm:$0xf] %v821
  %950 = vst [vmem:[%s3 + $0xa0] sm:$0xf] %v822
  %951 = vst [vmem:[%s3 + $0xa4] sm:$0xf] %v823
  %952 = vst [vmem:[%s3 + $0xa8] sm:$0xf] %v824
  %953 = vst [vmem:[%s3 + $0xac] sm:$0xf] %v825
  %954 = vst [vmem:[%s3 + $0xb0] sm:$0xf] %v826
  %955 = vst [vmem:[%s3 + $0xb4] sm:$0xf] %v827
  %956 = vst [vmem:[%s3 + $0xb8] sm:$0xf] %v828
  %957 = vst [vmem:[%s3 + $0xbc] sm:$0xf] %v829
  %958 = vst [vmem:[%s3 + $0xc0] sm:$0xf] %v830
  %959 = vst [vmem:[%s3 + $0xc4] sm:$0xf] %v831
  %960 = vst [vmem:[%s3 + $0xc8] sm:$0xf] %v832
  %961 = vst [vmem:[%s3 + $0xcc] sm:$0xf] %v833
  %962 = vst [vmem:[%s3 + $0xd0] sm:$0xf] %v834
  %963 = vst [vmem:[%s3 + $0xd4] sm:$0xf] %v835
  %964 = vst [vmem:[%s3 + $0xd8] sm:$0xf] %v836
  %965 = vst [vmem:[%s3 + $0xdc] sm:$0xf] %v837
  %966 = vst [vmem:[%s3 + $0xe0] sm:$0xf] %v838
  %967 = vst [vmem:[%s3 + $0xe4] sm:$0xf] %v839
  %968 = vst [vmem:[%s3 + $0xe8] sm:$0xf] %v840
  %969 = vst [vmem:[%s3 + $0xec] sm:$0xf] %v841
  %970 = vst [vmem:[%s3 + $0xf0] sm:$0xf] %v842
  %971 = vst [vmem:[%s3 + $0xf4] sm:$0xf] %v843
  %972 = vst [vmem:[%s3 + $0xf8] sm:$0xf] %v844
  %973 = vst [vmem:[%s3 + $0xfc] sm:$0xf] %v845
  // Predicated region
  $region14: #{liif_forward.2} parent=0 // pred_check
    _
  $region15: #{liif_forward.2} parent=0 // pred_check_branch
    %975 = sbr.rel (0) target = $region17
  $region16: #{liif_forward.2} parent=0 // pred_region
    _
  $region17: #{liif_forward.2} parent=0 // pred_fallthru
    _
  // Predicated region
  $region18: #{liif_forward.2} parent=0 // pred_check
    _
  $region19: #{liif_forward.2} parent=0 // pred_check_branch
    %977 = sbr.rel (0) target = $region21
  $region20: #{liif_forward.2} parent=0 // pred_region
    _
  $region21: #{liif_forward.2} parent=0 // pred_fallthru
    _

// kernel: liif_forward.3
$region0: #{liif_forward.3}
  #allocation0 [shape = 'u32[]', space=smem, size = 0x4, offset = 0x4, fixed_abs, tag = 'smem constant byte address 0x4 - core index']
  #allocation1 [shape = 'u32[144,128]{1,0:T(1,128)}', space=vmem, size = 0x12000, scoped, tag = 'internal scratch']
  %s0 = inlined_call_operand.vmem [shape: bf16[4,1536,76], index: 0, kind: input, shape index: {}]
  %s1 = inlined_call_operand.vmem [shape: f32[1536,4], index: 1, kind: input, shape index: {}]
  %s2 = inlined_call_operand.vmem [shape: bf16[76,32], index: 2, kind: input, shape index: {}]
  %s3 = inlined_call_operand.vmem [shape: f32[1,32], index: 3, kind: input, shape index: {}]
  %s4 = inlined_call_operand.vmem [shape: bf16[32,32], index: 4, kind: input, shape index: {}]
  %s5 = inlined_call_operand.vmem [shape: f32[1,32], index: 5, kind: input, shape index: {}]
  %s6 = inlined_call_operand.vmem [shape: bf16[32,128], index: 6, kind: input, shape index: {}]
  %s7 = inlined_call_operand.vmem [shape: f32[1,128], index: 7, kind: input, shape index: {}]
  %s8 = inlined_call_operand.vmem [shape: f32[1536,128], index: 8, kind: output, shape index: {}]
  %s9 = sld [smem:[#allocation0]]
  $region106: #{liif_forward.3} parent=0
    _
  %s11 = ssub.s32 1, %s9
  %s12 = scalar_select 0, %s11, %s9
  $region1: #{liif_forward.3} parent=0
    #allocation2 [shape = 'u8[1048576]{0}', space=vmem, size = 0x100000, scoped, tag = 'input window, operand 0']
    loop: start=0, step=1, limit=5
    $region2: #{liif_forward.3} parent=1 // loop_pre_header
      _
    $region3: #{liif_forward.3} parent=1 // loop_header
      %s14 = sphi 0, %s18
      %p15 = scmp.ge.s32.totalorder %s14, 5
      %s24 = sphi 0, %s26
      %s27 = sphi 0, %s24
      %s28 = sphi 0, %s27
      %s44 = sphi 0, %s28
      %s50 = sphi 0, %s52
      %s53 = sphi 0, %s50
      %s54 = sphi 0, %s53
      %s70 = sphi 0, %s54
      %s74 = sphi 0, %s74
      %s76 = sphi 0, %s74
      %s77 = sphi 0, %s76
      %s91 = sphi 0, %s77
      %s95 = sphi 0, %s95
      %s97 = sphi 0, %s95
      %s98 = sphi 0, %s97
      %s112 = sphi 0, %s98
      %s116 = sphi 0, %s116
      %s118 = sphi 0, %s116
      %s119 = sphi 0, %s118
      %s133 = sphi 0, %s119
      %s137 = sphi 0, %s137
      %s139 = sphi 0, %s137
      %s140 = sphi 0, %s139
      %s154 = sphi 0, %s140
      %s158 = sphi 0, %s158
      %s160 = sphi 0, %s158
      %s161 = sphi 0, %s160
      %s175 = sphi 0, %s161
      %s179 = sphi 0, %s179
      %s181 = sphi 0, %s179
      %s182 = sphi 0, %s181
      %s196 = sphi 0, %s182
      %s202 = sphi 0, %s204
      %s205 = sphi 0, %s202
      %s206 = sphi 0, %s205
      %s222 = sphi 0, %s206
    $region4: #{liif_forward.3} parent=1 // loop_header_branch
      %17 = sbr.rel (%p15) target = $region8
    $region5: #{liif_forward.3} parent=1 // loop_body
      %s19 = ssub.s32 %s14, 1
      %s20 = ssub.s32 %s14, 2
      %s21 = sadd.s32 %s14, 1
      %s22 = ssub.s32 %s14, %s21
      %p23 = scmp.eq.s32.totalorder %s22, 0
      %s25 = sadd.s32 %s24, 1
      %s26 = scalar_select %p23, %s24, %s25
      %p29 = pneg %p23
      %p30 = scmp.eq.s32.totalorder %s14, 2
      %p31 = por %p29, %p30
      %p32 = scmp.ne.s32.totalorder %s24, %s27
      %p33 = scmp.eq.s32.totalorder %s14, 0
      %p34 = por %p32, %p33
      %p35 = scmp.ne.s32.totalorder %s24, %s27
      %p36 = scmp.eq.s32.totalorder %s19, 2
      %p37 = por %p35, %p36
      %p38 = scmp.ne.s32.totalorder %s27, %s28
      %p39 = scmp.eq.s32.totalorder %s19, 0
      %p40 = por %p38, %p39
      %p41 = scmp.ne.s32.totalorder %s27, %s28
      %p42 = scmp.eq.s32.totalorder %s20, 2
      %p43 = por %p41, %p42
      %p45 = scmp.ne.s32.totalorder %s28, %s44
      %p46 = scmp.eq.s32.totalorder %s20, 0
      %p47 = por %p45, %p46
      %s48 = ssub.s32 %s14, %s21
      %p49 = scmp.eq.s32.totalorder %s48, 0
      %s51 = sadd.s32 %s50, 1
      %s52 = scalar_select %p49, %s50, %s51
      %p55 = pneg %p49
      %p56 = scmp.eq.s32.totalorder %s14, 2
      %p57 = por %p55, %p56
      %p58 = scmp.ne.s32.totalorder %s50, %s53
      %p59 = scmp.eq.s32.totalorder %s14, 0
      %p60 = por %p58, %p59
      %p61 = scmp.ne.s32.totalorder %s50, %s53
      %p62 = scmp.eq.s32.totalorder %s19, 2
      %p63 = por %p61, %p62
      %p64 = scmp.ne.s32.totalorder %s53, %s54
      %p65 = scmp.eq.s32.totalorder %s19, 0
      %p66 = por %p64, %p65
      %p67 = scmp.ne.s32.totalorder %s53, %s54
      %p68 = scmp.eq.s32.totalorder %s20, 2
      %p69 = por %p67, %p68
      %p71 = scmp.ne.s32.totalorder %s54, %s70
      %p72 = scmp.eq.s32.totalorder %s20, 0
      %p73 = por %p71, %p72
      %s75 = sadd.s32 %s74, 1
      %p78 = scmp.eq.s32.totalorder %s14, 2
      %p79 = scmp.ne.s32.totalorder %s74, %s76
      %p80 = scmp.eq.s32.totalorder %s14, 0
      %p81 = por %p79, %p80
      %p82 = scmp.ne.s32.totalorder %s74, %s76
      %p83 = scmp.eq.s32.totalorder %s19, 2
      %p84 = por %p82, %p83
      %p85 = scmp.ne.s32.totalorder %s76, %s77
      %p86 = scmp.eq.s32.totalorder %s19, 0
      %p87 = por %p85, %p86
      %p88 = scmp.ne.s32.totalorder %s76, %s77
      %p89 = scmp.eq.s32.totalorder %s20, 2
      %p90 = por %p88, %p89
      %p92 = scmp.ne.s32.totalorder %s77, %s91
      %p93 = scmp.eq.s32.totalorder %s20, 0
      %p94 = por %p92, %p93
      %s96 = sadd.s32 %s95, 1
      %p99 = scmp.eq.s32.totalorder %s14, 2
      %p100 = scmp.ne.s32.totalorder %s95, %s97
      %p101 = scmp.eq.s32.totalorder %s14, 0
      %p102 = por %p100, %p101
      %p103 = scmp.ne.s32.totalorder %s95, %s97
      %p104 = scmp.eq.s32.totalorder %s19, 2
      %p105 = por %p103, %p104
      %p106 = scmp.ne.s32.totalorder %s97, %s98
      %p107 = scmp.eq.s32.totalorder %s19, 0
      %p108 = por %p106, %p107
      %p109 = scmp.ne.s32.totalorder %s97, %s98
      %p110 = scmp.eq.s32.totalorder %s20, 2
      %p111 = por %p109, %p110
      %p113 = scmp.ne.s32.totalorder %s98, %s112
      %p114 = scmp.eq.s32.totalorder %s20, 0
      %p115 = por %p113, %p114
      %s117 = sadd.s32 %s116, 1
      %p120 = scmp.eq.s32.totalorder %s14, 2
      %p121 = scmp.ne.s32.totalorder %s116, %s118
      %p122 = scmp.eq.s32.totalorder %s14, 0
      %p123 = por %p121, %p122
      %p124 = scmp.ne.s32.totalorder %s116, %s118
      %p125 = scmp.eq.s32.totalorder %s19, 2
      %p126 = por %p124, %p125
      %p127 = scmp.ne.s32.totalorder %s118, %s119
      %p128 = scmp.eq.s32.totalorder %s19, 0
      %p129 = por %p127, %p128
      %p130 = scmp.ne.s32.totalorder %s118, %s119
      %p131 = scmp.eq.s32.totalorder %s20, 2
      %p132 = por %p130, %p131
      %p134 = scmp.ne.s32.totalorder %s119, %s133
      %p135 = scmp.eq.s32.totalorder %s20, 0
      %p136 = por %p134, %p135
      %s138 = sadd.s32 %s137, 1
      %p141 = scmp.eq.s32.totalorder %s14, 2
      %p142 = scmp.ne.s32.totalorder %s137, %s139
      %p143 = scmp.eq.s32.totalorder %s14, 0
      %p144 = por %p142, %p143
      %p145 = scmp.ne.s32.totalorder %s137, %s139
      %p146 = scmp.eq.s32.totalorder %s19, 2
      %p147 = por %p145, %p146
      %p148 = scmp.ne.s32.totalorder %s139, %s140
      %p149 = scmp.eq.s32.totalorder %s19, 0
      %p150 = por %p148, %p149
      %p151 = scmp.ne.s32.totalorder %s139, %s140
      %p152 = scmp.eq.s32.totalorder %s20, 2
      %p153 = por %p151, %p152
      %p155 = scmp.ne.s32.totalorder %s140, %s154
      %p156 = scmp.eq.s32.totalorder %s20, 0
      %p157 = por %p155, %p156
      %s159 = sadd.s32 %s158, 1
      %p162 = scmp.eq.s32.totalorder %s14, 2
      %p163 = scmp.ne.s32.totalorder %s158, %s160
      %p164 = scmp.eq.s32.totalorder %s14, 0
      %p165 = por %p163, %p164
      %p166 = scmp.ne.s32.totalorder %s158, %s160
      %p167 = scmp.eq.s32.totalorder %s19, 2
      %p168 = por %p166, %p167
      %p169 = scmp.ne.s32.totalorder %s160, %s161
      %p170 = scmp.eq.s32.totalorder %s19, 0
      %p171 = por %p169, %p170
      %p172 = scmp.ne.s32.totalorder %s160, %s161
      %p173 = scmp.eq.s32.totalorder %s20, 2
      %p174 = por %p172, %p173
      %p176 = scmp.ne.s32.totalorder %s161, %s175
      %p177 = scmp.eq.s32.totalorder %s20, 0
      %p178 = por %p176, %p177
      %s180 = sadd.s32 %s179, 1
      %p183 = scmp.eq.s32.totalorder %s14, 2
      %p184 = scmp.ne.s32.totalorder %s179, %s181
      %p185 = scmp.eq.s32.totalorder %s14, 0
      %p186 = por %p184, %p185
      %p187 = scmp.ne.s32.totalorder %s179, %s181
      %p188 = scmp.eq.s32.totalorder %s19, 2
      %p189 = por %p187, %p188
      %p190 = scmp.ne.s32.totalorder %s181, %s182
      %p191 = scmp.eq.s32.totalorder %s19, 0
      %p192 = por %p190, %p191
      %p193 = scmp.ne.s32.totalorder %s181, %s182
      %p194 = scmp.eq.s32.totalorder %s20, 2
      %p195 = por %p193, %p194
      %p197 = scmp.ne.s32.totalorder %s182, %s196
      %p198 = scmp.eq.s32.totalorder %s20, 0
      %p199 = por %p197, %p198
      %s200 = ssub.s32 %s14, %s21
      %p201 = scmp.eq.s32.totalorder %s200, 0
      %s203 = sadd.s32 %s202, 1
      %s204 = scalar_select %p201, %s202, %s203
      %p207 = pneg %p201
      %p208 = scmp.eq.s32.totalorder %s14, 2
      %p209 = por %p207, %p208
      %p210 = scmp.ne.s32.totalorder %s202, %s205
      %p211 = scmp.eq.s32.totalorder %s14, 0
      %p212 = por %p210, %p211
      %p213 = scmp.ne.s32.totalorder %s202, %s205
      %p214 = scmp.eq.s32.totalorder %s19, 2
      %p215 = por %p213, %p214
      %p216 = scmp.ne.s32.totalorder %s205, %s206
      %p217 = scmp.eq.s32.totalorder %s19, 0
      %p218 = por %p216, %p217
      %p219 = scmp.ne.s32.totalorder %s205, %s206
      %p220 = scmp.eq.s32.totalorder %s20, 2
      %p221 = por %p219, %p220
      %p223 = scmp.ne.s32.totalorder %s206, %s222
      %p224 = scmp.eq.s32.totalorder %s20, 0
      %p225 = por %p223, %p224
      %p226 = scmp.le.s32.totalorder 1, %s14
      %p227 = scmp.lt.s32.totalorder %s14, 4
      %p228 = pnand %p226, %p227
      %p229 = pneg %p228
      // Predicated region
      $region9: #{liif_forward.3} parent=5 // pred_check
        _
      $region10: #{liif_forward.3} parent=5 // pred_check_branch
        %231 = sbr.rel (%p228) target = $region12
      $region11: #{liif_forward.3} parent=5 // pred_region
        %s232 = ssub.s32 %s14, 1
        // Predicated region
        $region13: #{liif_forward.3} parent=11 // pred_check
          %p233 = pneg %p87
        $region14: #{liif_forward.3} parent=11 // pred_check_branch
          %235 = sbr.rel (%p233) target = $region16
        $region15: #{liif_forward.3} parent=11 // pred_region
          _
        $region16: #{liif_forward.3} parent=11 // pred_fallthru
          _
        // Predicated region
        $region17: #{liif_forward.3} parent=11 // pred_check
          %p236 = pneg %p108
        $region18: #{liif_forward.3} parent=11 // pred_check_branch
          %238 = sbr.rel (%p236) target = $region20
        $region19: #{liif_forward.3} parent=11 // pred_region
          _
        $region20: #{liif_forward.3} parent=11 // pred_fallthru
          _
        // Predicated region
        $region21: #{liif_forward.3} parent=11 // pred_check
          %p239 = pneg %p129
        $region22: #{liif_forward.3} parent=11 // pred_check_branch
          %241 = sbr.rel (%p239) target = $region24
        $region23: #{liif_forward.3} parent=11 // pred_region
          _
        $region24: #{liif_forward.3} parent=11 // pred_fallthru
          _
        // Predicated region
        $region25: #{liif_forward.3} parent=11 // pred_check
          %p242 = pneg %p150
        $region26: #{liif_forward.3} parent=11 // pred_check_branch
          %244 = sbr.rel (%p242) target = $region28
        $region27: #{liif_forward.3} parent=11 // pred_region
          _
        $region28: #{liif_forward.3} parent=11 // pred_fallthru
          _
        // Predicated region
        $region29: #{liif_forward.3} parent=11 // pred_check
          %p245 = pneg %p171
        $region30: #{liif_forward.3} parent=11 // pred_check_branch
          %247 = sbr.rel (%p245) target = $region32
        $region31: #{liif_forward.3} parent=11 // pred_region
          _
        $region32: #{liif_forward.3} parent=11 // pred_fallthru
          _
        // Predicated region
        $region33: #{liif_forward.3} parent=11 // pred_check
          %p248 = pneg %p192
        $region34: #{liif_forward.3} parent=11 // pred_check_branch
          %250 = sbr.rel (%p248) target = $region36
        $region35: #{liif_forward.3} parent=11 // pred_region
          _
        $region36: #{liif_forward.3} parent=11 // pred_fallthru
          _
      $region12: #{liif_forward.3} parent=5 // pred_fallthru
        _
      %p251 = scmp.lt.s32.totalorder %s14, 3
      // Predicated region
      $region37: #{liif_forward.3} parent=5 // pred_check
        %p252 = pneg %p251
      $region38: #{liif_forward.3} parent=5 // pred_check_branch
        %254 = sbr.rel (%p252) target = $region40
      $region39: #{liif_forward.3} parent=5 // pred_region
        // Predicated region
        $region41: #{liif_forward.3} parent=39 // pred_check
          %p255 = pneg %p34
        $region42: #{liif_forward.3} parent=39 // pred_check_branch
          %257 = sbr.rel (%p255) target = $region44
        $region43: #{liif_forward.3} parent=39 // pred_region
          %s258 = sand.u32 %s24, 1
          %s259 = sand.u32 %s24, 1
          %s260 = smul.addr %s259, 1024
          %s261 = scalar_lea.vmem [#allocation2], %s260
          %s262 = smul.u32 64, %s14
          %s263 = smul.addr %s262, 4
          %s264 = scalar_lea.vmem %s0, %s263
          // Predicated region
          $region45: #{liif_forward.3} parent=43 // pred_check
            _
          $region46: #{liif_forward.3} parent=43 // pred_check_branch
            %266 = sbr.rel (0) target = $region48
          $region47: #{liif_forward.3} parent=43 // pred_region
            // Predicated region
            $region49: #{liif_forward.3} parent=47 // pred_check
              _
            $region50: #{liif_forward.3} parent=47 // pred_check_branch
              %268 = sbr.rel target = $region52
            $region51: #{liif_forward.3} parent=47 // pred_region
              // Predicated region
              $region64: #{liif_forward.3} parent=51 // pred_check
                _
              $region65: #{liif_forward.3} parent=51 // pred_check_branch
                %793 = sbr.rel (0) target = $region67
              $region66: #{liif_forward.3} parent=51 // pred_region
                loop: start=0, step=1, limit=1
                $region68: #{liif_forward.3} parent=66 // loop_pre_header
                  _
                $region69: #{liif_forward.3} parent=66 // loop_header
                  %s795 = sphi 0, %s799
                  %p796 = scmp.ge.s32.totalorder %s795, 1
                  %s800 = sphi %s264, %s264
                  %s801 = sphi %s261, %s261
                $region70: #{liif_forward.3} parent=66 // loop_header_branch
                  %798 = sbr.rel (%p796) target = $region74
                $region71: #{liif_forward.3} parent=66 // loop_body
                  _
                $region72: #{liif_forward.3} parent=66 // loop_footer
                  %s799 = sadd.s32 1, %s795
                $region73: #{liif_forward.3} parent=66 // loop_footer_branch
                  %794 = sbr.rel target = $region69
                $region74: #{liif_forward.3} parent=66 // loop_exit
                  _
                loop: start=0, step=1, limit=1
                $region75: #{liif_forward.3} parent=66 // loop_pre_header
                  _
                $region76: #{liif_forward.3} parent=66 // loop_header
                  %s804 = sphi 0, %s808
                  %p805 = scmp.ge.s32.totalorder %s804, 1
                  %s809 = sphi %s264, %s264
                  %s810 = sphi %s261, %s261
                $region77: #{liif_forward.3} parent=66 // loop_header_branch
                  %807 = sbr.rel (%p805) target = $region81
                $region78: #{liif_forward.3} parent=66 // loop_body
                  %v811 = vld [vmem:[%s809] sm:$0xf]
                  %812 = vst [vmem:[%s810] sm:$0xf] %v811
                  %v813 = vld [vmem:[%s809 + $0x4] sm:$0xf]
                  %814 = vst [vmem:[%s810 + $0x4] sm:$0xf] %v813
                  %v815 = vld [vmem:[%s809 + $0x8] sm:$0xf]
                  %816 = vst [vmem:[%s810 + $0x8] sm:$0xf] %v815
                  %v817 = vld [vmem:[%s809 + $0xc] sm:$0xf]
                  %818 = vst [vmem:[%s810 + $0xc] sm:$0xf] %v817
                  %v819 = vld [vmem:[%s809 + $0x10] sm:$0xf]
                  %820 = vst [vmem:[%s810 + $0x10] sm:$0xf] %v819
                  %v821 = vld [vmem:[%s809 + $0x14] sm:$0xf]
                  %822 = vst [vmem:[%s810 + $0x14] sm:$0xf] %v821
                  %v823 = vld [vmem:[%s809 + $0x18] sm:$0xf]
                  %824 = vst [vmem:[%s810 + $0x18] sm:$0xf] %v823
                  %v825 = vld [vmem:[%s809 + $0x1c] sm:$0xf]
                  %826 = vst [vmem:[%s810 + $0x1c] sm:$0xf] %v825
                  %v827 = vld [vmem:[%s809 + $0x20] sm:$0xf]
                  %828 = vst [vmem:[%s810 + $0x20] sm:$0xf] %v827
                  %v829 = vld [vmem:[%s809 + $0x24] sm:$0xf]
                  %830 = vst [vmem:[%s810 + $0x24] sm:$0xf] %v829
                  %v831 = vld [vmem:[%s809 + $0x28] sm:$0xf]
                  %832 = vst [vmem:[%s810 + $0x28] sm:$0xf] %v831
                  %v833 = vld [vmem:[%s809 + $0x2c] sm:$0xf]
                  %834 = vst [vmem:[%s810 + $0x2c] sm:$0xf] %v833
                  %v835 = vld [vmem:[%s809 + $0x30] sm:$0xf]
                  %836 = vst [vmem:[%s810 + $0x30] sm:$0xf] %v835
                  %v837 = vld [vmem:[%s809 + $0x34] sm:$0xf]
                  %838 = vst [vmem:[%s810 + $0x34] sm:$0xf] %v837
                  %v839 = vld [vmem:[%s809 + $0x38] sm:$0xf]
                  %840 = vst [vmem:[%s810 + $0x38] sm:$0xf] %v839
                  %v841 = vld [vmem:[%s809 + $0x3c] sm:$0xf]
                  %842 = vst [vmem:[%s810 + $0x3c] sm:$0xf] %v841
                  %v843 = vld [vmem:[%s809 + $0x40] sm:$0xf]
                  %844 = vst [vmem:[%s810 + $0x40] sm:$0xf] %v843
                  %v845 = vld [vmem:[%s809 + $0x44] sm:$0xf]
                  %846 = vst [vmem:[%s810 + $0x44] sm:$0xf] %v845
                  %v847 = vld [vmem:[%s809 + $0x48] sm:$0xf]
                  %848 = vst [vmem:[%s810 + $0x48] sm:$0xf] %v847
                  %v849 = vld [vmem:[%s809 + $0x4c] sm:$0xf]
                  %850 = vst [vmem:[%s810 + $0x4c] sm:$0xf] %v849
                  %v851 = vld [vmem:[%s809 + $0x50] sm:$0xf]
                  %852 = vst [vmem:[%s810 + $0x50] sm:$0xf] %v851
                  %v853 = vld [vmem:[%s809 + $0x54] sm:$0xf]
                  %854 = vst [vmem:[%s810 + $0x54] sm:$0xf] %v853
                  %v855 = vld [vmem:[%s809 + $0x58] sm:$0xf]
                  %856 = vst [vmem:[%s810 + $0x58] sm:$0xf] %v855
                  %v857 = vld [vmem:[%s809 + $0x5c] sm:$0xf]
                  %858 = vst [vmem:[%s810 + $0x5c] sm:$0xf] %v857
                  %v859 = vld [vmem:[%s809 + $0x60] sm:$0xf]
                  %860 = vst [vmem:[%s810 + $0x60] sm:$0xf] %v859
                  %v861 = vld [vmem:[%s809 + $0x64] sm:$0xf]
                  %862 = vst [vmem:[%s810 + $0x64] sm:$0xf] %v861
                  %v863 = vld [vmem:[%s809 + $0x68] sm:$0xf]
                  %864 = vst [vmem:[%s810 + $0x68] sm:$0xf] %v863
                  %v865 = vld [vmem:[%s809 + $0x6c] sm:$0xf]
                  %866 = vst [vmem:[%s810 + $0x6c] sm:$0xf] %v865
                  %v867 = vld [vmem:[%s809 + $0x70] sm:$0xf]
                  %868 = vst [vmem:[%s810 + $0x70] sm:$0xf] %v867
                  %v869 = vld [vmem:[%s809 + $0x74] sm:$0xf]
                  %870 = vst [vmem:[%s810 + $0x74] sm:$0xf] %v869
                  %v871 = vld [vmem:[%s809 + $0x78] sm:$0xf]
                  %872 = vst [vmem:[%s810 + $0x78] sm:$0xf] %v871
                  %v873 = vld [vmem:[%s809 + $0x7c] sm:$0xf]
                  %874 = vst [vmem:[%s810 + $0x7c] sm:$0xf] %v873
                  %v875 = vld [vmem:[%s809 + $0x80] sm:$0xf]
                  %876 = vst [vmem:[%s810 + $0x80] sm:$0xf] %v875
                  %v877 = vld [vmem:[%s809 + $0x84] sm:$0xf]
                  %878 = vst [vmem:[%s810 + $0x84] sm:$0xf] %v877
                  %v879 = vld [vmem:[%s809 + $0x88] sm:$0xf]
                  %880 = vst [vmem:[%s810 + $0x88] sm:$0xf] %v879
                  %v881 = vld [vmem:[%s809 + $0x8c] sm:$0xf]
                  %882 = vst [vmem:[%s810 + $0x8c] sm:$0xf] %v881
                  %v883 = vld [vmem:[%s809 + $0x90] sm:$0xf]
                  %884 = vst [vmem:[%s810 + $0x90] sm:$0xf] %v883
                  %v885 = vld [vmem:[%s809 + $0x94] sm:$0xf]
                  %886 = vst [vmem:[%s810 + $0x94] sm:$0xf] %v885
                  %v887 = vld [vmem:[%s809 + $0x98] sm:$0xf]
                  %888 = vst [vmem:[%s810 + $0x98] sm:$0xf] %v887
                  %v889 = vld [vmem:[%s809 + $0x9c] sm:$0xf]
                  %890 = vst [vmem:[%s810 + $0x9c] sm:$0xf] %v889
                  %v891 = vld [vmem:[%s809 + $0xa0] sm:$0xf]
                  %892 = vst [vmem:[%s810 + $0xa0] sm:$0xf] %v891
                  %v893 = vld [vmem:[%s809 + $0xa4] sm:$0xf]
                  %894 = vst [vmem:[%s810 + $0xa4] sm:$0xf] %v893
                  %v895 = vld [vmem:[%s809 + $0xa8] sm:$0xf]
                  %896 = vst [vmem:[%s810 + $0xa8] sm:$0xf] %v895
                  %v897 = vld [vmem:[%s809 + $0xac] sm:$0xf]
                  %898 = vst [vmem:[%s810 + $0xac] sm:$0xf] %v897
                  %v899 = vld [vmem:[%s809 + $0xb0] sm:$0xf]
                  %900 = vst [vmem:[%s810 + $0xb0] sm:$0xf] %v899
                  %v901 = vld [vmem:[%s809 + $0xb4] sm:$0xf]
                  %902 = vst [vmem:[%s810 + $0xb4] sm:$0xf] %v901
                  %v903 = vld [vmem:[%s809 + $0xb8] sm:$0xf]
                  %904 = vst [vmem:[%s810 + $0xb8] sm:$0xf] %v903
                  %v905 = vld [vmem:[%s809 + $0xbc] sm:$0xf]
                  %906 = vst [vmem:[%s810 + $0xbc] sm:$0xf] %v905
                  %v907 = vld [vmem:[%s809 + $0xc0] sm:$0xf]
                  %908 = vst [vmem:[%s810 + $0xc0] sm:$0xf] %v907
                  %v909 = vld [vmem:[%s809 + $0xc4] sm:$0xf]
                  %910 = vst [vmem:[%s810 + $0xc4] sm:$0xf] %v909
                  %v911 = vld [vmem:[%s809 + $0xc8] sm:$0xf]
                  %912 = vst [vmem:[%s810 + $0xc8] sm:$0xf] %v911
                  %v913 = vld [vmem:[%s809 + $0xcc] sm:$0xf]
                  %914 = vst [vmem:[%s810 + $0xcc] sm:$0xf] %v913
                  %v915 = vld [vmem:[%s809 + $0xd0] sm:$0xf]
                  %916 = vst [vmem:[%s810 + $0xd0] sm:$0xf] %v915
                  %v917 = vld [vmem:[%s809 + $0xd4] sm:$0xf]
                  %918 = vst [vmem:[%s810 + $0xd4] sm:$0xf] %v917
                  %v919 = vld [vmem:[%s809 + $0xd8] sm:$0xf]
                  %920 = vst [vmem:[%s810 + $0xd8] sm:$0xf] %v919
                  %v921 = vld [vmem:[%s809 + $0xdc] sm:$0xf]
                  %922 = vst [vmem:[%s810 + $0xdc] sm:$0xf] %v921
                  %v923 = vld [vmem:[%s809 + $0xe0] sm:$0xf]
                  %924 = vst [vmem:[%s810 + $0xe0] sm:$0xf] %v923
                  %v925 = vld [vmem:[%s809 + $0xe4] sm:$0xf]
                  %926 = vst [vmem:[%s810 + $0xe4] sm:$0xf] %v925
                  %v927 = vld [vmem:[%s809 + $0xe8] sm:$0xf]
                  %928 = vst [vmem:[%s810 + $0xe8] sm:$0xf] %v927
                  %v929 = vld [vmem:[%s809 + $0xec] sm:$0xf]
                  %930 = vst [vmem:[%s810 + $0xec] sm:$0xf] %v929
                  %v931 = vld [vmem:[%s809 + $0xf0] sm:$0xf]
                  %932 = vst [vmem:[%s810 + $0xf0] sm:$0xf] %v931
                  %v933 = vld [vmem:[%s809 + $0xf4] sm:$0xf]
                  %934 = vst [vmem:[%s810 + $0xf4] sm:$0xf] %v933
                  %v935 = vld [vmem:[%s809 + $0xf8] sm:$0xf]
                  %936 = vst [vmem:[%s810 + $0xf8] sm:$0xf] %v935
                  %v937 = vld [vmem:[%s809 + $0xfc] sm:$0xf]
                  %938 = vst [vmem:[%s810 + $0xfc] sm:$0xf] %v937
                  %v939 = vld [vmem:[%s809 + $0x300] sm:$0xf]
                  %940 = vst [vmem:[%s810 + $0x100] sm:$0xf] %v939
                  %v941 = vld [vmem:[%s809 + $0x304] sm:$0xf]
                  %942 = vst [vmem:[%s810 + $0x104] sm:$0xf] %v941
                  %v943 = vld [vmem:[%s809 + $0x308] sm:$0xf]
                  %944 = vst [vmem:[%s810 + $0x108] sm:$0xf] %v943
                  %v945 = vld [vmem:[%s809 + $0x30c] sm:$0xf]
                  %946 = vst [vmem:[%s810 + $0x10c] sm:$0xf] %v945
                  %v947 = vld [vmem:[%s809 + $0x310] sm:$0xf]
                  %948 = vst [vmem:[%s810 + $0x110] sm:$0xf] %v947
                  %v949 = vld [vmem:[%s809 + $0x314] sm:$0xf]
                  %950 = vst [vmem:[%s810 + $0x114] sm:$0xf] %v949
                  %v951 = vld [vmem:[%s809 + $0x318] sm:$0xf]
                  %952 = vst [vmem:[%s810 + $0x118] sm:$0xf] %v951
                  %v953 = vld [vmem:[%s809 + $0x31c] sm:$0xf]
                  %954 = vst [vmem:[%s810 + $0x11c] sm:$0xf] %v953
                  %v955 = vld [vmem:[%s809 + $0x320] sm:$0xf]
                  %956 = vst [vmem:[%s810 + $0x120] sm:$0xf] %v955
                  %v957 = vld [vmem:[%s809 + $0x324] sm:$0xf]
                  %958 = vst [vmem:[%s810 + $0x124] sm:$0xf] %v957
                  %v959 = vld [vmem:[%s809 + $0x328] sm:$0xf]
                  %960 = vst [vmem:[%s810 + $0x128] sm:$0xf] %v959
                  %v961 = vld [vmem:[%s809 + $0x32c] sm:$0xf]
                  %962 = vst [vmem:[%s810 + $0x12c] sm:$0xf] %v961
                  %v963 = vld [vmem:[%s809 + $0x330] sm:$0xf]
                  %964 = vst [vmem:[%s810 + $0x130] sm:$0xf] %v963
                  %v965 = vld [vmem:[%s809 + $0x334] sm:$0xf]
                  %966 = vst [vmem:[%s810 + $0x134] sm:$0xf] %v965
                  %v967 = vld [vmem:[%s809 + $0x338] sm:$0xf]
                  %968 = vst [vmem:[%s810 + $0x138] sm:$0xf] %v967
                  %v969 = vld [vmem:[%s809 + $0x33c] sm:$0xf]
                  %970 = vst [vmem:[%s810 + $0x13c] sm:$0xf] %v969
                  %v971 = vld [vmem:[%s809 + $0x340] sm:$0xf]
                  %972 = vst [vmem:[%s810 + $0x140] sm:$0xf] %v971
                  %v973 = vld [vmem:[%s809 + $0x344] sm:$0xf]
                  %974 = vst [vmem:[%s810 + $0x144] sm:$0xf] %v973
                  %v975 = vld [vmem:[%s809 + $0x348] sm:$0xf]
                  %976 = vst [vmem:[%s810 + $0x148] sm:$0xf] %v975
                  %v977 = vld [vmem:[%s809 + $0x34c] sm:$0xf]
                  %978 = vst [vmem:[%s810 + $0x14c] sm:$0xf] %v977
                  %v979 = vld [vmem:[%s809 + $0x350] sm:$0xf]
                  %980 = vst [vmem:[%s810 + $0x150] sm:$0xf] %v979
                  %v981 = vld [vmem:[%s809 + $0x354] sm:$0xf]
                  %982 = vst [vmem:[%s810 + $0x154] sm:$0xf] %v981
                  %v983 = vld [vmem:[%s809 + $0x358] sm:$0xf]
                  %984 = vst [vmem:[%s810 + $0x158] sm:$0xf] %v983
                  %v985 = vld [vmem:[%s809 + $0x35c] sm:$0xf]
                  %986 = vst [vmem:[%s810 + $0x15c] sm:$0xf] %v985
                  %v987 = vld [vmem:[%s809 + $0x360] sm:$0xf]
                  %988 = vst [vmem:[%s810 + $0x160] sm:$0xf] %v987
                  %v989 = vld [vmem:[%s809 + $0x364] sm:$0xf]
                  %990 = vst [vmem:[%s810 + $0x164] sm:$0xf] %v989
                  %v991 = vld [vmem:[%s809 + $0x368] sm:$0xf]
                  %992 = vst [vmem:[%s810 + $0x168] sm:$0xf] %v991
                  %v993 = vld [vmem:[%s809 + $0x36c] sm:$0xf]
                  %994 = vst [vmem:[%s810 + $0x16c] sm:$0xf] %v993
                  %v995 = vld [vmem:[%s809 + $0x370] sm:$0xf]
                  %996 = vst [vmem:[%s810 + $0x170] sm:$0xf] %v995
                  %v997 = vld [vmem:[%s809 + $0x374] sm:$0xf]
                  %998 = vst [vmem:[%s810 + $0x174] sm:$0xf] %v997
                  %v999 = vld [vmem:[%s809 + $0x378] sm:$0xf]
                  %1000 = vst [vmem:[%s810 + $0x178] sm:$0xf] %v999
                  %v1001 = vld [vmem:[%s809 + $0x37c] sm:$0xf]
                  %1002 = vst [vmem:[%s810 + $0x17c] sm:$0xf] %v1001
                  %v1003 = vld [vmem:[%s809 + $0x380] sm:$0xf]
                  %1004 = vst [vmem:[%s810 + $0x180] sm:$0xf] %v1003
                  %v1005 = vld [vmem:[%s809 + $0x384] sm:$0xf]
                  %1006 = vst [vmem:[%s810 + $0x184] sm:$0xf] %v1005
                  %v1007 = vld [vmem:[%s809 + $0x388] sm:$0xf]
                  %1008 = vst [vmem:[%s810 + $0x188] sm:$0xf] %v1007
                  %v1009 = vld [vmem:[%s809 + $0x38c] sm:$0xf]
                  %1010 = vst [vmem:[%s810 + $0x18c] sm:$0xf] %v1009
                  %v1011 = vld [vmem:[%s809 + $0x390] sm:$0xf]
                  %1012 = vst [vmem:[%s810 + $0x190] sm:$0xf] %v1011
                  %v1013 = vld [vmem:[%s809 + $0x394] sm:$0xf]
                  %1014 = vst [vmem:[%s810 + $0x194] sm:$0xf] %v1013
                  %v1015 = vld [vmem:[%s809 + $0x398] sm:$0xf]
                  %1016 = vst [vmem:[%s810 + $0x198] sm:$0xf] %v1015
                  %v1017 = vld [vmem:[%s809 + $0x39c] sm:$0xf]
                  %1018 = vst [vmem:[%s810 + $0x19c] sm:$0xf] %v1017
                  %v1019 = vld [vmem:[%s809 + $0x3a0] sm:$0xf]
                  %1020 = vst [vmem:[%s810 + $0x1a0] sm:$0xf] %v1019
                  %v1021 = vld [vmem:[%s809 + $0x3a4] sm:$0xf]
                  %1022 = vst [vmem:[%s810 + $0x1a4] sm:$0xf] %v1021
                  %v1023 = vld [vmem:[%s809 + $0x3a8] sm:$0xf]
                  %1024 = vst [vmem:[%s810 + $0x1a8] sm:$0xf] %v1023
                  %v1025 = vld [vmem:[%s809 + $0x3ac] sm:$0xf]
                  %1026 = vst [vmem:[%s810 + $0x1ac] sm:$0xf] %v1025
                  %v1027 = vld [vmem:[%s809 + $0x3b0] sm:$0xf]
                  %1028 = vst [vmem:[%s810 + $0x1b0] sm:$0xf] %v1027
                  %v1029 = vld [vmem:[%s809 + $0x3b4] sm:$0xf]
                  %1030 = vst [vmem:[%s810 + $0x1b4] sm:$0xf] %v1029
                  %v1031 = vld [vmem:[%s809 + $0x3b8] sm:$0xf]
                  %1032 = vst [vmem:[%s810 + $0x1b8] sm:$0xf] %v1031
                  %v1033 = vld [vmem:[%s809 + $0x3bc] sm:$0xf]
                  %1034 = vst [vmem:[%s810 + $0x1bc] sm:$0xf] %v1033
                  %v1035 = vld [vmem:[%s809 + $0x3c0] sm:$0xf]
                  %1036 = vst [vmem:[%s810 + $0x1c0] sm:$0xf] %v1035
                  %v1037 = vld [vmem:[%s809 + $0x3c4] sm:$0xf]
                  %1038 = vst [vmem:[%s810 + $0x1c4] sm:$0xf] %v1037
                  %v1039 = vld [vmem:[%s809 + $0x3c8] sm:$0xf]
                  %1040 = vst [vmem:[%s810 + $0x1c8] sm:$0xf] %v1039
                  %v1041 = vld [vmem:[%s809 + $0x3cc] sm:$0xf]
                  %1042 = vst [vmem:[%s810 + $0x1cc] sm:$0xf] %v1041
                  %v1043 = vld [vmem:[%s809 + $0x3d0] sm:$0xf]
                  %1044 = vst [vmem:[%s810 + $0x1d0] sm:$0xf] %v1043
                  %v1045 = vld [vmem:[%s809 + $0x3d4] sm:$0xf]
                  %1046 = vst [vmem:[%s810 + $0x1d4] sm:$0xf] %v1045
                  %v1047 = vld [vmem:[%s809 + $0x3d8] sm:$0xf]
                  %1048 = vst [vmem:[%s810 + $0x1d8] sm:$0xf] %v1047
                  %v1049 = vld [vmem:[%s809 + $0x3dc] sm:$0xf]
                  %1050 = vst [vmem:[%s810 + $0x1dc] sm:$0xf] %v1049
                  %v1051 = vld [vmem:[%s809 + $0x3e0] sm:$0xf]
                  %1052 = vst [vmem:[%s810 + $0x1e0] sm:$0xf] %v1051
                  %v1053 = vld [vmem:[%s809 + $0x3e4] sm:$0xf]
                  %1054 = vst [vmem:[%s810 + $0x1e4] sm:$0xf] %v1053
                  %v1055 = vld [vmem:[%s809 + $0x3e8] sm:$0xf]
                  %1056 = vst [vmem:[%s810 + $0x1e8] sm:$0xf] %v1055
                  %v1057 = vld [vmem:[%s809 + $0x3ec] sm:$0xf]
                  %1058 = vst [vmem:[%s810 + $0x1ec] sm:$0xf] %v1057
                  %v1059 = vld [vmem:[%s809 + $0x3f0] sm:$0xf]
                  %1060 = vst [vmem:[%s810 + $0x1f0] sm:$0xf] %v1059
                  %v1061 = vld [vmem:[%s809 + $0x3f4] sm:$0xf]
                  %1062 = vst [vmem:[%s810 + $0x1f4] sm:$0xf] %v1061
                  %v1063 = vld [vmem:[%s809 + $0x3f8] sm:$0xf]
                  %1064 = vst [vmem:[%s810 + $0x1f8] sm:$0xf] %v1063
                  %v1065 = vld [vmem:[%s809 + $0x3fc] sm:$0xf]
                  %1066 = vst [vmem:[%s810 + $0x1fc] sm:$0xf] %v1065
                  %v1067 = vld [vmem:[%s809 + $0x600] sm:$0xf]
                  %1068 = vst [vmem:[%s810 + $0x200] sm:$0xf] %v1067
                  %v1069 = vld [vmem:[%s809 + $0x604] sm:$0xf]
                  %1070 = vst [vmem:[%s810 + $0x204] sm:$0xf] %v1069
                  %v1071 = vld [vmem:[%s809 + $0x608] sm:$0xf]
                  %1072 = vst [vmem:[%s810 + $0x208] sm:$0xf] %v1071
                  %v1073 = vld [vmem:[%s809 + $0x60c] sm:$0xf]
                  %1074 = vst [vmem:[%s810 + $0x20c] sm:$0xf] %v1073
                  %v1075 = vld [vmem:[%s809 + $0x610] sm:$0xf]
                  %1076 = vst [vmem:[%s810 + $0x210] sm:$0xf] %v1075
                  %v1077 = vld [vmem:[%s809 + $0x614] sm:$0xf]
                  %1078 = vst [vmem:[%s810 + $0x214] sm:$0xf] %v1077
                  %v1079 = vld [vmem:[%s809 + $0x618] sm:$0xf]
                  %1080 = vst [vmem:[%s810 + $0x218] sm:$0xf] %v1079
                  %v1081 = vld [vmem:[%s809 + $0x61c] sm:$0xf]
                  %1082 = vst [vmem:[%s810 + $0x21c] sm:$0xf] %v1081
                  %v1083 = vld [vmem:[%s809 + $0x620] sm:$0xf]
                  %1084 = vst [vmem:[%s810 + $0x220] sm:$0xf] %v1083
                  %v1085 = vld [vmem:[%s809 + $0x624] sm:$0xf]
                  %1086 = vst [vmem:[%s810 + $0x224] sm:$0xf] %v1085
                  %v1087 = vld [vmem:[%s809 + $0x628] sm:$0xf]
                  %1088 = vst [vmem:[%s810 + $0x228] sm:$0xf] %v1087
                  %v1089 = vld [vmem:[%s809 + $0x62c] sm:$0xf]
                  %1090 = vst [vmem:[%s810 + $0x22c] sm:$0xf] %v1089
                  %v1091 = vld [vmem:[%s809 + $0x630] sm:$0xf]
                  %1092 = vst [vmem:[%s810 + $0x230] sm:$0xf] %v1091
                  %v1093 = vld [vmem:[%s809 + $0x634] sm:$0xf]
                  %1094 = vst [vmem:[%s810 + $0x234] sm:$0xf] %v1093
                  %v1095 = vld [vmem:[%s809 + $0x638] sm:$0xf]
                  %1096 = vst [vmem:[%s810 + $0x238] sm:$0xf] %v1095
                  %v1097 = vld [vmem:[%s809 + $0x63c] sm:$0xf]
                  %1098 = vst [vmem:[%s810 + $0x23c] sm:$0xf] %v1097
                  %v1099 = vld [vmem:[%s809 + $0x640] sm:$0xf]
                  %1100 = vst [vmem:[%s810 + $0x240] sm:$0xf] %v1099
                  %v1101 = vld [vmem:[%s809 + $0x644] sm:$0xf]
                  %1102 = vst [vmem:[%s810 + $0x244] sm:$0xf] %v1101
                  %v1103 = vld [vmem:[%s809 + $0x648] sm:$0xf]
                  %1104 = vst [vmem:[%s810 + $0x248] sm:$0xf] %v1103
                  %v1105 = vld [vmem:[%s809 + $0x64c] sm:$0xf]
                  %1106 = vst [vmem:[%s810 + $0x24c] sm:$0xf] %v1105
                  %v1107 = vld [vmem:[%s809 + $0x650] sm:$0xf]
                  %1108 = vst [vmem:[%s810 + $0x250] sm:$0xf] %v1107
                  %v1109 = vld [vmem:[%s809 + $0x654] sm:$0xf]
                  %1110 = vst [vmem:[%s810 + $0x254] sm:$0xf] %v1109
                  %v1111 = vld [vmem:[%s809 + $0x658] sm:$0xf]
                  %1112 = vst [vmem:[%s810 + $0x258] sm:$0xf] %v1111
                  %v1113 = vld [vmem:[%s809 + $0x65c] sm:$0xf]
                  %1114 = vst [vmem:[%s810 + $0x25c] sm:$0xf] %v1113
                  %v1115 = vld [vmem:[%s809 + $0x660] sm:$0xf]
                  %1116 = vst [vmem:[%s810 + $0x260] sm:$0xf] %v1115
                  %v1117 = vld [vmem:[%s809 + $0x664] sm:$0xf]
                  %1118 = vst [vmem:[%s810 + $0x264] sm:$0xf] %v1117
                  %v1119 = vld [vmem:[%s809 + $0x668] sm:$0xf]
                  %1120 = vst [vmem:[%s810 + $0x268] sm:$0xf] %v1119
                  %v1121 = vld [vmem:[%s809 + $0x66c] sm:$0xf]
                  %1122 = vst [vmem:[%s810 + $0x26c] sm:$0xf] %v1121
                  %v1123 = vld [vmem:[%s809 + $0x670] sm:$0xf]
                  %1124 = vst [vmem:[%s810 + $0x270] sm:$0xf] %v1123
                  %v1125 = vld [vmem:[%s809 + $0x674] sm:$0xf]
                  %1126 = vst [vmem:[%s810 + $0x274] sm:$0xf] %v1125
                  %v1127 = vld [vmem:[%s809 + $0x678] sm:$0xf]
                  %1128 = vst [vmem:[%s810 + $0x278] sm:$0xf] %v1127
                  %v1129 = vld [vmem:[%s809 + $0x67c] sm:$0xf]
                  %1130 = vst [vmem:[%s810 + $0x27c] sm:$0xf] %v1129
                  %v1131 = vld [vmem:[%s809 + $0x680] sm:$0xf]
                  %1132 = vst [vmem:[%s810 + $0x280] sm:$0xf] %v1131
                  %v1133 = vld [vmem:[%s809 + $0x684] sm:$0xf]
                  %1134 = vst [vmem:[%s810 + $0x284] sm:$0xf] %v1133
                  %v1135 = vld [vmem:[%s809 + $0x688] sm:$0xf]
                  %1136 = vst [vmem:[%s810 + $0x288] sm:$0xf] %v1135
                  %v1137 = vld [vmem:[%s809 + $0x68c] sm:$0xf]
                  %1138 = vst [vmem:[%s810 + $0x28c] sm:$0xf] %v1137
                  %v1139 = vld [vmem:[%s809 + $0x690] sm:$0xf]
                  %1140 = vst [vmem:[%s810 + $0x290] sm:$0xf] %v1139
                  %v1141 = vld [vmem:[%s809 + $0x694] sm:$0xf]
                  %1142 = vst [vmem:[%s810 + $0x294] sm:$0xf] %v1141
                  %v1143 = vld [vmem:[%s809 + $0x698] sm:$0xf]
                  %1144 = vst [vmem:[%s810 + $0x298] sm:$0xf] %v1143
                  %v1145 = vld [vmem:[%s809 + $0x69c] sm:$0xf]
                  %1146 = vst [vmem:[%s810 + $0x29c] sm:$0xf] %v1145
                  %v1147 = vld [vmem:[%s809 + $0x6a0] sm:$0xf]
                  %1148 = vst [vmem:[%s810 + $0x2a0] sm:$0xf] %v1147
                  %v1149 = vld [vmem:[%s809 + $0x6a4] sm:$0xf]
                  %1150 = vst [vmem:[%s810 + $0x2a4] sm:$0xf] %v1149
                  %v1151 = vld [vmem:[%s809 + $0x6a8] sm:$0xf]
                  %1152 = vst [vmem:[%s810 + $0x2a8] sm:$0xf] %v1151
                  %v1153 = vld [vmem:[%s809 + $0x6ac] sm:$0xf]
                  %1154 = vst [vmem:[%s810 + $0x2ac] sm:$0xf] %v1153
                  %v1155 = vld [vmem:[%s809 + $0x6b0] sm:$0xf]
                  %1156 = vst [vmem:[%s810 + $0x2b0] sm:$0xf] %v1155
                  %v1157 = vld [vmem:[%s809 + $0x6b4] sm:$0xf]
                  %1158 = vst [vmem:[%s810 + $0x2b4] sm:$0xf] %v1157
                  %v1159 = vld [vmem:[%s809 + $0x6b8] sm:$0xf]
                  %1160 = vst [vmem:[%s810 + $0x2b8] sm:$0xf] %v1159
                  %v1161 = vld [vmem:[%s809 + $0x6bc] sm:$0xf]
                  %1162 = vst [vmem:[%s810 + $0x2bc] sm:$0xf] %v1161
                  %v1163 = vld [vmem:[%s809 + $0x6c0] sm:$0xf]
                  %1164 = vst [vmem:[%s810 + $0x2c0] sm:$0xf] %v1163
                  %v1165 = vld [vmem:[%s809 + $0x6c4] sm:$0xf]
                  %1166 = vst [vmem:[%s810 + $0x2c4] sm:$0xf] %v1165
                  %v1167 = vld [vmem:[%s809 + $0x6c8] sm:$0xf]
                  %1168 = vst [vmem:[%s810 + $0x2c8] sm:$0xf] %v1167
                  %v1169 = vld [vmem:[%s809 + $0x6cc] sm:$0xf]
                  %1170 = vst [vmem:[%s810 + $0x2cc] sm:$0xf] %v1169
                  %v1171 = vld [vmem:[%s809 + $0x6d0] sm:$0xf]
                  %1172 = vst [vmem:[%s810 + $0x2d0] sm:$0xf] %v1171
                  %v1173 = vld [vmem:[%s809 + $0x6d4] sm:$0xf]
                  %1174 = vst [vmem:[%s810 + $0x2d4] sm:$0xf] %v1173
                  %v1175 = vld [vmem:[%s809 + $0x6d8] sm:$0xf]
                  %1176 = vst [vmem:[%s810 + $0x2d8] sm:$0xf] %v1175
                  %v1177 = vld [vmem:[%s809 + $0x6dc] sm:$0xf]
                  %1178 = vst [vmem:[%s810 + $0x2dc] sm:$0xf] %v1177
                  %v1179 = vld [vmem:[%s809 + $0x6e0] sm:$0xf]
                  %1180 = vst [vmem:[%s810 + $0x2e0] sm:$0xf] %v1179
                  %v1181 = vld [vmem:[%s809 + $0x6e4] sm:$0xf]
                  %1182 = vst [vmem:[%s810 + $0x2e4] sm:$0xf] %v1181
                  %v1183 = vld [vmem:[%s809 + $0x6e8] sm:$0xf]
                  %1184 = vst [vmem:[%s810 + $0x2e8] sm:$0xf] %v1183
                  %v1185 = vld [vmem:[%s809 + $0x6ec] sm:$0xf]
                  %1186 = vst [vmem:[%s810 + $0x2ec] sm:$0xf] %v1185
                  %v1187 = vld [vmem:[%s809 + $0x6f0] sm:$0xf]
                  %1188 = vst [vmem:[%s810 + $0x2f0] sm:$0xf] %v1187
                  %v1189 = vld [vmem:[%s809 + $0x6f4] sm:$0xf]
                  %1190 = vst [vmem:[%s810 + $0x2f4] sm:$0xf] %v1189
                  %v1191 = vld [vmem:[%s809 + $0x6f8] sm:$0xf]
                  %1192 = vst [vmem:[%s810 + $0x2f8] sm:$0xf] %v1191
                  %v1193 = vld [vmem:[%s809 + $0x6fc] sm:$0xf]
                  %1194 = vst [vmem:[%s810 + $0x2fc] sm:$0xf] %v1193
                  %v1195 = vld [vmem:[%s809 + $0x900] sm:$0xf]
                  %1196 = vst [vmem:[%s810 + $0x300] sm:$0xf] %v1195
                  %v1197 = vld [vmem:[%s809 + $0x904] sm:$0xf]
                  %1198 = vst [vmem:[%s810 + $0x304] sm:$0xf] %v1197
                  %v1199 = vld [vmem:[%s809 + $0x908] sm:$0xf]
                  %1200 = vst [vmem:[%s810 + $0x308] sm:$0xf] %v1199
                  %v1201 = vld [vmem:[%s809 + $0x90c] sm:$0xf]
                  %1202 = vst [vmem:[%s810 + $0x30c] sm:$0xf] %v1201
                  %v1203 = vld [vmem:[%s809 + $0x910] sm:$0xf]
                  %1204 = vst [vmem:[%s810 + $0x310] sm:$0xf] %v1203
                  %v1205 = vld [vmem:[%s809 + $0x914] sm:$0xf]
                  %1206 = vst [vmem:[%s810 + $0x314] sm:$0xf] %v1205
                  %v1207 = vld [vmem:[%s809 + $0x918] sm:$0xf]
                  %1208 = vst [vmem:[%s810 + $0x318] sm:$0xf] %v1207
                  %v1209 = vld [vmem:[%s809 + $0x91c] sm:$0xf]
                  %1210 = vst [vmem:[%s810 + $0x31c] sm:$0xf] %v1209
                  %v1211 = vld [vmem:[%s809 + $0x920] sm:$0xf]
                  %1212 = vst [vmem:[%s810 + $0x320] sm:$0xf] %v1211
                  %v1213 = vld [vmem:[%s809 + $0x924] sm:$0xf]
                  %1214 = vst [vmem:[%s810 + $0x324] sm:$0xf] %v1213
                  %v1215 = vld [vmem:[%s809 + $0x928] sm:$0xf]
                  %1216 = vst [vmem:[%s810 + $0x328] sm:$0xf] %v1215
                  %v1217 = vld [vmem:[%s809 + $0x92c] sm:$0xf]
                  %1218 = vst [vmem:[%s810 + $0x32c] sm:$0xf] %v1217
                  %v1219 = vld [vmem:[%s809 + $0x930] sm:$0xf]
                  %1220 = vst [vmem:[%s810 + $0x330] sm:$0xf] %v1219
                  %v1221 = vld [vmem:[%s809 + $0x934] sm:$0xf]
                  %1222 = vst [vmem:[%s810 + $0x334] sm:$0xf] %v1221
                  %v1223 = vld [vmem:[%s809 + $0x938] sm:$0xf]
                  %1224 = vst [vmem:[%s810 + $0x338] sm:$0xf] %v1223
                  %v1225 = vld [vmem:[%s809 + $0x93c] sm:$0xf]
                  %1226 = vst [vmem:[%s810 + $0x33c] sm:$0xf] %v1225
                  %v1227 = vld [vmem:[%s809 + $0x940] sm:$0xf]
                  %1228 = vst [vmem:[%s810 + $0x340] sm:$0xf] %v1227
                  %v1229 = vld [vmem:[%s809 + $0x944] sm:$0xf]
                  %1230 = vst [vmem:[%s810 + $0x344] sm:$0xf] %v1229
                  %v1231 = vld [vmem:[%s809 + $0x948] sm:$0xf]
                  %1232 = vst [vmem:[%s810 + $0x348] sm:$0xf] %v1231
                  %v1233 = vld [vmem:[%s809 + $0x94c] sm:$0xf]
                  %1234 = vst [vmem:[%s810 + $0x34c] sm:$0xf] %v1233
                  %v1235 = vld [vmem:[%s809 + $0x950] sm:$0xf]
                  %1236 = vst [vmem:[%s810 + $0x350] sm:$0xf] %v1235
                  %v1237 = vld [vmem:[%s809 + $0x954] sm:$0xf]
                  %1238 = vst [vmem:[%s810 + $0x354] sm:$0xf] %v1237
                  %v1239 = vld [vmem:[%s809 + $0x958] sm:$0xf]
                  %1240 = vst [vmem:[%s810 + $0x358] sm:$0xf] %v1239
                  %v1241 = vld [vmem:[%s809 + $0x95c] sm:$0xf]
                  %1242 = vst [vmem:[%s810 + $0x35c] sm:$0xf] %v1241
                  %v1243 = vld [vmem:[%s809 + $0x960] sm:$0xf]
                  %1244 = vst [vmem:[%s810 + $0x360] sm:$0xf] %v1243
                  %v1245 = vld [vmem:[%s809 + $0x964] sm:$0xf]
                  %1246 = vst [vmem:[%s810 + $0x364] sm:$0xf] %v1245
                  %v1247 = vld [vmem:[%s809 + $0x968] sm:$0xf]
                  %1248 = vst [vmem:[%s810 + $0x368] sm:$0xf] %v1247
                  %v1249 = vld [vmem:[%s809 + $0x96c] sm:$0xf]
                  %1250 = vst [vmem:[%s810 + $0x36c] sm:$0xf] %v1249
                  %v1251 = vld [vmem:[%s809 + $0x970] sm:$0xf]
                  %1252 = vst [vmem:[%s810 + $0x370] sm:$0xf] %v1251
                  %v1253 = vld [vmem:[%s809 + $0x974] sm:$0xf]
                  %1254 = vst [vmem:[%s810 + $0x374] sm:$0xf] %v1253
                  %v1255 = vld [vmem:[%s809 + $0x978] sm:$0xf]
                  %1256 = vst [vmem:[%s810 + $0x378] sm:$0xf] %v1255
                  %v1257 = vld [vmem:[%s809 + $0x97c] sm:$0xf]
                  %1258 = vst [vmem:[%s810 + $0x37c] sm:$0xf] %v1257
                  %v1259 = vld [vmem:[%s809 + $0x980] sm:$0xf]
                  %1260 = vst [vmem:[%s810 + $0x380] sm:$0xf] %v1259
                  %v1261 = vld [vmem:[%s809 + $0x984] sm:$0xf]
                  %1262 = vst [vmem:[%s810 + $0x384] sm:$0xf] %v1261
                  %v1263 = vld [vmem:[%s809 + $0x988] sm:$0xf]
                  %1264 = vst [vmem:[%s810 + $0x388] sm:$0xf] %v1263
                  %v1265 = vld [vmem:[%s809 + $0x98c] sm:$0xf]
                  %1266 = vst [vmem:[%s810 + $0x38c] sm:$0xf] %v1265
                  %v1267 = vld [vmem:[%s809 + $0x990] sm:$0xf]
                  %1268 = vst [vmem:[%s810 + $0x390] sm:$0xf] %v1267
                  %v1269 = vld [vmem:[%s809 + $0x994] sm:$0xf]
                  %1270 = vst [vmem:[%s810 + $0x394] sm:$0xf] %v1269
                  %v1271 = vld [vmem:[%s809 + $0x998] sm:$0xf]
                  %1272 = vst [vmem:[%s810 + $0x398] sm:$0xf] %v1271
                  %v1273 = vld [vmem:[%s809 + $0x99c] sm:$0xf]
                  %1274 = vst [vmem:[%s810 + $0x39c] sm:$0xf] %v1273
                  %v1275 = vld [vmem:[%s809 + $0x9a0] sm:$0xf]
                  %1276 = vst [vmem:[%s810 + $0x3a0] sm:$0xf] %v1275
                  %v1277 = vld [vmem:[%s809 + $0x9a4] sm:$0xf]
                  %1278 = vst [vmem:[%s810 + $0x3a4] sm:$0xf] %v1277
                  %v1279 = vld [vmem:[%s809 + $0x9a8] sm:$0xf]
                  %1280 = vst [vmem:[%s810 + $0x3a8] sm:$0xf] %v1279
                  %v1281 = vld [vmem:[%s809 + $0x9ac] sm:$0xf]
                  %1282 = vst [vmem:[%s810 + $0x3ac] sm:$0xf] %v1281
                  %v1283 = vld [vmem:[%s809 + $0x9b0] sm:$0xf]
                  %1284 = vst [vmem:[%s810 + $0x3b0] sm:$0xf] %v1283
                  %v1285 = vld [vmem:[%s809 + $0x9b4] sm:$0xf]
                  %1286 = vst [vmem:[%s810 + $0x3b4] sm:$0xf] %v1285
                  %v1287 = vld [vmem:[%s809 + $0x9b8] sm:$0xf]
                  %1288 = vst [vmem:[%s810 + $0x3b8] sm:$0xf] %v1287
                  %v1289 = vld [vmem:[%s809 + $0x9bc] sm:$0xf]
                  %1290 = vst [vmem:[%s810 + $0x3bc] sm:$0xf] %v1289
                  %v1291 = vld [vmem:[%s809 + $0x9c0] sm:$0xf]
                  %1292 = vst [vmem:[%s810 + $0x3c0] sm:$0xf] %v1291
                  %v1293 = vld [vmem:[%s809 + $0x9c4] sm:$0xf]
                  %1294 = vst [vmem:[%s810 + $0x3c4] sm:$0xf] %v1293
                  %v1295 = vld [vmem:[%s809 + $0x9c8] sm:$0xf]
                  %1296 = vst [vmem:[%s810 + $0x3c8] sm:$0xf] %v1295
                  %v1297 = vld [vmem:[%s809 + $0x9cc] sm:$0xf]
                  %1298 = vst [vmem:[%s810 + $0x3cc] sm:$0xf] %v1297
                  %v1299 = vld [vmem:[%s809 + $0x9d0] sm:$0xf]
                  %1300 = vst [vmem:[%s810 + $0x3d0] sm:$0xf] %v1299
                  %v1301 = vld [vmem:[%s809 + $0x9d4] sm:$0xf]
                  %1302 = vst [vmem:[%s810 + $0x3d4] sm:$0xf] %v1301
                  %v1303 = vld [vmem:[%s809 + $0x9d8] sm:$0xf]
                  %1304 = vst [vmem:[%s810 + $0x3d8] sm:$0xf] %v1303
                  %v1305 = vld [vmem:[%s809 + $0x9dc] sm:$0xf]
                  %1306 = vst [vmem:[%s810 + $0x3dc] sm:$0xf] %v1305
                  %v1307 = vld [vmem:[%s809 + $0x9e0] sm:$0xf]
                  %1308 = vst [vmem:[%s810 + $0x3e0] sm:$0xf] %v1307
                  %v1309 = vld [vmem:[%s809 + $0x9e4] sm:$0xf]
                  %1310 = vst [vmem:[%s810 + $0x3e4] sm:$0xf] %v1309
                  %v1311 = vld [vmem:[%s809 + $0x9e8] sm:$0xf]
                  %1312 = vst [vmem:[%s810 + $0x3e8] sm:$0xf] %v1311
                  %v1313 = vld [vmem:[%s809 + $0x9ec] sm:$0xf]
                  %1314 = vst [vmem:[%s810 + $0x3ec] sm:$0xf] %v1313
                  %v1315 = vld [vmem:[%s809 + $0x9f0] sm:$0xf]
                  %1316 = vst [vmem:[%s810 + $0x3f0] sm:$0xf] %v1315
                  %v1317 = vld [vmem:[%s809 + $0x9f4] sm:$0xf]
                  %1318 = vst [vmem:[%s810 + $0x3f4] sm:$0xf] %v1317
                  %v1319 = vld [vmem:[%s809 + $0x9f8] sm:$0xf]
                  %1320 = vst [vmem:[%s810 + $0x3f8] sm:$0xf] %v1319
                  %v1321 = vld [vmem:[%s809 + $0x9fc] sm:$0xf]
                  %1322 = vst [vmem:[%s810 + $0x3fc] sm:$0xf] %v1321
                $region79: #{liif_forward.3} parent=66 // loop_footer
                  %s808 = sadd.s32 1, %s804
                $region80: #{liif_forward.3} parent=66 // loop_footer_branch
                  %803 = sbr.rel target = $region76
                $region81: #{liif_forward.3} parent=66 // loop_exit
                  _
              $region67: #{liif_forward.3} parent=51 // pred_fallthru
                _
            $region52: #{liif_forward.3} parent=47 // pred_fallthru
              _
            // Predicated region
            $region53: #{liif_forward.3} parent=47 // pred_check
              _
            $region54: #{liif_forward.3} parent=47 // pred_check_branch
              %270 = sbr.rel (0) target = $region56
            $region55: #{liif_forward.3} parent=47 // pred_region
              loop: start=0, step=1, limit=1
              $region57: #{liif_forward.3} parent=55 // loop_pre_header
                _
              $region58: #{liif_forward.3} parent=55 // loop_header
                %s273 = sphi 0, %s277
                %p274 = scmp.ge.s32.totalorder %s273, 1
                %s278 = sphi %s264, %s264
                %s279 = sphi %s261, %s261
              $region59: #{liif_forward.3} parent=55 // loop_header_branch
                %276 = sbr.rel (%p274) target = $region63
              $region60: #{liif_forward.3} parent=55 // loop_body
                %v280 = vld [vmem:[%s278] sm:$0xf]
                %281 = vst [vmem:[%s279] sm:$0xf] %v280
                %v282 = vld [vmem:[%s278 + $0x4] sm:$0xf]
                %283 = vst [vmem:[%s279 + $0x4] sm:$0xf] %v282
                %v284 = vld [vmem:[%s278 + $0x8] sm:$0xf]
                %285 = vst [vmem:[%s279 + $0x8] sm:$0xf] %v284
                %v286 = vld [vmem:[%s278 + $0xc] sm:$0xf]
                %287 = vst [vmem:[%s279 + $0xc] sm:$0xf] %v286
                %v288 = vld [vmem:[%s278 + $0x10] sm:$0xf]
                %289 = vst [vmem:[%s279 + $0x10] sm:$0xf] %v288
                %v290 = vld [vmem:[%s278 + $0x14] sm:$0xf]
                %291 = vst [vmem:[%s279 + $0x14] sm:$0xf] %v290
                %v292 = vld [vmem:[%s278 + $0x18] sm:$0xf]
                %293 = vst [vmem:[%s279 + $0x18] sm:$0xf] %v292
                %v294 = vld [vmem:[%s278 + $0x1c] sm:$0xf]
                %295 = vst [vmem:[%s279 + $0x1c] sm:$0xf] %v294
                %v296 = vld [vmem:[%s278 + $0x20] sm:$0xf]
                %297 = vst [vmem:[%s279 + $0x20] sm:$0xf] %v296
                %v298 = vld [vmem:[%s278 + $0x24] sm:$0xf]
                %299 = vst [vmem:[%s279 + $0x24] sm:$0xf] %v298
                %v300 = vld [vmem:[%s278 + $0x28] sm:$0xf]
                %301 = vst [vmem:[%s279 + $0x28] sm:$0xf] %v300
                %v302 = vld [vmem:[%s278 + $0x2c] sm:$0xf]
                %303 = vst [vmem:[%s279 + $0x2c] sm:$0xf] %v302
                %v304 = vld [vmem:[%s278 + $0x30] sm:$0xf]
                %305 = vst [vmem:[%s279 + $0x30] sm:$0xf] %v304
                %v306 = vld [vmem:[%s278 + $0x34] sm:$0xf]
                %307 = vst [vmem:[%s279 + $0x34] sm:$0xf] %v306
                %v308 = vld [vmem:[%s278 + $0x38] sm:$0xf]
                %309 = vst [vmem:[%s279 + $0x38] sm:$0xf] %v308
                %v310 = vld [vmem:[%s278 + $0x3c] sm:$0xf]
                %311 = vst [vmem:[%s279 + $0x3c] sm:$0xf] %v310
                %v312 = vld [vmem:[%s278 + $0x40] sm:$0xf]
                %313 = vst [vmem:[%s279 + $0x40] sm:$0xf] %v312
                %v314 = vld [vmem:[%s278 + $0x44] sm:$0xf]
                %315 = vst [vmem:[%s279 + $0x44] sm:$0xf] %v314
                %v316 = vld [vmem:[%s278 + $0x48] sm:$0xf]
                %317 = vst [vmem:[%s279 + $0x48] sm:$0xf] %v316
                %v318 = vld [vmem:[%s278 + $0x4c] sm:$0xf]
                %319 = vst [vmem:[%s279 + $0x4c] sm:$0xf] %v318
                %v320 = vld [vmem:[%s278 + $0x50] sm:$0xf]
                %321 = vst [vmem:[%s279 + $0x50] sm:$0xf] %v320
                %v322 = vld [vmem:[%s278 + $0x54] sm:$0xf]
                %323 = vst [vmem:[%s279 + $0x54] sm:$0xf] %v322
                %v324 = vld [vmem:[%s278 + $0x58] sm:$0xf]
                %325 = vst [vmem:[%s279 + $0x58] sm:$0xf] %v324
                %v326 = vld [vmem:[%s278 + $0x5c] sm:$0xf]
                %327 = vst [vmem:[%s279 + $0x5c] sm:$0xf] %v326
                %v328 = vld [vmem:[%s278 + $0x60] sm:$0xf]
                %329 = vst [vmem:[%s279 + $0x60] sm:$0xf] %v328
                %v330 = vld [vmem:[%s278 + $0x64] sm:$0xf]
                %331 = vst [vmem:[%s279 + $0x64] sm:$0xf] %v330
                %v332 = vld [vmem:[%s278 + $0x68] sm:$0xf]
                %333 = vst [vmem:[%s279 + $0x68] sm:$0xf] %v332
                %v334 = vld [vmem:[%s278 + $0x6c] sm:$0xf]
                %335 = vst [vmem:[%s279 + $0x6c] sm:$0xf] %v334
                %v336 = vld [vmem:[%s278 + $0x70] sm:$0xf]
                %337 = vst [vmem:[%s279 + $0x70] sm:$0xf] %v336
                %v338 = vld [vmem:[%s278 + $0x74] sm:$0xf]
                %339 = vst [vmem:[%s279 + $0x74] sm:$0xf] %v338
                %v340 = vld [vmem:[%s278 + $0x78] sm:$0xf]
                %341 = vst [vmem:[%s279 + $0x78] sm:$0xf] %v340
                %v342 = vld [vmem:[%s278 + $0x7c] sm:$0xf]
                %343 = vst [vmem:[%s279 + $0x7c] sm:$0xf] %v342
                %v344 = vld [vmem:[%s278 + $0x80] sm:$0xf]
                %345 = vst [vmem:[%s279 + $0x80] sm:$0xf] %v344
                %v346 = vld [vmem:[%s278 + $0x84] sm:$0xf]
                %347 = vst [vmem:[%s279 + $0x84] sm:$0xf] %v346
                %v348 = vld [vmem:[%s278 + $0x88] sm:$0xf]
                %349 = vst [vmem:[%s279 + $0x88] sm:$0xf] %v348
                %v350 = vld [vmem:[%s278 + $0x8c] sm:$0xf]
                %351 = vst [vmem:[%s279 + $0x8c] sm:$0xf] %v350
                %v352 = vld [vmem:[%s278 + $0x90] sm:$0xf]
                %353 = vst [vmem:[%s279 + $0x90] sm:$0xf] %v352
                %v354 = vld [vmem:[%s278 + $0x94] sm:$0xf]
                %355 = vst [vmem:[%s279 + $0x94] sm:$0xf] %v354
                %v356 = vld [vmem:[%s278 + $0x98] sm:$0xf]
                %357 = vst [vmem:[%s279 + $0x98] sm:$0xf] %v356
                %v358 = vld [vmem:[%s278 + $0x9c] sm:$0xf]
                %359 = vst [vmem:[%s279 + $0x9c] sm:$0xf] %v358
                %v360 = vld [vmem:[%s278 + $0xa0] sm:$0xf]
                %361 = vst [vmem:[%s279 + $0xa0] sm:$0xf] %v360
                %v362 = vld [vmem:[%s278 + $0xa4] sm:$0xf]
                %363 = vst [vmem:[%s279 + $0xa4] sm:$0xf] %v362
                %v364 = vld [vmem:[%s278 + $0xa8] sm:$0xf]
                %365 = vst [vmem:[%s279 + $0xa8] sm:$0xf] %v364
                %v366 = vld [vmem:[%s278 + $0xac] sm:$0xf]
                %367 = vst [vmem:[%s279 + $0xac] sm:$0xf] %v366
                %v368 = vld [vmem:[%s278 + $0xb0] sm:$0xf]
                %369 = vst [vmem:[%s279 + $0xb0] sm:$0xf] %v368
                %v370 = vld [vmem:[%s278 + $0xb4] sm:$0xf]
                %371 = vst [vmem:[%s279 + $0xb4] sm:$0xf] %v370
                %v372 = vld [vmem:[%s278 + $0xb8] sm:$0xf]
                %373 = vst [vmem:[%s279 + $0xb8] sm:$0xf] %v372
                %v374 = vld [vmem:[%s278 + $0xbc] sm:$0xf]
                %375 = vst [vmem:[%s279 + $0xbc] sm:$0xf] %v374
                %v376 = vld [vmem:[%s278 + $0xc0] sm:$0xf]
                %377 = vst [vmem:[%s279 + $0xc0] sm:$0xf] %v376
                %v378 = vld [vmem:[%s278 + $0xc4] sm:$0xf]
                %379 = vst [vmem:[%s279 + $0xc4] sm:$0xf] %v378
                %v380 = vld [vmem:[%s278 + $0xc8] sm:$0xf]
                %381 = vst [vmem:[%s279 + $0xc8] sm:$0xf] %v380
                %v382 = vld [vmem:[%s278 + $0xcc] sm:$0xf]
                %383 = vst [vmem:[%s279 + $0xcc] sm:$0xf] %v382
                %v384 = vld [vmem:[%s278 + $0xd0] sm:$0xf]
                %385 = vst [vmem:[%s279 + $0xd0] sm:$0xf] %v384
                %v386 = vld [vmem:[%s278 + $0xd4] sm:$0xf]
                %387 = vst [vmem:[%s279 + $0xd4] sm:$0xf] %v386
                %v388 = vld [vmem:[%s278 + $0xd8] sm:$0xf]
                %389 = vst [vmem:[%s279 + $0xd8] sm:$0xf] %v388
                %v390 = vld [vmem:[%s278 + $0xdc] sm:$0xf]
                %391 = vst [vmem:[%s279 + $0xdc] sm:$0xf] %v390
                %v392 = vld [vmem:[%s278 + $0xe0] sm:$0xf]
                %393 = vst [vmem:[%s279 + $0xe0] sm:$0xf] %v392
                %v394 = vld [vmem:[%s278 + $0xe4] sm:$0xf]
                %395 = vst [vmem:[%s279 + $0xe4] sm:$0xf] %v394
                %v396 = vld [vmem:[%s278 + $0xe8] sm:$0xf]
                %397 = vst [vmem:[%s279 + $0xe8] sm:$0xf] %v396
                %v398 = vld [vmem:[%s278 + $0xec] sm:$0xf]
                %399 = vst [vmem:[%s279 + $0xec] sm:$0xf] %v398
                %v400 = vld [vmem:[%s278 + $0xf0] sm:$0xf]
                %401 = vst [vmem:[%s279 + $0xf0] sm:$0xf] %v400
                %v402 = vld [vmem:[%s278 + $0xf4] sm:$0xf]
                %403 = vst [vmem:[%s279 + $0xf4] sm:$0xf] %v402
                %v404 = vld [vmem:[%s278 + $0xf8] sm:$0xf]
                %405 = vst [vmem:[%s279 + $0xf8] sm:$0xf] %v404
                %v406 = vld [vmem:[%s278 + $0xfc] sm:$0xf]
                %407 = vst [vmem:[%s279 + $0xfc] sm:$0xf] %v406
                %v408 = vld [vmem:[%s278 + $0x300] sm:$0xf]
                %409 = vst [vmem:[%s279 + $0x100] sm:$0xf] %v408
                %v410 = vld [vmem:[%s278 + $0x304] sm:$0xf]
                %411 = vst [vmem:[%s279 + $0x104] sm:$0xf] %v410
                %v412 = vld [vmem:[%s278 + $0x308] sm:$0xf]
                %413 = vst [vmem:[%s279 + $0x108] sm:$0xf] %v412
                %v414 = vld [vmem:[%s278 + $0x30c] sm:$0xf]
                %415 = vst [vmem:[%s279 + $0x10c] sm:$0xf] %v414
                %v416 = vld [vmem:[%s278 + $0x310] sm:$0xf]
                %417 = vst [vmem:[%s279 + $0x110] sm:$0xf] %v416
                %v418 = vld [vmem:[%s278 + $0x314] sm:$0xf]
                %419 = vst [vmem:[%s279 + $0x114] sm:$0xf] %v418
                %v420 = vld [vmem:[%s278 + $0x318] sm:$0xf]
                %421 = vst [vmem:[%s279 + $0x118] sm:$0xf] %v420
                %v422 = vld [vmem:[%s278 + $0x31c] sm:$0xf]
                %423 = vst [vmem:[%s279 + $0x11c] sm:$0xf] %v422
                %v424 = vld [vmem:[%s278 + $0x320] sm:$0xf]
                %425 = vst [vmem:[%s279 + $0x120] sm:$0xf] %v424
                %v426 = vld [vmem:[%s278 + $0x324] sm:$0xf]
                %427 = vst [vmem:[%s279 + $0x124] sm:$0xf] %v426
                %v428 = vld [vmem:[%s278 + $0x328] sm:$0xf]
                %429 = vst [vmem:[%s279 + $0x128] sm:$0xf] %v428
                %v430 = vld [vmem:[%s278 + $0x32c] sm:$0xf]
                %431 = vst [vmem:[%s279 + $0x12c] sm:$0xf] %v430
                %v432 = vld [vmem:[%s278 + $0x330] sm:$0xf]
                %433 = vst [vmem:[%s279 + $0x130] sm:$0xf] %v432
                %v434 = vld [vmem:[%s278 + $0x334] sm:$0xf]
                %435 = vst [vmem:[%s279 + $0x134] sm:$0xf] %v434
                %v436 = vld [vmem:[%s278 + $0x338] sm:$0xf]
                %437 = vst [vmem:[%s279 + $0x138] sm:$0xf] %v436
                %v438 = vld [vmem:[%s278 + $0x33c] sm:$0xf]
                %439 = vst [vmem:[%s279 + $0x13c] sm:$0xf] %v438
                %v440 = vld [vmem:[%s278 + $0x340] sm:$0xf]
                %441 = vst [vmem:[%s279 + $0x140] sm:$0xf] %v440
                %v442 = vld [vmem:[%s278 + $0x344] sm:$0xf]
                %443 = vst [vmem:[%s279 + $0x144] sm:$0xf] %v442
                %v444 = vld [vmem:[%s278 + $0x348] sm:$0xf]
                %445 = vst [vmem:[%s279 + $0x148] sm:$0xf] %v444
                %v446 = vld [vmem:[%s278 + $0x34c] sm:$0xf]
                %447 = vst [vmem:[%s279 + $0x14c] sm:$0xf] %v446
                %v448 = vld [vmem:[%s278 + $0x350] sm:$0xf]
                %449 = vst [vmem:[%s279 + $0x150] sm:$0xf] %v448
                %v450 = vld [vmem:[%s278 + $0x354] sm:$0xf]
                %451 = vst [vmem:[%s279 + $0x154] sm:$0xf] %v450
                %v452 = vld [vmem:[%s278 + $0x358] sm:$0xf]
                %453 = vst [vmem:[%s279 + $0x158] sm:$0xf] %v452
                %v454 = vld [vmem:[%s278 + $0x35c] sm:$0xf]
                %455 = vst [vmem:[%s279 + $0x15c] sm:$0xf] %v454
                %v456 = vld [vmem:[%s278 + $0x360] sm:$0xf]
                %457 = vst [vmem:[%s279 + $0x160] sm:$0xf] %v456
                %v458 = vld [vmem:[%s278 + $0x364] sm:$0xf]
                %459 = vst [vmem:[%s279 + $0x164] sm:$0xf] %v458
                %v460 = vld [vmem:[%s278 + $0x368] sm:$0xf]
                %461 = vst [vmem:[%s279 + $0x168] sm:$0xf] %v460
                %v462 = vld [vmem:[%s278 + $0x36c] sm:$0xf]
                %463 = vst [vmem:[%s279 + $0x16c] sm:$0xf] %v462
                %v464 = vld [vmem:[%s278 + $0x370] sm:$0xf]
                %465 = vst [vmem:[%s279 + $0x170] sm:$0xf] %v464
                %v466 = vld [vmem:[%s278 + $0x374] sm:$0xf]
                %467 = vst [vmem:[%s279 + $0x174] sm:$0xf] %v466
                %v468 = vld [vmem:[%s278 + $0x378] sm:$0xf]
                %469 = vst [vmem:[%s279 + $0x178] sm:$0xf] %v468
                %v470 = vld [vmem:[%s278 + $0x37c] sm:$0xf]
                %471 = vst [vmem:[%s279 + $0x17c] sm:$0xf] %v470
                %v472 = vld [vmem:[%s278 + $0x380] sm:$0xf]
                %473 = vst [vmem:[%s279 + $0x180] sm:$0xf] %v472
                %v474 = vld [vmem:[%s278 + $0x384] sm:$0xf]
                %475 = vst [vmem:[%s279 + $0x184] sm:$0xf] %v474
                %v476 = vld [vmem:[%s278 + $0x388] sm:$0xf]
                %477 = vst [vmem:[%s279 + $0x188] sm:$0xf] %v476
                %v478 = vld [vmem:[%s278 + $0x38c] sm:$0xf]
                %479 = vst [vmem:[%s279 + $0x18c] sm:$0xf] %v478
                %v480 = vld [vmem:[%s278 + $0x390] sm:$0xf]
                %481 = vst [vmem:[%s279 + $0x190] sm:$0xf] %v480
                %v482 = vld [vmem:[%s278 + $0x394] sm:$0xf]
                %483 = vst [vmem:[%s279 + $0x194] sm:$0xf] %v482
                %v484 = vld [vmem:[%s278 + $0x398] sm:$0xf]
                %485 = vst [vmem:[%s279 + $0x198] sm:$0xf] %v484
                %v486 = vld [vmem:[%s278 + $0x39c] sm:$0xf]
                %487 = vst [vmem:[%s279 + $0x19c] sm:$0xf] %v486
                %v488 = vld [vmem:[%s278 + $0x3a0] sm:$0xf]
                %489 = vst [vmem:[%s279 + $0x1a0] sm:$0xf] %v488
                %v490 = vld [vmem:[%s278 + $0x3a4] sm:$0xf]
                %491 = vst [vmem:[%s279 + $0x1a4] sm:$0xf] %v490
                %v492 = vld [vmem:[%s278 + $0x3a8] sm:$0xf]
                %493 = vst [vmem:[%s279 + $0x1a8] sm:$0xf] %v492
                %v494 = vld [vmem:[%s278 + $0x3ac] sm:$0xf]
                %495 = vst [vmem:[%s279 + $0x1ac] sm:$0xf] %v494
                %v496 = vld [vmem:[%s278 + $0x3b0] sm:$0xf]
                %497 = vst [vmem:[%s279 + $0x1b0] sm:$0xf] %v496
                %v498 = vld [vmem:[%s278 + $0x3b4] sm:$0xf]
                %499 = vst [vmem:[%s279 + $0x1b4] sm:$0xf] %v498
                %v500 = vld [vmem:[%s278 + $0x3b8] sm:$0xf]
                %501 = vst [vmem:[%s279 + $0x1b8] sm:$0xf] %v500
                %v502 = vld [vmem:[%s278 + $0x3bc] sm:$0xf]
                %503 = vst [vmem:[%s279 + $0x1bc] sm:$0xf] %v502
                %v504 = vld [vmem:[%s278 + $0x3c0] sm:$0xf]
                %505 = vst [vmem:[%s279 + $0x1c0] sm:$0xf] %v504
                %v506 = vld [vmem:[%s278 + $0x3c4] sm:$0xf]
                %507 = vst [vmem:[%s279 + $0x1c4] sm:$0xf] %v506
                %v508 = vld [vmem:[%s278 + $0x3c8] sm:$0xf]
                %509 = vst [vmem:[%s279 + $0x1c8] sm:$0xf] %v508
                %v510 = vld [vmem:[%s278 + $0x3cc] sm:$0xf]
                %511 = vst [vmem:[%s279 + $0x1cc] sm:$0xf] %v510
                %v512 = vld [vmem:[%s278 + $0x3d0] sm:$0xf]
                %513 = vst [vmem:[%s279 + $0x1d0] sm:$0xf] %v512
                %v514 = vld [vmem:[%s278 + $0x3d4] sm:$0xf]
                %515 = vst [vmem:[%s279 + $0x1d4] sm:$0xf] %v514
                %v516 = vld [vmem:[%s278 + $0x3d8] sm:$0xf]
                %517 = vst [vmem:[%s279 + $0x1d8] sm:$0xf] %v516
                %v518 = vld [vmem:[%s278 + $0x3dc] sm:$0xf]
                %519 = vst [vmem:[%s279 + $0x1dc] sm:$0xf] %v518
                %v520 = vld [vmem:[%s278 + $0x3e0] sm:$0xf]
                %521 = vst [vmem:[%s279 + $0x1e0] sm:$0xf] %v520
                %v522 = vld [vmem:[%s278 + $0x3e4] sm:$0xf]
                %523 = vst [vmem:[%s279 + $0x1e4] sm:$0xf] %v522
                %v524 = vld [vmem:[%s278 + $0x3e8] sm:$0xf]
                %525 = vst [vmem:[%s279 + $0x1e8] sm:$0xf] %v524
                %v526 = vld [vmem:[%s278 + $0x3ec] sm:$0xf]
                %527 = vst [vmem:[%s279 + $0x1ec] sm:$0xf] %v526
                %v528 = vld [vmem:[%s278 + $0x3f0] sm:$0xf]
                %529 = vst [vmem:[%s279 + $0x1f0] sm:$0xf] %v528
                %v530 = vld [vmem:[%s278 + $0x3f4] sm:$0xf]
                %531 = vst [vmem:[%s279 + $0x1f4] sm:$0xf] %v530
                %v532 = vld [vmem:[%s278 + $0x3f8] sm:$0xf]
                %533 = vst [vmem:[%s279 + $0x1f8] sm:$0xf] %v532
                %v534 = vld [vmem:[%s278 + $0x3fc] sm:$0xf]
                %535 = vst [vmem:[%s279 + $0x1fc] sm:$0xf] %v534
                %v536 = vld [vmem:[%s278 + $0x600] sm:$0xf]
                %537 = vst [vmem:[%s279 + $0x200] sm:$0xf] %v536
                %v538 = vld [vmem:[%s278 + $0x604] sm:$0xf]
                %539 = vst [vmem:[%s279 + $0x204] sm:$0xf] %v538
                %v540 = vld [vmem:[%s278 + $0x608] sm:$0xf]
                %541 = vst [vmem:[%s279 + $0x208] sm:$0xf] %v540
                %v542 = vld [vmem:[%s278 + $0x60c] sm:$0xf]
                %543 = vst [vmem:[%s279 + $0x20c] sm:$0xf] %v542
                %v544 = vld [vmem:[%s278 + $0x610] sm:$0xf]
                %545 = vst [vmem:[%s279 + $0x210] sm:$0xf] %v544
                %v546 = vld [vmem:[%s278 + $0x614] sm:$0xf]
                %547 = vst [vmem:[%s279 + $0x214] sm:$0xf] %v546
                %v548 = vld [vmem:[%s278 + $0x618] sm:$0xf]
                %549 = vst [vmem:[%s279 + $0x218] sm:$0xf] %v548
                %v550 = vld [vmem:[%s278 + $0x61c] sm:$0xf]
                %551 = vst [vmem:[%s279 + $0x21c] sm:$0xf] %v550
                %v552 = vld [vmem:[%s278 + $0x620] sm:$0xf]
                %553 = vst [vmem:[%s279 + $0x220] sm:$0xf] %v552
                %v554 = vld [vmem:[%s278 + $0x624] sm:$0xf]
                %555 = vst [vmem:[%s279 + $0x224] sm:$0xf] %v554
                %v556 = vld [vmem:[%s278 + $0x628] sm:$0xf]
                %557 = vst [vmem:[%s279 + $0x228] sm:$0xf] %v556
                %v558 = vld [vmem:[%s278 + $0x62c] sm:$0xf]
                %559 = vst [vmem:[%s279 + $0x22c] sm:$0xf] %v558
                %v560 = vld [vmem:[%s278 + $0x630] sm:$0xf]
                %561 = vst [vmem:[%s279 + $0x230] sm:$0xf] %v560
                %v562 = vld [vmem:[%s278 + $0x634] sm:$0xf]
                %563 = vst [vmem:[%s279 + $0x234] sm:$0xf] %v562
                %v564 = vld [vmem:[%s278 + $0x638] sm:$0xf]
                %565 = vst [vmem:[%s279 + $0x238] sm:$0xf] %v564
                %v566 = vld [vmem:[%s278 + $0x63c] sm:$0xf]
                %567 = vst [vmem:[%s279 + $0x23c] sm:$0xf] %v566
                %v568 = vld [vmem:[%s278 + $0x640] sm:$0xf]
                %569 = vst [vmem:[%s279 + $0x240] sm:$0xf] %v568
                %v570 = vld [vmem:[%s278 + $0x644] sm:$0xf]
                %571 = vst [vmem:[%s279 + $0x244] sm:$0xf] %v570
                %v572 = vld [vmem:[%s278 + $0x648] sm:$0xf]
                %573 = vst [vmem:[%s279 + $0x248] sm:$0xf] %v572
                %v574 = vld [vmem:[%s278 + $0x64c] sm:$0xf]
                %575 = vst [vmem:[%s279 + $0x24c] sm:$0xf] %v574
                %v576 = vld [vmem:[%s278 + $0x650] sm:$0xf]
                %577 = vst [vmem:[%s279 + $0x250] sm:$0xf] %v576
                %v578 = vld [vmem:[%s278 + $0x654] sm:$0xf]
                %579 = vst [vmem:[%s279 + $0x254] sm:$0xf] %v578
                %v580 = vld [vmem:[%s278 + $0x658] sm:$0xf]
                %581 = vst [vmem:[%s279 + $0x258] sm:$0xf] %v580
                %v582 = vld [vmem:[%s278 + $0x65c] sm:$0xf]
                %583 = vst [vmem:[%s279 + $0x25c] sm:$0xf] %v582
                %v584 = vld [vmem:[%s278 + $0x660] sm:$0xf]
                %585 = vst [vmem:[%s279 + $0x260] sm:$0xf] %v584
                %v586 = vld [vmem:[%s278 + $0x664] sm:$0xf]
                %587 = vst [vmem:[%s279 + $0x264] sm:$0xf] %v586
                %v588 = vld [vmem:[%s278 + $0x668] sm:$0xf]
                %589 = vst [vmem:[%s279 + $0x268] sm:$0xf] %v588
                %v590 = vld [vmem:[%s278 + $0x66c] sm:$0xf]
                %591 = vst [vmem:[%s279 + $0x26c] sm:$0xf] %v590
                %v592 = vld [vmem:[%s278 + $0x670] sm:$0xf]
                %593 = vst [vmem:[%s279 + $0x270] sm:$0xf] %v592
                %v594 = vld [vmem:[%s278 + $0x674] sm:$0xf]
                %595 = vst [vmem:[%s279 + $0x274] sm:$0xf] %v594
                %v596 = vld [vmem:[%s278 + $0x678] sm:$0xf]
                %597 = vst [vmem:[%s279 + $0x278] sm:$0xf] %v596
                %v598 = vld [vmem:[%s278 + $0x67c] sm:$0xf]
                %599 = vst [vmem:[%s279 + $0x27c] sm:$0xf] %v598
                %v600 = vld [vmem:[%s278 + $0x680] sm:$0xf]
                %601 = vst [vmem:[%s279 + $0x280] sm:$0xf] %v600
                %v602 = vld [vmem:[%s278 + $0x684] sm:$0xf]
                %603 = vst [vmem:[%s279 + $0x284] sm:$0xf] %v602
                %v604 = vld [vmem:[%s278 + $0x688] sm:$0xf]
                %605 = vst [vmem:[%s279 + $0x288] sm:$0xf] %v604
                %v606 = vld [vmem:[%s278 + $0x68c] sm:$0xf]
                %607 = vst [vmem:[%s279 + $0x28c] sm:$0xf] %v606
                %v608 = vld [vmem:[%s278 + $0x690] sm:$0xf]
                %609 = vst [vmem:[%s279 + $0x290] sm:$0xf] %v608
                %v610 = vld [vmem:[%s278 + $0x694] sm:$0xf]
                %611 = vst [vmem:[%s279 + $0x294] sm:$0xf] %v610
                %v612 = vld [vmem:[%s278 + $0x698] sm:$0xf]
                %613 = vst [vmem:[%s279 + $0x298] sm:$0xf] %v612
                %v614 = vld [vmem:[%s278 + $0x69c] sm:$0xf]
                %615 = vst [vmem:[%s279 + $0x29c] sm:$0xf] %v614
                %v616 = vld [vmem:[%s278 + $0x6a0] sm:$0xf]
                %617 = vst [vmem:[%s279 + $0x2a0] sm:$0xf] %v616
                %v618 = vld [vmem:[%s278 + $0x6a4] sm:$0xf]
                %619 = vst [vmem:[%s279 + $0x2a4] sm:$0xf] %v618
                %v620 = vld [vmem:[%s278 + $0x6a8] sm:$0xf]
                %621 = vst [vmem:[%s279 + $0x2a8] sm:$0xf] %v620
                %v622 = vld [vmem:[%s278 + $0x6ac] sm:$0xf]
                %623 = vst [vmem:[%s279 + $0x2ac] sm:$0xf] %v622
                %v624 = vld [vmem:[%s278 + $0x6b0] sm:$0xf]
                %625 = vst [vmem:[%s279 + $0x2b0] sm:$0xf] %v624
                %v626 = vld [vmem:[%s278 + $0x6b4] sm:$0xf]
                %627 = vst [vmem:[%s279 + $0x2b4] sm:$0xf] %v626
                %v628 = vld [vmem:[%s278 + $0x6b8] sm:$0xf]
                %629 = vst [vmem:[%s279 + $0x2b8] sm:$0xf] %v628
                %v630 = vld [vmem:[%s278 + $0x6bc] sm:$0xf]
                %631 = vst [vmem:[%s279 + $0x2bc] sm:$0xf] %v630
                %v632 = vld [vmem:[%s278 + $0x6c0] sm:$0xf]
                %633 = vst [vmem:[%s279 + $0x2c0] sm:$0xf] %v632
                %v634 = vld [vmem:[%s278 + $0x6c4] sm:$0xf]
                %635 = vst [vmem:[%s279 + $0x2c4] sm:$0xf] %v634
                %v636 = vld [vmem:[%s278 + $0x6c8] sm:$0xf]
                %637 = vst [vmem:[%s279 + $0x2c8] sm:$0xf] %v636
                %v638 = vld [vmem:[%s278 + $0x6cc] sm:$0xf]
                %639 = vst [vmem:[%s279 + $0x2cc] sm:$0xf] %v638
                %v640 = vld [vmem:[%s278 + $0x6d0] sm:$0xf]
                %641 = vst [vmem:[%s279 + $0x2d0] sm:$0xf] %v640
                %v642 = vld [vmem:[%s278 + $0x6d4] sm:$0xf]
                %643 = vst [vmem:[%s279 + $0x2d4] sm:$0xf] %v642
                %v644 = vld [vmem:[%s278 + $0x6d8] sm:$0xf]
                %645 = vst [vmem:[%s279 + $0x2d8] sm:$0xf] %v644
                %v646 = vld [vmem:[%s278 + $0x6dc] sm:$0xf]
                %647 = vst [vmem:[%s279 + $0x2dc] sm:$0xf] %v646
                %v648 = vld [vmem:[%s278 + $0x6e0] sm:$0xf]
                %649 = vst [vmem:[%s279 + $0x2e0] sm:$0xf] %v648
                %v650 = vld [vmem:[%s278 + $0x6e4] sm:$0xf]
                %651 = vst [vmem:[%s279 + $0x2e4] sm:$0xf] %v650
                %v652 = vld [vmem:[%s278 + $0x6e8] sm:$0xf]
                %653 = vst [vmem:[%s279 + $0x2e8] sm:$0xf] %v652
                %v654 = vld [vmem:[%s278 + $0x6ec] sm:$0xf]
                %655 = vst [vmem:[%s279 + $0x2ec] sm:$0xf] %v654
                %v656 = vld [vmem:[%s278 + $0x6f0] sm:$0xf]
                %657 = vst [vmem:[%s279 + $0x2f0] sm:$0xf] %v656
                %v658 = vld [vmem:[%s278 + $0x6f4] sm:$0xf]
                %659 = vst [vmem:[%s279 + $0x2f4] sm:$0xf] %v658
                %v660 = vld [vmem:[%s278 + $0x6f8] sm:$0xf]
                %661 = vst [vmem:[%s279 + $0x2f8] sm:$0xf] %v660
                %v662 = vld [vmem:[%s278 + $0x6fc] sm:$0xf]
                %663 = vst [vmem:[%s279 + $0x2fc] sm:$0xf] %v662
                %v664 = vld [vmem:[%s278 + $0x900] sm:$0xf]
                %665 = vst [vmem:[%s279 + $0x300] sm:$0xf] %v664
                %v666 = vld [vmem:[%s278 + $0x904] sm:$0xf]
                %667 = vst [vmem:[%s279 + $0x304] sm:$0xf] %v666
                %v668 = vld [vmem:[%s278 + $0x908] sm:$0xf]
                %669 = vst [vmem:[%s279 + $0x308] sm:$0xf] %v668
                %v670 = vld [vmem:[%s278 + $0x90c] sm:$0xf]
                %671 = vst [vmem:[%s279 + $0x30c] sm:$0xf] %v670
                %v672 = vld [vmem:[%s278 + $0x910] sm:$0xf]
                %673 = vst [vmem:[%s279 + $0x310] sm:$0xf] %v672
                %v674 = vld [vmem:[%s278 + $0x914] sm:$0xf]
                %675 = vst [vmem:[%s279 + $0x314] sm:$0xf] %v674
                %v676 = vld [vmem:[%s278 + $0x918] sm:$0xf]
                %677 = vst [vmem:[%s279 + $0x318] sm:$0xf] %v676
                %v678 = vld [vmem:[%s278 + $0x91c] sm:$0xf]
                %679 = vst [vmem:[%s279 + $0x31c] sm:$0xf] %v678
                %v680 = vld [vmem:[%s278 + $0x920] sm:$0xf]
                %681 = vst [vmem:[%s279 + $0x320] sm:$0xf] %v680
                %v682 = vld [vmem:[%s278 + $0x924] sm:$0xf]
                %683 = vst [vmem:[%s279 + $0x324] sm:$0xf] %v682
                %v684 = vld [vmem:[%s278 + $0x928] sm:$0xf]
                %685 = vst [vmem:[%s279 + $0x328] sm:$0xf] %v684
                %v686 = vld [vmem:[%s278 + $0x92c] sm:$0xf]
                %687 = vst [vmem:[%s279 + $0x32c] sm:$0xf] %v686
                %v688 = vld [vmem:[%s278 + $0x930] sm:$0xf]
                %689 = vst [vmem:[%s279 + $0x330] sm:$0xf] %v688
                %v690 = vld [vmem:[%s278 + $0x934] sm:$0xf]
                %691 = vst [vmem:[%s279 + $0x334] sm:$0xf] %v690
                %v692 = vld [vmem:[%s278 + $0x938] sm:$0xf]
                %693 = vst [vmem:[%s279 + $0x338] sm:$0xf] %v692
                %v694 = vld [vmem:[%s278 + $0x93c] sm:$0xf]
                %695 = vst [vmem:[%s279 + $0x33c] sm:$0xf] %v694
                %v696 = vld [vmem:[%s278 + $0x940] sm:$0xf]
                %697 = vst [vmem:[%s279 + $0x340] sm:$0xf] %v696
                %v698 = vld [vmem:[%s278 + $0x944] sm:$0xf]
                %699 = vst [vmem:[%s279 + $0x344] sm:$0xf] %v698
                %v700 = vld [vmem:[%s278 + $0x948] sm:$0xf]
                %701 = vst [vmem:[%s279 + $0x348] sm:$0xf] %v700
                %v702 = vld [vmem:[%s278 + $0x94c] sm:$0xf]
                %703 = vst [vmem:[%s279 + $0x34c] sm:$0xf] %v702
                %v704 = vld [vmem:[%s278 + $0x950] sm:$0xf]
                %705 = vst [vmem:[%s279 + $0x350] sm:$0xf] %v704
                %v706 = vld [vmem:[%s278 + $0x954] sm:$0xf]
                %707 = vst [vmem:[%s279 + $0x354] sm:$0xf] %v706
                %v708 = vld [vmem:[%s278 + $0x958] sm:$0xf]
                %709 = vst [vmem:[%s279 + $0x358] sm:$0xf] %v708
                %v710 = vld [vmem:[%s278 + $0x95c] sm:$0xf]
                %711 = vst [vmem:[%s279 + $0x35c] sm:$0xf] %v710
                %v712 = vld [vmem:[%s278 + $0x960] sm:$0xf]
                %713 = vst [vmem:[%s279 + $0x360] sm:$0xf] %v712
                %v714 = vld [vmem:[%s278 + $0x964] sm:$0xf]
                %715 = vst [vmem:[%s279 + $0x364] sm:$0xf] %v714
                %v716 = vld [vmem:[%s278 + $0x968] sm:$0xf]
                %717 = vst [vmem:[%s279 + $0x368] sm:$0xf] %v716
                %v718 = vld [vmem:[%s278 + $0x96c] sm:$0xf]
                %719 = vst [vmem:[%s279 + $0x36c] sm:$0xf] %v718
                %v720 = vld [vmem:[%s278 + $0x970] sm:$0xf]
                %721 = vst [vmem:[%s279 + $0x370] sm:$0xf] %v720
                %v722 = vld [vmem:[%s278 + $0x974] sm:$0xf]
                %723 = vst [vmem:[%s279 + $0x374] sm:$0xf] %v722
                %v724 = vld [vmem:[%s278 + $0x978] sm:$0xf]
                %725 = vst [vmem:[%s279 + $0x378] sm:$0xf] %v724
                %v726 = vld [vmem:[%s278 + $0x97c] sm:$0xf]
                %727 = vst [vmem:[%s279 + $0x37c] sm:$0xf] %v726
                %v728 = vld [vmem:[%s278 + $0x980] sm:$0xf]
                %729 = vst [vmem:[%s279 + $0x380] sm:$0xf] %v728
                %v730 = vld [vmem:[%s278 + $0x984] sm:$0xf]
                %731 = vst [vmem:[%s279 + $0x384] sm:$0xf] %v730
                %v732 = vld [vmem:[%s278 + $0x988] sm:$0xf]
                %733 = vst [vmem:[%s279 + $0x388] sm:$0xf] %v732
                %v734 = vld [vmem:[%s278 + $0x98c] sm:$0xf]
                %735 = vst [vmem:[%s279 + $0x38c] sm:$0xf] %v734
                %v736 = vld [vmem:[%s278 + $0x990] sm:$0xf]
                %737 = vst [vmem:[%s279 + $0x390] sm:$0xf] %v736
                %v738 = vld [vmem:[%s278 + $0x994] sm:$0xf]
                %739 = vst [vmem:[%s279 + $0x394] sm:$0xf] %v738
                %v740 = vld [vmem:[%s278 + $0x998] sm:$0xf]
                %741 = vst [vmem:[%s279 + $0x398] sm:$0xf] %v740
                %v742 = vld [vmem:[%s278 + $0x99c] sm:$0xf]
                %743 = vst [vmem:[%s279 + $0x39c] sm:$0xf] %v742
                %v744 = vld [vmem:[%s278 + $0x9a0] sm:$0xf]
                %745 = vst [vmem:[%s279 + $0x3a0] sm:$0xf] %v744
                %v746 = vld [vmem:[%s278 + $0x9a4] sm:$0xf]
                %747 = vst [vmem:[%s279 + $0x3a4] sm:$0xf] %v746
                %v748 = vld [vmem:[%s278 + $0x9a8] sm:$0xf]
                %749 = vst [vmem:[%s279 + $0x3a8] sm:$0xf] %v748
                %v750 = vld [vmem:[%s278 + $0x9ac] sm:$0xf]
                %751 = vst [vmem:[%s279 + $0x3ac] sm:$0xf] %v750
                %v752 = vld [vmem:[%s278 + $0x9b0] sm:$0xf]
                %753 = vst [vmem:[%s279 + $0x3b0] sm:$0xf] %v752
                %v754 = vld [vmem:[%s278 + $0x9b4] sm:$0xf]
                %755 = vst [vmem:[%s279 + $0x3b4] sm:$0xf] %v754
                %v756 = vld [vmem:[%s278 + $0x9b8] sm:$0xf]
                %757 = vst [vmem:[%s279 + $0x3b8] sm:$0xf] %v756
                %v758 = vld [vmem:[%s278 + $0x9bc] sm:$0xf]
                %759 = vst [vmem:[%s279 + $0x3bc] sm:$0xf] %v758
                %v760 = vld [vmem:[%s278 + $0x9c0] sm:$0xf]
                %761 = vst [vmem:[%s279 + $0x3c0] sm:$0xf] %v760
                %v762 = vld [vmem:[%s278 + $0x9c4] sm:$0xf]
                %763 = vst [vmem:[%s279 + $0x3c4] sm:$0xf] %v762
                %v764 = vld [vmem:[%s278 + $0x9c8] sm:$0xf]
                %765 = vst [vmem:[%s279 + $0x3c8] sm:$0xf] %v764
                %v766 = vld [vmem:[%s278 + $0x9cc] sm:$0xf]
                %767 = vst [vmem:[%s279 + $0x3cc] sm:$0xf] %v766
                %v768 = vld [vmem:[%s278 + $0x9d0] sm:$0xf]
                %769 = vst [vmem:[%s279 + $0x3d0] sm:$0xf] %v768
                %v770 = vld [vmem:[%s278 + $0x9d4] sm:$0xf]
                %771 = vst [vmem:[%s279 + $0x3d4] sm:$0xf] %v770
                %v772 = vld [vmem:[%s278 + $0x9d8] sm:$0xf]
                %773 = vst [vmem:[%s279 + $0x3d8] sm:$0xf] %v772
                %v774 = vld [vmem:[%s278 + $0x9dc] sm:$0xf]
                %775 = vst [vmem:[%s279 + $0x3dc] sm:$0xf] %v774
                %v776 = vld [vmem:[%s278 + $0x9e0] sm:$0xf]
                %777 = vst [vmem:[%s279 + $0x3e0] sm:$0xf] %v776
                %v778 = vld [vmem:[%s278 + $0x9e4] sm:$0xf]
                %779 = vst [vmem:[%s279 + $0x3e4] sm:$0xf] %v778
                %v780 = vld [vmem:[%s278 + $0x9e8] sm:$0xf]
                %781 = vst [vmem:[%s279 + $0x3e8] sm:$0xf] %v780
                %v782 = vld [vmem:[%s278 + $0x9ec] sm:$0xf]
                %783 = vst [vmem:[%s279 + $0x3ec] sm:$0xf] %v782
                %v784 = vld [vmem:[%s278 + $0x9f0] sm:$0xf]
                %785 = vst [vmem:[%s279 + $0x3f0] sm:$0xf] %v784
                %v786 = vld [vmem:[%s278 + $0x9f4] sm:$0xf]
                %787 = vst [vmem:[%s279 + $0x3f4] sm:$0xf] %v786
                %v788 = vld [vmem:[%s278 + $0x9f8] sm:$0xf]
                %789 = vst [vmem:[%s279 + $0x3f8] sm:$0xf] %v788
                %v790 = vld [vmem:[%s278 + $0x9fc] sm:$0xf]
                %791 = vst [vmem:[%s279 + $0x3fc] sm:$0xf] %v790
              $region61: #{liif_forward.3} parent=55 // loop_footer
                %s277 = sadd.s32 1, %s273
              $region62: #{liif_forward.3} parent=55 // loop_footer_branch
                %272 = sbr.rel target = $region58
              $region63: #{liif_forward.3} parent=55 // loop_exit
                _
            $region56: #{liif_forward.3} parent=47 // pred_fallthru
              _
          $region48: #{liif_forward.3} parent=43 // pred_fallthru
            _
          %1323 = vnop
        $region44: #{liif_forward.3} parent=39 // pred_fallthru
          _
        // Predicated region
        $region82: #{liif_forward.3} parent=39 // pred_check
          %p1324 = pneg %p60
        $region83: #{liif_forward.3} parent=39 // pred_check_branch
          %1326 = sbr.rel (%p1324) target = $region85
        $region84: #{liif_forward.3} parent=39 // pred_region
          %s1327 = smul.u32 64, %s14
          %p1328 = scmp.lt.s32.totalorder %s1327, 191
          %s1329 = scalar_select %p1328, %s1327, 191
          %s1330 = smul.addr %s1329, 8
          %s1331 = scalar_lea.vmem %s1, %s1330
          %s1332 = smul.u32 64, %s14
        $region85: #{liif_forward.3} parent=39 // pred_fallthru
          _
      $region40: #{liif_forward.3} parent=5 // pred_fallthru
        _
      %p1333 = scmp.le.s32.totalorder 1, %s14
      %p1334 = scmp.lt.s32.totalorder %s14, 4
      %p1335 = pnand %p1333, %p1334
      %p1336 = pneg %p1335
      // Predicated region
      $region86: #{liif_forward.3} parent=5 // pred_check
        _
      $region87: #{liif_forward.3} parent=5 // pred_check_branch
        %1338 = sbr.rel (%p1335) target = $region89
      $region88: #{liif_forward.3} parent=5 // pred_region
        %s1339 = ssub.s32 %s14, 1
        %s1340 = sand.u32 %s27, 1
        %s1341 = sand.u32 %s27, 1
        %s1342 = smul.addr %s1341, 1024
        %s1343 = scalar_lea.vmem [#allocation2], %s1342
        // Predicated region
        $region90: #{liif_forward.3} parent=88 // pred_check
          %p1344 = pneg %p40
        $region91: #{liif_forward.3} parent=88 // pred_check_branch
          %1346 = sbr.rel (%p1344) target = $region93
        $region92: #{liif_forward.3} parent=88 // pred_region
          _
        $region93: #{liif_forward.3} parent=88 // pred_fallthru
          _
        %s1347 = sand.u32 %s27, 1
        %s1348 = sand.u32 %s27, 1
        %s1349 = smul.addr %s1348, 1024
        %s1350 = scalar_lea.vmem [#allocation2], %s1349
        %p1351 = pneg %p40
        %p1352 = pneg %p37
        %s1353 = smul.u32 64, %s19
        %p1354 = scmp.lt.s32.totalorder %s1353, 191
        %s1355 = scalar_select %p1354, %s1353, 191
        %s1356 = smul.addr %s1355, 8
        %s1357 = scalar_lea.vmem %s1, %s1356
        %p1358 = pneg %p66
        %p1359 = pneg %p63
        %p1360 = pneg %p87
        %p1361 = pneg %p84
        %p1362 = pneg %p108
        %p1363 = pneg %p105
        %p1364 = pneg %p129
        %p1365 = pneg %p126
        %p1366 = pneg %p150
        %p1367 = pneg %p147
        %p1368 = pneg %p171
        %p1369 = pneg %p168
        %p1370 = pneg %p192
        %p1371 = pneg %p189
        %p1372 = pneg %p218
        %p1373 = pneg %p215
        %s1374 = smul.u32 64, %s19
        %p1375 = scmp.lt.s32.totalorder %s1374, 191
        %s1376 = scalar_select %p1375, %s1374, 191
        %s1377 = smul.addr %s1376, 8
        %s1378 = scalar_lea.vmem %s8, %s1377
        %s1379 = smul.u32 64, %s19
        %s1380 = smul.u32 64, %s19
        %p1381 = scmp.lt.s32.totalorder %s1380, 191
        %s1382 = scalar_select %p1381, %s1380, 191
        %s1383 = smul.addr %s1382, 8
        %s1384 = scalar_lea.vmem %s1, %s1383
        %s1385 = smul.u32 64, %s19
        %s1386 = smul.u32 64, %s19
        %p1387 = scmp.lt.s32.totalorder %s1386, 191
        %s1388 = scalar_select %p1387, %s1386, 191
        %s1389 = smul.addr %s1388, 8
        %s1390 = scalar_lea.vmem %s8, %s1389
        %s1391 = smul.u32 64, %s19
        %v1393 = vld [vmem:[%s1343] sm:$0xf]
        %v1394 = vld [vmem:[%s1343 + $0x4] sm:$0xf]
        %v1395 = vld [vmem:[%s1343 + $0x8] sm:$0xf]
        %v1396 = vld [vmem:[%s1343 + $0xc] sm:$0xf]
        %v1397 = vld [vmem:[%s1343 + $0x10] sm:$0xf]
        %v1398 = vld [vmem:[%s1343 + $0x14] sm:$0xf]
        %v1399 = vld [vmem:[%s1343 + $0x18] sm:$0xf]
        %v1400 = vld [vmem:[%s1343 + $0x1c] sm:$0xf]
        %v1401 = vld [vmem:[%s1343 + $0x20] sm:$0xf]
        %v1402 = vld [vmem:[%s1343 + $0x24] sm:$0xf]
        %v1403 = vld [vmem:[%s1343 + $0x28] sm:$0xf]
        %v1404 = vld [vmem:[%s1343 + $0x2c] sm:$0xf]
        %v1405 = vld [vmem:[%s1343 + $0x30] sm:$0xf]
        %v1406 = vld [vmem:[%s1343 + $0x34] sm:$0xf]
        %v1407 = vld [vmem:[%s1343 + $0x38] sm:$0xf]
        %v1408 = vld [vmem:[%s1343 + $0x3c] sm:$0xf]
        %v1409 = vld [vmem:[%s1343 + $0x40] sm:$0xf]
        %v1410 = vld [vmem:[%s1343 + $0x44] sm:$0xf]
        %v1411 = vld [vmem:[%s1343 + $0x48] sm:$0xf]
        %v1412 = vld [vmem:[%s1343 + $0x4c] sm:$0xf]
        %v1413 = vld [vmem:[%s1343 + $0x50] sm:$0xf]
        %v1414 = vld [vmem:[%s1343 + $0x54] sm:$0xf]
        %v1415 = vld [vmem:[%s1343 + $0x58] sm:$0xf]
        %v1416 = vld [vmem:[%s1343 + $0x5c] sm:$0xf]
        %v1417 = vld [vmem:[%s1343 + $0x60] sm:$0xf]
        %v1418 = vld [vmem:[%s1343 + $0x64] sm:$0xf]
        %v1419 = vld [vmem:[%s1343 + $0x68] sm:$0xf]
        %v1420 = vld [vmem:[%s1343 + $0x6c] sm:$0xf]
        %v1421 = vld [vmem:[%s1343 + $0x70] sm:$0xf]
        %v1422 = vld [vmem:[%s1343 + $0x74] sm:$0xf]
        %v1423 = vld [vmem:[%s1343 + $0x78] sm:$0xf]
        %v1424 = vld [vmem:[%s1343 + $0x7c] sm:$0xf]
        %v1425 = vld [vmem:[%s1343 + $0x80] sm:$0xf]
        %v1426 = vld [vmem:[%s1343 + $0x84] sm:$0xf]
        %v1427 = vld [vmem:[%s1343 + $0x88] sm:$0xf]
        %v1428 = vld [vmem:[%s1343 + $0x8c] sm:$0xf]
        %v1429 = vld [vmem:[%s1343 + $0x90] sm:$0xf]
        %v1430 = vld [vmem:[%s1343 + $0x94] sm:$0xf]
        %v1431 = vld [vmem:[%s1343 + $0x98] sm:$0xf]
        %v1432 = vld [vmem:[%s1343 + $0x9c] sm:$0xf]
        %v1433 = vld [vmem:[%s1343 + $0xa0] sm:$0xf]
        %v1434 = vld [vmem:[%s1343 + $0xa4] sm:$0xf]
        %v1435 = vld [vmem:[%s1343 + $0xa8] sm:$0xf]
        %v1436 = vld [vmem:[%s1343 + $0xac] sm:$0xf]
        %v1437 = vld [vmem:[%s1343 + $0xb0] sm:$0xf]
        %v1438 = vld [vmem:[%s1343 + $0xb4] sm:$0xf]
        %v1439 = vld [vmem:[%s1343 + $0xb8] sm:$0xf]
        %v1440 = vld [vmem:[%s1343 + $0xbc] sm:$0xf]
        %v1441 = vld [vmem:[%s1343 + $0xc0] sm:$0xf]
        %v1442 = vld [vmem:[%s1343 + $0xc4] sm:$0xf]
        %v1443 = vld [vmem:[%s1343 + $0xc8] sm:$0xf]
        %v1444 = vld [vmem:[%s1343 + $0xcc] sm:$0xf]
        %v1445 = vld [vmem:[%s1343 + $0xd0] sm:$0xf]
        %v1446 = vld [vmem:[%s1343 + $0xd4] sm:$0xf]
        %v1447 = vld [vmem:[%s1343 + $0xd8] sm:$0xf]
        %v1448 = vld [vmem:[%s1343 + $0xdc] sm:$0xf]
        %v1449 = vld [vmem:[%s1343 + $0xe0] sm:$0xf]
        %v1450 = vld [vmem:[%s1343 + $0xe4] sm:$0xf]
        %v1451 = vld [vmem:[%s1343 + $0xe8] sm:$0xf]
        %v1452 = vld [vmem:[%s1343 + $0xec] sm:$0xf]
        %v1453 = vld [vmem:[%s1343 + $0xf0] sm:$0xf]
        %v1454 = vld [vmem:[%s1343 + $0xf4] sm:$0xf]
        %v1455 = vld [vmem:[%s1343 + $0xf8] sm:$0xf]
        %v1456 = vld [vmem:[%s1343 + $0xfc] sm:$0xf]
        %v1457 = vld [vmem:[%s1343 + $0x100] sm:$0xf]
        %v1458 = vld [vmem:[%s1343 + $0x104] sm:$0xf]
        %v1459 = vld [vmem:[%s1343 + $0x108] sm:$0xf]
        %v1460 = vld [vmem:[%s1343 + $0x10c] sm:$0xf]
        %v1461 = vld [vmem:[%s1343 + $0x110] sm:$0xf]
        %v1462 = vld [vmem:[%s1343 + $0x114] sm:$0xf]
        %v1463 = vld [vmem:[%s1343 + $0x118] sm:$0xf]
        %v1464 = vld [vmem:[%s1343 + $0x11c] sm:$0xf]
        %v1465 = vld [vmem:[%s1343 + $0x120] sm:$0xf]
        %v1466 = vld [vmem:[%s1343 + $0x124] sm:$0xf]
        %v1467 = vld [vmem:[%s1343 + $0x128] sm:$0xf]
        %v1468 = vld [vmem:[%s1343 + $0x12c] sm:$0xf]
        %v1469 = vld [vmem:[%s1343 + $0x130] sm:$0xf]
        %v1470 = vld [vmem:[%s1343 + $0x134] sm:$0xf]
        %v1471 = vld [vmem:[%s1343 + $0x138] sm:$0xf]
        %v1472 = vld [vmem:[%s1343 + $0x13c] sm:$0xf]
        %v1473 = vld [vmem:[%s1343 + $0x140] sm:$0xf]
        %v1474 = vld [vmem:[%s1343 + $0x144] sm:$0xf]
        %v1475 = vld [vmem:[%s1343 + $0x148] sm:$0xf]
        %v1476 = vld [vmem:[%s1343 + $0x14c] sm:$0xf]
        %v1477 = vld [vmem:[%s1343 + $0x150] sm:$0xf]
        %v1478 = vld [vmem:[%s1343 + $0x154] sm:$0xf]
        %v1479 = vld [vmem:[%s1343 + $0x158] sm:$0xf]
        %v1480 = vld [vmem:[%s1343 + $0x15c] sm:$0xf]
        %v1481 = vld [vmem:[%s1343 + $0x160] sm:$0xf]
        %v1482 = vld [vmem:[%s1343 + $0x164] sm:$0xf]
        %v1483 = vld [vmem:[%s1343 + $0x168] sm:$0xf]
        %v1484 = vld [vmem:[%s1343 + $0x16c] sm:$0xf]
        %v1485 = vld [vmem:[%s1343 + $0x170] sm:$0xf]
        %v1486 = vld [vmem:[%s1343 + $0x174] sm:$0xf]
        %v1487 = vld [vmem:[%s1343 + $0x178] sm:$0xf]
        %v1488 = vld [vmem:[%s1343 + $0x17c] sm:$0xf]
        %v1489 = vld [vmem:[%s1343 + $0x180] sm:$0xf]
        %v1490 = vld [vmem:[%s1343 + $0x184] sm:$0xf]
        %v1491 = vld [vmem:[%s1343 + $0x188] sm:$0xf]
        %v1492 = vld [vmem:[%s1343 + $0x18c] sm:$0xf]
        %v1493 = vld [vmem:[%s1343 + $0x190] sm:$0xf]
        %v1494 = vld [vmem:[%s1343 + $0x194] sm:$0xf]
        %v1495 = vld [vmem:[%s1343 + $0x198] sm:$0xf]
        %v1496 = vld [vmem:[%s1343 + $0x19c] sm:$0xf]
        %v1497 = vld [vmem:[%s1343 + $0x1a0] sm:$0xf]
        %v1498 = vld [vmem:[%s1343 + $0x1a4] sm:$0xf]
        %v1499 = vld [vmem:[%s1343 + $0x1a8] sm:$0xf]
        %v1500 = vld [vmem:[%s1343 + $0x1ac] sm:$0xf]
        %v1501 = vld [vmem:[%s1343 + $0x1b0] sm:$0xf]
        %v1502 = vld [vmem:[%s1343 + $0x1b4] sm:$0xf]
        %v1503 = vld [vmem:[%s1343 + $0x1b8] sm:$0xf]
        %v1504 = vld [vmem:[%s1343 + $0x1bc] sm:$0xf]
        %v1505 = vld [vmem:[%s1343 + $0x1c0] sm:$0xf]
        %v1506 = vld [vmem:[%s1343 + $0x1c4] sm:$0xf]
        %v1507 = vld [vmem:[%s1343 + $0x1c8] sm:$0xf]
        %v1508 = vld [vmem:[%s1343 + $0x1cc] sm:$0xf]
        %v1509 = vld [vmem:[%s1343 + $0x1d0] sm:$0xf]
        %v1510 = vld [vmem:[%s1343 + $0x1d4] sm:$0xf]
        %v1511 = vld [vmem:[%s1343 + $0x1d8] sm:$0xf]
        %v1512 = vld [vmem:[%s1343 + $0x1dc] sm:$0xf]
        %v1513 = vld [vmem:[%s1343 + $0x1e0] sm:$0xf]
        %v1514 = vld [vmem:[%s1343 + $0x1e4] sm:$0xf]
        %v1515 = vld [vmem:[%s1343 + $0x1e8] sm:$0xf]
        %v1516 = vld [vmem:[%s1343 + $0x1ec] sm:$0xf]
        %v1517 = vld [vmem:[%s1343 + $0x1f0] sm:$0xf]
        %v1518 = vld [vmem:[%s1343 + $0x1f4] sm:$0xf]
        %v1519 = vld [vmem:[%s1343 + $0x1f8] sm:$0xf]
        %v1520 = vld [vmem:[%s1343 + $0x1fc] sm:$0xf]
        %v1521 = vld [vmem:[%s1343 + $0x200] sm:$0xf]
        %v1522 = vld [vmem:[%s1343 + $0x204] sm:$0xf]
        %v1523 = vld [vmem:[%s1343 + $0x208] sm:$0xf]
        %v1524 = vld [vmem:[%s1343 + $0x20c] sm:$0xf]
        %v1525 = vld [vmem:[%s1343 + $0x210] sm:$0xf]
        %v1526 = vld [vmem:[%s1343 + $0x214] sm:$0xf]
        %v1527 = vld [vmem:[%s1343 + $0x218] sm:$0xf]
        %v1528 = vld [vmem:[%s1343 + $0x21c] sm:$0xf]
        %v1529 = vld [vmem:[%s1343 + $0x220] sm:$0xf]
        %v1530 = vld [vmem:[%s1343 + $0x224] sm:$0xf]
        %v1531 = vld [vmem:[%s1343 + $0x228] sm:$0xf]
        %v1532 = vld [vmem:[%s1343 + $0x22c] sm:$0xf]
        %v1533 = vld [vmem:[%s1343 + $0x230] sm:$0xf]
        %v1534 = vld [vmem:[%s1343 + $0x234] sm:$0xf]
        %v1535 = vld [vmem:[%s1343 + $0x238] sm:$0xf]
        %v1536 = vld [vmem:[%s1343 + $0x23c] sm:$0xf]
        %v1537 = vld [vmem:[%s1343 + $0x240] sm:$0xf]
        %v1538 = vld [vmem:[%s1343 + $0x244] sm:$0xf]
        %v1539 = vld [vmem:[%s1343 + $0x248] sm:$0xf]
        %v1540 = vld [vmem:[%s1343 + $0x24c] sm:$0xf]
        %v1541 = vld [vmem:[%s1343 + $0x250] sm:$0xf]
        %v1542 = vld [vmem:[%s1343 + $0x254] sm:$0xf]
        %v1543 = vld [vmem:[%s1343 + $0x258] sm:$0xf]
        %v1544 = vld [vmem:[%s1343 + $0x25c] sm:$0xf]
        %v1545 = vld [vmem:[%s1343 + $0x260] sm:$0xf]
        %v1546 = vld [vmem:[%s1343 + $0x264] sm:$0xf]
        %v1547 = vld [vmem:[%s1343 + $0x268] sm:$0xf]
        %v1548 = vld [vmem:[%s1343 + $0x26c] sm:$0xf]
        %v1549 = vld [vmem:[%s1343 + $0x270] sm:$0xf]
        %v1550 = vld [vmem:[%s1343 + $0x274] sm:$0xf]
        %v1551 = vld [vmem:[%s1343 + $0x278] sm:$0xf]
        %v1552 = vld [vmem:[%s1343 + $0x27c] sm:$0xf]
        %v1553 = vld [vmem:[%s1343 + $0x280] sm:$0xf]
        %v1554 = vld [vmem:[%s1343 + $0x284] sm:$0xf]
        %v1555 = vld [vmem:[%s1343 + $0x288] sm:$0xf]
        %v1556 = vld [vmem:[%s1343 + $0x28c] sm:$0xf]
        %v1557 = vld [vmem:[%s1343 + $0x290] sm:$0xf]
        %v1558 = vld [vmem:[%s1343 + $0x294] sm:$0xf]
        %v1559 = vld [vmem:[%s1343 + $0x298] sm:$0xf]
        %v1560 = vld [vmem:[%s1343 + $0x29c] sm:$0xf]
        %v1561 = vld [vmem:[%s1343 + $0x2a0] sm:$0xf]
        %v1562 = vld [vmem:[%s1343 + $0x2a4] sm:$0xf]
        %v1563 = vld [vmem:[%s1343 + $0x2a8] sm:$0xf]
        %v1564 = vld [vmem:[%s1343 + $0x2ac] sm:$0xf]
        %v1565 = vld [vmem:[%s1343 + $0x2b0] sm:$0xf]
        %v1566 = vld [vmem:[%s1343 + $0x2b4] sm:$0xf]
        %v1567 = vld [vmem:[%s1343 + $0x2b8] sm:$0xf]
        %v1568 = vld [vmem:[%s1343 + $0x2bc] sm:$0xf]
        %v1569 = vld [vmem:[%s1343 + $0x2c0] sm:$0xf]
        %v1570 = vld [vmem:[%s1343 + $0x2c4] sm:$0xf]
        %v1571 = vld [vmem:[%s1343 + $0x2c8] sm:$0xf]
        %v1572 = vld [vmem:[%s1343 + $0x2cc] sm:$0xf]
        %v1573 = vld [vmem:[%s1343 + $0x2d0] sm:$0xf]
        %v1574 = vld [vmem:[%s1343 + $0x2d4] sm:$0xf]
        %v1575 = vld [vmem:[%s1343 + $0x2d8] sm:$0xf]
        %v1576 = vld [vmem:[%s1343 + $0x2dc] sm:$0xf]
        %v1577 = vld [vmem:[%s1343 + $0x2e0] sm:$0xf]
        %v1578 = vld [vmem:[%s1343 + $0x2e4] sm:$0xf]
        %v1579 = vld [vmem:[%s1343 + $0x2e8] sm:$0xf]
        %v1580 = vld [vmem:[%s1343 + $0x2ec] sm:$0xf]
        %v1581 = vld [vmem:[%s1343 + $0x2f0] sm:$0xf]
        %v1582 = vld [vmem:[%s1343 + $0x2f4] sm:$0xf]
        %v1583 = vld [vmem:[%s1343 + $0x2f8] sm:$0xf]
        %v1584 = vld [vmem:[%s1343 + $0x2fc] sm:$0xf]
        %v1585 = vld [vmem:[%s1343 + $0x300] sm:$0xf]
        %v1586 = vld [vmem:[%s1343 + $0x304] sm:$0xf]
        %v1587 = vld [vmem:[%s1343 + $0x308] sm:$0xf]
        %v1588 = vld [vmem:[%s1343 + $0x30c] sm:$0xf]
        %v1589 = vld [vmem:[%s1343 + $0x310] sm:$0xf]
        %v1590 = vld [vmem:[%s1343 + $0x314] sm:$0xf]
        %v1591 = vld [vmem:[%s1343 + $0x318] sm:$0xf]
        %v1592 = vld [vmem:[%s1343 + $0x31c] sm:$0xf]
        %v1593 = vld [vmem:[%s1343 + $0x320] sm:$0xf]
        %v1594 = vld [vmem:[%s1343 + $0x324] sm:$0xf]
        %v1595 = vld [vmem:[%s1343 + $0x328] sm:$0xf]
        %v1596 = vld [vmem:[%s1343 + $0x32c] sm:$0xf]
        %v1597 = vld [vmem:[%s1343 + $0x330] sm:$0xf]
        %v1598 = vld [vmem:[%s1343 + $0x334] sm:$0xf]
        %v1599 = vld [vmem:[%s1343 + $0x338] sm:$0xf]
        %v1600 = vld [vmem:[%s1343 + $0x33c] sm:$0xf]
        %v1601 = vld [vmem:[%s1343 + $0x340] sm:$0xf]
        %v1602 = vld [vmem:[%s1343 + $0x344] sm:$0xf]
        %v1603 = vld [vmem:[%s1343 + $0x348] sm:$0xf]
        %v1604 = vld [vmem:[%s1343 + $0x34c] sm:$0xf]
        %v1605 = vld [vmem:[%s1343 + $0x350] sm:$0xf]
        %v1606 = vld [vmem:[%s1343 + $0x354] sm:$0xf]
        %v1607 = vld [vmem:[%s1343 + $0x358] sm:$0xf]
        %v1608 = vld [vmem:[%s1343 + $0x35c] sm:$0xf]
        %v1609 = vld [vmem:[%s1343 + $0x360] sm:$0xf]
        %v1610 = vld [vmem:[%s1343 + $0x364] sm:$0xf]
        %v1611 = vld [vmem:[%s1343 + $0x368] sm:$0xf]
        %v1612 = vld [vmem:[%s1343 + $0x36c] sm:$0xf]
        %v1613 = vld [vmem:[%s1343 + $0x370] sm:$0xf]
        %v1614 = vld [vmem:[%s1343 + $0x374] sm:$0xf]
        %v1615 = vld [vmem:[%s1343 + $0x378] sm:$0xf]
        %v1616 = vld [vmem:[%s1343 + $0x37c] sm:$0xf]
        %v1617 = vld [vmem:[%s1343 + $0x380] sm:$0xf]
        %v1618 = vld [vmem:[%s1343 + $0x384] sm:$0xf]
        %v1619 = vld [vmem:[%s1343 + $0x388] sm:$0xf]
        %v1620 = vld [vmem:[%s1343 + $0x38c] sm:$0xf]
        %v1621 = vld [vmem:[%s1343 + $0x390] sm:$0xf]
        %v1622 = vld [vmem:[%s1343 + $0x394] sm:$0xf]
        %v1623 = vld [vmem:[%s1343 + $0x398] sm:$0xf]
        %v1624 = vld [vmem:[%s1343 + $0x39c] sm:$0xf]
        %v1625 = vld [vmem:[%s1343 + $0x3a0] sm:$0xf]
        %v1626 = vld [vmem:[%s1343 + $0x3a4] sm:$0xf]
        %v1627 = vld [vmem:[%s1343 + $0x3a8] sm:$0xf]
        %v1628 = vld [vmem:[%s1343 + $0x3ac] sm:$0xf]
        %v1629 = vld [vmem:[%s1343 + $0x3b0] sm:$0xf]
        %v1630 = vld [vmem:[%s1343 + $0x3b4] sm:$0xf]
        %v1631 = vld [vmem:[%s1343 + $0x3b8] sm:$0xf]
        %v1632 = vld [vmem:[%s1343 + $0x3bc] sm:$0xf]
        %v1633 = vld [vmem:[%s1343 + $0x3c0] sm:$0xf]
        %v1634 = vld [vmem:[%s1343 + $0x3c4] sm:$0xf]
        %v1635 = vld [vmem:[%s1343 + $0x3c8] sm:$0xf]
        %v1636 = vld [vmem:[%s1343 + $0x3cc] sm:$0xf]
        %v1637 = vld [vmem:[%s1343 + $0x3d0] sm:$0xf]
        %v1638 = vld [vmem:[%s1343 + $0x3d4] sm:$0xf]
        %v1639 = vld [vmem:[%s1343 + $0x3d8] sm:$0xf]
        %v1640 = vld [vmem:[%s1343 + $0x3dc] sm:$0xf]
        %v1641 = vld [vmem:[%s1343 + $0x3e0] sm:$0xf]
        %v1642 = vld [vmem:[%s1343 + $0x3e4] sm:$0xf]
        %v1643 = vld [vmem:[%s1343 + $0x3e8] sm:$0xf]
        %v1644 = vld [vmem:[%s1343 + $0x3ec] sm:$0xf]
        %v1645 = vld [vmem:[%s1343 + $0x3f0] sm:$0xf]
        %v1646 = vld [vmem:[%s1343 + $0x3f4] sm:$0xf]
        %v1647 = vld [vmem:[%s1343 + $0x3f8] sm:$0xf]
        %v1648 = vld [vmem:[%s1343 + $0x3fc] sm:$0xf]
        %v1649 = vld [vmem:[%s2] sm:$0xf]
        %v1650 = vld [vmem:[%s2 + $0x4] sm:$0xf]
        %v1651 = vld [vmem:[%s2 + $0x8] sm:$0xf]
        %v1652 = vld [vmem:[%s2 + $0xc] sm:$0xf]
        %v1653 = vld [vmem:[%s2 + $0x10] sm:$0xf]
        %v1654 = vld [vmem:[%s2 + $0x14] sm:$0xf]
        %v1655 = vld [vmem:[%s2 + $0x18] sm:$0xf]
        %v1656 = vld [vmem:[%s2 + $0x1c] sm:$0xf]
        %v1657 = vld [vmem:[%s2 + $0x20] sm:$0xf]
        %v1658 = vld [vmem:[%s2 + $0x24] sm:$0x3]
        %v1659 = vld [vmem:[%s3] sm:$0x1]
        %v1661 = vlaneseq
        %v1662 = vshrl.u32 %v1661, 7
        %v1663 = vsub.s32 0, %v1662
        %v1664 = vrot.slane %v1659, %v1663
        %v1922 = vunpack.c.l.b16 %v1393
        %v1923 = vunpack.c.l.b16 %v1394
        %v1924 = vunpack.c.l.b16 %v1395
        %v1925 = vunpack.c.l.b16 %v1396
        %v1926 = vunpack.c.l.b16 %v1397
        %v1927 = vunpack.c.l.b16 %v1398
        %v1928 = vunpack.c.l.b16 %v1399
        %v1929 = vunpack.c.l.b16 %v1400
        %v1930 = vunpack.c.l.b16 %v1401
        %v1931 = vunpack.c.l.b16 %v1402
        %v1932 = vunpack.c.l.b16 %v1403
        %v1933 = vunpack.c.l.b16 %v1404
        %v1934 = vunpack.c.l.b16 %v1405
        %v1935 = vunpack.c.l.b16 %v1406
        %v1936 = vunpack.c.l.b16 %v1407
        %v1937 = vunpack.c.l.b16 %v1408
        %v1938 = vunpack.c.l.b16 %v1409
        %v1939 = vunpack.c.l.b16 %v1410
        %v1940 = vunpack.c.l.b16 %v1411
        %v1941 = vunpack.c.l.b16 %v1412
        %v1942 = vunpack.c.l.b16 %v1413
        %v1943 = vunpack.c.l.b16 %v1414
        %v1944 = vunpack.c.l.b16 %v1415
        %v1945 = vunpack.c.l.b16 %v1416
        %v1946 = vunpack.c.l.b16 %v1417
        %v1947 = vunpack.c.l.b16 %v1418
        %v1948 = vunpack.c.l.b16 %v1419
        %v1949 = vunpack.c.l.b16 %v1420
        %v1950 = vunpack.c.l.b16 %v1421
        %v1951 = vunpack.c.l.b16 %v1422
        %v1952 = vunpack.c.l.b16 %v1423
        %v1953 = vunpack.c.l.b16 %v1424
        %v1954 = vunpack.c.l.b16 %v1425
        %v1955 = vunpack.c.l.b16 %v1426
        %v1956 = vunpack.c.l.b16 %v1427
        %v1957 = vunpack.c.l.b16 %v1428
        %v1958 = vunpack.c.l.b16 %v1429
        %v1959 = vunpack.c.l.b16 %v1430
        %v1960 = vunpack.c.l.b16 %v1431
        %v1961 = vunpack.c.l.b16 %v1432
        %v1962 = vunpack.c.l.b16 %v1433
        %v1963 = vunpack.c.l.b16 %v1434
        %v1964 = vunpack.c.l.b16 %v1435
        %v1965 = vunpack.c.l.b16 %v1436
        %v1966 = vunpack.c.l.b16 %v1437
        %v1967 = vunpack.c.l.b16 %v1438
        %v1968 = vunpack.c.l.b16 %v1439
        %v1969 = vunpack.c.l.b16 %v1440
        %v1970 = vunpack.c.l.b16 %v1441
        %v1971 = vunpack.c.l.b16 %v1442
        %v1972 = vunpack.c.l.b16 %v1443
        %v1973 = vunpack.c.l.b16 %v1444
        %v1974 = vunpack.c.l.b16 %v1445
        %v1975 = vunpack.c.l.b16 %v1446
        %v1976 = vunpack.c.l.b16 %v1447
        %v1977 = vunpack.c.l.b16 %v1448
        %v1978 = vunpack.c.l.b16 %v1449
        %v1979 = vunpack.c.l.b16 %v1450
        %v1980 = vunpack.c.l.b16 %v1451
        %v1981 = vunpack.c.l.b16 %v1452
        %v1982 = vunpack.c.l.b16 %v1453
        %v1983 = vunpack.c.l.b16 %v1454
        %v1984 = vunpack.c.l.b16 %v1455
        %v1985 = vunpack.c.l.b16 %v1456
        %v1986 = vunpack.c.l.b16 %v1457
        %v1987 = vunpack.c.l.b16 %v1458
        %v1988 = vunpack.c.l.b16 %v1459
        %v1989 = vunpack.c.l.b16 %v1460
        %v1990 = vunpack.c.l.b16 %v1461
        %v1991 = vunpack.c.l.b16 %v1462
        %v1992 = vunpack.c.l.b16 %v1463
        %v1993 = vunpack.c.l.b16 %v1464
        %v1994 = vunpack.c.l.b16 %v1465
        %v1995 = vunpack.c.l.b16 %v1466
        %v1996 = vunpack.c.l.b16 %v1467
        %v1997 = vunpack.c.l.b16 %v1468
        %v1998 = vunpack.c.l.b16 %v1469
        %v1999 = vunpack.c.l.b16 %v1470
        %v2000 = vunpack.c.l.b16 %v1471
        %v2001 = vunpack.c.l.b16 %v1472
        %v2002 = vunpack.c.l.b16 %v1473
        %v2003 = vunpack.c.l.b16 %v1474
        %v2004 = vunpack.c.l.b16 %v1475
        %v2005 = vunpack.c.l.b16 %v1476
        %v2006 = vunpack.c.l.b16 %v1477
        %v2007 = vunpack.c.l.b16 %v1478
        %v2008 = vunpack.c.l.b16 %v1479
        %v2009 = vunpack.c.l.b16 %v1480
        %v2010 = vunpack.c.l.b16 %v1481
        %v2011 = vunpack.c.l.b16 %v1482
        %v2012 = vunpack.c.l.b16 %v1483
        %v2013 = vunpack.c.l.b16 %v1484
        %v2014 = vunpack.c.l.b16 %v1485
        %v2015 = vunpack.c.l.b16 %v1486
        %v2016 = vunpack.c.l.b16 %v1487
        %v2017 = vunpack.c.l.b16 %v1488
        %v2018 = vunpack.c.l.b16 %v1489
        %v2019 = vunpack.c.l.b16 %v1490
        %v2020 = vunpack.c.l.b16 %v1491
        %v2021 = vunpack.c.l.b16 %v1492
        %v2022 = vunpack.c.l.b16 %v1493
        %v2023 = vunpack.c.l.b16 %v1494
        %v2024 = vunpack.c.l.b16 %v1495
        %v2025 = vunpack.c.l.b16 %v1496
        %v2026 = vunpack.c.l.b16 %v1497
        %v2027 = vunpack.c.l.b16 %v1498
        %v2028 = vunpack.c.l.b16 %v1499
        %v2029 = vunpack.c.l.b16 %v1500
        %v2030 = vunpack.c.l.b16 %v1501
        %v2031 = vunpack.c.l.b16 %v1502
        %v2032 = vunpack.c.l.b16 %v1503
        %v2033 = vunpack.c.l.b16 %v1504
        %v2034 = vunpack.c.l.b16 %v1505
        %v2035 = vunpack.c.l.b16 %v1506
        %v2036 = vunpack.c.l.b16 %v1507
        %v2037 = vunpack.c.l.b16 %v1508
        %v2038 = vunpack.c.l.b16 %v1509
        %v2039 = vunpack.c.l.b16 %v1510
        %v2040 = vunpack.c.l.b16 %v1511
        %v2041 = vunpack.c.l.b16 %v1512
        %v2042 = vunpack.c.l.b16 %v1513
        %v2043 = vunpack.c.l.b16 %v1514
        %v2044 = vunpack.c.l.b16 %v1515
        %v2045 = vunpack.c.l.b16 %v1516
        %v2046 = vunpack.c.l.b16 %v1517
        %v2047 = vunpack.c.l.b16 %v1518
        %v2048 = vunpack.c.l.b16 %v1519
        %v2049 = vunpack.c.l.b16 %v1520
        %v2050 = vunpack.c.l.b16 %v1521
        %v2051 = vunpack.c.l.b16 %v1522
        %v2052 = vunpack.c.l.b16 %v1523
        %v2053 = vunpack.c.l.b16 %v1524
        %v2054 = vunpack.c.l.b16 %v1525
        %v2055 = vunpack.c.l.b16 %v1526
        %v2056 = vunpack.c.l.b16 %v1527
        %v2057 = vunpack.c.l.b16 %v1528
        %v2058 = vunpack.c.l.b16 %v1529
        %v2059 = vunpack.c.l.b16 %v1530
        %v2060 = vunpack.c.l.b16 %v1531
        %v2061 = vunpack.c.l.b16 %v1532
        %v2062 = vunpack.c.l.b16 %v1533
        %v2063 = vunpack.c.l.b16 %v1534
        %v2064 = vunpack.c.l.b16 %v1535
        %v2065 = vunpack.c.l.b16 %v1536
        %v2066 = vunpack.c.l.b16 %v1537
        %v2067 = vunpack.c.l.b16 %v1538
        %v2068 = vunpack.c.l.b16 %v1539
        %v2069 = vunpack.c.l.b16 %v1540
        %v2070 = vunpack.c.l.b16 %v1541
        %v2071 = vunpack.c.l.b16 %v1542
        %v2072 = vunpack.c.l.b16 %v1543
        %v2073 = vunpack.c.l.b16 %v1544
        %v2074 = vunpack.c.l.b16 %v1545
        %v2075 = vunpack.c.l.b16 %v1546
        %v2076 = vunpack.c.l.b16 %v1547
        %v2077 = vunpack.c.l.b16 %v1548
        %v2078 = vunpack.c.l.b16 %v1549
        %v2079 = vunpack.c.l.b16 %v1550
        %v2080 = vunpack.c.l.b16 %v1551
        %v2081 = vunpack.c.l.b16 %v1552
        %v2082 = vunpack.c.l.b16 %v1553
        %v2083 = vunpack.c.l.b16 %v1554
        %v2084 = vunpack.c.l.b16 %v1555
        %v2085 = vunpack.c.l.b16 %v1556
        %v2086 = vunpack.c.l.b16 %v1557
        %v2087 = vunpack.c.l.b16 %v1558
        %v2088 = vunpack.c.l.b16 %v1559
        %v2089 = vunpack.c.l.b16 %v1560
        %v2090 = vunpack.c.l.b16 %v1561
        %v2091 = vunpack.c.l.b16 %v1562
        %v2092 = vunpack.c.l.b16 %v1563
        %v2093 = vunpack.c.l.b16 %v1564
        %v2094 = vunpack.c.l.b16 %v1565
        %v2095 = vunpack.c.l.b16 %v1566
        %v2096 = vunpack.c.l.b16 %v1567
        %v2097 = vunpack.c.l.b16 %v1568
        %v2098 = vunpack.c.l.b16 %v1569
        %v2099 = vunpack.c.l.b16 %v1570
        %v2100 = vunpack.c.l.b16 %v1571
        %v2101 = vunpack.c.l.b16 %v1572
        %v2102 = vunpack.c.l.b16 %v1573
        %v2103 = vunpack.c.l.b16 %v1574
        %v2104 = vunpack.c.l.b16 %v1575
        %v2105 = vunpack.c.l.b16 %v1576
        %v2106 = vunpack.c.l.b16 %v1577
        %v2107 = vunpack.c.l.b16 %v1578
        %v2108 = vunpack.c.l.b16 %v1579
        %v2109 = vunpack.c.l.b16 %v1580
        %v2110 = vunpack.c.l.b16 %v1581
        %v2111 = vunpack.c.l.b16 %v1582
        %v2112 = vunpack.c.l.b16 %v1583
        %v2113 = vunpack.c.l.b16 %v1584
        %v2114 = vunpack.c.l.b16 %v1585
        %v2115 = vunpack.c.l.b16 %v1586
        %v2116 = vunpack.c.l.b16 %v1587
        %v2117 = vunpack.c.l.b16 %v1588
        %v2118 = vunpack.c.l.b16 %v1589
        %v2119 = vunpack.c.l.b16 %v1590
        %v2120 = vunpack.c.l.b16 %v1591
        %v2121 = vunpack.c.l.b16 %v1592
        %v2122 = vunpack.c.l.b16 %v1593
        %v2123 = vunpack.c.l.b16 %v1594
        %v2124 = vunpack.c.l.b16 %v1595
        %v2125 = vunpack.c.l.b16 %v1596
        %v2126 = vunpack.c.l.b16 %v1597
        %v2127 = vunpack.c.l.b16 %v1598
        %v2128 = vunpack.c.l.b16 %v1599
        %v2129 = vunpack.c.l.b16 %v1600
        %v2130 = vunpack.c.l.b16 %v1601
        %v2131 = vunpack.c.l.b16 %v1602
        %v2132 = vunpack.c.l.b16 %v1603
        %v2133 = vunpack.c.l.b16 %v1604
        %v2134 = vunpack.c.l.b16 %v1605
        %v2135 = vunpack.c.l.b16 %v1606
        %v2136 = vunpack.c.l.b16 %v1607
        %v2137 = vunpack.c.l.b16 %v1608
        %v2138 = vunpack.c.l.b16 %v1609
        %v2139 = vunpack.c.l.b16 %v1610
        %v2140 = vunpack.c.l.b16 %v1611
        %v2141 = vunpack.c.l.b16 %v1612
        %v2142 = vunpack.c.l.b16 %v1613
        %v2143 = vunpack.c.l.b16 %v1614
        %v2144 = vunpack.c.l.b16 %v1615
        %v2145 = vunpack.c.l.b16 %v1616
        %v2146 = vunpack.c.l.b16 %v1617
        %v2147 = vunpack.c.l.b16 %v1618
        %v2148 = vunpack.c.l.b16 %v1619
        %v2149 = vunpack.c.l.b16 %v1620
        %v2150 = vunpack.c.l.b16 %v1621
        %v2151 = vunpack.c.l.b16 %v1622
        %v2152 = vunpack.c.l.b16 %v1623
        %v2153 = vunpack.c.l.b16 %v1624
        %v2154 = vunpack.c.l.b16 %v1625
        %v2155 = vunpack.c.l.b16 %v1626
        %v2156 = vunpack.c.l.b16 %v1627
        %v2157 = vunpack.c.l.b16 %v1628
        %v2158 = vunpack.c.l.b16 %v1629
        %v2159 = vunpack.c.l.b16 %v1630
        %v2160 = vunpack.c.l.b16 %v1631
        %v2161 = vunpack.c.l.b16 %v1632
        %v2162 = vunpack.c.l.b16 %v1633
        %v2163 = vunpack.c.l.b16 %v1634
        %v2164 = vunpack.c.l.b16 %v1635
        %v2165 = vunpack.c.l.b16 %v1636
        %v2166 = vunpack.c.l.b16 %v1637
        %v2167 = vunpack.c.l.b16 %v1638
        %v2168 = vunpack.c.l.b16 %v1639
        %v2169 = vunpack.c.l.b16 %v1640
        %v2170 = vunpack.c.l.b16 %v1641
        %v2171 = vunpack.c.l.b16 %v1642
        %v2172 = vunpack.c.l.b16 %v1643
        %v2173 = vunpack.c.l.b16 %v1644
        %v2174 = vunpack.c.l.b16 %v1645
        %v2175 = vunpack.c.l.b16 %v1646
        %v2176 = vunpack.c.l.b16 %v1647
        %v2177 = vunpack.c.l.b16 %v1648
        %v2178 = vpack.c.b16 %v1923, %v1922
        %v2179 = vpack.c.b16 %v1925, %v1924
        %v2180 = vpack.c.b16 %v1927, %v1926
        %v2181 = vpack.c.b16 %v1929, %v1928
        %v2182 = vpack.c.b16 %v1931, %v1930
        %v2183 = vpack.c.b16 %v1933, %v1932
        %v2184 = vpack.c.b16 %v1935, %v1934
        %v2185 = vpack.c.b16 %v1937, %v1936
        %v2186 = vpack.c.b16 %v1939, %v1938
        %v2187 = vpack.c.b16 %v1941, %v1940
        %v2188 = vpack.c.b16 %v1943, %v1942
        %v2189 = vpack.c.b16 %v1945, %v1944
        %v2190 = vpack.c.b16 %v1947, %v1946
        %v2191 = vpack.c.b16 %v1949, %v1948
        %v2192 = vpack.c.b16 %v1951, %v1950
        %v2193 = vpack.c.b16 %v1953, %v1952
        %v2194 = vpack.c.b16 %v1955, %v1954
        %v2195 = vpack.c.b16 %v1957, %v1956
        %v2196 = vpack.c.b16 %v1959, %v1958
        %v2197 = vpack.c.b16 %v1961, %v1960
        %v2198 = vpack.c.b16 %v1963, %v1962
        %v2199 = vpack.c.b16 %v1965, %v1964
        %v2200 = vpack.c.b16 %v1967, %v1966
        %v2201 = vpack.c.b16 %v1969, %v1968
        %v2202 = vpack.c.b16 %v1971, %v1970
        %v2203 = vpack.c.b16 %v1973, %v1972
        %v2204 = vpack.c.b16 %v1975, %v1974
        %v2205 = vpack.c.b16 %v1977, %v1976
        %v2206 = vpack.c.b16 %v1979, %v1978
        %v2207 = vpack.c.b16 %v1981, %v1980
        %v2208 = vpack.c.b16 %v1983, %v1982
        %v2209 = vpack.c.b16 %v1985, %v1984
        %v2210 = vpack.c.b16 %v1987, %v1986
        %v2211 = vpack.c.b16 %v1989, %v1988
        %v2212 = vpack.c.b16 %v1991, %v1990
        %v2213 = vpack.c.b16 %v1993, %v1992
        %v2214 = vpack.c.b16 %v1995, %v1994
        %v2215 = vpack.c.b16 %v1997, %v1996
        %v2216 = vpack.c.b16 %v1999, %v1998
        %v2217 = vpack.c.b16 %v2001, %v2000
        %v2218 = vpack.c.b16 %v2003, %v2002
        %v2219 = vpack.c.b16 %v2005, %v2004
        %v2220 = vpack.c.b16 %v2007, %v2006
        %v2221 = vpack.c.b16 %v2009, %v2008
        %v2222 = vpack.c.b16 %v2011, %v2010
        %v2223 = vpack.c.b16 %v2013, %v2012
        %v2224 = vpack.c.b16 %v2015, %v2014
        %v2225 = vpack.c.b16 %v2017, %v2016
        %v2226 = vpack.c.b16 %v2019, %v2018
        %v2227 = vpack.c.b16 %v2021, %v2020
        %v2228 = vpack.c.b16 %v2023, %v2022
        %v2229 = vpack.c.b16 %v2025, %v2024
        %v2230 = vpack.c.b16 %v2027, %v2026
        %v2231 = vpack.c.b16 %v2029, %v2028
        %v2232 = vpack.c.b16 %v2031, %v2030
        %v2233 = vpack.c.b16 %v2033, %v2032
        %v2234 = vpack.c.b16 %v2035, %v2034
        %v2235 = vpack.c.b16 %v2037, %v2036
        %v2236 = vpack.c.b16 %v2039, %v2038
        %v2237 = vpack.c.b16 %v2041, %v2040
        %v2238 = vpack.c.b16 %v2043, %v2042
        %v2239 = vpack.c.b16 %v2045, %v2044
        %v2240 = vpack.c.b16 %v2047, %v2046
        %v2241 = vpack.c.b16 %v2049, %v2048
        %v2242 = vpack.c.b16 %v2051, %v2050
        %v2243 = vpack.c.b16 %v2053, %v2052
        %v2244 = vpack.c.b16 %v2055, %v2054
        %v2245 = vpack.c.b16 %v2057, %v2056
        %v2246 = vpack.c.b16 %v2059, %v2058
        %v2247 = vpack.c.b16 %v2061, %v2060
        %v2248 = vpack.c.b16 %v2063, %v2062
        %v2249 = vpack.c.b16 %v2065, %v2064
        %v2250 = vpack.c.b16 %v2067, %v2066
        %v2251 = vpack.c.b16 %v2069, %v2068
        %v2252 = vpack.c.b16 %v2071, %v2070
        %v2253 = vpack.c.b16 %v2073, %v2072
        %v2254 = vpack.c.b16 %v2075, %v2074
        %v2255 = vpack.c.b16 %v2077, %v2076
        %v2256 = vpack.c.b16 %v2079, %v2078
        %v2257 = vpack.c.b16 %v2081, %v2080
        %v2258 = vpack.c.b16 %v2083, %v2082
        %v2259 = vpack.c.b16 %v2085, %v2084
        %v2260 = vpack.c.b16 %v2087, %v2086
        %v2261 = vpack.c.b16 %v2089, %v2088
        %v2262 = vpack.c.b16 %v2091, %v2090
        %v2263 = vpack.c.b16 %v2093, %v2092
        %v2264 = vpack.c.b16 %v2095, %v2094
        %v2265 = vpack.c.b16 %v2097, %v2096
        %v2266 = vpack.c.b16 %v2099, %v2098
        %v2267 = vpack.c.b16 %v2101, %v2100
        %v2268 = vpack.c.b16 %v2103, %v2102
        %v2269 = vpack.c.b16 %v2105, %v2104
        %v2270 = vpack.c.b16 %v2107, %v2106
        %v2271 = vpack.c.b16 %v2109, %v2108
        %v2272 = vpack.c.b16 %v2111, %v2110
        %v2273 = vpack.c.b16 %v2113, %v2112
        %v2274 = vpack.c.b16 %v2115, %v2114
        %v2275 = vpack.c.b16 %v2117, %v2116
        %v2276 = vpack.c.b16 %v2119, %v2118
        %v2277 = vpack.c.b16 %v2121, %v2120
        %v2278 = vpack.c.b16 %v2123, %v2122
        %v2279 = vpack.c.b16 %v2125, %v2124
        %v2280 = vpack.c.b16 %v2127, %v2126
        %v2281 = vpack.c.b16 %v2129, %v2128
        %v2282 = vpack.c.b16 %v2131, %v2130
        %v2283 = vpack.c.b16 %v2133, %v2132
        %v2284 = vpack.c.b16 %v2135, %v2134
        %v2285 = vpack.c.b16 %v2137, %v2136
        %v2286 = vpack.c.b16 %v2139, %v2138
        %v2287 = vpack.c.b16 %v2141, %v2140
        %v2288 = vpack.c.b16 %v2143, %v2142
        %v2289 = vpack.c.b16 %v2145, %v2144
        %v2290 = vpack.c.b16 %v2147, %v2146
        %v2291 = vpack.c.b16 %v2149, %v2148
        %v2292 = vpack.c.b16 %v2151, %v2150
        %v2293 = vpack.c.b16 %v2153, %v2152
        %v2294 = vpack.c.b16 %v2155, %v2154
        %v2295 = vpack.c.b16 %v2157, %v2156
        %v2296 = vpack.c.b16 %v2159, %v2158
        %v2297 = vpack.c.b16 %v2161, %v2160
        %v2298 = vpack.c.b16 %v2163, %v2162
        %v2299 = vpack.c.b16 %v2165, %v2164
        %v2300 = vpack.c.b16 %v2167, %v2166
        %v2301 = vpack.c.b16 %v2169, %v2168
        %v2302 = vpack.c.b16 %v2171, %v2170
        %v2303 = vpack.c.b16 %v2173, %v2172
        %v2304 = vpack.c.b16 %v2175, %v2174
        %v2305 = vpack.c.b16 %v2177, %v2176
        %v2316 = vunpack.c.l.b16 %v1649
        %v2317 = vunpack.c.l.b16 %v1650
        %v2318 = vunpack.c.l.b16 %v1651
        %v2319 = vunpack.c.l.b16 %v1652
        %v2320 = vunpack.c.l.b16 %v1653
        %v2321 = vunpack.c.l.b16 %v1654
        %v2322 = vunpack.c.l.b16 %v1655
        %v2323 = vunpack.c.l.b16 %v1656
        %v2324 = vunpack.c.l.b16 %v1657
        %v2325 = vunpack.c.l.b16 %v1658
        %v2326 = vpack.c.b16 %v2317, %v2316
        %v2327 = vpack.c.b16 %v2319, %v2318
        %v2328 = vpack.c.b16 %v2321, %v2320
        %v2329 = vpack.c.b16 %v2323, %v2322
        %v2330 = vpack.c.b16 %v2325, %v2324
        %vm2335 = vcmask 621568
        %v2337 = vsel %vm2335, %v2178, 0
        %v2340 = vsel %vm2335, %v2179, 0
        %v2343 = vsel %vm2335, %v2180, 0
        %v2346 = vsel %vm2335, %v2181, 0
        %v2349 = vsel %vm2335, %v2182, 0
        %v2352 = vsel %vm2335, %v2183, 0
        %v2355 = vsel %vm2335, %v2184, 0
        %v2358 = vsel %vm2335, %v2185, 0
        %v2361 = vsel %vm2335, %v2186, 0
        %v2364 = vsel %vm2335, %v2187, 0
        %v2367 = vsel %vm2335, %v2188, 0
        %v2370 = vsel %vm2335, %v2189, 0
        %v2373 = vsel %vm2335, %v2190, 0
        %v2376 = vsel %vm2335, %v2191, 0
        %v2379 = vsel %vm2335, %v2192, 0
        %v2382 = vsel %vm2335, %v2193, 0
        %v2385 = vsel %vm2335, %v2194, 0
        %v2388 = vsel %vm2335, %v2195, 0
        %v2391 = vsel %vm2335, %v2196, 0
        %v2394 = vsel %vm2335, %v2197, 0
        %v2397 = vsel %vm2335, %v2198, 0
        %v2400 = vsel %vm2335, %v2199, 0
        %v2403 = vsel %vm2335, %v2200, 0
        %v2406 = vsel %vm2335, %v2201, 0
        %v2409 = vsel %vm2335, %v2202, 0
        %v2412 = vsel %vm2335, %v2203, 0
        %v2415 = vsel %vm2335, %v2204, 0
        %v2418 = vsel %vm2335, %v2205, 0
        %v2421 = vsel %vm2335, %v2206, 0
        %v2424 = vsel %vm2335, %v2207, 0
        %v2427 = vsel %vm2335, %v2208, 0
        %v2430 = vsel %vm2335, %v2209, 0
        %v2433 = vsel %vm2335, %v2210, 0
        %v2436 = vsel %vm2335, %v2211, 0
        %v2439 = vsel %vm2335, %v2212, 0
        %v2442 = vsel %vm2335, %v2213, 0
        %v2445 = vsel %vm2335, %v2214, 0
        %v2448 = vsel %vm2335, %v2215, 0
        %v2451 = vsel %vm2335, %v2216, 0
        %v2454 = vsel %vm2335, %v2217, 0
        %v2457 = vsel %vm2335, %v2218, 0
        %v2460 = vsel %vm2335, %v2219, 0
        %v2463 = vsel %vm2335, %v2220, 0
        %v2466 = vsel %vm2335, %v2221, 0
        %v2469 = vsel %vm2335, %v2222, 0
        %v2472 = vsel %vm2335, %v2223, 0
        %v2475 = vsel %vm2335, %v2224, 0
        %v2478 = vsel %vm2335, %v2225, 0
        %v2481 = vsel %vm2335, %v2226, 0
        %v2484 = vsel %vm2335, %v2227, 0
        %v2487 = vsel %vm2335, %v2228, 0
        %v2490 = vsel %vm2335, %v2229, 0
        %v2493 = vsel %vm2335, %v2230, 0
        %v2496 = vsel %vm2335, %v2231, 0
        %v2499 = vsel %vm2335, %v2232, 0
        %v2502 = vsel %vm2335, %v2233, 0
        %v2505 = vsel %vm2335, %v2234, 0
        %v2508 = vsel %vm2335, %v2235, 0
        %v2511 = vsel %vm2335, %v2236, 0
        %v2514 = vsel %vm2335, %v2237, 0
        %v2517 = vsel %vm2335, %v2238, 0
        %v2520 = vsel %vm2335, %v2239, 0
        %v2523 = vsel %vm2335, %v2240, 0
        %v2526 = vsel %vm2335, %v2241, 0
        %v2529 = vsel %vm2335, %v2242, 0
        %v2532 = vsel %vm2335, %v2243, 0
        %v2535 = vsel %vm2335, %v2244, 0
        %v2538 = vsel %vm2335, %v2245, 0
        %v2541 = vsel %vm2335, %v2246, 0
        %v2544 = vsel %vm2335, %v2247, 0
        %v2547 = vsel %vm2335, %v2248, 0
        %v2550 = vsel %vm2335, %v2249, 0
        %v2553 = vsel %vm2335, %v2250, 0
        %v2556 = vsel %vm2335, %v2251, 0
        %v2559 = vsel %vm2335, %v2252, 0
        %v2562 = vsel %vm2335, %v2253, 0
        %v2565 = vsel %vm2335, %v2254, 0
        %v2568 = vsel %vm2335, %v2255, 0
        %v2571 = vsel %vm2335, %v2256, 0
        %v2574 = vsel %vm2335, %v2257, 0
        %v2577 = vsel %vm2335, %v2258, 0
        %v2580 = vsel %vm2335, %v2259, 0
        %v2583 = vsel %vm2335, %v2260, 0
        %v2586 = vsel %vm2335, %v2261, 0
        %v2589 = vsel %vm2335, %v2262, 0
        %v2592 = vsel %vm2335, %v2263, 0
        %v2595 = vsel %vm2335, %v2264, 0
        %v2598 = vsel %vm2335, %v2265, 0
        %v2601 = vsel %vm2335, %v2266, 0
        %v2604 = vsel %vm2335, %v2267, 0
        %v2607 = vsel %vm2335, %v2268, 0
        %v2610 = vsel %vm2335, %v2269, 0
        %v2613 = vsel %vm2335, %v2270, 0
        %v2616 = vsel %vm2335, %v2271, 0
        %v2619 = vsel %vm2335, %v2272, 0
        %v2622 = vsel %vm2335, %v2273, 0
        %v2625 = vsel %vm2335, %v2274, 0
        %v2628 = vsel %vm2335, %v2275, 0
        %v2631 = vsel %vm2335, %v2276, 0
        %v2634 = vsel %vm2335, %v2277, 0
        %v2637 = vsel %vm2335, %v2278, 0
        %v2640 = vsel %vm2335, %v2279, 0
        %v2643 = vsel %vm2335, %v2280, 0
        %v2646 = vsel %vm2335, %v2281, 0
        %v2649 = vsel %vm2335, %v2282, 0
        %v2652 = vsel %vm2335, %v2283, 0
        %v2655 = vsel %vm2335, %v2284, 0
        %v2658 = vsel %vm2335, %v2285, 0
        %v2661 = vsel %vm2335, %v2286, 0
        %v2664 = vsel %vm2335, %v2287, 0
        %v2667 = vsel %vm2335, %v2288, 0
        %v2670 = vsel %vm2335, %v2289, 0
        %v2673 = vsel %vm2335, %v2290, 0
        %v2676 = vsel %vm2335, %v2291, 0
        %v2679 = vsel %vm2335, %v2292, 0
        %v2682 = vsel %vm2335, %v2293, 0
        %v2685 = vsel %vm2335, %v2294, 0
        %v2688 = vsel %vm2335, %v2295, 0
        %v2691 = vsel %vm2335, %v2296, 0
        %v2694 = vsel %vm2335, %v2297, 0
        %v2697 = vsel %vm2335, %v2298, 0
        %v2700 = vsel %vm2335, %v2299, 0
        %v2703 = vsel %vm2335, %v2300, 0
        %v2706 = vsel %vm2335, %v2301, 0
        %v2709 = vsel %vm2335, %v2302, 0
        %v2712 = vsel %vm2335, %v2303, 0
        %v2715 = vsel %vm2335, %v2304, 0
        %v2718 = vsel %vm2335, %v2305, 0
        %vm2720 = vcmask 1045504
        %v2722 = vsel %vm2720, %v2330, 0
        %2724 = vmatprep.subr.bf16.mxu0 0
        %2725 = vmatpush1.bf16.msra.mxu0 %v2326
        %2726 = vmatprep.subr.bf16.mxu0 0
        %2727 = vmatpush1.bf16.msra.mxu0 %v2327
        %2728 = vmatprep.subr.bf16.mxu0 0
        %2729 = vmatpush1.bf16.msra.mxu0 %v2328
        %2730 = vmatprep.subr.bf16.mxu0 0
        %2731 = vmatpush1.bf16.msra.mxu0 %v2329
        %2732 = vmatprep.subr.bf16.mxu0 0
        %2733 = vmatpush1.bf16.msra.mxu0 %v2722
        %2734 = vmatprep.subr.bf16.mxu0 0
        %2735 = vmatpush1.bf16.msra.mxu0 0
        %2736 = vmatprep.subr.bf16.mxu0 0
        %2737 = vmatpush1.bf16.msra.mxu0 0
        %2738 = vmatprep.subr.bf16.mxu0 0
        %2739 = vmatpush1.bf16.msra.mxu0 0
        %2740 = vmatprep.subr.bf16.mxu0 0
        %2741 = vmatpush1.bf16.msra.mxu0 0
        %2742 = vmatprep.subr.bf16.mxu0 0
        %2743 = vmatpush1.bf16.msra.mxu0 0
        %2744 = vmatprep.subr.bf16.mxu0 0
        %2745 = vmatpush1.bf16.msra.mxu0 0
        %2746 = vmatprep.subr.bf16.mxu0 0
        %2747 = vmatpush1.bf16.msra.mxu0 0
        %2748 = vmatprep.subr.bf16.mxu0 0
        %2749 = vmatpush1.bf16.msra.mxu0 0
        %2750 = vmatprep.subr.bf16.mxu0 0
        %2751 = vmatpush1.bf16.msra.mxu0 0
        %2752 = vmatprep.subr.bf16.mxu0 0
        %2753 = vmatpush1.bf16.msra.mxu0 0
        %2754 = vmatprep.subr.bf16.mxu0 0
        %2755 = vmatpush1.bf16.msra.mxu0 0
        %2756 = vmatprep.mubr.bf16.mxu0 0
        %2757 = vmatmul.mubr.bf16.gmra.mrb[0].mxu0 %v2337
        %v2758 = vpop.f32.mrb[0].mxu0
        %v2759 = vadd.f32 %v1664, %v2758
        %v2760 = vpop.f32.mrb[0].mxu0
        %v2761 = vpop.f32.mrb[0].mxu0
        %v2762 = vadd.f32 %v1664, %v2761
        %v2763 = vpop.f32.mrb[0].mxu0
        %2764 = vmatprep.mubr.bf16.mxu0 0
        %2765 = vmatmul.mubr.bf16.gmra.mrb[0].mxu0 %v2340
        %v2766 = vpop.f32.mrb[0].mxu0
        %v2767 = vadd.f32 %v1664, %v2766
        %v2768 = vpop.f32.mrb[0].mxu0
        %v2769 = vpop.f32.mrb[0].mxu0
        %v2770 = vadd.f32 %v1664, %v2769
        %v2771 = vpop.f32.mrb[0].mxu0
        %2772 = vmatprep.mubr.bf16.mxu0 0
        %2773 = vmatmul.mubr.bf16.gmra.mrb[0].mxu0 %v2343
        %v2774 = vpop.f32.mrb[0].mxu0
        %v2775 = vadd.f32 %v1664, %v2774
        %v2776 = vpop.f32.mrb[0].mxu0
        %v2777 = vpop.f32.mrb[0].mxu0
        %v2778 = vadd.f32 %v1664, %v2777
        %v2779 = vpop.f32.mrb[0].mxu0
        %2780 = vmatprep.mubr.bf16.mxu0 0
        %2781 = vmatmul.mubr.bf16.gmra.mrb[0].mxu0 %v2346
        %v2782 = vpop.f32.mrb[0].mxu0
        %v2783 = vadd.f32 %v1664, %v2782
        %v2784 = vpop.f32.mrb[0].mxu0
        %v2785 = vpop.f32.mrb[0].mxu0
        %v2786 = vadd.f32 %v1664, %v2785
        %v2787 = vpop.f32.mrb[0].mxu0
        %2788 = vmatprep.mubr.bf16.mxu0 0
        %2789 = vmatmul.mubr.bf16.gmra.mrb[0].mxu0 %v2349
        %v2790 = vpop.f32.mrb[0].mxu0
        %v2791 = vadd.f32 %v1664, %v2790
        %v2792 = vpop.f32.mrb[0].mxu0
        %v2793 = vpop.f32.mrb[0].mxu0
        %v2794 = vadd.f32 %v1664, %v2793
        %v2795 = vpop.f32.mrb[0].mxu0
        %2796 = vmatprep.mubr.bf16.mxu0 0
        %2797 = vmatmul.mubr.bf16.gmra.mrb[0].mxu0 %v2352
        %v2798 = vpop.f32.mrb[0].mxu0
        %v2799 = vadd.f32 %v1664, %v2798
        %v2800 = vpop.f32.mrb[0].mxu0
        %v2801 = vpop.f32.mrb[0].mxu0
        %v2802 = vadd.f32 %v1664, %v2801
        %v2803 = vpop.f32.mrb[0].mxu0
        %2804 = vmatprep.mubr.bf16.mxu0 0
        %2805 = vmatmul.mubr.bf16.gmra.mrb[0].mxu0 %v2355
        %v2806 = vpop.f32.mrb[0].mxu0
        %v2807 = vadd.f32 %v1664, %v2806
        %v2808 = vpop.f32.mrb[0].mxu0
        %v2809 = vpop.f32.mrb[0].mxu0
        %v2810 = vadd.f32 %v1664, %v2809
        %v2811 = vpop.f32.mrb[0].mxu0
        %2812 = vmatprep.mubr.bf16.mxu0 0
        %2813 = vmatmul.mubr.bf16.gmra.mrb[0].mxu0 %v2358
        %v2814 = vpop.f32.mrb[0].mxu0
        %v2815 = vadd.f32 %v1664, %v2814
        %v2816 = vpop.f32.mrb[0].mxu0
        %v2817 = vpop.f32.mrb[0].mxu0
        %v2818 = vadd.f32 %v1664, %v2817
        %v2819 = vpop.f32.mrb[0].mxu0
        %2820 = vmatprep.mubr.bf16.mxu0 0
        %2821 = vmatmul.mubr.bf16.gmra.mrb[0].mxu0 %v2361
        %v2822 = vpop.f32.mrb[0].mxu0
        %v2823 = vadd.f32 %v1664, %v2822
        %v2824 = vpop.f32.mrb[0].mxu0
        %v2825 = vpop.f32.mrb[0].mxu0
        %v2826 = vadd.f32 %v1664, %v2825
        %v2827 = vpop.f32.mrb[0].mxu0
        %2828 = vmatprep.mubr.bf16.mxu0 0
        %2829 = vmatmul.mubr.bf16.gmra.mrb[0].mxu0 %v2364
        %v2830 = vpop.f32.mrb[0].mxu0
        %v2831 = vadd.f32 %v1664, %v2830
        %v2832 = vpop.f32.mrb[0].mxu0
        %v2833 = vpop.f32.mrb[0].mxu0
        %v2834 = vadd.f32 %v1664, %v2833
        %v2835 = vpop.f32.mrb[0].mxu0
        %2836 = vmatprep.mubr.bf16.mxu0 0
        %2837 = vmatmul.mubr.bf16.gmra.mrb[0].mxu0 %v2367
        %v2838 = vpop.f32.mrb[0].mxu0
        %v2839 = vadd.f32 %v1664, %v2838
        %v2840 = vpop.f32.mrb[0].mxu0
        %v2841 = vpop.f32.mrb[0].mxu0
        %v2842 = vadd.f32 %v1664, %v2841
        %v2843 = vpop.f32.mrb[0].mxu0
        %2844 = vmatprep.mubr.bf16.mxu0 0
        %2845 = vmatmul.mubr.bf16.gmra.mrb[0].mxu0 %v2370
        %v2846 = vpop.f32.mrb[0].mxu0
        %v2847 = vadd.f32 %v1664, %v2846
        %v2848 = vpop.f32.mrb[0].mxu0
        %v2849 = vpop.f32.mrb[0].mxu0
        %v2850 = vadd.f32 %v1664, %v2849
        %v2851 = vpop.f32.mrb[0].mxu0
        %2852 = vmatprep.mubr.bf16.mxu0 0
        %2853 = vmatmul.mubr.bf16.gmra.mrb[0].mxu0 %v2373
        %v2854 = vpop.f32.mrb[0].mxu0
        %v2855 = vadd.f32 %v1664, %v2854
        %v2856 = vpop.f32.mrb[0].mxu0
        %v2857 = vpop.f32.mrb[0].mxu0
        %v2858 = vadd.f32 %v1664, %v2857
        %v2859 = vpop.f32.mrb[0].mxu0
        %2860 = vmatprep.mubr.bf16.mxu0 0
        %2861 = vmatmul.mubr.bf16.gmra.mrb[0].mxu0 %v2376
        %v2862 = vpop.f32.mrb[0].mxu0
        %v2863 = vadd.f32 %v1664, %v2862
        %v2864 = vpop.f32.mrb[0].mxu0
        %v2865 = vpop.f32.mrb[0].mxu0
        %v2866 = vadd.f32 %v1664, %v2865
        %v2867 = vpop.f32.mrb[0].mxu0
        %2868 = vmatprep.mubr.bf16.mxu0 0
        %2869 = vmatmul.mubr.bf16.gmra.mrb[0].mxu0 %v2379
        %v2870 = vpop.f32.mrb[0].mxu0
        %v2871 = vadd.f32 %v1664, %v2870
        %v2872 = vpop.f32.mrb[0].mxu0
        %v2873 = vpop.f32.mrb[0].mxu0
        %v2874 = vadd.f32 %v1664, %v2873
        %v2875 = vpop.f32.mrb[0].mxu0
        %2876 = vmatprep.mubr.bf16.mxu0 0
        %2877 = vmatmul.mubr.bf16.gmra.mrb[0].mxu0 %v2382
        %v2878 = vpop.f32.mrb[0].mxu0
        %v2879 = vadd.f32 %v1664, %v2878
        %v2880 = vpop.f32.mrb[0].mxu0
        %v2881 = vpop.f32.mrb[0].mxu0
        %v2882 = vadd.f32 %v1664, %v2881
        %v2883 = vpop.f32.mrb[0].mxu0
        %2884 = vmatprep.mubr.bf16.mxu0 0
        %2885 = vmatmul.mubr.bf16.gmra.mrb[0].mxu0 %v2385
        %v2886 = vpop.f32.mrb[0].mxu0
        %v2887 = vadd.f32 %v1664, %v2886
        %v2888 = vpop.f32.mrb[0].mxu0
        %v2889 = vpop.f32.mrb[0].mxu0
        %v2890 = vadd.f32 %v1664, %v2889
        %v2891 = vpop.f32.mrb[0].mxu0
        %2892 = vmatprep.mubr.bf16.mxu0 0
        %2893 = vmatmul.mubr.bf16.gmra.mrb[0].mxu0 %v2388
        %v2894 = vpop.f32.mrb[0].mxu0
        %v2895 = vadd.f32 %v1664, %v2894
        %v2896 = vpop.f32.mrb[0].mxu0
        %v2897 = vpop.f32.mrb[0].mxu0
        %v2898 = vadd.f32 %v1664, %v2897
        %v2899 = vpop.f32.mrb[0].mxu0
        %2900 = vmatprep.mubr.bf16.mxu0 0
        %2901 = vmatmul.mubr.bf16.gmra.mrb[0].mxu0 %v2391
        %v2902 = vpop.f32.mrb[0].mxu0
        %v2903 = vadd.f32 %v1664, %v2902
        %v2904 = vpop.f32.mrb[0].mxu0
        %v2905 = vpop.f32.mrb[0].mxu0
        %v2906 = vadd.f32 %v1664, %v2905
        %v2907 = vpop.f32.mrb[0].mxu0
        %2908 = vmatprep.mubr.bf16.mxu0 0
        %2909 = vmatmul.mubr.bf16.gmra.mrb[0].mxu0 %v2394
        %v2910 = vpop.f32.mrb[0].mxu0
        %v2911 = vadd.f32 %v1664, %v2910
        %v2912 = vpop.f32.mrb[0].mxu0
        %v2913 = vpop.f32.mrb[0].mxu0
        %v2914 = vadd.f32 %v1664, %v2913
        %v2915 = vpop.f32.mrb[0].mxu0
        %2916 = vmatprep.mubr.bf16.mxu0 0
        %2917 = vmatmul.mubr.bf16.gmra.mrb[0].mxu0 %v2397
        %v2918 = vpop.f32.mrb[0].mxu0
        %v2919 = vadd.f32 %v1664, %v2918
        %v2920 = vpop.f32.mrb[0].mxu0
        %v2921 = vpop.f32.mrb[0].mxu0
        %v2922 = vadd.f32 %v1664, %v2921
        %v2923 = vpop.f32.mrb[0].mxu0
        %2924 = vmatprep.mubr.bf16.mxu0 0
        %2925 = vmatmul.mubr.bf16.gmra.mrb[0].mxu0 %v2400
        %v2926 = vpop.f32.mrb[0].mxu0
        %v2927 = vadd.f32 %v1664, %v2926
        %v2928 = vpop.f32.mrb[0].mxu0
        %v2929 = vpop.f32.mrb[0].mxu0
        %v2930 = vadd.f32 %v1664, %v2929
        %v2931 = vpop.f32.mrb[0].mxu0
        %2932 = vmatprep.mubr.bf16.mxu0 0
        %2933 = vmatmul.mubr.bf16.gmra.mrb[0].mxu0 %v2403
        %v2934 = vpop.f32.mrb[0].mxu0
        %v2935 = vadd.f32 %v1664, %v2934
        %v2936 = vpop.f32.mrb[0].mxu0
        %v2937 = vpop.f32.mrb[0].mxu0
        %v2938 = vadd.f32 %v1664, %v2937
        %v2939 = vpop.f32.mrb[0].mxu0
        %2940 = vmatprep.mubr.bf16.mxu0 0
        %2941 = vmatmul.mubr.bf16.gmra.mrb[0].mxu0 %v2406
        %v2942 = vpop.f32.mrb[0].mxu0
        %v2943 = vadd.f32 %v1664, %v2942
        %v2944 = vpop.f32.mrb[0].mxu0
        %v2945 = vpop.f32.mrb[0].mxu0
        %v2946 = vadd.f32 %v1664, %v2945
        %v2947 = vpop.f32.mrb[0].mxu0
        %2948 = vmatprep.mubr.bf16.mxu0 0
        %2949 = vmatmul.mubr.bf16.gmra.mrb[0].mxu0 %v2409
        %v2950 = vpop.f32.mrb[0].mxu0
        %v2951 = vadd.f32 %v1664, %v2950
        %v2952 = vpop.f32.mrb[0].mxu0
        %v2953 = vpop.f32.mrb[0].mxu0
        %v2954 = vadd.f32 %v1664, %v2953
        %v2955 = vpop.f32.mrb[0].mxu0
        %2956 = vmatprep.mubr.bf16.mxu0 0
        %2957 = vmatmul.mubr.bf16.gmra.mrb[0].mxu0 %v2412
        %v2958 = vpop.f32.mrb[0].mxu0
        %v2959 = vadd.f32 %v1664, %v2958
        %v2960 = vpop.f32.mrb[0].mxu0
        %v2961 = vpop.f32.mrb[0].mxu0
        %v2962 = vadd.f32 %v1664, %v2961
        %v2963 = vpop.f32.mrb[0].mxu0
        %2964 = vmatprep.mubr.bf16.mxu0 0
        %2965 = vmatmul.mubr.bf16.gmra.mrb[0].mxu0 %v2415
        %v2966 = vpop.f32.mrb[0].mxu0
        %v2967 = vadd.f32 %v1664, %v2966
        %v2968 = vpop.f32.mrb[0].mxu0
        %v2969 = vpop.f32.mrb[0].mxu0
        %v2970 = vadd.f32 %v1664, %v2969
        %v2971 = vpop.f32.mrb[0].mxu0
        %2972 = vmatprep.mubr.bf16.mxu0 0
        %2973 = vmatmul.mubr.bf16.gmra.mrb[0].mxu0 %v2418
        %v2974 = vpop.f32.mrb[0].mxu0
        %v2975 = vadd.f32 %v1664, %v2974
        %v2976 = vpop.f32.mrb[0].mxu0
        %v2977 = vpop.f32.mrb[0].mxu0
        %v2978 = vadd.f32 %v1664, %v2977
        %v2979 = vpop.f32.mrb[0].mxu0
        %2980 = vmatprep.mubr.bf16.mxu0 0
        %2981 = vmatmul.mubr.bf16.gmra.mrb[0].mxu0 %v2421
        %v2982 = vpop.f32.mrb[0].mxu0
        %v2983 = vadd.f32 %v1664, %v2982
        %v2984 = vpop.f32.mrb[0].mxu0
        %v2985 = vpop.f32.mrb[0].mxu0
        %v2986 = vadd.f32 %v1664, %v2985
        %v2987 = vpop.f32.mrb[0].mxu0
        %2988 = vmatprep.mubr.bf16.mxu0 0
        %2989 = vmatmul.mubr.bf16.gmra.mrb[0].mxu0 %v2424
        %v2990 = vpop.f32.mrb[0].mxu0
        %v2991 = vadd.f32 %v1664, %v2990
        %v2992 = vpop.f32.mrb[0].mxu0
        %v2993 = vpop.f32.mrb[0].mxu0
        %v2994 = vadd.f32 %v1664, %v2993
        %v2995 = vpop.f32.mrb[0].mxu0
        %2996 = vmatprep.mubr.bf16.mxu0 0
        %2997 = vmatmul.mubr.bf16.gmra.mrb[0].mxu0 %v2427
        %v2998 = vpop.f32.mrb[0].mxu0
        %v2999 = vadd.f32 %v1664, %v2998
        %v3000 = vpop.f32.mrb[0].mxu0
        %v3001 = vpop.f32.mrb[0].mxu0
        %v3002 = vadd.f32 %v1664, %v3001
        %v3003 = vpop.f32.mrb[0].mxu0
        %3004 = vmatprep.mubr.bf16.mxu0 0
        %3005 = vmatmul.mubr.bf16.gmra.mrb[0].mxu0 %v2430
        %v3006 = vpop.f32.mrb[0].mxu0
        %v3007 = vadd.f32 %v1664, %v3006
        %v3008 = vpop.f32.mrb[0].mxu0
        %v3009 = vpop.f32.mrb[0].mxu0
        %v3010 = vadd.f32 %v1664, %v3009
        %v3011 = vpop.f32.mrb[0].mxu0
        %3012 = vmatprep.mubr.bf16.mxu0 0
        %3013 = vmatmul.mubr.bf16.gmra.mrb[0].mxu0 %v2433
        %v3014 = vpop.f32.mrb[0].mxu0
        %v3015 = vadd.f32 %v1664, %v3014
        %v3016 = vpop.f32.mrb[0].mxu0
        %v3017 = vpop.f32.mrb[0].mxu0
        %v3018 = vadd.f32 %v1664, %v3017
        %v3019 = vpop.f32.mrb[0].mxu0
        %3020 = vmatprep.mubr.bf16.mxu0 0
        %3021 = vmatmul.mubr.bf16.gmra.mrb[0].mxu0 %v2436
        %v3022 = vpop.f32.mrb[0].mxu0
        %v3023 = vadd.f32 %v1664, %v3022
        %v3024 = vpop.f32.mrb[0].mxu0
        %v3025 = vpop.f32.mrb[0].mxu0
        %v3026 = vadd.f32 %v1664, %v3025
        %v3027 = vpop.f32.mrb[0].mxu0
        %3028 = vmatprep.mubr.bf16.mxu0 0
        %3029 = vmatmul.mubr.bf16.gmra.mrb[0].mxu0 %v2439
        %v3030 = vpop.f32.mrb[0].mxu0
        %v3031 = vadd.f32 %v1664, %v3030
        %v3032 = vpop.f32.mrb[0].mxu0
        %v3033 = vpop.f32.mrb[0].mxu0
        %v3034 = vadd.f32 %v1664, %v3033
        %v3035 = vpop.f32.mrb[0].mxu0
        %3036 = vmatprep.mubr.bf16.mxu0 0
        %3037 = vmatmul.mubr.bf16.gmra.mrb[0].mxu0 %v2442
        %v3038 = vpop.f32.mrb[0].mxu0
        %v3039 = vadd.f32 %v1664, %v3038
        %v3040 = vpop.f32.mrb[0].mxu0
        %v3041 = vpop.f32.mrb[0].mxu0
        %v3042 = vadd.f32 %v1664, %v3041
        %v3043 = vpop.f32.mrb[0].mxu0
        %3044 = vmatprep.mubr.bf16.mxu0 0
        %3045 = vmatmul.mubr.bf16.gmra.mrb[0].mxu0 %v2445
        %v3046 = vpop.f32.mrb[0].mxu0
        %v3047 = vadd.f32 %v1664, %v3046
        %v3048 = vpop.f32.mrb[0].mxu0
        %v3049 = vpop.f32.mrb[0].mxu0
        %v3050 = vadd.f32 %v1664, %v3049
        %v3051 = vpop.f32.mrb[0].mxu0
        %3052 = vmatprep.mubr.bf16.mxu0 0
        %3053 = vmatmul.mubr.bf16.gmra.mrb[0].mxu0 %v2448
        %v3054 = vpop.f32.mrb[0].mxu0
        %v3055 = vadd.f32 %v1664, %v3054
        %v3056 = vpop.f32.mrb[0].mxu0
        %v3057 = vpop.f32.mrb[0].mxu0
        %v3058 = vadd.f32 %v1664, %v3057
        %v3059 = vpop.f32.mrb[0].mxu0
        %3060 = vmatprep.mubr.bf16.mxu0 0
        %3061 = vmatmul.mubr.bf16.gmra.mrb[0].mxu0 %v2451
        %v3062 = vpop.f32.mrb[0].mxu0
        %v3063 = vadd.f32 %v1664, %v3062
        %v3064 = vpop.f32.mrb[0].mxu0
        %v3065 = vpop.f32.mrb[0].mxu0
        %v3066 = vadd.f32 %v1664, %v3065
        %v3067 = vpop.f32.mrb[0].mxu0
        %3068 = vmatprep.mubr.bf16.mxu0 0
        %3069 = vmatmul.mubr.bf16.gmra.mrb[0].mxu0 %v2454
        %v3070 = vpop.f32.mrb[0].mxu0
        %v3071 = vadd.f32 %v1664, %v3070
        %v3072 = vpop.f32.mrb[0].mxu0
        %v3073 = vpop.f32.mrb[0].mxu0
        %v3074 = vadd.f32 %v1664, %v3073
        %v3075 = vpop.f32.mrb[0].mxu0
        %3076 = vmatprep.mubr.bf16.mxu0 0
        %3077 = vmatmul.mubr.bf16.gmra.mrb[0].mxu0 %v2457
        %v3078 = vpop.f32.mrb[0].mxu0
        %v3079 = vadd.f32 %v1664, %v3078
        %v3080 = vpop.f32.mrb[0].mxu0
        %v3081 = vpop.f32.mrb[0].mxu0
        %v3082 = vadd.f32 %v1664, %v3081
        %v3083 = vpop.f32.mrb[0].mxu0
        %3084 = vmatprep.mubr.bf16.mxu0 0
        %3085 = vmatmul.mubr.bf16.gmra.mrb[0].mxu0 %v2460
        %v3086 = vpop.f32.mrb[0].mxu0
        %v3087 = vadd.f32 %v1664, %v3086
        %v3088 = vpop.f32.mrb[0].mxu0
        %v3089 = vpop.f32.mrb[0].mxu0
        %v3090 = vadd.f32 %v1664, %v3089
        %v3091 = vpop.f32.mrb[0].mxu0
        %3092 = vmatprep.mubr.bf16.mxu0 0
        %3093 = vmatmul.mubr.bf16.gmra.mrb[0].mxu0 %v2463
        %v3094 = vpop.f32.mrb[0].mxu0
        %v3095 = vadd.f32 %v1664, %v3094
        %v3096 = vpop.f32.mrb[0].mxu0
        %v3097 = vpop.f32.mrb[0].mxu0
        %v3098 = vadd.f32 %v1664, %v3097
        %v3099 = vpop.f32.mrb[0].mxu0
        %3100 = vmatprep.mubr.bf16.mxu0 0
        %3101 = vmatmul.mubr.bf16.gmra.mrb[0].mxu0 %v2466
        %v3102 = vpop.f32.mrb[0].mxu0
        %v3103 = vadd.f32 %v1664, %v3102
        %v3104 = vpop.f32.mrb[0].mxu0
        %v3105 = vpop.f32.mrb[0].mxu0
        %v3106 = vadd.f32 %v1664, %v3105
        %v3107 = vpop.f32.mrb[0].mxu0
        %3108 = vmatprep.mubr.bf16.mxu0 0
        %3109 = vmatmul.mubr.bf16.gmra.mrb[0].mxu0 %v2469
        %v3110 = vpop.f32.mrb[0].mxu0
        %v3111 = vadd.f32 %v1664, %v3110
        %v3112 = vpop.f32.mrb[0].mxu0
        %v3113 = vpop.f32.mrb[0].mxu0
        %v3114 = vadd.f32 %v1664, %v3113
        %v3115 = vpop.f32.mrb[0].mxu0
        %3116 = vmatprep.mubr.bf16.mxu0 0
        %3117 = vmatmul.mubr.bf16.gmra.mrb[0].mxu0 %v2472
        %v3118 = vpop.f32.mrb[0].mxu0
        %v3119 = vadd.f32 %v1664, %v3118
        %v3120 = vpop.f32.mrb[0].mxu0
        %v3121 = vpop.f32.mrb[0].mxu0
        %v3122 = vadd.f32 %v1664, %v3121
        %v3123 = vpop.f32.mrb[0].mxu0
        %3124 = vmatprep.mubr.bf16.mxu0 0
        %3125 = vmatmul.mubr.bf16.gmra.mrb[0].mxu0 %v2475
        %v3126 = vpop.f32.mrb[0].mxu0
        %v3127 = vadd.f32 %v1664, %v3126
        %v3128 = vpop.f32.mrb[0].mxu0
        %v3129 = vpop.f32.mrb[0].mxu0
        %v3130 = vadd.f32 %v1664, %v3129
        %v3131 = vpop.f32.mrb[0].mxu0
        %3132 = vmatprep.mubr.bf16.mxu0 0
        %3133 = vmatmul.mubr.bf16.gmra.mrb[0].mxu0 %v2478
        %v3134 = vpop.f32.mrb[0].mxu0
        %v3135 = vadd.f32 %v1664, %v3134
        %v3136 = vpop.f32.mrb[0].mxu0
        %v3137 = vpop.f32.mrb[0].mxu0
        %v3138 = vadd.f32 %v1664, %v3137
        %v3139 = vpop.f32.mrb[0].mxu0
        %3140 = vmatprep.mubr.bf16.mxu0 0
        %3141 = vmatmul.mubr.bf16.gmra.mrb[0].mxu0 %v2481
        %v3142 = vpop.f32.mrb[0].mxu0
        %v3143 = vadd.f32 %v1664, %v3142
        %v3144 = vpop.f32.mrb[0].mxu0
        %v3145 = vpop.f32.mrb[0].mxu0
        %v3146 = vadd.f32 %v1664, %v3145
        %v3147 = vpop.f32.mrb[0].mxu0
        %3148 = vmatprep.mubr.bf16.mxu0 0
        %3149 = vmatmul.mubr.bf16.gmra.mrb[0].mxu0 %v2484
        %v3150 = vpop.f32.mrb[0].mxu0
        %v3151 = vadd.f32 %v1664, %v3150
        %v3152 = vpop.f32.mrb[0].mxu0
        %v3153 = vpop.f32.mrb[0].mxu0
        %v3154 = vadd.f32 %v1664, %v3153
        %v3155 = vpop.f32.mrb[0].mxu0
        %3156 = vmatprep.mubr.bf16.mxu0 0
        %3157 = vmatmul.mubr.bf16.gmra.mrb[0].mxu0 %v2487
        %v3158 = vpop.f32.mrb[0].mxu0
        %v3159 = vadd.f32 %v1664, %v3158
        %v3160 = vpop.f32.mrb[0].mxu0
        %v3161 = vpop.f32.mrb[0].mxu0
        %v3162 = vadd.f32 %v1664, %v3161
        %v3163 = vpop.f32.mrb[0].mxu0
        %3164 = vmatprep.mubr.bf16.mxu0 0
        %3165 = vmatmul.mubr.bf16.gmra.mrb[0].mxu0 %v2490
        %v3166 = vpop.f32.mrb[0].mxu0
        %v3167 = vadd.f32 %v1664, %v3166
        %v3168 = vpop.f32.mrb[0].mxu0
        %v3169 = vpop.f32.mrb[0].mxu0
        %v3170 = vadd.f32 %v1664, %v3169
        %v3171 = vpop.f32.mrb[0].mxu0
        %3172 = vmatprep.mubr.bf16.mxu0 0
        %3173 = vmatmul.mubr.bf16.gmra.mrb[0].mxu0 %v2493
        %v3174 = vpop.f32.mrb[0].mxu0
        %v3175 = vadd.f32 %v1664, %v3174
        %v3176 = vpop.f32.mrb[0].mxu0
        %v3177 = vpop.f32.mrb[0].mxu0
        %v3178 = vadd.f32 %v1664, %v3177
        %v3179 = vpop.f32.mrb[0].mxu0
        %3180 = vmatprep.mubr.bf16.mxu0 0
        %3181 = vmatmul.mubr.bf16.gmra.mrb[0].mxu0 %v2496
        %v3182 = vpop.f32.mrb[0].mxu0
        %v3183 = vadd.f32 %v1664, %v3182
        %v3184 = vpop.f32.mrb[0].mxu0
        %v3185 = vpop.f32.mrb[0].mxu0
        %v3186 = vadd.f32 %v1664, %v3185
        %v3187 = vpop.f32.mrb[0].mxu0
        %3188 = vmatprep.mubr.bf16.mxu0 0
        %3189 = vmatmul.mubr.bf16.gmra.mrb[0].mxu0 %v2499
        %v3190 = vpop.f32.mrb[0].mxu0
        %v3191 = vadd.f32 %v1664, %v3190
        %v3192 = vpop.f32.mrb[0].mxu0
        %v3193 = vpop.f32.mrb[0].mxu0
        %v3194 = vadd.f32 %v1664, %v3193
        %v3195 = vpop.f32.mrb[0].mxu0
        %3196 = vmatprep.mubr.bf16.mxu0 0
        %3197 = vmatmul.mubr.bf16.gmra.mrb[0].mxu0 %v2502
        %v3198 = vpop.f32.mrb[0].mxu0
        %v3199 = vadd.f32 %v1664, %v3198
        %v3200 = vpop.f32.mrb[0].mxu0
        %v3201 = vpop.f32.mrb[0].mxu0
        %v3202 = vadd.f32 %v1664, %v3201
        %v3203 = vpop.f32.mrb[0].mxu0
        %3204 = vmatprep.mubr.bf16.mxu0 0
        %3205 = vmatmul.mubr.bf16.gmra.mrb[0].mxu0 %v2505
        %v3206 = vpop.f32.mrb[0].mxu0
        %v3207 = vadd.f32 %v1664, %v3206
        %v3208 = vpop.f32.mrb[0].mxu0
        %v3209 = vpop.f32.mrb[0].mxu0
        %v3210 = vadd.f32 %v1664, %v3209
        %v3211 = vpop.f32.mrb[0].mxu0
        %3212 = vmatprep.mubr.bf16.mxu0 0
        %3213 = vmatmul.mubr.bf16.gmra.mrb[0].mxu0 %v2508
        %v3214 = vpop.f32.mrb[0].mxu0
        %v3215 = vadd.f32 %v1664, %v3214
        %v3216 = vpop.f32.mrb[0].mxu0
        %v3217 = vpop.f32.mrb[0].mxu0
        %v3218 = vadd.f32 %v1664, %v3217
        %v3219 = vpop.f32.mrb[0].mxu0
        %3220 = vmatprep.mubr.bf16.mxu0 0
        %3221 = vmatmul.mubr.bf16.gmra.mrb[0].mxu0 %v2511
        %v3222 = vpop.f32.mrb[0].mxu0
        %v3223 = vadd.f32 %v1664, %v3222
        %v3224 = vpop.f32.mrb[0].mxu0
        %v3225 = vpop.f32.mrb[0].mxu0
        %v3226 = vadd.f32 %v1664, %v3225
        %v3227 = vpop.f32.mrb[0].mxu0
        %3228 = vmatprep.mubr.bf16.mxu0 0
        %3229 = vmatmul.mubr.bf16.gmra.mrb[0].mxu0 %v2514
        %v3230 = vpop.f32.mrb[0].mxu0
        %v3231 = vadd.f32 %v1664, %v3230
        %v3232 = vpop.f32.mrb[0].mxu0
        %v3233 = vpop.f32.mrb[0].mxu0
        %v3234 = vadd.f32 %v1664, %v3233
        %v3235 = vpop.f32.mrb[0].mxu0
        %3236 = vmatprep.mubr.bf16.mxu0 0
        %3237 = vmatmul.mubr.bf16.gmra.mrb[0].mxu0 %v2517
        %v3238 = vpop.f32.mrb[0].mxu0
        %v3239 = vadd.f32 %v1664, %v3238
        %v3240 = vpop.f32.mrb[0].mxu0
        %v3241 = vpop.f32.mrb[0].mxu0
        %v3242 = vadd.f32 %v1664, %v3241
        %v3243 = vpop.f32.mrb[0].mxu0
        %3244 = vmatprep.mubr.bf16.mxu0 0
        %3245 = vmatmul.mubr.bf16.gmra.mrb[0].mxu0 %v2520
        %v3246 = vpop.f32.mrb[0].mxu0
        %v3247 = vadd.f32 %v1664, %v3246
        %v3248 = vpop.f32.mrb[0].mxu0
        %v3249 = vpop.f32.mrb[0].mxu0
        %v3250 = vadd.f32 %v1664, %v3249
        %v3251 = vpop.f32.mrb[0].mxu0
        %3252 = vmatprep.mubr.bf16.mxu0 0
        %3253 = vmatmul.mubr.bf16.gmra.mrb[0].mxu0 %v2523
        %v3254 = vpop.f32.mrb[0].mxu0
        %v3255 = vadd.f32 %v1664, %v3254
        %v3256 = vpop.f32.mrb[0].mxu0
        %v3257 = vpop.f32.mrb[0].mxu0
        %v3258 = vadd.f32 %v1664, %v3257
        %v3259 = vpop.f32.mrb[0].mxu0
        %3260 = vmatprep.mubr.bf16.mxu0 0
        %3261 = vmatmul.mubr.bf16.gmra.mrb[0].mxu0 %v2526
        %v3262 = vpop.f32.mrb[0].mxu0
        %v3263 = vadd.f32 %v1664, %v3262
        %v3264 = vpop.f32.mrb[0].mxu0
        %v3265 = vpop.f32.mrb[0].mxu0
        %v3266 = vadd.f32 %v1664, %v3265
        %v3267 = vpop.f32.mrb[0].mxu0
        %3268 = vmatprep.mubr.bf16.mxu0 0
        %3269 = vmatmul.mubr.bf16.gmra.mrb[0].mxu0 %v2529
        %v3270 = vpop.f32.mrb[0].mxu0
        %v3271 = vadd.f32 %v1664, %v3270
        %v3272 = vpop.f32.mrb[0].mxu0
        %v3273 = vpop.f32.mrb[0].mxu0
        %v3274 = vadd.f32 %v1664, %v3273
        %v3275 = vpop.f32.mrb[0].mxu0
        %3276 = vmatprep.mubr.bf16.mxu0 0
        %3277 = vmatmul.mubr.bf16.gmra.mrb[0].mxu0 %v2532
        %v3278 = vpop.f32.mrb[0].mxu0
        %v3279 = vadd.f32 %v1664, %v3278
        %v3280 = vpop.f32.mrb[0].mxu0
        %v3281 = vpop.f32.mrb[0].mxu0
        %v3282 = vadd.f32 %v1664, %v3281
        %v3283 = vpop.f32.mrb[0].mxu0
        %3284 = vmatprep.mubr.bf16.mxu0 0
        %3285 = vmatmul.mubr.bf16.gmra.mrb[0].mxu0 %v2535
        %v3286 = vpop.f32.mrb[0].mxu0
        %v3287 = vadd.f32 %v1664, %v3286
        %v3288 = vpop.f32.mrb[0].mxu0
        %v3289 = vpop.f32.mrb[0].mxu0
        %v3290 = vadd.f32 %v1664, %v3289
        %v3291 = vpop.f32.mrb[0].mxu0
        %3292 = vmatprep.mubr.bf16.mxu0 0
        %3293 = vmatmul.mubr.bf16.gmra.mrb[0].mxu0 %v2538
        %v3294 = vpop.f32.mrb[0].mxu0
        %v3295 = vadd.f32 %v1664, %v3294
        %v3296 = vpop.f32.mrb[0].mxu0
        %v3297 = vpop.f32.mrb[0].mxu0
        %v3298 = vadd.f32 %v1664, %v3297
        %v3299 = vpop.f32.mrb[0].mxu0
        %3300 = vmatprep.mubr.bf16.mxu0 0
        %3301 = vmatmul.mubr.bf16.gmra.mrb[0].mxu0 %v2541
        %v3302 = vpop.f32.mrb[0].mxu0
        %v3303 = vadd.f32 %v1664, %v3302
        %v3304 = vpop.f32.mrb[0].mxu0
        %v3305 = vpop.f32.mrb[0].mxu0
        %v3306 = vadd.f32 %v1664, %v3305
        %v3307 = vpop.f32.mrb[0].mxu0
        %3308 = vmatprep.mubr.bf16.mxu0 0
        %3309 = vmatmul.mubr.bf16.gmra.mrb[0].mxu0 %v2544
        %v3310 = vpop.f32.mrb[0].mxu0
        %v3311 = vadd.f32 %v1664, %v3310
        %v3312 = vpop.f32.mrb[0].mxu0
        %v3313 = vpop.f32.mrb[0].mxu0
        %v3314 = vadd.f32 %v1664, %v3313
        %v3315 = vpop.f32.mrb[0].mxu0
        %3316 = vmatprep.mubr.bf16.mxu0 0
        %3317 = vmatmul.mubr.bf16.gmra.mrb[0].mxu0 %v2547
        %v3318 = vpop.f32.mrb[0].mxu0
        %v3319 = vadd.f32 %v1664, %v3318
        %v3320 = vpop.f32.mrb[0].mxu0
        %v3321 = vpop.f32.mrb[0].mxu0
        %v3322 = vadd.f32 %v1664, %v3321
        %v3323 = vpop.f32.mrb[0].mxu0
        %3324 = vmatprep.mubr.bf16.mxu0 0
        %3325 = vmatmul.mubr.bf16.gmra.mrb[0].mxu0 %v2550
        %v3326 = vpop.f32.mrb[0].mxu0
        %v3327 = vadd.f32 %v1664, %v3326
        %v3328 = vpop.f32.mrb[0].mxu0
        %v3329 = vpop.f32.mrb[0].mxu0
        %v3330 = vadd.f32 %v1664, %v3329
        %v3331 = vpop.f32.mrb[0].mxu0
        %3332 = vmatprep.mubr.bf16.mxu0 0
        %3333 = vmatmul.mubr.bf16.gmra.mrb[0].mxu0 %v2553
        %v3334 = vpop.f32.mrb[0].mxu0
        %v3335 = vadd.f32 %v1664, %v3334
        %v3336 = vpop.f32.mrb[0].mxu0
        %v3337 = vpop.f32.mrb[0].mxu0
        %v3338 = vadd.f32 %v1664, %v3337
        %v3339 = vpop.f32.mrb[0].mxu0
        %3340 = vmatprep.mubr.bf16.mxu0 0
        %3341 = vmatmul.mubr.bf16.gmra.mrb[0].mxu0 %v2556
        %v3342 = vpop.f32.mrb[0].mxu0
        %v3343 = vadd.f32 %v1664, %v3342
        %v3344 = vpop.f32.mrb[0].mxu0
        %v3345 = vpop.f32.mrb[0].mxu0
        %v3346 = vadd.f32 %v1664, %v3345
        %v3347 = vpop.f32.mrb[0].mxu0
        %3348 = vmatprep.mubr.bf16.mxu0 0
        %3349 = vmatmul.mubr.bf16.gmra.mrb[0].mxu0 %v2559
        %v3350 = vpop.f32.mrb[0].mxu0
        %v3351 = vadd.f32 %v1664, %v3350
        %v3352 = vpop.f32.mrb[0].mxu0
        %v3353 = vpop.f32.mrb[0].mxu0
        %v3354 = vadd.f32 %v1664, %v3353
        %v3355 = vpop.f32.mrb[0].mxu0
        %3356 = vmatprep.mubr.bf16.mxu0 0
        %3357 = vmatmul.mubr.bf16.gmra.mrb[0].mxu0 %v2562
        %v3358 = vpop.f32.mrb[0].mxu0
        %v3359 = vadd.f32 %v1664, %v3358
        %v3360 = vpop.f32.mrb[0].mxu0
        %v3361 = vpop.f32.mrb[0].mxu0
        %v3362 = vadd.f32 %v1664, %v3361
        %v3363 = vpop.f32.mrb[0].mxu0
        %3364 = vmatprep.mubr.bf16.mxu0 0
        %3365 = vmatmul.mubr.bf16.gmra.mrb[0].mxu0 %v2565
        %v3366 = vpop.f32.mrb[0].mxu0
        %v3367 = vadd.f32 %v1664, %v3366
        %v3368 = vpop.f32.mrb[0].mxu0
        %v3369 = vpop.f32.mrb[0].mxu0
        %v3370 = vadd.f32 %v1664, %v3369
        %v3371 = vpop.f32.mrb[0].mxu0
        %3372 = vmatprep.mubr.bf16.mxu0 0
        %3373 = vmatmul.mubr.bf16.gmra.mrb[0].mxu0 %v2568
        %v3374 = vpop.f32.mrb[0].mxu0
        %v3375 = vadd.f32 %v1664, %v3374
        %v3376 = vpop.f32.mrb[0].mxu0
        %v3377 = vpop.f32.mrb[0].mxu0
        %v3378 = vadd.f32 %v1664, %v3377
        %v3379 = vpop.f32.mrb[0].mxu0
        %3380 = vmatprep.mubr.bf16.mxu0 0
        %3381 = vmatmul.mubr.bf16.gmra.mrb[0].mxu0 %v2571
        %v3382 = vpop.f32.mrb[0].mxu0
        %v3383 = vadd.f32 %v1664, %v3382
        %v3384 = vpop.f32.mrb[0].mxu0
        %v3385 = vpop.f32.mrb[0].mxu0
        %v3386 = vadd.f32 %v1664, %v3385
        %v3387 = vpop.f32.mrb[0].mxu0
        %3388 = vmatprep.mubr.bf16.mxu0 0
        %3389 = vmatmul.mubr.bf16.gmra.mrb[0].mxu0 %v2574
        %v3390 = vpop.f32.mrb[0].mxu0
        %v3391 = vadd.f32 %v1664, %v3390
        %v3392 = vpop.f32.mrb[0].mxu0
        %v3393 = vpop.f32.mrb[0].mxu0
        %v3394 = vadd.f32 %v1664, %v3393
        %v3395 = vpop.f32.mrb[0].mxu0
        %3396 = vmatprep.mubr.bf16.mxu0 0
        %3397 = vmatmul.mubr.bf16.gmra.mrb[0].mxu0 %v2577
        %v3398 = vpop.f32.mrb[0].mxu0
        %v3399 = vadd.f32 %v1664, %v3398
        %v3400 = vpop.f32.mrb[0].mxu0
        %v3401 = vpop.f32.mrb[0].mxu0
        %v3402 = vadd.f32 %v1664, %v3401
        %v3403 = vpop.f32.mrb[0].mxu0
        %3404 = vmatprep.mubr.bf16.mxu0 0
        %3405 = vmatmul.mubr.bf16.gmra.mrb[0].mxu0 %v2580
        %v3406 = vpop.f32.mrb[0].mxu0
        %v3407 = vadd.f32 %v1664, %v3406
        %v3408 = vpop.f32.mrb[0].mxu0
        %v3409 = vpop.f32.mrb[0].mxu0
        %v3410 = vadd.f32 %v1664, %v3409
        %v3411 = vpop.f32.mrb[0].mxu0
        %3412 = vmatprep.mubr.bf16.mxu0 0
        %3413 = vmatmul.mubr.bf16.gmra.mrb[0].mxu0 %v2583
        %v3414 = vpop.f32.mrb[0].mxu0
        %v3415 = vadd.f32 %v1664, %v3414
        %v3416 = vpop.f32.mrb[0].mxu0
        %v3417 = vpop.f32.mrb[0].mxu0
        %v3418 = vadd.f32 %v1664, %v3417
        %v3419 = vpop.f32.mrb[0].mxu0
        %3420 = vmatprep.mubr.bf16.mxu0 0
        %3421 = vmatmul.mubr.bf16.gmra.mrb[0].mxu0 %v2586
        %v3422 = vpop.f32.mrb[0].mxu0
        %v3423 = vadd.f32 %v1664, %v3422
        %v3424 = vpop.f32.mrb[0].mxu0
        %v3425 = vpop.f32.mrb[0].mxu0
        %v3426 = vadd.f32 %v1664, %v3425
        %v3427 = vpop.f32.mrb[0].mxu0
        %3428 = vmatprep.mubr.bf16.mxu0 0
        %3429 = vmatmul.mubr.bf16.gmra.mrb[0].mxu0 %v2589
        %v3430 = vpop.f32.mrb[0].mxu0
        %v3431 = vadd.f32 %v1664, %v3430
        %v3432 = vpop.f32.mrb[0].mxu0
        %v3433 = vpop.f32.mrb[0].mxu0
        %v3434 = vadd.f32 %v1664, %v3433
        %v3435 = vpop.f32.mrb[0].mxu0
        %3436 = vmatprep.mubr.bf16.mxu0 0
        %3437 = vmatmul.mubr.bf16.gmra.mrb[0].mxu0 %v2592
        %v3438 = vpop.f32.mrb[0].mxu0
        %v3439 = vadd.f32 %v1664, %v3438
        %v3440 = vpop.f32.mrb[0].mxu0
        %v3441 = vpop.f32.mrb[0].mxu0
        %v3442 = vadd.f32 %v1664, %v3441
        %v3443 = vpop.f32.mrb[0].mxu0
        %3444 = vmatprep.mubr.bf16.mxu0 0
        %3445 = vmatmul.mubr.bf16.gmra.mrb[0].mxu0 %v2595
        %v3446 = vpop.f32.mrb[0].mxu0
        %v3447 = vadd.f32 %v1664, %v3446
        %v3448 = vpop.f32.mrb[0].mxu0
        %v3449 = vpop.f32.mrb[0].mxu0
        %v3450 = vadd.f32 %v1664, %v3449
        %v3451 = vpop.f32.mrb[0].mxu0
        %3452 = vmatprep.mubr.bf16.mxu0 0
        %3453 = vmatmul.mubr.bf16.gmra.mrb[0].mxu0 %v2598
        %v3454 = vpop.f32.mrb[0].mxu0
        %v3455 = vadd.f32 %v1664, %v3454
        %v3456 = vpop.f32.mrb[0].mxu0
        %v3457 = vpop.f32.mrb[0].mxu0
        %v3458 = vadd.f32 %v1664, %v3457
        %v3459 = vpop.f32.mrb[0].mxu0
        %3460 = vmatprep.mubr.bf16.mxu0 0
        %3461 = vmatmul.mubr.bf16.gmra.mrb[0].mxu0 %v2601
        %v3462 = vpop.f32.mrb[0].mxu0
        %v3463 = vadd.f32 %v1664, %v3462
        %v3464 = vpop.f32.mrb[0].mxu0
        %v3465 = vpop.f32.mrb[0].mxu0
        %v3466 = vadd.f32 %v1664, %v3465
        %v3467 = vpop.f32.mrb[0].mxu0
        %3468 = vmatprep.mubr.bf16.mxu0 0
        %3469 = vmatmul.mubr.bf16.gmra.mrb[0].mxu0 %v2604
        %v3470 = vpop.f32.mrb[0].mxu0
        %v3471 = vadd.f32 %v1664, %v3470
        %v3472 = vpop.f32.mrb[0].mxu0
        %v3473 = vpop.f32.mrb[0].mxu0
        %v3474 = vadd.f32 %v1664, %v3473
        %v3475 = vpop.f32.mrb[0].mxu0
        %3476 = vmatprep.mubr.bf16.mxu0 0
        %3477 = vmatmul.mubr.bf16.gmra.mrb[0].mxu0 %v2607
        %v3478 = vpop.f32.mrb[0].mxu0
        %v3479 = vadd.f32 %v1664, %v3478
        %v3480 = vpop.f32.mrb[0].mxu0
        %v3481 = vpop.f32.mrb[0].mxu0
        %v3482 = vadd.f32 %v1664, %v3481
        %v3483 = vpop.f32.mrb[0].mxu0
        %3484 = vmatprep.mubr.bf16.mxu0 0
        %3485 = vmatmul.mubr.bf16.gmra.mrb[0].mxu0 %v2610
        %v3486 = vpop.f32.mrb[0].mxu0
        %v3487 = vadd.f32 %v1664, %v3486
        %v3488 = vpop.f32.mrb[0].mxu0
        %v3489 = vpop.f32.mrb[0].mxu0
        %v3490 = vadd.f32 %v1664, %v3489
        %v3491 = vpop.f32.mrb[0].mxu0
        %3492 = vmatprep.mubr.bf16.mxu0 0
        %3493 = vmatmul.mubr.bf16.gmra.mrb[0].mxu0 %v2613
        %v3494 = vpop.f32.mrb[0].mxu0
        %v3495 = vadd.f32 %v1664, %v3494
        %v3496 = vpop.f32.mrb[0].mxu0
        %v3497 = vpop.f32.mrb[0].mxu0
        %v3498 = vadd.f32 %v1664, %v3497
        %v3499 = vpop.f32.mrb[0].mxu0
        %3500 = vmatprep.mubr.bf16.mxu0 0
        %3501 = vmatmul.mubr.bf16.gmra.mrb[0].mxu0 %v2616
        %v3502 = vpop.f32.mrb[0].mxu0
        %v3503 = vadd.f32 %v1664, %v3502
        %v3504 = vpop.f32.mrb[0].mxu0
        %v3505 = vpop.f32.mrb[0].mxu0
        %v3506 = vadd.f32 %v1664, %v3505
        %v3507 = vpop.f32.mrb[0].mxu0
        %3508 = vmatprep.mubr.bf16.mxu0 0
        %3509 = vmatmul.mubr.bf16.gmra.mrb[0].mxu0 %v2619
        %v3510 = vpop.f32.mrb[0].mxu0
        %v3511 = vadd.f32 %v1664, %v3510
        %v3512 = vpop.f32.mrb[0].mxu0
        %v3513 = vpop.f32.mrb[0].mxu0
        %v3514 = vadd.f32 %v1664, %v3513
        %v3515 = vpop.f32.mrb[0].mxu0
        %3516 = vmatprep.mubr.bf16.mxu0 0
        %3517 = vmatmul.mubr.bf16.gmra.mrb[0].mxu0 %v2622
        %v3518 = vpop.f32.mrb[0].mxu0
        %v3519 = vadd.f32 %v1664, %v3518
        %v3520 = vpop.f32.mrb[0].mxu0
        %v3521 = vpop.f32.mrb[0].mxu0
        %v3522 = vadd.f32 %v1664, %v3521
        %v3523 = vpop.f32.mrb[0].mxu0
        %3524 = vmatprep.mubr.bf16.mxu0 0
        %3525 = vmatmul.mubr.bf16.gmra.mrb[0].mxu0 %v2625
        %v3526 = vpop.f32.mrb[0].mxu0
        %v3527 = vadd.f32 %v1664, %v3526
        %v3528 = vpop.f32.mrb[0].mxu0
        %v3529 = vpop.f32.mrb[0].mxu0
        %v3530 = vadd.f32 %v1664, %v3529
        %v3531 = vpop.f32.mrb[0].mxu0
        %3532 = vmatprep.mubr.bf16.mxu0 0
        %3533 = vmatmul.mubr.bf16.gmra.mrb[0].mxu0 %v2628
        %v3534 = vpop.f32.mrb[0].mxu0
        %v3535 = vadd.f32 %v1664, %v3534
        %v3536 = vpop.f32.mrb[0].mxu0
        %v3537 = vpop.f32.mrb[0].mxu0
        %v3538 = vadd.f32 %v1664, %v3537
        %v3539 = vpop.f32.mrb[0].mxu0
        %3540 = vmatprep.mubr.bf16.mxu0 0
        %3541 = vmatmul.mubr.bf16.gmra.mrb[0].mxu0 %v2631
        %v3542 = vpop.f32.mrb[0].mxu0
        %v3543 = vadd.f32 %v1664, %v3542
        %v3544 = vpop.f32.mrb[0].mxu0
        %v3545 = vpop.f32.mrb[0].mxu0
        %v3546 = vadd.f32 %v1664, %v3545
        %v3547 = vpop.f32.mrb[0].mxu0
        %3548 = vmatprep.mubr.bf16.mxu0 0
        %3549 = vmatmul.mubr.bf16.gmra.mrb[0].mxu0 %v2634
        %v3550 = vpop.f32.mrb[0].mxu0
        %v3551 = vadd.f32 %v1664, %v3550
        %v3552 = vpop.f32.mrb[0].mxu0
        %v3553 = vpop.f32.mrb[0].mxu0
        %v3554 = vadd.f32 %v1664, %v3553
        %v3555 = vpop.f32.mrb[0].mxu0
        %3556 = vmatprep.mubr.bf16.mxu0 0
        %3557 = vmatmul.mubr.bf16.gmra.mrb[0].mxu0 %v2637
        %v3558 = vpop.f32.mrb[0].mxu0
        %v3559 = vadd.f32 %v1664, %v3558
        %v3560 = vpop.f32.mrb[0].mxu0
        %v3561 = vpop.f32.mrb[0].mxu0
        %v3562 = vadd.f32 %v1664, %v3561
        %v3563 = vpop.f32.mrb[0].mxu0
        %3564 = vmatprep.mubr.bf16.mxu0 0
        %3565 = vmatmul.mubr.bf16.gmra.mrb[0].mxu0 %v2640
        %v3566 = vpop.f32.mrb[0].mxu0
        %v3567 = vadd.f32 %v1664, %v3566
        %v3568 = vpop.f32.mrb[0].mxu0
        %v3569 = vpop.f32.mrb[0].mxu0
        %v3570 = vadd.f32 %v1664, %v3569
        %v3571 = vpop.f32.mrb[0].mxu0
        %3572 = vmatprep.mubr.bf16.mxu0 0
        %3573 = vmatmul.mubr.bf16.gmra.mrb[0].mxu0 %v2643
        %v3574 = vpop.f32.mrb[0].mxu0
        %v3575 = vadd.f32 %v1664, %v3574
        %v3576 = vpop.f32.mrb[0].mxu0
        %v3577 = vpop.f32.mrb[0].mxu0
        %v3578 = vadd.f32 %v1664, %v3577
        %v3579 = vpop.f32.mrb[0].mxu0
        %3580 = vmatprep.mubr.bf16.mxu0 0
        %3581 = vmatmul.mubr.bf16.gmra.mrb[0].mxu0 %v2646
        %v3582 = vpop.f32.mrb[0].mxu0
        %v3583 = vadd.f32 %v1664, %v3582
        %v3584 = vpop.f32.mrb[0].mxu0
        %v3585 = vpop.f32.mrb[0].mxu0
        %v3586 = vadd.f32 %v1664, %v3585
        %v3587 = vpop.f32.mrb[0].mxu0
        %3588 = vmatprep.mubr.bf16.mxu0 0
        %3589 = vmatmul.mubr.bf16.gmra.mrb[0].mxu0 %v2649
        %v3590 = vpop.f32.mrb[0].mxu0
        %v3591 = vadd.f32 %v1664, %v3590
        %v3592 = vpop.f32.mrb[0].mxu0
        %v3593 = vpop.f32.mrb[0].mxu0
        %v3594 = vadd.f32 %v1664, %v3593
        %v3595 = vpop.f32.mrb[0].mxu0
        %3596 = vmatprep.mubr.bf16.mxu0 0
        %3597 = vmatmul.mubr.bf16.gmra.mrb[0].mxu0 %v2652
        %v3598 = vpop.f32.mrb[0].mxu0
        %v3599 = vadd.f32 %v1664, %v3598
        %v3600 = vpop.f32.mrb[0].mxu0
        %v3601 = vpop.f32.mrb[0].mxu0
        %v3602 = vadd.f32 %v1664, %v3601
        %v3603 = vpop.f32.mrb[0].mxu0
        %3604 = vmatprep.mubr.bf16.mxu0 0
        %3605 = vmatmul.mubr.bf16.gmra.mrb[0].mxu0 %v2655
        %v3606 = vpop.f32.mrb[0].mxu0
        %v3607 = vadd.f32 %v1664, %v3606
        %v3608 = vpop.f32.mrb[0].mxu0
        %v3609 = vpop.f32.mrb[0].mxu0
        %v3610 = vadd.f32 %v1664, %v3609
        %v3611 = vpop.f32.mrb[0].mxu0
        %3612 = vmatprep.mubr.bf16.mxu0 0
        %3613 = vmatmul.mubr.bf16.gmra.mrb[0].mxu0 %v2658
        %v3614 = vpop.f32.mrb[0].mxu0
        %v3615 = vadd.f32 %v1664, %v3614
        %v3616 = vpop.f32.mrb[0].mxu0
        %v3617 = vpop.f32.mrb[0].mxu0
        %v3618 = vadd.f32 %v1664, %v3617
        %v3619 = vpop.f32.mrb[0].mxu0
        %3620 = vmatprep.mubr.bf16.mxu0 0
        %3621 = vmatmul.mubr.bf16.gmra.mrb[0].mxu0 %v2661
        %v3622 = vpop.f32.mrb[0].mxu0
        %v3623 = vadd.f32 %v1664, %v3622
        %v3624 = vpop.f32.mrb[0].mxu0
        %v3625 = vpop.f32.mrb[0].mxu0
        %v3626 = vadd.f32 %v1664, %v3625
        %v3627 = vpop.f32.mrb[0].mxu0
        %3628 = vmatprep.mubr.bf16.mxu0 0
        %3629 = vmatmul.mubr.bf16.gmra.mrb[0].mxu0 %v2664
        %v3630 = vpop.f32.mrb[0].mxu0
        %v3631 = vadd.f32 %v1664, %v3630
        %v3632 = vpop.f32.mrb[0].mxu0
        %v3633 = vpop.f32.mrb[0].mxu0
        %v3634 = vadd.f32 %v1664, %v3633
        %v3635 = vpop.f32.mrb[0].mxu0
        %3636 = vmatprep.mubr.bf16.mxu0 0
        %3637 = vmatmul.mubr.bf16.gmra.mrb[0].mxu0 %v2667
        %v3638 = vpop.f32.mrb[0].mxu0
        %v3639 = vadd.f32 %v1664, %v3638
        %v3640 = vpop.f32.mrb[0].mxu0
        %v3641 = vpop.f32.mrb[0].mxu0
        %v3642 = vadd.f32 %v1664, %v3641
        %v3643 = vpop.f32.mrb[0].mxu0
        %3644 = vmatprep.mubr.bf16.mxu0 0
        %3645 = vmatmul.mubr.bf16.gmra.mrb[0].mxu0 %v2670
        %v3646 = vpop.f32.mrb[0].mxu0
        %v3647 = vadd.f32 %v1664, %v3646
        %v3648 = vpop.f32.mrb[0].mxu0
        %v3649 = vpop.f32.mrb[0].mxu0
        %v3650 = vadd.f32 %v1664, %v3649
        %v3651 = vpop.f32.mrb[0].mxu0
        %3652 = vmatprep.mubr.bf16.mxu0 0
        %3653 = vmatmul.mubr.bf16.gmra.mrb[0].mxu0 %v2673
        %v3654 = vpop.f32.mrb[0].mxu0
        %v3655 = vadd.f32 %v1664, %v3654
        %v3656 = vpop.f32.mrb[0].mxu0
        %v3657 = vpop.f32.mrb[0].mxu0
        %v3658 = vadd.f32 %v1664, %v3657
        %v3659 = vpop.f32.mrb[0].mxu0
        %3660 = vmatprep.mubr.bf16.mxu0 0
        %3661 = vmatmul.mubr.bf16.gmra.mrb[0].mxu0 %v2676
        %v3662 = vpop.f32.mrb[0].mxu0
        %v3663 = vadd.f32 %v1664, %v3662
        %v3664 = vpop.f32.mrb[0].mxu0
        %v3665 = vpop.f32.mrb[0].mxu0
        %v3666 = vadd.f32 %v1664, %v3665
        %v3667 = vpop.f32.mrb[0].mxu0
        %3668 = vmatprep.mubr.bf16.mxu0 0
        %3669 = vmatmul.mubr.bf16.gmra.mrb[0].mxu0 %v2679
        %v3670 = vpop.f32.mrb[0].mxu0
        %v3671 = vadd.f32 %v1664, %v3670
        %v3672 = vpop.f32.mrb[0].mxu0
        %v3673 = vpop.f32.mrb[0].mxu0
        %v3674 = vadd.f32 %v1664, %v3673
        %v3675 = vpop.f32.mrb[0].mxu0
        %3676 = vmatprep.mubr.bf16.mxu0 0
        %3677 = vmatmul.mubr.bf16.gmra.mrb[0].mxu0 %v2682
        %v3678 = vpop.f32.mrb[0].mxu0
        %v3679 = vadd.f32 %v1664, %v3678
        %v3680 = vpop.f32.mrb[0].mxu0
        %v3681 = vpop.f32.mrb[0].mxu0
        %v3682 = vadd.f32 %v1664, %v3681
        %v3683 = vpop.f32.mrb[0].mxu0
        %3684 = vmatprep.mubr.bf16.mxu0 0
        %3685 = vmatmul.mubr.bf16.gmra.mrb[0].mxu0 %v2685
        %v3686 = vpop.f32.mrb[0].mxu0
        %v3687 = vadd.f32 %v1664, %v3686
        %v3688 = vpop.f32.mrb[0].mxu0
        %v3689 = vpop.f32.mrb[0].mxu0
        %v3690 = vadd.f32 %v1664, %v3689
        %v3691 = vpop.f32.mrb[0].mxu0
        %3692 = vmatprep.mubr.bf16.mxu0 0
        %3693 = vmatmul.mubr.bf16.gmra.mrb[0].mxu0 %v2688
        %v3694 = vpop.f32.mrb[0].mxu0
        %v3695 = vadd.f32 %v1664, %v3694
        %v3696 = vpop.f32.mrb[0].mxu0
        %v3697 = vpop.f32.mrb[0].mxu0
        %v3698 = vadd.f32 %v1664, %v3697
        %v3699 = vpop.f32.mrb[0].mxu0
        %3700 = vmatprep.mubr.bf16.mxu0 0
        %3701 = vmatmul.mubr.bf16.gmra.mrb[0].mxu0 %v2691
        %v3702 = vpop.f32.mrb[0].mxu0
        %v3703 = vadd.f32 %v1664, %v3702
        %v3704 = vpop.f32.mrb[0].mxu0
        %v3705 = vpop.f32.mrb[0].mxu0
        %v3706 = vadd.f32 %v1664, %v3705
        %v3707 = vpop.f32.mrb[0].mxu0
        %3708 = vmatprep.mubr.bf16.mxu0 0
        %3709 = vmatmul.mubr.bf16.gmra.mrb[0].mxu0 %v2694
        %v3710 = vpop.f32.mrb[0].mxu0
        %v3711 = vadd.f32 %v1664, %v3710
        %v3712 = vpop.f32.mrb[0].mxu0
        %v3713 = vpop.f32.mrb[0].mxu0
        %v3714 = vadd.f32 %v1664, %v3713
        %v3715 = vpop.f32.mrb[0].mxu0
        %3716 = vmatprep.mubr.bf16.mxu0 0
        %3717 = vmatmul.mubr.bf16.gmra.mrb[0].mxu0 %v2697
        %v3718 = vpop.f32.mrb[0].mxu0
        %v3719 = vadd.f32 %v1664, %v3718
        %v3720 = vpop.f32.mrb[0].mxu0
        %v3721 = vpop.f32.mrb[0].mxu0
        %v3722 = vadd.f32 %v1664, %v3721
        %v3723 = vpop.f32.mrb[0].mxu0
        %3724 = vmatprep.mubr.bf16.mxu0 0
        %3725 = vmatmul.mubr.bf16.gmra.mrb[0].mxu0 %v2700
        %v3726 = vpop.f32.mrb[0].mxu0
        %v3727 = vadd.f32 %v1664, %v3726
        %v3728 = vpop.f32.mrb[0].mxu0
        %v3729 = vpop.f32.mrb[0].mxu0
        %v3730 = vadd.f32 %v1664, %v3729
        %v3731 = vpop.f32.mrb[0].mxu0
        %3732 = vmatprep.mubr.bf16.mxu0 0
        %3733 = vmatmul.mubr.bf16.gmra.mrb[0].mxu0 %v2703
        %v3734 = vpop.f32.mrb[0].mxu0
        %v3735 = vadd.f32 %v1664, %v3734
        %v3736 = vpop.f32.mrb[0].mxu0
        %v3737 = vpop.f32.mrb[0].mxu0
        %v3738 = vadd.f32 %v1664, %v3737
        %v3739 = vpop.f32.mrb[0].mxu0
        %3740 = vmatprep.mubr.bf16.mxu0 0
        %3741 = vmatmul.mubr.bf16.gmra.mrb[0].mxu0 %v2706
        %v3742 = vpop.f32.mrb[0].mxu0
        %v3743 = vadd.f32 %v1664, %v3742
        %v3744 = vpop.f32.mrb[0].mxu0
        %v3745 = vpop.f32.mrb[0].mxu0
        %v3746 = vadd.f32 %v1664, %v3745
        %v3747 = vpop.f32.mrb[0].mxu0
        %3748 = vmatprep.mubr.bf16.mxu0 0
        %3749 = vmatmul.mubr.bf16.gmra.mrb[0].mxu0 %v2709
        %v3750 = vpop.f32.mrb[0].mxu0
        %v3751 = vadd.f32 %v1664, %v3750
        %v3752 = vpop.f32.mrb[0].mxu0
        %v3753 = vpop.f32.mrb[0].mxu0
        %v3754 = vadd.f32 %v1664, %v3753
        %v3755 = vpop.f32.mrb[0].mxu0
        %3756 = vmatprep.mubr.bf16.mxu0 0
        %3757 = vmatmul.mubr.bf16.gmra.mrb[0].mxu0 %v2712
        %v3758 = vpop.f32.mrb[0].mxu0
        %v3759 = vadd.f32 %v1664, %v3758
        %v3760 = vpop.f32.mrb[0].mxu0
        %v3761 = vpop.f32.mrb[0].mxu0
        %v3762 = vadd.f32 %v1664, %v3761
        %v3763 = vpop.f32.mrb[0].mxu0
        %3764 = vmatprep.mubr.bf16.mxu0 0
        %3765 = vmatmul.mubr.bf16.gmra.mrb[0].mxu0 %v2715
        %v3766 = vpop.f32.mrb[0].mxu0
        %v3767 = vadd.f32 %v1664, %v3766
        %v3768 = vpop.f32.mrb[0].mxu0
        %v3769 = vpop.f32.mrb[0].mxu0
        %v3770 = vadd.f32 %v1664, %v3769
        %v3771 = vpop.f32.mrb[0].mxu0
        %3772 = vmatprep.mubr.bf16.mxu0 0
        %3773 = vmatmul.mubr.bf16.gmra.mrb[0].mxu0 %v2718
        %v3774 = vpop.f32.mrb[0].mxu0
        %v3775 = vadd.f32 %v1664, %v3774
        %v3776 = vpop.f32.mrb[0].mxu0
        %v3777 = vpop.f32.mrb[0].mxu0
        %v3778 = vadd.f32 %v1664, %v3777
        %v3779 = vpop.f32.mrb[0].mxu0
        %3780 = vdwg.mxu0
        %v3781 = vmax.f32 %v2759, 0.0
        %v3782 = vmax.f32 %v2762, 0.0
        %v3783 = vmax.f32 %v2767, 0.0
        %v3784 = vmax.f32 %v2770, 0.0
        %v3785 = vmax.f32 %v2775, 0.0
        %v3786 = vmax.f32 %v2778, 0.0
        %v3787 = vmax.f32 %v2783, 0.0
        %v3788 = vmax.f32 %v2786, 0.0
        %v3789 = vmax.f32 %v2791, 0.0
        %v3790 = vmax.f32 %v2794, 0.0
        %v3791 = vmax.f32 %v2799, 0.0
        %v3792 = vmax.f32 %v2802, 0.0
        %v3793 = vmax.f32 %v2807, 0.0
        %v3794 = vmax.f32 %v2810, 0.0
        %v3795 = vmax.f32 %v2815, 0.0
        %v3796 = vmax.f32 %v2818, 0.0
        %v3797 = vmax.f32 %v2823, 0.0
        %v3798 = vmax.f32 %v2826, 0.0
        %v3799 = vmax.f32 %v2831, 0.0
        %v3800 = vmax.f32 %v2834, 0.0
        %v3801 = vmax.f32 %v2839, 0.0
        %v3802 = vmax.f32 %v2842, 0.0
        %v3803 = vmax.f32 %v2847, 0.0
        %v3804 = vmax.f32 %v2850, 0.0
        %v3805 = vmax.f32 %v2855, 0.0
        %v3806 = vmax.f32 %v2858, 0.0
        %v3807 = vmax.f32 %v2863, 0.0
        %v3808 = vmax.f32 %v2866, 0.0
        %v3809 = vmax.f32 %v2871, 0.0
        %v3810 = vmax.f32 %v2874, 0.0
        %v3811 = vmax.f32 %v2879, 0.0
        %v3812 = vmax.f32 %v2882, 0.0
        %v3813 = vmax.f32 %v2887, 0.0
        %v3814 = vmax.f32 %v2890, 0.0
        %v3815 = vmax.f32 %v2895, 0.0
        %v3816 = vmax.f32 %v2898, 0.0
        %v3817 = vmax.f32 %v2903, 0.0
        %v3818 = vmax.f32 %v2906, 0.0
        %v3819 = vmax.f32 %v2911, 0.0
        %v3820 = vmax.f32 %v2914, 0.0
        %v3821 = vmax.f32 %v2919, 0.0
        %v3822 = vmax.f32 %v2922, 0.0
        %v3823 = vmax.f32 %v2927, 0.0
        %v3824 = vmax.f32 %v2930, 0.0
        %v3825 = vmax.f32 %v2935, 0.0
        %v3826 = vmax.f32 %v2938, 0.0
        %v3827 = vmax.f32 %v2943, 0.0
        %v3828 = vmax.f32 %v2946, 0.0
        %v3829 = vmax.f32 %v2951, 0.0
        %v3830 = vmax.f32 %v2954, 0.0
        %v3831 = vmax.f32 %v2959, 0.0
        %v3832 = vmax.f32 %v2962, 0.0
        %v3833 = vmax.f32 %v2967, 0.0
        %v3834 = vmax.f32 %v2970, 0.0
        %v3835 = vmax.f32 %v2975, 0.0
        %v3836 = vmax.f32 %v2978, 0.0
        %v3837 = vmax.f32 %v2983, 0.0
        %v3838 = vmax.f32 %v2986, 0.0
        %v3839 = vmax.f32 %v2991, 0.0
        %v3840 = vmax.f32 %v2994, 0.0
        %v3841 = vmax.f32 %v2999, 0.0
        %v3842 = vmax.f32 %v3002, 0.0
        %v3843 = vmax.f32 %v3007, 0.0
        %v3844 = vmax.f32 %v3010, 0.0
        %v3845 = vmax.f32 %v3015, 0.0
        %v3846 = vmax.f32 %v3018, 0.0
        %v3847 = vmax.f32 %v3023, 0.0
        %v3848 = vmax.f32 %v3026, 0.0
        %v3849 = vmax.f32 %v3031, 0.0
        %v3850 = vmax.f32 %v3034, 0.0
        %v3851 = vmax.f32 %v3039, 0.0
        %v3852 = vmax.f32 %v3042, 0.0
        %v3853 = vmax.f32 %v3047, 0.0
        %v3854 = vmax.f32 %v3050, 0.0
        %v3855 = vmax.f32 %v3055, 0.0
        %v3856 = vmax.f32 %v3058, 0.0
        %v3857 = vmax.f32 %v3063, 0.0
        %v3858 = vmax.f32 %v3066, 0.0
        %v3859 = vmax.f32 %v3071, 0.0
        %v3860 = vmax.f32 %v3074, 0.0
        %v3861 = vmax.f32 %v3079, 0.0
        %v3862 = vmax.f32 %v3082, 0.0
        %v3863 = vmax.f32 %v3087, 0.0
        %v3864 = vmax.f32 %v3090, 0.0
        %v3865 = vmax.f32 %v3095, 0.0
        %v3866 = vmax.f32 %v3098, 0.0
        %v3867 = vmax.f32 %v3103, 0.0
        %v3868 = vmax.f32 %v3106, 0.0
        %v3869 = vmax.f32 %v3111, 0.0
        %v3870 = vmax.f32 %v3114, 0.0
        %v3871 = vmax.f32 %v3119, 0.0
        %v3872 = vmax.f32 %v3122, 0.0
        %v3873 = vmax.f32 %v3127, 0.0
        %v3874 = vmax.f32 %v3130, 0.0
        %v3875 = vmax.f32 %v3135, 0.0
        %v3876 = vmax.f32 %v3138, 0.0
        %v3877 = vmax.f32 %v3143, 0.0
        %v3878 = vmax.f32 %v3146, 0.0
        %v3879 = vmax.f32 %v3151, 0.0
        %v3880 = vmax.f32 %v3154, 0.0
        %v3881 = vmax.f32 %v3159, 0.0
        %v3882 = vmax.f32 %v3162, 0.0
        %v3883 = vmax.f32 %v3167, 0.0
        %v3884 = vmax.f32 %v3170, 0.0
        %v3885 = vmax.f32 %v3175, 0.0
        %v3886 = vmax.f32 %v3178, 0.0
        %v3887 = vmax.f32 %v3183, 0.0
        %v3888 = vmax.f32 %v3186, 0.0
        %v3889 = vmax.f32 %v3191, 0.0
        %v3890 = vmax.f32 %v3194, 0.0
        %v3891 = vmax.f32 %v3199, 0.0
        %v3892 = vmax.f32 %v3202, 0.0
        %v3893 = vmax.f32 %v3207, 0.0
        %v3894 = vmax.f32 %v3210, 0.0
        %v3895 = vmax.f32 %v3215, 0.0
        %v3896 = vmax.f32 %v3218, 0.0
        %v3897 = vmax.f32 %v3223, 0.0
        %v3898 = vmax.f32 %v3226, 0.0
        %v3899 = vmax.f32 %v3231, 0.0
        %v3900 = vmax.f32 %v3234, 0.0
        %v3901 = vmax.f32 %v3239, 0.0
        %v3902 = vmax.f32 %v3242, 0.0
        %v3903 = vmax.f32 %v3247, 0.0
        %v3904 = vmax.f32 %v3250, 0.0
        %v3905 = vmax.f32 %v3255, 0.0
        %v3906 = vmax.f32 %v3258, 0.0
        %v3907 = vmax.f32 %v3263, 0.0
        %v3908 = vmax.f32 %v3266, 0.0
        %v3909 = vmax.f32 %v3271, 0.0
        %v3910 = vmax.f32 %v3274, 0.0
        %v3911 = vmax.f32 %v3279, 0.0
        %v3912 = vmax.f32 %v3282, 0.0
        %v3913 = vmax.f32 %v3287, 0.0
        %v3914 = vmax.f32 %v3290, 0.0
        %v3915 = vmax.f32 %v3295, 0.0
        %v3916 = vmax.f32 %v3298, 0.0
        %v3917 = vmax.f32 %v3303, 0.0
        %v3918 = vmax.f32 %v3306, 0.0
        %v3919 = vmax.f32 %v3311, 0.0
        %v3920 = vmax.f32 %v3314, 0.0
        %v3921 = vmax.f32 %v3319, 0.0
        %v3922 = vmax.f32 %v3322, 0.0
        %v3923 = vmax.f32 %v3327, 0.0
        %v3924 = vmax.f32 %v3330, 0.0
        %v3925 = vmax.f32 %v3335, 0.0
        %v3926 = vmax.f32 %v3338, 0.0
        %v3927 = vmax.f32 %v3343, 0.0
        %v3928 = vmax.f32 %v3346, 0.0
        %v3929 = vmax.f32 %v3351, 0.0
        %v3930 = vmax.f32 %v3354, 0.0
        %v3931 = vmax.f32 %v3359, 0.0
        %v3932 = vmax.f32 %v3362, 0.0
        %v3933 = vmax.f32 %v3367, 0.0
        %v3934 = vmax.f32 %v3370, 0.0
        %v3935 = vmax.f32 %v3375, 0.0
        %v3936 = vmax.f32 %v3378, 0.0
        %v3937 = vmax.f32 %v3383, 0.0
        %v3938 = vmax.f32 %v3386, 0.0
        %v3939 = vmax.f32 %v3391, 0.0
        %v3940 = vmax.f32 %v3394, 0.0
        %v3941 = vmax.f32 %v3399, 0.0
        %v3942 = vmax.f32 %v3402, 0.0
        %v3943 = vmax.f32 %v3407, 0.0
        %v3944 = vmax.f32 %v3410, 0.0
        %v3945 = vmax.f32 %v3415, 0.0
        %v3946 = vmax.f32 %v3418, 0.0
        %v3947 = vmax.f32 %v3423, 0.0
        %v3948 = vmax.f32 %v3426, 0.0
        %v3949 = vmax.f32 %v3431, 0.0
        %v3950 = vmax.f32 %v3434, 0.0
        %v3951 = vmax.f32 %v3439, 0.0
        %v3952 = vmax.f32 %v3442, 0.0
        %v3953 = vmax.f32 %v3447, 0.0
        %v3954 = vmax.f32 %v3450, 0.0
        %v3955 = vmax.f32 %v3455, 0.0
        %v3956 = vmax.f32 %v3458, 0.0
        %v3957 = vmax.f32 %v3463, 0.0
        %v3958 = vmax.f32 %v3466, 0.0
        %v3959 = vmax.f32 %v3471, 0.0
        %v3960 = vmax.f32 %v3474, 0.0
        %v3961 = vmax.f32 %v3479, 0.0
        %v3962 = vmax.f32 %v3482, 0.0
        %v3963 = vmax.f32 %v3487, 0.0
        %v3964 = vmax.f32 %v3490, 0.0
        %v3965 = vmax.f32 %v3495, 0.0
        %v3966 = vmax.f32 %v3498, 0.0
        %v3967 = vmax.f32 %v3503, 0.0
        %v3968 = vmax.f32 %v3506, 0.0
        %v3969 = vmax.f32 %v3511, 0.0
        %v3970 = vmax.f32 %v3514, 0.0
        %v3971 = vmax.f32 %v3519, 0.0
        %v3972 = vmax.f32 %v3522, 0.0
        %v3973 = vmax.f32 %v3527, 0.0
        %v3974 = vmax.f32 %v3530, 0.0
        %v3975 = vmax.f32 %v3535, 0.0
        %v3976 = vmax.f32 %v3538, 0.0
        %v3977 = vmax.f32 %v3543, 0.0
        %v3978 = vmax.f32 %v3546, 0.0
        %v3979 = vmax.f32 %v3551, 0.0
        %v3980 = vmax.f32 %v3554, 0.0
        %v3981 = vmax.f32 %v3559, 0.0
        %v3982 = vmax.f32 %v3562, 0.0
        %v3983 = vmax.f32 %v3567, 0.0
        %v3984 = vmax.f32 %v3570, 0.0
        %v3985 = vmax.f32 %v3575, 0.0
        %v3986 = vmax.f32 %v3578, 0.0
        %v3987 = vmax.f32 %v3583, 0.0
        %v3988 = vmax.f32 %v3586, 0.0
        %v3989 = vmax.f32 %v3591, 0.0
        %v3990 = vmax.f32 %v3594, 0.0
        %v3991 = vmax.f32 %v3599, 0.0
        %v3992 = vmax.f32 %v3602, 0.0
        %v3993 = vmax.f32 %v3607, 0.0
        %v3994 = vmax.f32 %v3610, 0.0
        %v3995 = vmax.f32 %v3615, 0.0
        %v3996 = vmax.f32 %v3618, 0.0
        %v3997 = vmax.f32 %v3623, 0.0
        %v3998 = vmax.f32 %v3626, 0.0
        %v3999 = vmax.f32 %v3631, 0.0
        %v4000 = vmax.f32 %v3634, 0.0
        %v4001 = vmax.f32 %v3639, 0.0
        %v4002 = vmax.f32 %v3642, 0.0
        %v4003 = vmax.f32 %v3647, 0.0
        %v4004 = vmax.f32 %v3650, 0.0
        %v4005 = vmax.f32 %v3655, 0.0
        %v4006 = vmax.f32 %v3658, 0.0
        %v4007 = vmax.f32 %v3663, 0.0
        %v4008 = vmax.f32 %v3666, 0.0
        %v4009 = vmax.f32 %v3671, 0.0
        %v4010 = vmax.f32 %v3674, 0.0
        %v4011 = vmax.f32 %v3679, 0.0
        %v4012 = vmax.f32 %v3682, 0.0
        %v4013 = vmax.f32 %v3687, 0.0
        %v4014 = vmax.f32 %v3690, 0.0
        %v4015 = vmax.f32 %v3695, 0.0
        %v4016 = vmax.f32 %v3698, 0.0
        %v4017 = vmax.f32 %v3703, 0.0
        %v4018 = vmax.f32 %v3706, 0.0
        %v4019 = vmax.f32 %v3711, 0.0
        %v4020 = vmax.f32 %v3714, 0.0
        %v4021 = vmax.f32 %v3719, 0.0
        %v4022 = vmax.f32 %v3722, 0.0
        %v4023 = vmax.f32 %v3727, 0.0
        %v4024 = vmax.f32 %v3730, 0.0
        %v4025 = vmax.f32 %v3735, 0.0
        %v4026 = vmax.f32 %v3738, 0.0
        %v4027 = vmax.f32 %v3743, 0.0
        %v4028 = vmax.f32 %v3746, 0.0
        %v4029 = vmax.f32 %v3751, 0.0
        %v4030 = vmax.f32 %v3754, 0.0
        %v4031 = vmax.f32 %v3759, 0.0
        %v4032 = vmax.f32 %v3762, 0.0
        %v4033 = vmax.f32 %v3767, 0.0
        %v4034 = vmax.f32 %v3770, 0.0
        %v4035 = vmax.f32 %v3775, 0.0
        %v4036 = vmax.f32 %v3778, 0.0
        %v4037 = vpack.c.bf16 %v3782, %v3781
        %v4038 = vpack.c.bf16 %v3784, %v3783
        %v4039 = vpack.c.bf16 %v3786, %v3785
        %v4040 = vpack.c.bf16 %v3788, %v3787
        %v4041 = vpack.c.bf16 %v3790, %v3789
        %v4042 = vpack.c.bf16 %v3792, %v3791
        %v4043 = vpack.c.bf16 %v3794, %v3793
        %v4044 = vpack.c.bf16 %v3796, %v3795
        %v4045 = vpack.c.bf16 %v3798, %v3797
        %v4046 = vpack.c.bf16 %v3800, %v3799
        %v4047 = vpack.c.bf16 %v3802, %v3801
        %v4048 = vpack.c.bf16 %v3804, %v3803
        %v4049 = vpack.c.bf16 %v3806, %v3805
        %v4050 = vpack.c.bf16 %v3808, %v3807
        %v4051 = vpack.c.bf16 %v3810, %v3809
        %v4052 = vpack.c.bf16 %v3812, %v3811
        %v4053 = vpack.c.bf16 %v3814, %v3813
        %v4054 = vpack.c.bf16 %v3816, %v3815
        %v4055 = vpack.c.bf16 %v3818, %v3817
        %v4056 = vpack.c.bf16 %v3820, %v3819
        %v4057 = vpack.c.bf16 %v3822, %v3821
        %v4058 = vpack.c.bf16 %v3824, %v3823
        %v4059 = vpack.c.bf16 %v3826, %v3825
        %v4060 = vpack.c.bf16 %v3828, %v3827
        %v4061 = vpack.c.bf16 %v3830, %v3829
        %v4062 = vpack.c.bf16 %v3832, %v3831
        %v4063 = vpack.c.bf16 %v3834, %v3833
        %v4064 = vpack.c.bf16 %v3836, %v3835
        %v4065 = vpack.c.bf16 %v3838, %v3837
        %v4066 = vpack.c.bf16 %v3840, %v3839
        %v4067 = vpack.c.bf16 %v3842, %v3841
        %v4068 = vpack.c.bf16 %v3844, %v3843
        %v4069 = vpack.c.bf16 %v3846, %v3845
        %v4070 = vpack.c.bf16 %v3848, %v3847
        %v4071 = vpack.c.bf16 %v3850, %v3849
        %v4072 = vpack.c.bf16 %v3852, %v3851
        %v4073 = vpack.c.bf16 %v3854, %v3853
        %v4074 = vpack.c.bf16 %v3856, %v3855
        %v4075 = vpack.c.bf16 %v3858, %v3857
        %v4076 = vpack.c.bf16 %v3860, %v3859
        %v4077 = vpack.c.bf16 %v3862, %v3861
        %v4078 = vpack.c.bf16 %v3864, %v3863
        %v4079 = vpack.c.bf16 %v3866, %v3865
        %v4080 = vpack.c.bf16 %v3868, %v3867
        %v4081 = vpack.c.bf16 %v3870, %v3869
        %v4082 = vpack.c.bf16 %v3872, %v3871
        %v4083 = vpack.c.bf16 %v3874, %v3873
        %v4084 = vpack.c.bf16 %v3876, %v3875
        %v4085 = vpack.c.bf16 %v3878, %v3877
        %v4086 = vpack.c.bf16 %v3880, %v3879
        %v4087 = vpack.c.bf16 %v3882, %v3881
        %v4088 = vpack.c.bf16 %v3884, %v3883
        %v4089 = vpack.c.bf16 %v3886, %v3885
        %v4090 = vpack.c.bf16 %v3888, %v3887
        %v4091 = vpack.c.bf16 %v3890, %v3889
        %v4092 = vpack.c.bf16 %v3892, %v3891
        %v4093 = vpack.c.bf16 %v3894, %v3893
        %v4094 = vpack.c.bf16 %v3896, %v3895
        %v4095 = vpack.c.bf16 %v3898, %v3897
        %v4096 = vpack.c.bf16 %v3900, %v3899
        %v4097 = vpack.c.bf16 %v3902, %v3901
        %v4098 = vpack.c.bf16 %v3904, %v3903
        %v4099 = vpack.c.bf16 %v3906, %v3905
        %v4100 = vpack.c.bf16 %v3908, %v3907
        %v4101 = vpack.c.bf16 %v3910, %v3909
        %v4102 = vpack.c.bf16 %v3912, %v3911
        %v4103 = vpack.c.bf16 %v3914, %v3913
        %v4104 = vpack.c.bf16 %v3916, %v3915
        %v4105 = vpack.c.bf16 %v3918, %v3917
        %v4106 = vpack.c.bf16 %v3920, %v3919
        %v4107 = vpack.c.bf16 %v3922, %v3921
        %v4108 = vpack.c.bf16 %v3924, %v3923
        %v4109 = vpack.c.bf16 %v3926, %v3925
        %v4110 = vpack.c.bf16 %v3928, %v3927
        %v4111 = vpack.c.bf16 %v3930, %v3929
        %v4112 = vpack.c.bf16 %v3932, %v3931
        %v4113 = vpack.c.bf16 %v3934, %v3933
        %v4114 = vpack.c.bf16 %v3936, %v3935
        %v4115 = vpack.c.bf16 %v3938, %v3937
        %v4116 = vpack.c.bf16 %v3940, %v3939
        %v4117 = vpack.c.bf16 %v3942, %v3941
        %v4118 = vpack.c.bf16 %v3944, %v3943
        %v4119 = vpack.c.bf16 %v3946, %v3945
        %v4120 = vpack.c.bf16 %v3948, %v3947
        %v4121 = vpack.c.bf16 %v3950, %v3949
        %v4122 = vpack.c.bf16 %v3952, %v3951
        %v4123 = vpack.c.bf16 %v3954, %v3953
        %v4124 = vpack.c.bf16 %v3956, %v3955
        %v4125 = vpack.c.bf16 %v3958, %v3957
        %v4126 = vpack.c.bf16 %v3960, %v3959
        %v4127 = vpack.c.bf16 %v3962, %v3961
        %v4128 = vpack.c.bf16 %v3964, %v3963
        %v4129 = vpack.c.bf16 %v3966, %v3965
        %v4130 = vpack.c.bf16 %v3968, %v3967
        %v4131 = vpack.c.bf16 %v3970, %v3969
        %v4132 = vpack.c.bf16 %v3972, %v3971
        %v4133 = vpack.c.bf16 %v3974, %v3973
        %v4134 = vpack.c.bf16 %v3976, %v3975
        %v4135 = vpack.c.bf16 %v3978, %v3977
        %v4136 = vpack.c.bf16 %v3980, %v3979
        %v4137 = vpack.c.bf16 %v3982, %v3981
        %v4138 = vpack.c.bf16 %v3984, %v3983
        %v4139 = vpack.c.bf16 %v3986, %v3985
        %v4140 = vpack.c.bf16 %v3988, %v3987
        %v4141 = vpack.c.bf16 %v3990, %v3989
        %v4142 = vpack.c.bf16 %v3992, %v3991
        %v4143 = vpack.c.bf16 %v3994, %v3993
        %v4144 = vpack.c.bf16 %v3996, %v3995
        %v4145 = vpack.c.bf16 %v3998, %v3997
        %v4146 = vpack.c.bf16 %v4000, %v3999
        %v4147 = vpack.c.bf16 %v4002, %v4001
        %v4148 = vpack.c.bf16 %v4004, %v4003
        %v4149 = vpack.c.bf16 %v4006, %v4005
        %v4150 = vpack.c.bf16 %v4008, %v4007
        %v4151 = vpack.c.bf16 %v4010, %v4009
        %v4152 = vpack.c.bf16 %v4012, %v4011
        %v4153 = vpack.c.bf16 %v4014, %v4013
        %v4154 = vpack.c.bf16 %v4016, %v4015
        %v4155 = vpack.c.bf16 %v4018, %v4017
        %v4156 = vpack.c.bf16 %v4020, %v4019
        %v4157 = vpack.c.bf16 %v4022, %v4021
        %v4158 = vpack.c.bf16 %v4024, %v4023
        %v4159 = vpack.c.bf16 %v4026, %v4025
        %v4160 = vpack.c.bf16 %v4028, %v4027
        %v4161 = vpack.c.bf16 %v4030, %v4029
        %v4162 = vpack.c.bf16 %v4032, %v4031
        %v4163 = vpack.c.bf16 %v4034, %v4033
        %v4164 = vpack.c.bf16 %v4036, %v4035
        %v4165 = vld [vmem:[%s4] sm:$0xf]
        %v4166 = vld [vmem:[%s4 + $0x4] sm:$0xf]
        %v4167 = vld [vmem:[%s4 + $0x8] sm:$0xf]
        %v4168 = vld [vmem:[%s4 + $0xc] sm:$0xf]
        %v4169 = vld [vmem:[%s5] sm:$0x1]
        %v4171 = vlaneseq
        %v4172 = vshrl.u32 %v4171, 7
        %v4173 = vsub.s32 0, %v4172
        %v4174 = vrot.slane %v4169, %v4173
        %v4180 = vunpack.c.l.b16 %v4165
        %v4181 = vunpack.c.l.b16 %v4166
        %v4182 = vunpack.c.l.b16 %v4167
        %v4183 = vunpack.c.l.b16 %v4168
        %v4184 = vpack.c.b16 %v4181, %v4180
        %v4185 = vpack.c.b16 %v4183, %v4182
        %vm4188 = vcmask 261120
        %v4190 = vsel %vm4188, %v4037, 0
        %v4193 = vsel %vm4188, %v4038, 0
        %v4196 = vsel %vm4188, %v4039, 0
        %v4199 = vsel %vm4188, %v4040, 0
        %v4202 = vsel %vm4188, %v4041, 0
        %v4205 = vsel %vm4188, %v4042, 0
        %v4208 = vsel %vm4188, %v4043, 0
        %v4211 = vsel %vm4188, %v4044, 0
        %v4214 = vsel %vm4188, %v4045, 0
        %v4217 = vsel %vm4188, %v4046, 0
        %v4220 = vsel %vm4188, %v4047, 0
        %v4223 = vsel %vm4188, %v4048, 0
        %v4226 = vsel %vm4188, %v4049, 0
        %v4229 = vsel %vm4188, %v4050, 0
        %v4232 = vsel %vm4188, %v4051, 0
        %v4235 = vsel %vm4188, %v4052, 0
        %v4238 = vsel %vm4188, %v4053, 0
        %v4241 = vsel %vm4188, %v4054, 0
        %v4244 = vsel %vm4188, %v4055, 0
        %v4247 = vsel %vm4188, %v4056, 0
        %v4250 = vsel %vm4188, %v4057, 0
        %v4253 = vsel %vm4188, %v4058, 0
        %v4256 = vsel %vm4188, %v4059, 0
        %v4259 = vsel %vm4188, %v4060, 0
        %v4262 = vsel %vm4188, %v4061, 0
        %v4265 = vsel %vm4188, %v4062, 0
        %v4268 = vsel %vm4188, %v4063, 0
        %v4271 = vsel %vm4188, %v4064, 0
        %v4274 = vsel %vm4188, %v4065, 0
        %v4277 = vsel %vm4188, %v4066, 0
        %v4280 = vsel %vm4188, %v4067, 0
        %v4283 = vsel %vm4188, %v4068, 0
        %v4286 = vsel %vm4188, %v4069, 0
        %v4289 = vsel %vm4188, %v4070, 0
        %v4292 = vsel %vm4188, %v4071, 0
        %v4295 = vsel %vm4188, %v4072, 0
        %v4298 = vsel %vm4188, %v4073, 0
        %v4301 = vsel %vm4188, %v4074, 0
        %v4304 = vsel %vm4188, %v4075, 0
        %v4307 = vsel %vm4188, %v4076, 0
        %v4310 = vsel %vm4188, %v4077, 0
        %v4313 = vsel %vm4188, %v4078, 0
        %v4316 = vsel %vm4188, %v4079, 0
        %v4319 = vsel %vm4188, %v4080, 0
        %v4322 = vsel %vm4188, %v4081, 0
        %v4325 = vsel %vm4188, %v4082, 0
        %v4328 = vsel %vm4188, %v4083, 0
        %v4331 = vsel %vm4188, %v4084, 0
        %v4334 = vsel %vm4188, %v4085, 0
        %v4337 = vsel %vm4188, %v4086, 0
        %v4340 = vsel %vm4188, %v4087, 0
        %v4343 = vsel %vm4188, %v4088, 0
        %v4346 = vsel %vm4188, %v4089, 0
        %v4349 = vsel %vm4188, %v4090, 0
        %v4352 = vsel %vm4188, %v4091, 0
        %v4355 = vsel %vm4188, %v4092, 0
        %v4358 = vsel %vm4188, %v4093, 0
        %v4361 = vsel %vm4188, %v4094, 0
        %v4364 = vsel %vm4188, %v4095, 0
        %v4367 = vsel %vm4188, %v4096, 0
        %v4370 = vsel %vm4188, %v4097, 0
        %v4373 = vsel %vm4188, %v4098, 0
        %v4376 = vsel %vm4188, %v4099, 0
        %v4379 = vsel %vm4188, %v4100, 0
        %v4382 = vsel %vm4188, %v4101, 0
        %v4385 = vsel %vm4188, %v4102, 0
        %v4388 = vsel %vm4188, %v4103, 0
        %v4391 = vsel %vm4188, %v4104, 0
        %v4394 = vsel %vm4188, %v4105, 0
        %v4397 = vsel %vm4188, %v4106, 0
        %v4400 = vsel %vm4188, %v4107, 0
        %v4403 = vsel %vm4188, %v4108, 0
        %v4406 = vsel %vm4188, %v4109, 0
        %v4409 = vsel %vm4188, %v4110, 0
        %v4412 = vsel %vm4188, %v4111, 0
        %v4415 = vsel %vm4188, %v4112, 0
        %v4418 = vsel %vm4188, %v4113, 0
        %v4421 = vsel %vm4188, %v4114, 0
        %v4424 = vsel %vm4188, %v4115, 0
        %v4427 = vsel %vm4188, %v4116, 0
        %v4430 = vsel %vm4188, %v4117, 0
        %v4433 = vsel %vm4188, %v4118, 0
        %v4436 = vsel %vm4188, %v4119, 0
        %v4439 = vsel %vm4188, %v4120, 0
        %v4442 = vsel %vm4188, %v4121, 0
        %v4445 = vsel %vm4188, %v4122, 0
        %v4448 = vsel %vm4188, %v4123, 0
        %v4451 = vsel %vm4188, %v4124, 0
        %v4454 = vsel %vm4188, %v4125, 0
        %v4457 = vsel %vm4188, %v4126, 0
        %v4460 = vsel %vm4188, %v4127, 0
        %v4463 = vsel %vm4188, %v4128, 0
        %v4466 = vsel %vm4188, %v4129, 0
        %v4469 = vsel %vm4188, %v4130, 0
        %v4472 = vsel %vm4188, %v4131, 0
        %v4475 = vsel %vm4188, %v4132, 0
        %v4478 = vsel %vm4188, %v4133, 0
        %v4481 = vsel %vm4188, %v4134, 0
        %v4484 = vsel %vm4188, %v4135, 0
        %v4487 = vsel %vm4188, %v4136, 0
        %v4490 = vsel %vm4188, %v4137, 0
        %v4493 = vsel %vm4188, %v4138, 0
        %v4496 = vsel %vm4188, %v4139, 0
        %v4499 = vsel %vm4188, %v4140, 0
        %v4502 = vsel %vm4188, %v4141, 0
        %v4505 = vsel %vm4188, %v4142, 0
        %v4508 = vsel %vm4188, %v4143, 0
        %v4511 = vsel %vm4188, %v4144, 0
        %v4514 = vsel %vm4188, %v4145, 0
        %v4517 = vsel %vm4188, %v4146, 0
        %v4520 = vsel %vm4188, %v4147, 0
        %v4523 = vsel %vm4188, %v4148, 0
        %v4526 = vsel %vm4188, %v4149, 0
        %v4529 = vsel %vm4188, %v4150, 0
        %v4532 = vsel %vm4188, %v4151, 0
        %v4535 = vsel %vm4188, %v4152, 0
        %v4538 = vsel %vm4188, %v4153, 0
        %v4541 = vsel %vm4188, %v4154, 0
        %v4544 = vsel %vm4188, %v4155, 0
        %v4547 = vsel %vm4188, %v4156, 0
        %v4550 = vsel %vm4188, %v4157, 0
        %v4553 = vsel %vm4188, %v4158, 0
        %v4556 = vsel %vm4188, %v4159, 0
        %v4559 = vsel %vm4188, %v4160, 0
        %v4562 = vsel %vm4188, %v4161, 0
        %v4565 = vsel %vm4188, %v4162, 0
        %v4568 = vsel %vm4188, %v4163, 0
        %v4571 = vsel %vm4188, %v4164, 0
        %4573 = vmatprep.subr.bf16.mxu0 0
        %4574 = vmatpush1.bf16.msra.mxu0 %v4184
        %4575 = vmatprep.subr.bf16.mxu0 0
        %4576 = vmatpush1.bf16.msra.mxu0 %v4185
        %4577 = vmatprep.subr.bf16.mxu0 0
        %4578 = vmatpush1.bf16.msra.mxu0 0
        %4579 = vmatprep.subr.bf16.mxu0 0
        %4580 = vmatpush1.bf16.msra.mxu0 0
        %4581 = vmatprep.subr.bf16.mxu0 0
        %4582 = vmatpush1.bf16.msra.mxu0 0
        %4583 = vmatprep.subr.bf16.mxu0 0
        %4584 = vmatpush1.bf16.msra.mxu0 0
        %4585 = vmatprep.subr.bf16.mxu0 0
        %4586 = vmatpush1.bf16.msra.mxu0 0
        %4587 = vmatprep.subr.bf16.mxu0 0
        %4588 = vmatpush1.bf16.msra.mxu0 0
        %4589 = vmatprep.subr.bf16.mxu0 0
        %4590 = vmatpush1.bf16.msra.mxu0 0
        %4591 = vmatprep.subr.bf16.mxu0 0
        %4592 = vmatpush1.bf16.msra.mxu0 0
        %4593 = vmatprep.subr.bf16.mxu0 0
        %4594 = vmatpush1.bf16.msra.mxu0 0
        %4595 = vmatprep.subr.bf16.mxu0 0
        %4596 = vmatpush1.bf16.msra.mxu0 0
        %4597 = vmatprep.subr.bf16.mxu0 0
        %4598 = vmatpush1.bf16.msra.mxu0 0
        %4599 = vmatprep.subr.bf16.mxu0 0
        %4600 = vmatpush1.bf16.msra.mxu0 0
        %4601 = vmatprep.subr.bf16.mxu0 0
        %4602 = vmatpush1.bf16.msra.mxu0 0
        %4603 = vmatprep.subr.bf16.mxu0 0
        %4604 = vmatpush1.bf16.msra.mxu0 0
        %4605 = vmatprep.mubr.bf16.mxu0 0
        %4606 = vmatmul.mubr.bf16.gmra.mrb[0].mxu0 %v4190
        %v4607 = vpop.f32.mrb[0].mxu0
        %v4608 = vadd.f32 %v4174, %v4607
        %v4609 = vpop.f32.mrb[0].mxu0
        %v4610 = vpop.f32.mrb[0].mxu0
        %v4611 = vadd.f32 %v4174, %v4610
        %v4612 = vpop.f32.mrb[0].mxu0
        %4613 = vmatprep.mubr.bf16.mxu0 0
        %4614 = vmatmul.mubr.bf16.gmra.mrb[0].mxu0 %v4193
        %v4615 = vpop.f32.mrb[0].mxu0
        %v4616 = vadd.f32 %v4174, %v4615
        %v4617 = vpop.f32.mrb[0].mxu0
        %v4618 = vpop.f32.mrb[0].mxu0
        %v4619 = vadd.f32 %v4174, %v4618
        %v4620 = vpop.f32.mrb[0].mxu0
        %4621 = vmatprep.mubr.bf16.mxu0 0
        %4622 = vmatmul.mubr.bf16.gmra.mrb[0].mxu0 %v4196
        %v4623 = vpop.f32.mrb[0].mxu0
        %v4624 = vadd.f32 %v4174, %v4623
        %v4625 = vpop.f32.mrb[0].mxu0
        %v4626 = vpop.f32.mrb[0].mxu0
        %v4627 = vadd.f32 %v4174, %v4626
        %v4628 = vpop.f32.mrb[0].mxu0
        %4629 = vmatprep.mubr.bf16.mxu0 0
        %4630 = vmatmul.mubr.bf16.gmra.mrb[0].mxu0 %v4199
        %v4631 = vpop.f32.mrb[0].mxu0
        %v4632 = vadd.f32 %v4174, %v4631
        %v4633 = vpop.f32.mrb[0].mxu0
        %v4634 = vpop.f32.mrb[0].mxu0
        %v4635 = vadd.f32 %v4174, %v4634
        %v4636 = vpop.f32.mrb[0].mxu0
        %4637 = vmatprep.mubr.bf16.mxu0 0
        %4638 = vmatmul.mubr.bf16.gmra.mrb[0].mxu0 %v4202
        %v4639 = vpop.f32.mrb[0].mxu0
        %v4640 = vadd.f32 %v4174, %v4639
        %v4641 = vpop.f32.mrb[0].mxu0
        %v4642 = vpop.f32.mrb[0].mxu0
        %v4643 = vadd.f32 %v4174, %v4642
        %v4644 = vpop.f32.mrb[0].mxu0
        %4645 = vmatprep.mubr.bf16.mxu0 0
        %4646 = vmatmul.mubr.bf16.gmra.mrb[0].mxu0 %v4205
        %v4647 = vpop.f32.mrb[0].mxu0
        %v4648 = vadd.f32 %v4174, %v4647
        %v4649 = vpop.f32.mrb[0].mxu0
        %v4650 = vpop.f32.mrb[0].mxu0
        %v4651 = vadd.f32 %v4174, %v4650
        %v4652 = vpop.f32.mrb[0].mxu0
        %4653 = vmatprep.mubr.bf16.mxu0 0
        %4654 = vmatmul.mubr.bf16.gmra.mrb[0].mxu0 %v4208
        %v4655 = vpop.f32.mrb[0].mxu0
        %v4656 = vadd.f32 %v4174, %v4655
        %v4657 = vpop.f32.mrb[0].mxu0
        %v4658 = vpop.f32.mrb[0].mxu0
        %v4659 = vadd.f32 %v4174, %v4658
        %v4660 = vpop.f32.mrb[0].mxu0
        %4661 = vmatprep.mubr.bf16.mxu0 0
        %4662 = vmatmul.mubr.bf16.gmra.mrb[0].mxu0 %v4211
        %v4663 = vpop.f32.mrb[0].mxu0
        %v4664 = vadd.f32 %v4174, %v4663
        %v4665 = vpop.f32.mrb[0].mxu0
        %v4666 = vpop.f32.mrb[0].mxu0
        %v4667 = vadd.f32 %v4174, %v4666
        %v4668 = vpop.f32.mrb[0].mxu0
        %4669 = vmatprep.mubr.bf16.mxu0 0
        %4670 = vmatmul.mubr.bf16.gmra.mrb[0].mxu0 %v4214
        %v4671 = vpop.f32.mrb[0].mxu0
        %v4672 = vadd.f32 %v4174, %v4671
        %v4673 = vpop.f32.mrb[0].mxu0
        %v4674 = vpop.f32.mrb[0].mxu0
        %v4675 = vadd.f32 %v4174, %v4674
        %v4676 = vpop.f32.mrb[0].mxu0
        %4677 = vmatprep.mubr.bf16.mxu0 0
        %4678 = vmatmul.mubr.bf16.gmra.mrb[0].mxu0 %v4217
        %v4679 = vpop.f32.mrb[0].mxu0
        %v4680 = vadd.f32 %v4174, %v4679
        %v4681 = vpop.f32.mrb[0].mxu0
        %v4682 = vpop.f32.mrb[0].mxu0
        %v4683 = vadd.f32 %v4174, %v4682
        %v4684 = vpop.f32.mrb[0].mxu0
        %4685 = vmatprep.mubr.bf16.mxu0 0
        %4686 = vmatmul.mubr.bf16.gmra.mrb[0].mxu0 %v4220
        %v4687 = vpop.f32.mrb[0].mxu0
        %v4688 = vadd.f32 %v4174, %v4687
        %v4689 = vpop.f32.mrb[0].mxu0
        %v4690 = vpop.f32.mrb[0].mxu0
        %v4691 = vadd.f32 %v4174, %v4690
        %v4692 = vpop.f32.mrb[0].mxu0
        %4693 = vmatprep.mubr.bf16.mxu0 0
        %4694 = vmatmul.mubr.bf16.gmra.mrb[0].mxu0 %v4223
        %v4695 = vpop.f32.mrb[0].mxu0
        %v4696 = vadd.f32 %v4174, %v4695
        %v4697 = vpop.f32.mrb[0].mxu0
        %v4698 = vpop.f32.mrb[0].mxu0
        %v4699 = vadd.f32 %v4174, %v4698
        %v4700 = vpop.f32.mrb[0].mxu0
        %4701 = vmatprep.mubr.bf16.mxu0 0
        %4702 = vmatmul.mubr.bf16.gmra.mrb[0].mxu0 %v4226
        %v4703 = vpop.f32.mrb[0].mxu0
        %v4704 = vadd.f32 %v4174, %v4703
        %v4705 = vpop.f32.mrb[0].mxu0
        %v4706 = vpop.f32.mrb[0].mxu0
        %v4707 = vadd.f32 %v4174, %v4706
        %v4708 = vpop.f32.mrb[0].mxu0
        %4709 = vmatprep.mubr.bf16.mxu0 0
        %4710 = vmatmul.mubr.bf16.gmra.mrb[0].mxu0 %v4229
        %v4711 = vpop.f32.mrb[0].mxu0
        %v4712 = vadd.f32 %v4174, %v4711
        %v4713 = vpop.f32.mrb[0].mxu0
        %v4714 = vpop.f32.mrb[0].mxu0
        %v4715 = vadd.f32 %v4174, %v4714
        %v4716 = vpop.f32.mrb[0].mxu0
        %4717 = vmatprep.mubr.bf16.mxu0 0
        %4718 = vmatmul.mubr.bf16.gmra.mrb[0].mxu0 %v4232
        %v4719 = vpop.f32.mrb[0].mxu0
        %v4720 = vadd.f32 %v4174, %v4719
        %v4721 = vpop.f32.mrb[0].mxu0
        %v4722 = vpop.f32.mrb[0].mxu0
        %v4723 = vadd.f32 %v4174, %v4722
        %v4724 = vpop.f32.mrb[0].mxu0
        %4725 = vmatprep.mubr.bf16.mxu0 0
        %4726 = vmatmul.mubr.bf16.gmra.mrb[0].mxu0 %v4235
        %v4727 = vpop.f32.mrb[0].mxu0
        %v4728 = vadd.f32 %v4174, %v4727
        %v4729 = vpop.f32.mrb[0].mxu0
        %v4730 = vpop.f32.mrb[0].mxu0
        %v4731 = vadd.f32 %v4174, %v4730
        %v4732 = vpop.f32.mrb[0].mxu0
        %4733 = vmatprep.mubr.bf16.mxu0 0
        %4734 = vmatmul.mubr.bf16.gmra.mrb[0].mxu0 %v4238
        %v4735 = vpop.f32.mrb[0].mxu0
        %v4736 = vadd.f32 %v4174, %v4735
        %v4737 = vpop.f32.mrb[0].mxu0
        %v4738 = vpop.f32.mrb[0].mxu0
        %v4739 = vadd.f32 %v4174, %v4738
        %v4740 = vpop.f32.mrb[0].mxu0
        %4741 = vmatprep.mubr.bf16.mxu0 0
        %4742 = vmatmul.mubr.bf16.gmra.mrb[0].mxu0 %v4241
        %v4743 = vpop.f32.mrb[0].mxu0
        %v4744 = vadd.f32 %v4174, %v4743
        %v4745 = vpop.f32.mrb[0].mxu0
        %v4746 = vpop.f32.mrb[0].mxu0
        %v4747 = vadd.f32 %v4174, %v4746
        %v4748 = vpop.f32.mrb[0].mxu0
        %4749 = vmatprep.mubr.bf16.mxu0 0
        %4750 = vmatmul.mubr.bf16.gmra.mrb[0].mxu0 %v4244
        %v4751 = vpop.f32.mrb[0].mxu0
        %v4752 = vadd.f32 %v4174, %v4751
        %v4753 = vpop.f32.mrb[0].mxu0
        %v4754 = vpop.f32.mrb[0].mxu0
        %v4755 = vadd.f32 %v4174, %v4754
        %v4756 = vpop.f32.mrb[0].mxu0
        %4757 = vmatprep.mubr.bf16.mxu0 0
        %4758 = vmatmul.mubr.bf16.gmra.mrb[0].mxu0 %v4247
        %v4759 = vpop.f32.mrb[0].mxu0
        %v4760 = vadd.f32 %v4174, %v4759
        %v4761 = vpop.f32.mrb[0].mxu0
        %v4762 = vpop.f32.mrb[0].mxu0
        %v4763 = vadd.f32 %v4174, %v4762
        %v4764 = vpop.f32.mrb[0].mxu0
        %4765 = vmatprep.mubr.bf16.mxu0 0
        %4766 = vmatmul.mubr.bf16.gmra.mrb[0].mxu0 %v4250
        %v4767 = vpop.f32.mrb[0].mxu0
        %v4768 = vadd.f32 %v4174, %v4767
        %v4769 = vpop.f32.mrb[0].mxu0
        %v4770 = vpop.f32.mrb[0].mxu0
        %v4771 = vadd.f32 %v4174, %v4770
        %v4772 = vpop.f32.mrb[0].mxu0
        %4773 = vmatprep.mubr.bf16.mxu0 0
        %4774 = vmatmul.mubr.bf16.gmra.mrb[0].mxu0 %v4253
        %v4775 = vpop.f32.mrb[0].mxu0
        %v4776 = vadd.f32 %v4174, %v4775
        %v4777 = vpop.f32.mrb[0].mxu0
        %v4778 = vpop.f32.mrb[0].mxu0
        %v4779 = vadd.f32 %v4174, %v4778
        %v4780 = vpop.f32.mrb[0].mxu0
        %4781 = vmatprep.mubr.bf16.mxu0 0
        %4782 = vmatmul.mubr.bf16.gmra.mrb[0].mxu0 %v4256
        %v4783 = vpop.f32.mrb[0].mxu0
        %v4784 = vadd.f32 %v4174, %v4783
        %v4785 = vpop.f32.mrb[0].mxu0
        %v4786 = vpop.f32.mrb[0].mxu0
        %v4787 = vadd.f32 %v4174, %v4786
        %v4788 = vpop.f32.mrb[0].mxu0
        %4789 = vmatprep.mubr.bf16.mxu0 0
        %4790 = vmatmul.mubr.bf16.gmra.mrb[0].mxu0 %v4259
        %v4791 = vpop.f32.mrb[0].mxu0
        %v4792 = vadd.f32 %v4174, %v4791
        %v4793 = vpop.f32.mrb[0].mxu0
        %v4794 = vpop.f32.mrb[0].mxu0
        %v4795 = vadd.f32 %v4174, %v4794
        %v4796 = vpop.f32.mrb[0].mxu0
        %4797 = vmatprep.mubr.bf16.mxu0 0
        %4798 = vmatmul.mubr.bf16.gmra.mrb[0].mxu0 %v4262
        %v4799 = vpop.f32.mrb[0].mxu0
        %v4800 = vadd.f32 %v4174, %v4799
        %v4801 = vpop.f32.mrb[0].mxu0
        %v4802 = vpop.f32.mrb[0].mxu0
        %v4803 = vadd.f32 %v4174, %v4802
        %v4804 = vpop.f32.mrb[0].mxu0
        %4805 = vmatprep.mubr.bf16.mxu0 0
        %4806 = vmatmul.mubr.bf16.gmra.mrb[0].mxu0 %v4265
        %v4807 = vpop.f32.mrb[0].mxu0
        %v4808 = vadd.f32 %v4174, %v4807
        %v4809 = vpop.f32.mrb[0].mxu0
        %v4810 = vpop.f32.mrb[0].mxu0
        %v4811 = vadd.f32 %v4174, %v4810
        %v4812 = vpop.f32.mrb[0].mxu0
        %4813 = vmatprep.mubr.bf16.mxu0 0
        %4814 = vmatmul.mubr.bf16.gmra.mrb[0].mxu0 %v4268
        %v4815 = vpop.f32.mrb[0].mxu0
        %v4816 = vadd.f32 %v4174, %v4815
        %v4817 = vpop.f32.mrb[0].mxu0
        %v4818 = vpop.f32.mrb[0].mxu0
        %v4819 = vadd.f32 %v4174, %v4818
        %v4820 = vpop.f32.mrb[0].mxu0
        %4821 = vmatprep.mubr.bf16.mxu0 0
        %4822 = vmatmul.mubr.bf16.gmra.mrb[0].mxu0 %v4271
        %v4823 = vpop.f32.mrb[0].mxu0
        %v4824 = vadd.f32 %v4174, %v4823
        %v4825 = vpop.f32.mrb[0].mxu0
        %v4826 = vpop.f32.mrb[0].mxu0
        %v4827 = vadd.f32 %v4174, %v4826
        %v4828 = vpop.f32.mrb[0].mxu0
        %4829 = vmatprep.mubr.bf16.mxu0 0
        %4830 = vmatmul.mubr.bf16.gmra.mrb[0].mxu0 %v4274
        %v4831 = vpop.f32.mrb[0].mxu0
        %v4832 = vadd.f32 %v4174, %v4831
        %v4833 = vpop.f32.mrb[0].mxu0
        %v4834 = vpop.f32.mrb[0].mxu0
        %v4835 = vadd.f32 %v4174, %v4834
        %v4836 = vpop.f32.mrb[0].mxu0
        %4837 = vmatprep.mubr.bf16.mxu0 0
        %4838 = vmatmul.mubr.bf16.gmra.mrb[0].mxu0 %v4277
        %v4839 = vpop.f32.mrb[0].mxu0
        %v4840 = vadd.f32 %v4174, %v4839
        %v4841 = vpop.f32.mrb[0].mxu0
        %v4842 = vpop.f32.mrb[0].mxu0
        %v4843 = vadd.f32 %v4174, %v4842
        %v4844 = vpop.f32.mrb[0].mxu0
        %4845 = vmatprep.mubr.bf16.mxu0 0
        %4846 = vmatmul.mubr.bf16.gmra.mrb[0].mxu0 %v4280
        %v4847 = vpop.f32.mrb[0].mxu0
        %v4848 = vadd.f32 %v4174, %v4847
        %v4849 = vpop.f32.mrb[0].mxu0
        %v4850 = vpop.f32.mrb[0].mxu0
        %v4851 = vadd.f32 %v4174, %v4850
        %v4852 = vpop.f32.mrb[0].mxu0
        %4853 = vmatprep.mubr.bf16.mxu0 0
        %4854 = vmatmul.mubr.bf16.gmra.mrb[0].mxu0 %v4283
        %v4855 = vpop.f32.mrb[0].mxu0
        %v4856 = vadd.f32 %v4174, %v4855
        %v4857 = vpop.f32.mrb[0].mxu0
        %v4858 = vpop.f32.mrb[0].mxu0
        %v4859 = vadd.f32 %v4174, %v4858
        %v4860 = vpop.f32.mrb[0].mxu0
        %4861 = vmatprep.mubr.bf16.mxu0 0
        %4862 = vmatmul.mubr.bf16.gmra.mrb[0].mxu0 %v4286
        %v4863 = vpop.f32.mrb[0].mxu0
        %v4864 = vadd.f32 %v4174, %v4863
        %v4865 = vpop.f32.mrb[0].mxu0
        %v4866 = vpop.f32.mrb[0].mxu0
        %v4867 = vadd.f32 %v4174, %v4866
        %v4868 = vpop.f32.mrb[0].mxu0
        %4869 = vmatprep.mubr.bf16.mxu0 0
        %4870 = vmatmul.mubr.bf16.gmra.mrb[0].mxu0 %v4289
        %v4871 = vpop.f32.mrb[0].mxu0
        %v4872 = vadd.f32 %v4174, %v4871
        %v4873 = vpop.f32.mrb[0].mxu0
        %v4874 = vpop.f32.mrb[0].mxu0
        %v4875 = vadd.f32 %v4174, %v4874
        %v4876 = vpop.f32.mrb[0].mxu0
        %4877 = vmatprep.mubr.bf16.mxu0 0
        %4878 = vmatmul.mubr.bf16.gmra.mrb[0].mxu0 %v4292
        %v4879 = vpop.f32.mrb[0].mxu0
        %v4880 = vadd.f32 %v4174, %v4879
        %v4881 = vpop.f32.mrb[0].mxu0
        %v4882 = vpop.f32.mrb[0].mxu0
        %v4883 = vadd.f32 %v4174, %v4882
        %v4884 = vpop.f32.mrb[0].mxu0
        %4885 = vmatprep.mubr.bf16.mxu0 0
        %4886 = vmatmul.mubr.bf16.gmra.mrb[0].mxu0 %v4295
        %v4887 = vpop.f32.mrb[0].mxu0
        %v4888 = vadd.f32 %v4174, %v4887
        %v4889 = vpop.f32.mrb[0].mxu0
        %v4890 = vpop.f32.mrb[0].mxu0
        %v4891 = vadd.f32 %v4174, %v4890
        %v4892 = vpop.f32.mrb[0].mxu0
        %4893 = vmatprep.mubr.bf16.mxu0 0
        %4894 = vmatmul.mubr.bf16.gmra.mrb[0].mxu0 %v4298
        %v4895 = vpop.f32.mrb[0].mxu0
        %v4896 = vadd.f32 %v4174, %v4895
        %v4897 = vpop.f32.mrb[0].mxu0
        %v4898 = vpop.f32.mrb[0].mxu0
        %v4899 = vadd.f32 %v4174, %v4898
        %v4900 = vpop.f32.mrb[0].mxu0
        %4901 = vmatprep.mubr.bf16.mxu0 0
        %4902 = vmatmul.mubr.bf16.gmra.mrb[0].mxu0 %v4301
        %v4903 = vpop.f32.mrb[0].mxu0
        %v4904 = vadd.f32 %v4174, %v4903
        %v4905 = vpop.f32.mrb[0].mxu0
        %v4906 = vpop.f32.mrb[0].mxu0
        %v4907 = vadd.f32 %v4174, %v4906
        %v4908 = vpop.f32.mrb[0].mxu0
        %4909 = vmatprep.mubr.bf16.mxu0 0
        %4910 = vmatmul.mubr.bf16.gmra.mrb[0].mxu0 %v4304
        %v4911 = vpop.f32.mrb[0].mxu0
        %v4912 = vadd.f32 %v4174, %v4911
        %v4913 = vpop.f32.mrb[0].mxu0
        %v4914 = vpop.f32.mrb[0].mxu0
        %v4915 = vadd.f32 %v4174, %v4914
        %v4916 = vpop.f32.mrb[0].mxu0
        %4917 = vmatprep.mubr.bf16.mxu0 0
        %4918 = vmatmul.mubr.bf16.gmra.mrb[0].mxu0 %v4307
        %v4919 = vpop.f32.mrb[0].mxu0
        %v4920 = vadd.f32 %v4174, %v4919
        %v4921 = vpop.f32.mrb[0].mxu0
        %v4922 = vpop.f32.mrb[0].mxu0
        %v4923 = vadd.f32 %v4174, %v4922
        %v4924 = vpop.f32.mrb[0].mxu0
        %4925 = vmatprep.mubr.bf16.mxu0 0
        %4926 = vmatmul.mubr.bf16.gmra.mrb[0].mxu0 %v4310
        %v4927 = vpop.f32.mrb[0].mxu0
        %v4928 = vadd.f32 %v4174, %v4927
        %v4929 = vpop.f32.mrb[0].mxu0
        %v4930 = vpop.f32.mrb[0].mxu0
        %v4931 = vadd.f32 %v4174, %v4930
        %v4932 = vpop.f32.mrb[0].mxu0
        %4933 = vmatprep.mubr.bf16.mxu0 0
        %4934 = vmatmul.mubr.bf16.gmra.mrb[0].mxu0 %v4313
        %v4935 = vpop.f32.mrb[0].mxu0
        %v4936 = vadd.f32 %v4174, %v4935
        %v4937 = vpop.f32.mrb[0].mxu0
        %v4938 = vpop.f32.mrb[0].mxu0
        %v4939 = vadd.f32 %v4174, %v4938
        %v4940 = vpop.f32.mrb[0].mxu0
        %4941 = vmatprep.mubr.bf16.mxu0 0
        %4942 = vmatmul.mubr.bf16.gmra.mrb[0].mxu0 %v4316
        %v4943 = vpop.f32.mrb[0].mxu0
        %v4944 = vadd.f32 %v4174, %v4943
        %v4945 = vpop.f32.mrb[0].mxu0
        %v4946 = vpop.f32.mrb[0].mxu0
        %v4947 = vadd.f32 %v4174, %v4946
        %v4948 = vpop.f32.mrb[0].mxu0
        %4949 = vmatprep.mubr.bf16.mxu0 0
        %4950 = vmatmul.mubr.bf16.gmra.mrb[0].mxu0 %v4319
        %v4951 = vpop.f32.mrb[0].mxu0
        %v4952 = vadd.f32 %v4174, %v4951
        %v4953 = vpop.f32.mrb[0].mxu0
        %v4954 = vpop.f32.mrb[0].mxu0
        %v4955 = vadd.f32 %v4174, %v4954
        %v4956 = vpop.f32.mrb[0].mxu0
        %4957 = vmatprep.mubr.bf16.mxu0 0
        %4958 = vmatmul.mubr.bf16.gmra.mrb[0].mxu0 %v4322
        %v4959 = vpop.f32.mrb[0].mxu0
        %v4960 = vadd.f32 %v4174, %v4959
        %v4961 = vpop.f32.mrb[0].mxu0
        %v4962 = vpop.f32.mrb[0].mxu0
        %v4963 = vadd.f32 %v4174, %v4962
        %v4964 = vpop.f32.mrb[0].mxu0
        %4965 = vmatprep.mubr.bf16.mxu0 0
        %4966 = vmatmul.mubr.bf16.gmra.mrb[0].mxu0 %v4325
        %v4967 = vpop.f32.mrb[0].mxu0
        %v4968 = vadd.f32 %v4174, %v4967
        %v4969 = vpop.f32.mrb[0].mxu0
        %v4970 = vpop.f32.mrb[0].mxu0
        %v4971 = vadd.f32 %v4174, %v4970
        %v4972 = vpop.f32.mrb[0].mxu0
        %4973 = vmatprep.mubr.bf16.mxu0 0
        %4974 = vmatmul.mubr.bf16.gmra.mrb[0].mxu0 %v4328
        %v4975 = vpop.f32.mrb[0].mxu0
        %v4976 = vadd.f32 %v4174, %v4975
        %v4977 = vpop.f32.mrb[0].mxu0
        %v4978 = vpop.f32.mrb[0].mxu0
        %v4979 = vadd.f32 %v4174, %v4978
        %v4980 = vpop.f32.mrb[0].mxu0
        %4981 = vmatprep.mubr.bf16.mxu0 0
        %4982 = vmatmul.mubr.bf16.gmra.mrb[0].mxu0 %v4331
        %v4983 = vpop.f32.mrb[0].mxu0
        %v4984 = vadd.f32 %v4174, %v4983
        %v4985 = vpop.f32.mrb[0].mxu0
        %v4986 = vpop.f32.mrb[0].mxu0
        %v4987 = vadd.f32 %v4174, %v4986
        %v4988 = vpop.f32.mrb[0].mxu0
        %4989 = vmatprep.mubr.bf16.mxu0 0
        %4990 = vmatmul.mubr.bf16.gmra.mrb[0].mxu0 %v4334
        %v4991 = vpop.f32.mrb[0].mxu0
        %v4992 = vadd.f32 %v4174, %v4991
        %v4993 = vpop.f32.mrb[0].mxu0
        %v4994 = vpop.f32.mrb[0].mxu0
        %v4995 = vadd.f32 %v4174, %v4994
        %v4996 = vpop.f32.mrb[0].mxu0
        %4997 = vmatprep.mubr.bf16.mxu0 0
        %4998 = vmatmul.mubr.bf16.gmra.mrb[0].mxu0 %v4337
        %v4999 = vpop.f32.mrb[0].mxu0
        %v5000 = vadd.f32 %v4174, %v4999
        %v5001 = vpop.f32.mrb[0].mxu0
        %v5002 = vpop.f32.mrb[0].mxu0
        %v5003 = vadd.f32 %v4174, %v5002
        %v5004 = vpop.f32.mrb[0].mxu0
        %5005 = vmatprep.mubr.bf16.mxu0 0
        %5006 = vmatmul.mubr.bf16.gmra.mrb[0].mxu0 %v4340
        %v5007 = vpop.f32.mrb[0].mxu0
        %v5008 = vadd.f32 %v4174, %v5007
        %v5009 = vpop.f32.mrb[0].mxu0
        %v5010 = vpop.f32.mrb[0].mxu0
        %v5011 = vadd.f32 %v4174, %v5010
        %v5012 = vpop.f32.mrb[0].mxu0
        %5013 = vmatprep.mubr.bf16.mxu0 0
        %5014 = vmatmul.mubr.bf16.gmra.mrb[0].mxu0 %v4343
        %v5015 = vpop.f32.mrb[0].mxu0
        %v5016 = vadd.f32 %v4174, %v5015
        %v5017 = vpop.f32.mrb[0].mxu0
        %v5018 = vpop.f32.mrb[0].mxu0
        %v5019 = vadd.f32 %v4174, %v5018
        %v5020 = vpop.f32.mrb[0].mxu0
        %5021 = vmatprep.mubr.bf16.mxu0 0
        %5022 = vmatmul.mubr.bf16.gmra.mrb[0].mxu0 %v4346
        %v5023 = vpop.f32.mrb[0].mxu0
        %v5024 = vadd.f32 %v4174, %v5023
        %v5025 = vpop.f32.mrb[0].mxu0
        %v5026 = vpop.f32.mrb[0].mxu0
        %v5027 = vadd.f32 %v4174, %v5026
        %v5028 = vpop.f32.mrb[0].mxu0
        %5029 = vmatprep.mubr.bf16.mxu0 0
        %5030 = vmatmul.mubr.bf16.gmra.mrb[0].mxu0 %v4349
        %v5031 = vpop.f32.mrb[0].mxu0
        %v5032 = vadd.f32 %v4174, %v5031
        %v5033 = vpop.f32.mrb[0].mxu0
        %v5034 = vpop.f32.mrb[0].mxu0
        %v5035 = vadd.f32 %v4174, %v5034
        %v5036 = vpop.f32.mrb[0].mxu0
        %5037 = vmatprep.mubr.bf16.mxu0 0
        %5038 = vmatmul.mubr.bf16.gmra.mrb[0].mxu0 %v4352
        %v5039 = vpop.f32.mrb[0].mxu0
        %v5040 = vadd.f32 %v4174, %v5039
        %v5041 = vpop.f32.mrb[0].mxu0
        %v5042 = vpop.f32.mrb[0].mxu0
        %v5043 = vadd.f32 %v4174, %v5042
        %v5044 = vpop.f32.mrb[0].mxu0
        %5045 = vmatprep.mubr.bf16.mxu0 0
        %5046 = vmatmul.mubr.bf16.gmra.mrb[0].mxu0 %v4355
        %v5047 = vpop.f32.mrb[0].mxu0
        %v5048 = vadd.f32 %v4174, %v5047
        %v5049 = vpop.f32.mrb[0].mxu0
        %v5050 = vpop.f32.mrb[0].mxu0
        %v5051 = vadd.f32 %v4174, %v5050
        %v5052 = vpop.f32.mrb[0].mxu0
        %5053 = vmatprep.mubr.bf16.mxu0 0
        %5054 = vmatmul.mubr.bf16.gmra.mrb[0].mxu0 %v4358
        %v5055 = vpop.f32.mrb[0].mxu0
        %v5056 = vadd.f32 %v4174, %v5055
        %v5057 = vpop.f32.mrb[0].mxu0
        %v5058 = vpop.f32.mrb[0].mxu0
        %v5059 = vadd.f32 %v4174, %v5058
        %v5060 = vpop.f32.mrb[0].mxu0
        %5061 = vmatprep.mubr.bf16.mxu0 0
        %5062 = vmatmul.mubr.bf16.gmra.mrb[0].mxu0 %v4361
        %v5063 = vpop.f32.mrb[0].mxu0
        %v5064 = vadd.f32 %v4174, %v5063
        %v5065 = vpop.f32.mrb[0].mxu0
        %v5066 = vpop.f32.mrb[0].mxu0
        %v5067 = vadd.f32 %v4174, %v5066
        %v5068 = vpop.f32.mrb[0].mxu0
        %5069 = vmatprep.mubr.bf16.mxu0 0
        %5070 = vmatmul.mubr.bf16.gmra.mrb[0].mxu0 %v4364
        %v5071 = vpop.f32.mrb[0].mxu0
        %v5072 = vadd.f32 %v4174, %v5071
        %v5073 = vpop.f32.mrb[0].mxu0
        %v5074 = vpop.f32.mrb[0].mxu0
        %v5075 = vadd.f32 %v4174, %v5074
        %v5076 = vpop.f32.mrb[0].mxu0
        %5077 = vmatprep.mubr.bf16.mxu0 0
        %5078 = vmatmul.mubr.bf16.gmra.mrb[0].mxu0 %v4367
        %v5079 = vpop.f32.mrb[0].mxu0
        %v5080 = vadd.f32 %v4174, %v5079
        %v5081 = vpop.f32.mrb[0].mxu0
        %v5082 = vpop.f32.mrb[0].mxu0
        %v5083 = vadd.f32 %v4174, %v5082
        %v5084 = vpop.f32.mrb[0].mxu0
        %5085 = vmatprep.mubr.bf16.mxu0 0
        %5086 = vmatmul.mubr.bf16.gmra.mrb[0].mxu0 %v4370
        %v5087 = vpop.f32.mrb[0].mxu0
        %v5088 = vadd.f32 %v4174, %v5087
        %v5089 = vpop.f32.mrb[0].mxu0
        %v5090 = vpop.f32.mrb[0].mxu0
        %v5091 = vadd.f32 %v4174, %v5090
        %v5092 = vpop.f32.mrb[0].mxu0
        %5093 = vmatprep.mubr.bf16.mxu0 0
        %5094 = vmatmul.mubr.bf16.gmra.mrb[0].mxu0 %v4373
        %v5095 = vpop.f32.mrb[0].mxu0
        %v5096 = vadd.f32 %v4174, %v5095
        %v5097 = vpop.f32.mrb[0].mxu0
        %v5098 = vpop.f32.mrb[0].mxu0
        %v5099 = vadd.f32 %v4174, %v5098
        %v5100 = vpop.f32.mrb[0].mxu0
        %5101 = vmatprep.mubr.bf16.mxu0 0
        %5102 = vmatmul.mubr.bf16.gmra.mrb[0].mxu0 %v4376
        %v5103 = vpop.f32.mrb[0].mxu0
        %v5104 = vadd.f32 %v4174, %v5103
        %v5105 = vpop.f32.mrb[0].mxu0
        %v5106 = vpop.f32.mrb[0].mxu0
        %v5107 = vadd.f32 %v4174, %v5106
        %v5108 = vpop.f32.mrb[0].mxu0
        %5109 = vmatprep.mubr.bf16.mxu0 0
        %5110 = vmatmul.mubr.bf16.gmra.mrb[0].mxu0 %v4379
        %v5111 = vpop.f32.mrb[0].mxu0
        %v5112 = vadd.f32 %v4174, %v5111
        %v5113 = vpop.f32.mrb[0].mxu0
        %v5114 = vpop.f32.mrb[0].mxu0
        %v5115 = vadd.f32 %v4174, %v5114
        %v5116 = vpop.f32.mrb[0].mxu0
        %5117 = vmatprep.mubr.bf16.mxu0 0
        %5118 = vmatmul.mubr.bf16.gmra.mrb[0].mxu0 %v4382
        %v5119 = vpop.f32.mrb[0].mxu0
        %v5120 = vadd.f32 %v4174, %v5119
        %v5121 = vpop.f32.mrb[0].mxu0
        %v5122 = vpop.f32.mrb[0].mxu0
        %v5123 = vadd.f32 %v4174, %v5122
        %v5124 = vpop.f32.mrb[0].mxu0
        %5125 = vmatprep.mubr.bf16.mxu0 0
        %5126 = vmatmul.mubr.bf16.gmra.mrb[0].mxu0 %v4385
        %v5127 = vpop.f32.mrb[0].mxu0
        %v5128 = vadd.f32 %v4174, %v5127
        %v5129 = vpop.f32.mrb[0].mxu0
        %v5130 = vpop.f32.mrb[0].mxu0
        %v5131 = vadd.f32 %v4174, %v5130
        %v5132 = vpop.f32.mrb[0].mxu0
        %5133 = vmatprep.mubr.bf16.mxu0 0
        %5134 = vmatmul.mubr.bf16.gmra.mrb[0].mxu0 %v4388
        %v5135 = vpop.f32.mrb[0].mxu0
        %v5136 = vadd.f32 %v4174, %v5135
        %v5137 = vpop.f32.mrb[0].mxu0
        %v5138 = vpop.f32.mrb[0].mxu0
        %v5139 = vadd.f32 %v4174, %v5138
        %v5140 = vpop.f32.mrb[0].mxu0
        %5141 = vmatprep.mubr.bf16.mxu0 0
        %5142 = vmatmul.mubr.bf16.gmra.mrb[0].mxu0 %v4391
        %v5143 = vpop.f32.mrb[0].mxu0
        %v5144 = vadd.f32 %v4174, %v5143
        %v5145 = vpop.f32.mrb[0].mxu0
        %v5146 = vpop.f32.mrb[0].mxu0
        %v5147 = vadd.f32 %v4174, %v5146
        %v5148 = vpop.f32.mrb[0].mxu0
        %5149 = vmatprep.mubr.bf16.mxu0 0
        %5150 = vmatmul.mubr.bf16.gmra.mrb[0].mxu0 %v4394
        %v5151 = vpop.f32.mrb[0].mxu0
        %v5152 = vadd.f32 %v4174, %v5151
        %v5153 = vpop.f32.mrb[0].mxu0
        %v5154 = vpop.f32.mrb[0].mxu0
        %v5155 = vadd.f32 %v4174, %v5154
        %v5156 = vpop.f32.mrb[0].mxu0
        %5157 = vmatprep.mubr.bf16.mxu0 0
        %5158 = vmatmul.mubr.bf16.gmra.mrb[0].mxu0 %v4397
        %v5159 = vpop.f32.mrb[0].mxu0
        %v5160 = vadd.f32 %v4174, %v5159
        %v5161 = vpop.f32.mrb[0].mxu0
        %v5162 = vpop.f32.mrb[0].mxu0
        %v5163 = vadd.f32 %v4174, %v5162
        %v5164 = vpop.f32.mrb[0].mxu0
        %5165 = vmatprep.mubr.bf16.mxu0 0
        %5166 = vmatmul.mubr.bf16.gmra.mrb[0].mxu0 %v4400
        %v5167 = vpop.f32.mrb[0].mxu0
        %v5168 = vadd.f32 %v4174, %v5167
        %v5169 = vpop.f32.mrb[0].mxu0
        %v5170 = vpop.f32.mrb[0].mxu0
        %v5171 = vadd.f32 %v4174, %v5170
        %v5172 = vpop.f32.mrb[0].mxu0
        %5173 = vmatprep.mubr.bf16.mxu0 0
        %5174 = vmatmul.mubr.bf16.gmra.mrb[0].mxu0 %v4403
        %v5175 = vpop.f32.mrb[0].mxu0
        %v5176 = vadd.f32 %v4174, %v5175
        %v5177 = vpop.f32.mrb[0].mxu0
        %v5178 = vpop.f32.mrb[0].mxu0
        %v5179 = vadd.f32 %v4174, %v5178
        %v5180 = vpop.f32.mrb[0].mxu0
        %5181 = vmatprep.mubr.bf16.mxu0 0
        %5182 = vmatmul.mubr.bf16.gmra.mrb[0].mxu0 %v4406
        %v5183 = vpop.f32.mrb[0].mxu0
        %v5184 = vadd.f32 %v4174, %v5183
        %v5185 = vpop.f32.mrb[0].mxu0
        %v5186 = vpop.f32.mrb[0].mxu0
        %v5187 = vadd.f32 %v4174, %v5186
        %v5188 = vpop.f32.mrb[0].mxu0
        %5189 = vmatprep.mubr.bf16.mxu0 0
        %5190 = vmatmul.mubr.bf16.gmra.mrb[0].mxu0 %v4409
        %v5191 = vpop.f32.mrb[0].mxu0
        %v5192 = vadd.f32 %v4174, %v5191
        %v5193 = vpop.f32.mrb[0].mxu0
        %v5194 = vpop.f32.mrb[0].mxu0
        %v5195 = vadd.f32 %v4174, %v5194
        %v5196 = vpop.f32.mrb[0].mxu0
        %5197 = vmatprep.mubr.bf16.mxu0 0
        %5198 = vmatmul.mubr.bf16.gmra.mrb[0].mxu0 %v4412
        %v5199 = vpop.f32.mrb[0].mxu0
        %v5200 = vadd.f32 %v4174, %v5199
        %v5201 = vpop.f32.mrb[0].mxu0
        %v5202 = vpop.f32.mrb[0].mxu0
        %v5203 = vadd.f32 %v4174, %v5202
        %v5204 = vpop.f32.mrb[0].mxu0
        %5205 = vmatprep.mubr.bf16.mxu0 0
        %5206 = vmatmul.mubr.bf16.gmra.mrb[0].mxu0 %v4415
        %v5207 = vpop.f32.mrb[0].mxu0
        %v5208 = vadd.f32 %v4174, %v5207
        %v5209 = vpop.f32.mrb[0].mxu0
        %v5210 = vpop.f32.mrb[0].mxu0
        %v5211 = vadd.f32 %v4174, %v5210
        %v5212 = vpop.f32.mrb[0].mxu0
        %5213 = vmatprep.mubr.bf16.mxu0 0
        %5214 = vmatmul.mubr.bf16.gmra.mrb[0].mxu0 %v4418
        %v5215 = vpop.f32.mrb[0].mxu0
        %v5216 = vadd.f32 %v4174, %v5215
        %v5217 = vpop.f32.mrb[0].mxu0
        %v5218 = vpop.f32.mrb[0].mxu0
        %v5219 = vadd.f32 %v4174, %v5218
        %v5220 = vpop.f32.mrb[0].mxu0
        %5221 = vmatprep.mubr.bf16.mxu0 0
        %5222 = vmatmul.mubr.bf16.gmra.mrb[0].mxu0 %v4421
        %v5223 = vpop.f32.mrb[0].mxu0
        %v5224 = vadd.f32 %v4174, %v5223
        %v5225 = vpop.f32.mrb[0].mxu0
        %v5226 = vpop.f32.mrb[0].mxu0
        %v5227 = vadd.f32 %v4174, %v5226
        %v5228 = vpop.f32.mrb[0].mxu0
        %5229 = vmatprep.mubr.bf16.mxu0 0
        %5230 = vmatmul.mubr.bf16.gmra.mrb[0].mxu0 %v4424
        %v5231 = vpop.f32.mrb[0].mxu0
        %v5232 = vadd.f32 %v4174, %v5231
        %v5233 = vpop.f32.mrb[0].mxu0
        %v5234 = vpop.f32.mrb[0].mxu0
        %v5235 = vadd.f32 %v4174, %v5234
        %v5236 = vpop.f32.mrb[0].mxu0
        %5237 = vmatprep.mubr.bf16.mxu0 0
        %5238 = vmatmul.mubr.bf16.gmra.mrb[0].mxu0 %v4427
        %v5239 = vpop.f32.mrb[0].mxu0
        %v5240 = vadd.f32 %v4174, %v5239
        %v5241 = vpop.f32.mrb[0].mxu0
        %v5242 = vpop.f32.mrb[0].mxu0
        %v5243 = vadd.f32 %v4174, %v5242
        %v5244 = vpop.f32.mrb[0].mxu0
        %5245 = vmatprep.mubr.bf16.mxu0 0
        %5246 = vmatmul.mubr.bf16.gmra.mrb[0].mxu0 %v4430
        %v5247 = vpop.f32.mrb[0].mxu0
        %v5248 = vadd.f32 %v4174, %v5247
        %v5249 = vpop.f32.mrb[0].mxu0
        %v5250 = vpop.f32.mrb[0].mxu0
        %v5251 = vadd.f32 %v4174, %v5250
        %v5252 = vpop.f32.mrb[0].mxu0
        %5253 = vmatprep.mubr.bf16.mxu0 0
        %5254 = vmatmul.mubr.bf16.gmra.mrb[0].mxu0 %v4433
        %v5255 = vpop.f32.mrb[0].mxu0
        %v5256 = vadd.f32 %v4174, %v5255
        %v5257 = vpop.f32.mrb[0].mxu0
        %v5258 = vpop.f32.mrb[0].mxu0
        %v5259 = vadd.f32 %v4174, %v5258
        %v5260 = vpop.f32.mrb[0].mxu0
        %5261 = vmatprep.mubr.bf16.mxu0 0
        %5262 = vmatmul.mubr.bf16.gmra.mrb[0].mxu0 %v4436
        %v5263 = vpop.f32.mrb[0].mxu0
        %v5264 = vadd.f32 %v4174, %v5263
        %v5265 = vpop.f32.mrb[0].mxu0
        %v5266 = vpop.f32.mrb[0].mxu0
        %v5267 = vadd.f32 %v4174, %v5266
        %v5268 = vpop.f32.mrb[0].mxu0
        %5269 = vmatprep.mubr.bf16.mxu0 0
        %5270 = vmatmul.mubr.bf16.gmra.mrb[0].mxu0 %v4439
        %v5271 = vpop.f32.mrb[0].mxu0
        %v5272 = vadd.f32 %v4174, %v5271
        %v5273 = vpop.f32.mrb[0].mxu0
        %v5274 = vpop.f32.mrb[0].mxu0
        %v5275 = vadd.f32 %v4174, %v5274
        %v5276 = vpop.f32.mrb[0].mxu0
        %5277 = vmatprep.mubr.bf16.mxu0 0
        %5278 = vmatmul.mubr.bf16.gmra.mrb[0].mxu0 %v4442
        %v5279 = vpop.f32.mrb[0].mxu0
        %v5280 = vadd.f32 %v4174, %v5279
        %v5281 = vpop.f32.mrb[0].mxu0
        %v5282 = vpop.f32.mrb[0].mxu0
        %v5283 = vadd.f32 %v4174, %v5282
        %v5284 = vpop.f32.mrb[0].mxu0
        %5285 = vmatprep.mubr.bf16.mxu0 0
        %5286 = vmatmul.mubr.bf16.gmra.mrb[0].mxu0 %v4445
        %v5287 = vpop.f32.mrb[0].mxu0
        %v5288 = vadd.f32 %v4174, %v5287
        %v5289 = vpop.f32.mrb[0].mxu0
        %v5290 = vpop.f32.mrb[0].mxu0
        %v5291 = vadd.f32 %v4174, %v5290
        %v5292 = vpop.f32.mrb[0].mxu0
        %5293 = vmatprep.mubr.bf16.mxu0 0
        %5294 = vmatmul.mubr.bf16.gmra.mrb[0].mxu0 %v4448
        %v5295 = vpop.f32.mrb[0].mxu0
        %v5296 = vadd.f32 %v4174, %v5295
        %v5297 = vpop.f32.mrb[0].mxu0
        %v5298 = vpop.f32.mrb[0].mxu0
        %v5299 = vadd.f32 %v4174, %v5298
        %v5300 = vpop.f32.mrb[0].mxu0
        %5301 = vmatprep.mubr.bf16.mxu0 0
        %5302 = vmatmul.mubr.bf16.gmra.mrb[0].mxu0 %v4451
        %v5303 = vpop.f32.mrb[0].mxu0
        %v5304 = vadd.f32 %v4174, %v5303
        %v5305 = vpop.f32.mrb[0].mxu0
        %v5306 = vpop.f32.mrb[0].mxu0
        %v5307 = vadd.f32 %v4174, %v5306
        %v5308 = vpop.f32.mrb[0].mxu0
        %5309 = vmatprep.mubr.bf16.mxu0 0
        %5310 = vmatmul.mubr.bf16.gmra.mrb[0].mxu0 %v4454
        %v5311 = vpop.f32.mrb[0].mxu0
        %v5312 = vadd.f32 %v4174, %v5311
        %v5313 = vpop.f32.mrb[0].mxu0
        %v5314 = vpop.f32.mrb[0].mxu0
        %v5315 = vadd.f32 %v4174, %v5314
        %v5316 = vpop.f32.mrb[0].mxu0
        %5317 = vmatprep.mubr.bf16.mxu0 0
        %5318 = vmatmul.mubr.bf16.gmra.mrb[0].mxu0 %v4457
        %v5319 = vpop.f32.mrb[0].mxu0
        %v5320 = vadd.f32 %v4174, %v5319
        %v5321 = vpop.f32.mrb[0].mxu0
        %v5322 = vpop.f32.mrb[0].mxu0
        %v5323 = vadd.f32 %v4174, %v5322
        %v5324 = vpop.f32.mrb[0].mxu0
        %5325 = vmatprep.mubr.bf16.mxu0 0
        %5326 = vmatmul.mubr.bf16.gmra.mrb[0].mxu0 %v4460
        %v5327 = vpop.f32.mrb[0].mxu0
        %v5328 = vadd.f32 %v4174, %v5327
        %v5329 = vpop.f32.mrb[0].mxu0
        %v5330 = vpop.f32.mrb[0].mxu0
        %v5331 = vadd.f32 %v4174, %v5330
        %v5332 = vpop.f32.mrb[0].mxu0
        %5333 = vmatprep.mubr.bf16.mxu0 0
        %5334 = vmatmul.mubr.bf16.gmra.mrb[0].mxu0 %v4463
        %v5335 = vpop.f32.mrb[0].mxu0
        %v5336 = vadd.f32 %v4174, %v5335
        %v5337 = vpop.f32.mrb[0].mxu0
        %v5338 = vpop.f32.mrb[0].mxu0
        %v5339 = vadd.f32 %v4174, %v5338
        %v5340 = vpop.f32.mrb[0].mxu0
        %5341 = vmatprep.mubr.bf16.mxu0 0
        %5342 = vmatmul.mubr.bf16.gmra.mrb[0].mxu0 %v4466
        %v5343 = vpop.f32.mrb[0].mxu0
        %v5344 = vadd.f32 %v4174, %v5343
        %v5345 = vpop.f32.mrb[0].mxu0
        %v5346 = vpop.f32.mrb[0].mxu0
        %v5347 = vadd.f32 %v4174, %v5346
        %v5348 = vpop.f32.mrb[0].mxu0
        %5349 = vmatprep.mubr.bf16.mxu0 0
        %5350 = vmatmul.mubr.bf16.gmra.mrb[0].mxu0 %v4469
        %v5351 = vpop.f32.mrb[0].mxu0
        %v5352 = vadd.f32 %v4174, %v5351
        %v5353 = vpop.f32.mrb[0].mxu0
        %v5354 = vpop.f32.mrb[0].mxu0
        %v5355 = vadd.f32 %v4174, %v5354
        %v5356 = vpop.f32.mrb[0].mxu0
        %5357 = vmatprep.mubr.bf16.mxu0 0
        %5358 = vmatmul.mubr.bf16.gmra.mrb[0].mxu0 %v4472
        %v5359 = vpop.f32.mrb[0].mxu0
        %v5360 = vadd.f32 %v4174, %v5359
        %v5361 = vpop.f32.mrb[0].mxu0
        %v5362 = vpop.f32.mrb[0].mxu0
        %v5363 = vadd.f32 %v4174, %v5362
        %v5364 = vpop.f32.mrb[0].mxu0
        %5365 = vmatprep.mubr.bf16.mxu0 0
        %5366 = vmatmul.mubr.bf16.gmra.mrb[0].mxu0 %v4475
        %v5367 = vpop.f32.mrb[0].mxu0
        %v5368 = vadd.f32 %v4174, %v5367
        %v5369 = vpop.f32.mrb[0].mxu0
        %v5370 = vpop.f32.mrb[0].mxu0
        %v5371 = vadd.f32 %v4174, %v5370
        %v5372 = vpop.f32.mrb[0].mxu0
        %5373 = vmatprep.mubr.bf16.mxu0 0
        %5374 = vmatmul.mubr.bf16.gmra.mrb[0].mxu0 %v4478
        %v5375 = vpop.f32.mrb[0].mxu0
        %v5376 = vadd.f32 %v4174, %v5375
        %v5377 = vpop.f32.mrb[0].mxu0
        %v5378 = vpop.f32.mrb[0].mxu0
        %v5379 = vadd.f32 %v4174, %v5378
        %v5380 = vpop.f32.mrb[0].mxu0
        %5381 = vmatprep.mubr.bf16.mxu0 0
        %5382 = vmatmul.mubr.bf16.gmra.mrb[0].mxu0 %v4481
        %v5383 = vpop.f32.mrb[0].mxu0
        %v5384 = vadd.f32 %v4174, %v5383
        %v5385 = vpop.f32.mrb[0].mxu0
        %v5386 = vpop.f32.mrb[0].mxu0
        %v5387 = vadd.f32 %v4174, %v5386
        %v5388 = vpop.f32.mrb[0].mxu0
        %5389 = vmatprep.mubr.bf16.mxu0 0
        %5390 = vmatmul.mubr.bf16.gmra.mrb[0].mxu0 %v4484
        %v5391 = vpop.f32.mrb[0].mxu0
        %v5392 = vadd.f32 %v4174, %v5391
        %v5393 = vpop.f32.mrb[0].mxu0
        %v5394 = vpop.f32.mrb[0].mxu0
        %v5395 = vadd.f32 %v4174, %v5394
        %v5396 = vpop.f32.mrb[0].mxu0
        %5397 = vmatprep.mubr.bf16.mxu0 0
        %5398 = vmatmul.mubr.bf16.gmra.mrb[0].mxu0 %v4487
        %v5399 = vpop.f32.mrb[0].mxu0
        %v5400 = vadd.f32 %v4174, %v5399
        %v5401 = vpop.f32.mrb[0].mxu0
        %v5402 = vpop.f32.mrb[0].mxu0
        %v5403 = vadd.f32 %v4174, %v5402
        %v5404 = vpop.f32.mrb[0].mxu0
        %5405 = vmatprep.mubr.bf16.mxu0 0
        %5406 = vmatmul.mubr.bf16.gmra.mrb[0].mxu0 %v4490
        %v5407 = vpop.f32.mrb[0].mxu0
        %v5408 = vadd.f32 %v4174, %v5407
        %v5409 = vpop.f32.mrb[0].mxu0
        %v5410 = vpop.f32.mrb[0].mxu0
        %v5411 = vadd.f32 %v4174, %v5410
        %v5412 = vpop.f32.mrb[0].mxu0
        %5413 = vmatprep.mubr.bf16.mxu0 0
        %5414 = vmatmul.mubr.bf16.gmra.mrb[0].mxu0 %v4493
        %v5415 = vpop.f32.mrb[0].mxu0
        %v5416 = vadd.f32 %v4174, %v5415
        %v5417 = vpop.f32.mrb[0].mxu0
        %v5418 = vpop.f32.mrb[0].mxu0
        %v5419 = vadd.f32 %v4174, %v5418
        %v5420 = vpop.f32.mrb[0].mxu0
        %5421 = vmatprep.mubr.bf16.mxu0 0
        %5422 = vmatmul.mubr.bf16.gmra.mrb[0].mxu0 %v4496
        %v5423 = vpop.f32.mrb[0].mxu0
        %v5424 = vadd.f32 %v4174, %v5423
        %v5425 = vpop.f32.mrb[0].mxu0
        %v5426 = vpop.f32.mrb[0].mxu0
        %v5427 = vadd.f32 %v4174, %v5426
        %v5428 = vpop.f32.mrb[0].mxu0
        %5429 = vmatprep.mubr.bf16.mxu0 0
        %5430 = vmatmul.mubr.bf16.gmra.mrb[0].mxu0 %v4499
        %v5431 = vpop.f32.mrb[0].mxu0
        %v5432 = vadd.f32 %v4174, %v5431
        %v5433 = vpop.f32.mrb[0].mxu0
        %v5434 = vpop.f32.mrb[0].mxu0
        %v5435 = vadd.f32 %v4174, %v5434
        %v5436 = vpop.f32.mrb[0].mxu0
        %5437 = vmatprep.mubr.bf16.mxu0 0
        %5438 = vmatmul.mubr.bf16.gmra.mrb[0].mxu0 %v4502
        %v5439 = vpop.f32.mrb[0].mxu0
        %v5440 = vadd.f32 %v4174, %v5439
        %v5441 = vpop.f32.mrb[0].mxu0
        %v5442 = vpop.f32.mrb[0].mxu0
        %v5443 = vadd.f32 %v4174, %v5442
        %v5444 = vpop.f32.mrb[0].mxu0
        %5445 = vmatprep.mubr.bf16.mxu0 0
        %5446 = vmatmul.mubr.bf16.gmra.mrb[0].mxu0 %v4505
        %v5447 = vpop.f32.mrb[0].mxu0
        %v5448 = vadd.f32 %v4174, %v5447
        %v5449 = vpop.f32.mrb[0].mxu0
        %v5450 = vpop.f32.mrb[0].mxu0
        %v5451 = vadd.f32 %v4174, %v5450
        %v5452 = vpop.f32.mrb[0].mxu0
        %5453 = vmatprep.mubr.bf16.mxu0 0
        %5454 = vmatmul.mubr.bf16.gmra.mrb[0].mxu0 %v4508
        %v5455 = vpop.f32.mrb[0].mxu0
        %v5456 = vadd.f32 %v4174, %v5455
        %v5457 = vpop.f32.mrb[0].mxu0
        %v5458 = vpop.f32.mrb[0].mxu0
        %v5459 = vadd.f32 %v4174, %v5458
        %v5460 = vpop.f32.mrb[0].mxu0
        %5461 = vmatprep.mubr.bf16.mxu0 0
        %5462 = vmatmul.mubr.bf16.gmra.mrb[0].mxu0 %v4511
        %v5463 = vpop.f32.mrb[0].mxu0
        %v5464 = vadd.f32 %v4174, %v5463
        %v5465 = vpop.f32.mrb[0].mxu0
        %v5466 = vpop.f32.mrb[0].mxu0
        %v5467 = vadd.f32 %v4174, %v5466
        %v5468 = vpop.f32.mrb[0].mxu0
        %5469 = vmatprep.mubr.bf16.mxu0 0
        %5470 = vmatmul.mubr.bf16.gmra.mrb[0].mxu0 %v4514
        %v5471 = vpop.f32.mrb[0].mxu0
        %v5472 = vadd.f32 %v4174, %v5471
        %v5473 = vpop.f32.mrb[0].mxu0
        %v5474 = vpop.f32.mrb[0].mxu0
        %v5475 = vadd.f32 %v4174, %v5474
        %v5476 = vpop.f32.mrb[0].mxu0
        %5477 = vmatprep.mubr.bf16.mxu0 0
        %5478 = vmatmul.mubr.bf16.gmra.mrb[0].mxu0 %v4517
        %v5479 = vpop.f32.mrb[0].mxu0
        %v5480 = vadd.f32 %v4174, %v5479
        %v5481 = vpop.f32.mrb[0].mxu0
        %v5482 = vpop.f32.mrb[0].mxu0
        %v5483 = vadd.f32 %v4174, %v5482
        %v5484 = vpop.f32.mrb[0].mxu0
        %5485 = vmatprep.mubr.bf16.mxu0 0
        %5486 = vmatmul.mubr.bf16.gmra.mrb[0].mxu0 %v4520
        %v5487 = vpop.f32.mrb[0].mxu0
        %v5488 = vadd.f32 %v4174, %v5487
        %v5489 = vpop.f32.mrb[0].mxu0
        %v5490 = vpop.f32.mrb[0].mxu0
        %v5491 = vadd.f32 %v4174, %v5490
        %v5492 = vpop.f32.mrb[0].mxu0
        %5493 = vmatprep.mubr.bf16.mxu0 0
        %5494 = vmatmul.mubr.bf16.gmra.mrb[0].mxu0 %v4523
        %v5495 = vpop.f32.mrb[0].mxu0
        %v5496 = vadd.f32 %v4174, %v5495
        %v5497 = vpop.f32.mrb[0].mxu0
        %v5498 = vpop.f32.mrb[0].mxu0
        %v5499 = vadd.f32 %v4174, %v5498
        %v5500 = vpop.f32.mrb[0].mxu0
        %5501 = vmatprep.mubr.bf16.mxu0 0
        %5502 = vmatmul.mubr.bf16.gmra.mrb[0].mxu0 %v4526
        %v5503 = vpop.f32.mrb[0].mxu0
        %v5504 = vadd.f32 %v4174, %v5503
        %v5505 = vpop.f32.mrb[0].mxu0
        %v5506 = vpop.f32.mrb[0].mxu0
        %v5507 = vadd.f32 %v4174, %v5506
        %v5508 = vpop.f32.mrb[0].mxu0
        %5509 = vmatprep.mubr.bf16.mxu0 0
        %5510 = vmatmul.mubr.bf16.gmra.mrb[0].mxu0 %v4529
        %v5511 = vpop.f32.mrb[0].mxu0
        %v5512 = vadd.f32 %v4174, %v5511
        %v5513 = vpop.f32.mrb[0].mxu0
        %v5514 = vpop.f32.mrb[0].mxu0
        %v5515 = vadd.f32 %v4174, %v5514
        %v5516 = vpop.f32.mrb[0].mxu0
        %5517 = vmatprep.mubr.bf16.mxu0 0
        %5518 = vmatmul.mubr.bf16.gmra.mrb[0].mxu0 %v4532
        %v5519 = vpop.f32.mrb[0].mxu0
        %v5520 = vadd.f32 %v4174, %v5519
        %v5521 = vpop.f32.mrb[0].mxu0
        %v5522 = vpop.f32.mrb[0].mxu0
        %v5523 = vadd.f32 %v4174, %v5522
        %v5524 = vpop.f32.mrb[0].mxu0
        %5525 = vmatprep.mubr.bf16.mxu0 0
        %5526 = vmatmul.mubr.bf16.gmra.mrb[0].mxu0 %v4535
        %v5527 = vpop.f32.mrb[0].mxu0
        %v5528 = vadd.f32 %v4174, %v5527
        %v5529 = vpop.f32.mrb[0].mxu0
        %v5530 = vpop.f32.mrb[0].mxu0
        %v5531 = vadd.f32 %v4174, %v5530
        %v5532 = vpop.f32.mrb[0].mxu0
        %5533 = vmatprep.mubr.bf16.mxu0 0
        %5534 = vmatmul.mubr.bf16.gmra.mrb[0].mxu0 %v4538
        %v5535 = vpop.f32.mrb[0].mxu0
        %v5536 = vadd.f32 %v4174, %v5535
        %v5537 = vpop.f32.mrb[0].mxu0
        %v5538 = vpop.f32.mrb[0].mxu0
        %v5539 = vadd.f32 %v4174, %v5538
        %v5540 = vpop.f32.mrb[0].mxu0
        %5541 = vmatprep.mubr.bf16.mxu0 0
        %5542 = vmatmul.mubr.bf16.gmra.mrb[0].mxu0 %v4541
        %v5543 = vpop.f32.mrb[0].mxu0
        %v5544 = vadd.f32 %v4174, %v5543
        %v5545 = vpop.f32.mrb[0].mxu0
        %v5546 = vpop.f32.mrb[0].mxu0
        %v5547 = vadd.f32 %v4174, %v5546
        %v5548 = vpop.f32.mrb[0].mxu0
        %5549 = vmatprep.mubr.bf16.mxu0 0
        %5550 = vmatmul.mubr.bf16.gmra.mrb[0].mxu0 %v4544
        %v5551 = vpop.f32.mrb[0].mxu0
        %v5552 = vadd.f32 %v4174, %v5551
        %v5553 = vpop.f32.mrb[0].mxu0
        %v5554 = vpop.f32.mrb[0].mxu0
        %v5555 = vadd.f32 %v4174, %v5554
        %v5556 = vpop.f32.mrb[0].mxu0
        %5557 = vmatprep.mubr.bf16.mxu0 0
        %5558 = vmatmul.mubr.bf16.gmra.mrb[0].mxu0 %v4547
        %v5559 = vpop.f32.mrb[0].mxu0
        %v5560 = vadd.f32 %v4174, %v5559
        %v5561 = vpop.f32.mrb[0].mxu0
        %v5562 = vpop.f32.mrb[0].mxu0
        %v5563 = vadd.f32 %v4174, %v5562
        %v5564 = vpop.f32.mrb[0].mxu0
        %5565 = vmatprep.mubr.bf16.mxu0 0
        %5566 = vmatmul.mubr.bf16.gmra.mrb[0].mxu0 %v4550
        %v5567 = vpop.f32.mrb[0].mxu0
        %v5568 = vadd.f32 %v4174, %v5567
        %v5569 = vpop.f32.mrb[0].mxu0
        %v5570 = vpop.f32.mrb[0].mxu0
        %v5571 = vadd.f32 %v4174, %v5570
        %v5572 = vpop.f32.mrb[0].mxu0
        %5573 = vmatprep.mubr.bf16.mxu0 0
        %5574 = vmatmul.mubr.bf16.gmra.mrb[0].mxu0 %v4553
        %v5575 = vpop.f32.mrb[0].mxu0
        %v5576 = vadd.f32 %v4174, %v5575
        %v5577 = vpop.f32.mrb[0].mxu0
        %v5578 = vpop.f32.mrb[0].mxu0
        %v5579 = vadd.f32 %v4174, %v5578
        %v5580 = vpop.f32.mrb[0].mxu0
        %5581 = vmatprep.mubr.bf16.mxu0 0
        %5582 = vmatmul.mubr.bf16.gmra.mrb[0].mxu0 %v4556
        %v5583 = vpop.f32.mrb[0].mxu0
        %v5584 = vadd.f32 %v4174, %v5583
        %v5585 = vpop.f32.mrb[0].mxu0
        %v5586 = vpop.f32.mrb[0].mxu0
        %v5587 = vadd.f32 %v4174, %v5586
        %v5588 = vpop.f32.mrb[0].mxu0
        %5589 = vmatprep.mubr.bf16.mxu0 0
        %5590 = vmatmul.mubr.bf16.gmra.mrb[0].mxu0 %v4559
        %v5591 = vpop.f32.mrb[0].mxu0
        %v5592 = vadd.f32 %v4174, %v5591
        %v5593 = vpop.f32.mrb[0].mxu0
        %v5594 = vpop.f32.mrb[0].mxu0
        %v5595 = vadd.f32 %v4174, %v5594
        %v5596 = vpop.f32.mrb[0].mxu0
        %5597 = vmatprep.mubr.bf16.mxu0 0
        %5598 = vmatmul.mubr.bf16.gmra.mrb[0].mxu0 %v4562
        %v5599 = vpop.f32.mrb[0].mxu0
        %v5600 = vadd.f32 %v4174, %v5599
        %v5601 = vpop.f32.mrb[0].mxu0
        %v5602 = vpop.f32.mrb[0].mxu0
        %v5603 = vadd.f32 %v4174, %v5602
        %v5604 = vpop.f32.mrb[0].mxu0
        %5605 = vmatprep.mubr.bf16.mxu0 0
        %5606 = vmatmul.mubr.bf16.gmra.mrb[0].mxu0 %v4565
        %v5607 = vpop.f32.mrb[0].mxu0
        %v5608 = vadd.f32 %v4174, %v5607
        %v5609 = vpop.f32.mrb[0].mxu0
        %v5610 = vpop.f32.mrb[0].mxu0
        %v5611 = vadd.f32 %v4174, %v5610
        %v5612 = vpop.f32.mrb[0].mxu0
        %5613 = vmatprep.mubr.bf16.mxu0 0
        %5614 = vmatmul.mubr.bf16.gmra.mrb[0].mxu0 %v4568
        %v5615 = vpop.f32.mrb[0].mxu0
        %v5616 = vadd.f32 %v4174, %v5615
        %v5617 = vpop.f32.mrb[0].mxu0
        %v5618 = vpop.f32.mrb[0].mxu0
        %v5619 = vadd.f32 %v4174, %v5618
        %v5620 = vpop.f32.mrb[0].mxu0
        %5621 = vmatprep.mubr.bf16.mxu0 0
        %5622 = vmatmul.mubr.bf16.gmra.mrb[0].mxu0 %v4571
        %v5623 = vpop.f32.mrb[0].mxu0
        %v5624 = vadd.f32 %v4174, %v5623
        %v5625 = vpop.f32.mrb[0].mxu0
        %v5626 = vpop.f32.mrb[0].mxu0
        %v5627 = vadd.f32 %v4174, %v5626
        %v5628 = vpop.f32.mrb[0].mxu0
        %5629 = vdwg.mxu0
        %v5630 = vmax.f32 %v4608, 0.0
        %v5631 = vmax.f32 %v4611, 0.0
        %v5632 = vmax.f32 %v4616, 0.0
        %v5633 = vmax.f32 %v4619, 0.0
        %v5634 = vmax.f32 %v4624, 0.0
        %v5635 = vmax.f32 %v4627, 0.0
        %v5636 = vmax.f32 %v4632, 0.0
        %v5637 = vmax.f32 %v4635, 0.0
        %v5638 = vmax.f32 %v4640, 0.0
        %v5639 = vmax.f32 %v4643, 0.0
        %v5640 = vmax.f32 %v4648, 0.0
        %v5641 = vmax.f32 %v4651, 0.0
        %v5642 = vmax.f32 %v4656, 0.0
        %v5643 = vmax.f32 %v4659, 0.0
        %v5644 = vmax.f32 %v4664, 0.0
        %v5645 = vmax.f32 %v4667, 0.0
        %v5646 = vmax.f32 %v4672, 0.0
        %v5647 = vmax.f32 %v4675, 0.0
        %v5648 = vmax.f32 %v4680, 0.0
        %v5649 = vmax.f32 %v4683, 0.0
        %v5650 = vmax.f32 %v4688, 0.0
        %v5651 = vmax.f32 %v4691, 0.0
        %v5652 = vmax.f32 %v4696, 0.0
        %v5653 = vmax.f32 %v4699, 0.0
        %v5654 = vmax.f32 %v4704, 0.0
        %v5655 = vmax.f32 %v4707, 0.0
        %v5656 = vmax.f32 %v4712, 0.0
        %v5657 = vmax.f32 %v4715, 0.0
        %v5658 = vmax.f32 %v4720, 0.0
        %v5659 = vmax.f32 %v4723, 0.0
        %v5660 = vmax.f32 %v4728, 0.0
        %v5661 = vmax.f32 %v4731, 0.0
        %v5662 = vmax.f32 %v4736, 0.0
        %v5663 = vmax.f32 %v4739, 0.0
        %v5664 = vmax.f32 %v4744, 0.0
        %v5665 = vmax.f32 %v4747, 0.0
        %v5666 = vmax.f32 %v4752, 0.0
        %v5667 = vmax.f32 %v4755, 0.0
        %v5668 = vmax.f32 %v4760, 0.0
        %v5669 = vmax.f32 %v4763, 0.0
        %v5670 = vmax.f32 %v4768, 0.0
        %v5671 = vmax.f32 %v4771, 0.0
        %v5672 = vmax.f32 %v4776, 0.0
        %v5673 = vmax.f32 %v4779, 0.0
        %v5674 = vmax.f32 %v4784, 0.0
        %v5675 = vmax.f32 %v4787, 0.0
        %v5676 = vmax.f32 %v4792, 0.0
        %v5677 = vmax.f32 %v4795, 0.0
        %v5678 = vmax.f32 %v4800, 0.0
        %v5679 = vmax.f32 %v4803, 0.0
        %v5680 = vmax.f32 %v4808, 0.0
        %v5681 = vmax.f32 %v4811, 0.0
        %v5682 = vmax.f32 %v4816, 0.0
        %v5683 = vmax.f32 %v4819, 0.0
        %v5684 = vmax.f32 %v4824, 0.0
        %v5685 = vmax.f32 %v4827, 0.0
        %v5686 = vmax.f32 %v4832, 0.0
        %v5687 = vmax.f32 %v4835, 0.0
        %v5688 = vmax.f32 %v4840, 0.0
        %v5689 = vmax.f32 %v4843, 0.0
        %v5690 = vmax.f32 %v4848, 0.0
        %v5691 = vmax.f32 %v4851, 0.0
        %v5692 = vmax.f32 %v4856, 0.0
        %v5693 = vmax.f32 %v4859, 0.0
        %v5694 = vmax.f32 %v4864, 0.0
        %v5695 = vmax.f32 %v4867, 0.0
        %v5696 = vmax.f32 %v4872, 0.0
        %v5697 = vmax.f32 %v4875, 0.0
        %v5698 = vmax.f32 %v4880, 0.0
        %v5699 = vmax.f32 %v4883, 0.0
        %v5700 = vmax.f32 %v4888, 0.0
        %v5701 = vmax.f32 %v4891, 0.0
        %v5702 = vmax.f32 %v4896, 0.0
        %v5703 = vmax.f32 %v4899, 0.0
        %v5704 = vmax.f32 %v4904, 0.0
        %v5705 = vmax.f32 %v4907, 0.0
        %v5706 = vmax.f32 %v4912, 0.0
        %v5707 = vmax.f32 %v4915, 0.0
        %v5708 = vmax.f32 %v4920, 0.0
        %v5709 = vmax.f32 %v4923, 0.0
        %v5710 = vmax.f32 %v4928, 0.0
        %v5711 = vmax.f32 %v4931, 0.0
        %v5712 = vmax.f32 %v4936, 0.0
        %v5713 = vmax.f32 %v4939, 0.0
        %v5714 = vmax.f32 %v4944, 0.0
        %v5715 = vmax.f32 %v4947, 0.0
        %v5716 = vmax.f32 %v4952, 0.0
        %v5717 = vmax.f32 %v4955, 0.0
        %v5718 = vmax.f32 %v4960, 0.0
        %v5719 = vmax.f32 %v4963, 0.0
        %v5720 = vmax.f32 %v4968, 0.0
        %v5721 = vmax.f32 %v4971, 0.0
        %v5722 = vmax.f32 %v4976, 0.0
        %v5723 = vmax.f32 %v4979, 0.0
        %v5724 = vmax.f32 %v4984, 0.0
        %v5725 = vmax.f32 %v4987, 0.0
        %v5726 = vmax.f32 %v4992, 0.0
        %v5727 = vmax.f32 %v4995, 0.0
        %v5728 = vmax.f32 %v5000, 0.0
        %v5729 = vmax.f32 %v5003, 0.0
        %v5730 = vmax.f32 %v5008, 0.0
        %v5731 = vmax.f32 %v5011, 0.0
        %v5732 = vmax.f32 %v5016, 0.0
        %v5733 = vmax.f32 %v5019, 0.0
        %v5734 = vmax.f32 %v5024, 0.0
        %v5735 = vmax.f32 %v5027, 0.0
        %v5736 = vmax.f32 %v5032, 0.0
        %v5737 = vmax.f32 %v5035, 0.0
        %v5738 = vmax.f32 %v5040, 0.0
        %v5739 = vmax.f32 %v5043, 0.0
        %v5740 = vmax.f32 %v5048, 0.0
        %v5741 = vmax.f32 %v5051, 0.0
        %v5742 = vmax.f32 %v5056, 0.0
        %v5743 = vmax.f32 %v5059, 0.0
        %v5744 = vmax.f32 %v5064, 0.0
        %v5745 = vmax.f32 %v5067, 0.0
        %v5746 = vmax.f32 %v5072, 0.0
        %v5747 = vmax.f32 %v5075, 0.0
        %v5748 = vmax.f32 %v5080, 0.0
        %v5749 = vmax.f32 %v5083, 0.0
        %v5750 = vmax.f32 %v5088, 0.0
        %v5751 = vmax.f32 %v5091, 0.0
        %v5752 = vmax.f32 %v5096, 0.0
        %v5753 = vmax.f32 %v5099, 0.0
        %v5754 = vmax.f32 %v5104, 0.0
        %v5755 = vmax.f32 %v5107, 0.0
        %v5756 = vmax.f32 %v5112, 0.0
        %v5757 = vmax.f32 %v5115, 0.0
        %v5758 = vmax.f32 %v5120, 0.0
        %v5759 = vmax.f32 %v5123, 0.0
        %v5760 = vmax.f32 %v5128, 0.0
        %v5761 = vmax.f32 %v5131, 0.0
        %v5762 = vmax.f32 %v5136, 0.0
        %v5763 = vmax.f32 %v5139, 0.0
        %v5764 = vmax.f32 %v5144, 0.0
        %v5765 = vmax.f32 %v5147, 0.0
        %v5766 = vmax.f32 %v5152, 0.0
        %v5767 = vmax.f32 %v5155, 0.0
        %v5768 = vmax.f32 %v5160, 0.0
        %v5769 = vmax.f32 %v5163, 0.0
        %v5770 = vmax.f32 %v5168, 0.0
        %v5771 = vmax.f32 %v5171, 0.0
        %v5772 = vmax.f32 %v5176, 0.0
        %v5773 = vmax.f32 %v5179, 0.0
        %v5774 = vmax.f32 %v5184, 0.0
        %v5775 = vmax.f32 %v5187, 0.0
        %v5776 = vmax.f32 %v5192, 0.0
        %v5777 = vmax.f32 %v5195, 0.0
        %v5778 = vmax.f32 %v5200, 0.0
        %v5779 = vmax.f32 %v5203, 0.0
        %v5780 = vmax.f32 %v5208, 0.0
        %v5781 = vmax.f32 %v5211, 0.0
        %v5782 = vmax.f32 %v5216, 0.0
        %v5783 = vmax.f32 %v5219, 0.0
        %v5784 = vmax.f32 %v5224, 0.0
        %v5785 = vmax.f32 %v5227, 0.0
        %v5786 = vmax.f32 %v5232, 0.0
        %v5787 = vmax.f32 %v5235, 0.0
        %v5788 = vmax.f32 %v5240, 0.0
        %v5789 = vmax.f32 %v5243, 0.0
        %v5790 = vmax.f32 %v5248, 0.0
        %v5791 = vmax.f32 %v5251, 0.0
        %v5792 = vmax.f32 %v5256, 0.0
        %v5793 = vmax.f32 %v5259, 0.0
        %v5794 = vmax.f32 %v5264, 0.0
        %v5795 = vmax.f32 %v5267, 0.0
        %v5796 = vmax.f32 %v5272, 0.0
        %v5797 = vmax.f32 %v5275, 0.0
        %v5798 = vmax.f32 %v5280, 0.0
        %v5799 = vmax.f32 %v5283, 0.0
        %v5800 = vmax.f32 %v5288, 0.0
        %v5801 = vmax.f32 %v5291, 0.0
        %v5802 = vmax.f32 %v5296, 0.0
        %v5803 = vmax.f32 %v5299, 0.0
        %v5804 = vmax.f32 %v5304, 0.0
        %v5805 = vmax.f32 %v5307, 0.0
        %v5806 = vmax.f32 %v5312, 0.0
        %v5807 = vmax.f32 %v5315, 0.0
        %v5808 = vmax.f32 %v5320, 0.0
        %v5809 = vmax.f32 %v5323, 0.0
        %v5810 = vmax.f32 %v5328, 0.0
        %v5811 = vmax.f32 %v5331, 0.0
        %v5812 = vmax.f32 %v5336, 0.0
        %v5813 = vmax.f32 %v5339, 0.0
        %v5814 = vmax.f32 %v5344, 0.0
        %v5815 = vmax.f32 %v5347, 0.0
        %v5816 = vmax.f32 %v5352, 0.0
        %v5817 = vmax.f32 %v5355, 0.0
        %v5818 = vmax.f32 %v5360, 0.0
        %v5819 = vmax.f32 %v5363, 0.0
        %v5820 = vmax.f32 %v5368, 0.0
        %v5821 = vmax.f32 %v5371, 0.0
        %v5822 = vmax.f32 %v5376, 0.0
        %v5823 = vmax.f32 %v5379, 0.0
        %v5824 = vmax.f32 %v5384, 0.0
        %v5825 = vmax.f32 %v5387, 0.0
        %v5826 = vmax.f32 %v5392, 0.0
        %v5827 = vmax.f32 %v5395, 0.0
        %v5828 = vmax.f32 %v5400, 0.0
        %v5829 = vmax.f32 %v5403, 0.0
        %v5830 = vmax.f32 %v5408, 0.0
        %v5831 = vmax.f32 %v5411, 0.0
        %v5832 = vmax.f32 %v5416, 0.0
        %v5833 = vmax.f32 %v5419, 0.0
        %v5834 = vmax.f32 %v5424, 0.0
        %v5835 = vmax.f32 %v5427, 0.0
        %v5836 = vmax.f32 %v5432, 0.0
        %v5837 = vmax.f32 %v5435, 0.0
        %v5838 = vmax.f32 %v5440, 0.0
        %v5839 = vmax.f32 %v5443, 0.0
        %v5840 = vmax.f32 %v5448, 0.0
        %v5841 = vmax.f32 %v5451, 0.0
        %v5842 = vmax.f32 %v5456, 0.0
        %v5843 = vmax.f32 %v5459, 0.0
        %v5844 = vmax.f32 %v5464, 0.0
        %v5845 = vmax.f32 %v5467, 0.0
        %v5846 = vmax.f32 %v5472, 0.0
        %v5847 = vmax.f32 %v5475, 0.0
        %v5848 = vmax.f32 %v5480, 0.0
        %v5849 = vmax.f32 %v5483, 0.0
        %v5850 = vmax.f32 %v5488, 0.0
        %v5851 = vmax.f32 %v5491, 0.0
        %v5852 = vmax.f32 %v5496, 0.0
        %v5853 = vmax.f32 %v5499, 0.0
        %v5854 = vmax.f32 %v5504, 0.0
        %v5855 = vmax.f32 %v5507, 0.0
        %v5856 = vmax.f32 %v5512, 0.0
        %v5857 = vmax.f32 %v5515, 0.0
        %v5858 = vmax.f32 %v5520, 0.0
        %v5859 = vmax.f32 %v5523, 0.0
        %v5860 = vmax.f32 %v5528, 0.0
        %v5861 = vmax.f32 %v5531, 0.0
        %v5862 = vmax.f32 %v5536, 0.0
        %v5863 = vmax.f32 %v5539, 0.0
        %v5864 = vmax.f32 %v5544, 0.0
        %v5865 = vmax.f32 %v5547, 0.0
        %v5866 = vmax.f32 %v5552, 0.0
        %v5867 = vmax.f32 %v5555, 0.0
        %v5868 = vmax.f32 %v5560, 0.0
        %v5869 = vmax.f32 %v5563, 0.0
        %v5870 = vmax.f32 %v5568, 0.0
        %v5871 = vmax.f32 %v5571, 0.0
        %v5872 = vmax.f32 %v5576, 0.0
        %v5873 = vmax.f32 %v5579, 0.0
        %v5874 = vmax.f32 %v5584, 0.0
        %v5875 = vmax.f32 %v5587, 0.0
        %v5876 = vmax.f32 %v5592, 0.0
        %v5877 = vmax.f32 %v5595, 0.0
        %v5878 = vmax.f32 %v5600, 0.0
        %v5879 = vmax.f32 %v5603, 0.0
        %v5880 = vmax.f32 %v5608, 0.0
        %v5881 = vmax.f32 %v5611, 0.0
        %v5882 = vmax.f32 %v5616, 0.0
        %v5883 = vmax.f32 %v5619, 0.0
        %v5884 = vmax.f32 %v5624, 0.0
        %v5885 = vmax.f32 %v5627, 0.0
        %v5886 = vpack.c.bf16 %v5631, %v5630
        %v5887 = vpack.c.bf16 %v5633, %v5632
        %v5888 = vpack.c.bf16 %v5635, %v5634
        %v5889 = vpack.c.bf16 %v5637, %v5636
        %v5890 = vpack.c.bf16 %v5639, %v5638
        %v5891 = vpack.c.bf16 %v5641, %v5640
        %v5892 = vpack.c.bf16 %v5643, %v5642
        %v5893 = vpack.c.bf16 %v5645, %v5644
        %v5894 = vpack.c.bf16 %v5647, %v5646
        %v5895 = vpack.c.bf16 %v5649, %v5648
        %v5896 = vpack.c.bf16 %v5651, %v5650
        %v5897 = vpack.c.bf16 %v5653, %v5652
        %v5898 = vpack.c.bf16 %v5655, %v5654
        %v5899 = vpack.c.bf16 %v5657, %v5656
        %v5900 = vpack.c.bf16 %v5659, %v5658
        %v5901 = vpack.c.bf16 %v5661, %v5660
        %v5902 = vpack.c.bf16 %v5663, %v5662
        %v5903 = vpack.c.bf16 %v5665, %v5664
        %v5904 = vpack.c.bf16 %v5667, %v5666
        %v5905 = vpack.c.bf16 %v5669, %v5668
        %v5906 = vpack.c.bf16 %v5671, %v5670
        %v5907 = vpack.c.bf16 %v5673, %v5672
        %v5908 = vpack.c.bf16 %v5675, %v5674
        %v5909 = vpack.c.bf16 %v5677, %v5676
        %v5910 = vpack.c.bf16 %v5679, %v5678
        %v5911 = vpack.c.bf16 %v5681, %v5680
        %v5912 = vpack.c.bf16 %v5683, %v5682
        %v5913 = vpack.c.bf16 %v5685, %v5684
        %v5914 = vpack.c.bf16 %v5687, %v5686
        %v5915 = vpack.c.bf16 %v5689, %v5688
        %v5916 = vpack.c.bf16 %v5691, %v5690
        %v5917 = vpack.c.bf16 %v5693, %v5692
        %v5918 = vpack.c.bf16 %v5695, %v5694
        %v5919 = vpack.c.bf16 %v5697, %v5696
        %v5920 = vpack.c.bf16 %v5699, %v5698
        %v5921 = vpack.c.bf16 %v5701, %v5700
        %v5922 = vpack.c.bf16 %v5703, %v5702
        %v5923 = vpack.c.bf16 %v5705, %v5704
        %v5924 = vpack.c.bf16 %v5707, %v5706
        %v5925 = vpack.c.bf16 %v5709, %v5708
        %v5926 = vpack.c.bf16 %v5711, %v5710
        %v5927 = vpack.c.bf16 %v5713, %v5712
        %v5928 = vpack.c.bf16 %v5715, %v5714
        %v5929 = vpack.c.bf16 %v5717, %v5716
        %v5930 = vpack.c.bf16 %v5719, %v5718
        %v5931 = vpack.c.bf16 %v5721, %v5720
        %v5932 = vpack.c.bf16 %v5723, %v5722
        %v5933 = vpack.c.bf16 %v5725, %v5724
        %v5934 = vpack.c.bf16 %v5727, %v5726
        %v5935 = vpack.c.bf16 %v5729, %v5728
        %v5936 = vpack.c.bf16 %v5731, %v5730
        %v5937 = vpack.c.bf16 %v5733, %v5732
        %v5938 = vpack.c.bf16 %v5735, %v5734
        %v5939 = vpack.c.bf16 %v5737, %v5736
        %v5940 = vpack.c.bf16 %v5739, %v5738
        %v5941 = vpack.c.bf16 %v5741, %v5740
        %v5942 = vpack.c.bf16 %v5743, %v5742
        %v5943 = vpack.c.bf16 %v5745, %v5744
        %v5944 = vpack.c.bf16 %v5747, %v5746
        %v5945 = vpack.c.bf16 %v5749, %v5748
        %v5946 = vpack.c.bf16 %v5751, %v5750
        %v5947 = vpack.c.bf16 %v5753, %v5752
        %v5948 = vpack.c.bf16 %v5755, %v5754
        %v5949 = vpack.c.bf16 %v5757, %v5756
        %v5950 = vpack.c.bf16 %v5759, %v5758
        %v5951 = vpack.c.bf16 %v5761, %v5760
        %v5952 = vpack.c.bf16 %v5763, %v5762
        %v5953 = vpack.c.bf16 %v5765, %v5764
        %v5954 = vpack.c.bf16 %v5767, %v5766
        %v5955 = vpack.c.bf16 %v5769, %v5768
        %v5956 = vpack.c.bf16 %v5771, %v5770
        %v5957 = vpack.c.bf16 %v5773, %v5772
        %v5958 = vpack.c.bf16 %v5775, %v5774
        %v5959 = vpack.c.bf16 %v5777, %v5776
        %v5960 = vpack.c.bf16 %v5779, %v5778
        %v5961 = vpack.c.bf16 %v5781, %v5780
        %v5962 = vpack.c.bf16 %v5783, %v5782
        %v5963 = vpack.c.bf16 %v5785, %v5784
        %v5964 = vpack.c.bf16 %v5787, %v5786
        %v5965 = vpack.c.bf16 %v5789, %v5788
        %v5966 = vpack.c.bf16 %v5791, %v5790
        %v5967 = vpack.c.bf16 %v5793, %v5792
        %v5968 = vpack.c.bf16 %v5795, %v5794
        %v5969 = vpack.c.bf16 %v5797, %v5796
        %v5970 = vpack.c.bf16 %v5799, %v5798
        %v5971 = vpack.c.bf16 %v5801, %v5800
        %v5972 = vpack.c.bf16 %v5803, %v5802
        %v5973 = vpack.c.bf16 %v5805, %v5804
        %v5974 = vpack.c.bf16 %v5807, %v5806
        %v5975 = vpack.c.bf16 %v5809, %v5808
        %v5976 = vpack.c.bf16 %v5811, %v5810
        %v5977 = vpack.c.bf16 %v5813, %v5812
        %v5978 = vpack.c.bf16 %v5815, %v5814
        %v5979 = vpack.c.bf16 %v5817, %v5816
        %v5980 = vpack.c.bf16 %v5819, %v5818
        %v5981 = vpack.c.bf16 %v5821, %v5820
        %v5982 = vpack.c.bf16 %v5823, %v5822
        %v5983 = vpack.c.bf16 %v5825, %v5824
        %v5984 = vpack.c.bf16 %v5827, %v5826
        %v5985 = vpack.c.bf16 %v5829, %v5828
        %v5986 = vpack.c.bf16 %v5831, %v5830
        %v5987 = vpack.c.bf16 %v5833, %v5832
        %v5988 = vpack.c.bf16 %v5835, %v5834
        %v5989 = vpack.c.bf16 %v5837, %v5836
        %v5990 = vpack.c.bf16 %v5839, %v5838
        %v5991 = vpack.c.bf16 %v5841, %v5840
        %v5992 = vpack.c.bf16 %v5843, %v5842
        %v5993 = vpack.c.bf16 %v5845, %v5844
        %v5994 = vpack.c.bf16 %v5847, %v5846
        %v5995 = vpack.c.bf16 %v5849, %v5848
        %v5996 = vpack.c.bf16 %v5851, %v5850
        %v5997 = vpack.c.bf16 %v5853, %v5852
        %v5998 = vpack.c.bf16 %v5855, %v5854
        %v5999 = vpack.c.bf16 %v5857, %v5856
        %v6000 = vpack.c.bf16 %v5859, %v5858
        %v6001 = vpack.c.bf16 %v5861, %v5860
        %v6002 = vpack.c.bf16 %v5863, %v5862
        %v6003 = vpack.c.bf16 %v5865, %v5864
        %v6004 = vpack.c.bf16 %v5867, %v5866
        %v6005 = vpack.c.bf16 %v5869, %v5868
        %v6006 = vpack.c.bf16 %v5871, %v5870
        %v6007 = vpack.c.bf16 %v5873, %v5872
        %v6008 = vpack.c.bf16 %v5875, %v5874
        %v6009 = vpack.c.bf16 %v5877, %v5876
        %v6010 = vpack.c.bf16 %v5879, %v5878
        %v6011 = vpack.c.bf16 %v5881, %v5880
        %v6012 = vpack.c.bf16 %v5883, %v5882
        %v6013 = vpack.c.bf16 %v5885, %v5884
        %v6014 = vld [vmem:[%s6] sm:$0xf]
        %v6015 = vld [vmem:[%s6 + $0x4] sm:$0xf]
        %v6016 = vld [vmem:[%s6 + $0x8] sm:$0xf]
        %v6017 = vld [vmem:[%s6 + $0xc] sm:$0xf]
        %v6018 = vld [vmem:[%s7] sm:$0x1]
        %v6020 = vlaneseq
        %v6021 = vshrl.u32 %v6020, 7
        %v6022 = vsub.s32 0, %v6021
        %v6023 = vrot.slane %v6018, %v6022
        %v6029 = vunpack.c.l.b16 %v6014
        %v6030 = vunpack.c.l.b16 %v6015
        %v6031 = vunpack.c.l.b16 %v6016
        %v6032 = vunpack.c.l.b16 %v6017
        %v6033 = vpack.c.b16 %v6030, %v6029
        %v6034 = vpack.c.b16 %v6032, %v6031
        %v6038 = vsel %vm4188, %v5886, 0
        %v6041 = vsel %vm4188, %v5887, 0
        %v6044 = vsel %vm4188, %v5888, 0
        %v6047 = vsel %vm4188, %v5889, 0
        %v6050 = vsel %vm4188, %v5890, 0
        %v6053 = vsel %vm4188, %v5891, 0
        %v6056 = vsel %vm4188, %v5892, 0
        %v6059 = vsel %vm4188, %v5893, 0
        %v6062 = vsel %vm4188, %v5894, 0
        %v6065 = vsel %vm4188, %v5895, 0
        %v6068 = vsel %vm4188, %v5896, 0
        %v6071 = vsel %vm4188, %v5897, 0
        %v6074 = vsel %vm4188, %v5898, 0
        %v6077 = vsel %vm4188, %v5899, 0
        %v6080 = vsel %vm4188, %v5900, 0
        %v6083 = vsel %vm4188, %v5901, 0
        %v6086 = vsel %vm4188, %v5902, 0
        %v6089 = vsel %vm4188, %v5903, 0
        %v6092 = vsel %vm4188, %v5904, 0
        %v6095 = vsel %vm4188, %v5905, 0
        %v6098 = vsel %vm4188, %v5906, 0
        %v6101 = vsel %vm4188, %v5907, 0
        %v6104 = vsel %vm4188, %v5908, 0
        %v6107 = vsel %vm4188, %v5909, 0
        %v6110 = vsel %vm4188, %v5910, 0
        %v6113 = vsel %vm4188, %v5911, 0
        %v6116 = vsel %vm4188, %v5912, 0
        %v6119 = vsel %vm4188, %v5913, 0
        %v6122 = vsel %vm4188, %v5914, 0
        %v6125 = vsel %vm4188, %v5915, 0
        %v6128 = vsel %vm4188, %v5916, 0
        %v6131 = vsel %vm4188, %v5917, 0
        %v6134 = vsel %vm4188, %v5918, 0
        %v6137 = vsel %vm4188, %v5919, 0
        %v6140 = vsel %vm4188, %v5920, 0
        %v6143 = vsel %vm4188, %v5921, 0
        %v6146 = vsel %vm4188, %v5922, 0
        %v6149 = vsel %vm4188, %v5923, 0
        %v6152 = vsel %vm4188, %v5924, 0
        %v6155 = vsel %vm4188, %v5925, 0
        %v6158 = vsel %vm4188, %v5926, 0
        %v6161 = vsel %vm4188, %v5927, 0
        %v6164 = vsel %vm4188, %v5928, 0
        %v6167 = vsel %vm4188, %v5929, 0
        %v6170 = vsel %vm4188, %v5930, 0
        %v6173 = vsel %vm4188, %v5931, 0
        %v6176 = vsel %vm4188, %v5932, 0
        %v6179 = vsel %vm4188, %v5933, 0
        %v6182 = vsel %vm4188, %v5934, 0
        %v6185 = vsel %vm4188, %v5935, 0
        %v6188 = vsel %vm4188, %v5936, 0
        %v6191 = vsel %vm4188, %v5937, 0
        %v6194 = vsel %vm4188, %v5938, 0
        %v6197 = vsel %vm4188, %v5939, 0
        %v6200 = vsel %vm4188, %v5940, 0
        %v6203 = vsel %vm4188, %v5941, 0
        %v6206 = vsel %vm4188, %v5942, 0
        %v6209 = vsel %vm4188, %v5943, 0
        %v6212 = vsel %vm4188, %v5944, 0
        %v6215 = vsel %vm4188, %v5945, 0
        %v6218 = vsel %vm4188, %v5946, 0
        %v6221 = vsel %vm4188, %v5947, 0
        %v6224 = vsel %vm4188, %v5948, 0
        %v6227 = vsel %vm4188, %v5949, 0
        %v6230 = vsel %vm4188, %v5950, 0
        %v6233 = vsel %vm4188, %v5951, 0
        %v6236 = vsel %vm4188, %v5952, 0
        %v6239 = vsel %vm4188, %v5953, 0
        %v6242 = vsel %vm4188, %v5954, 0
        %v6245 = vsel %vm4188, %v5955, 0
        %v6248 = vsel %vm4188, %v5956, 0
        %v6251 = vsel %vm4188, %v5957, 0
        %v6254 = vsel %vm4188, %v5958, 0
        %v6257 = vsel %vm4188, %v5959, 0
        %v6260 = vsel %vm4188, %v5960, 0
        %v6263 = vsel %vm4188, %v5961, 0
        %v6266 = vsel %vm4188, %v5962, 0
        %v6269 = vsel %vm4188, %v5963, 0
        %v6272 = vsel %vm4188, %v5964, 0
        %v6275 = vsel %vm4188, %v5965, 0
        %v6278 = vsel %vm4188, %v5966, 0
        %v6281 = vsel %vm4188, %v5967, 0
        %v6284 = vsel %vm4188, %v5968, 0
        %v6287 = vsel %vm4188, %v5969, 0
        %v6290 = vsel %vm4188, %v5970, 0
        %v6293 = vsel %vm4188, %v5971, 0
        %v6296 = vsel %vm4188, %v5972, 0
        %v6299 = vsel %vm4188, %v5973, 0
        %v6302 = vsel %vm4188, %v5974, 0
        %v6305 = vsel %vm4188, %v5975, 0
        %v6308 = vsel %vm4188, %v5976, 0
        %v6311 = vsel %vm4188, %v5977, 0
        %v6314 = vsel %vm4188, %v5978, 0
        %v6317 = vsel %vm4188, %v5979, 0
        %v6320 = vsel %vm4188, %v5980, 0
        %v6323 = vsel %vm4188, %v5981, 0
        %v6326 = vsel %vm4188, %v5982, 0
        %v6329 = vsel %vm4188, %v5983, 0
        %v6332 = vsel %vm4188, %v5984, 0
        %v6335 = vsel %vm4188, %v5985, 0
        %v6338 = vsel %vm4188, %v5986, 0
        %v6341 = vsel %vm4188, %v5987, 0
        %v6344 = vsel %vm4188, %v5988, 0
        %v6347 = vsel %vm4188, %v5989, 0
        %v6350 = vsel %vm4188, %v5990, 0
        %v6353 = vsel %vm4188, %v5991, 0
        %v6356 = vsel %vm4188, %v5992, 0
        %v6359 = vsel %vm4188, %v5993, 0
        %v6362 = vsel %vm4188, %v5994, 0
        %v6365 = vsel %vm4188, %v5995, 0
        %v6368 = vsel %vm4188, %v5996, 0
        %v6371 = vsel %vm4188, %v5997, 0
        %v6374 = vsel %vm4188, %v5998, 0
        %v6377 = vsel %vm4188, %v5999, 0
        %v6380 = vsel %vm4188, %v6000, 0
        %v6383 = vsel %vm4188, %v6001, 0
        %v6386 = vsel %vm4188, %v6002, 0
        %v6389 = vsel %vm4188, %v6003, 0
        %v6392 = vsel %vm4188, %v6004, 0
        %v6395 = vsel %vm4188, %v6005, 0
        %v6398 = vsel %vm4188, %v6006, 0
        %v6401 = vsel %vm4188, %v6007, 0
        %v6404 = vsel %vm4188, %v6008, 0
        %v6407 = vsel %vm4188, %v6009, 0
        %v6410 = vsel %vm4188, %v6010, 0
        %v6413 = vsel %vm4188, %v6011, 0
        %v6416 = vsel %vm4188, %v6012, 0
        %v6419 = vsel %vm4188, %v6013, 0
        %6421 = vmatprep.subr.bf16.mxu0 0
        %6422 = vmatpush1.bf16.msra.mxu0 %v6033
        %6423 = vmatprep.subr.bf16.mxu0 0
        %6424 = vmatpush1.bf16.msra.mxu0 %v6034
        %6425 = vmatprep.subr.bf16.mxu0 0
        %6426 = vmatpush1.bf16.msra.mxu0 0
        %6427 = vmatprep.subr.bf16.mxu0 0
        %6428 = vmatpush1.bf16.msra.mxu0 0
        %6429 = vmatprep.subr.bf16.mxu0 0
        %6430 = vmatpush1.bf16.msra.mxu0 0
        %6431 = vmatprep.subr.bf16.mxu0 0
        %6432 = vmatpush1.bf16.msra.mxu0 0
        %6433 = vmatprep.subr.bf16.mxu0 0
        %6434 = vmatpush1.bf16.msra.mxu0 0
        %6435 = vmatprep.subr.bf16.mxu0 0
        %6436 = vmatpush1.bf16.msra.mxu0 0
        %6437 = vmatprep.subr.bf16.mxu0 0
        %6438 = vmatpush1.bf16.msra.mxu0 0
        %6439 = vmatprep.subr.bf16.mxu0 0
        %6440 = vmatpush1.bf16.msra.mxu0 0
        %6441 = vmatprep.subr.bf16.mxu0 0
        %6442 = vmatpush1.bf16.msra.mxu0 0
        %6443 = vmatprep.subr.bf16.mxu0 0
        %6444 = vmatpush1.bf16.msra.mxu0 0
        %6445 = vmatprep.subr.bf16.mxu0 0
        %6446 = vmatpush1.bf16.msra.mxu0 0
        %6447 = vmatprep.subr.bf16.mxu0 0
        %6448 = vmatpush1.bf16.msra.mxu0 0
        %6449 = vmatprep.subr.bf16.mxu0 0
        %6450 = vmatpush1.bf16.msra.mxu0 0
        %6451 = vmatprep.subr.bf16.mxu0 0
        %6452 = vmatpush1.bf16.msra.mxu0 0
        %6453 = vmatprep.mubr.bf16.mxu0 0
        %6454 = vmatmul.mubr.bf16.gmra.mrb[0].mxu0 %v6038
        %v6455 = vpop.f32.mrb[0].mxu0
        %v6456 = vadd.f32 %v6023, %v6455
        %v6457 = vpop.f32.mrb[0].mxu0
        %v6458 = vpop.f32.mrb[0].mxu0
        %v6459 = vadd.f32 %v6023, %v6458
        %v6460 = vpop.f32.mrb[0].mxu0
        %6461 = vmatprep.mubr.bf16.mxu0 0
        %6462 = vmatmul.mubr.bf16.gmra.mrb[0].mxu0 %v6041
        %v6463 = vpop.f32.mrb[0].mxu0
        %v6464 = vadd.f32 %v6023, %v6463
        %v6465 = vpop.f32.mrb[0].mxu0
        %v6466 = vpop.f32.mrb[0].mxu0
        %v6467 = vadd.f32 %v6023, %v6466
        %v6468 = vpop.f32.mrb[0].mxu0
        %6469 = vmatprep.mubr.bf16.mxu0 0
        %6470 = vmatmul.mubr.bf16.gmra.mrb[0].mxu0 %v6044
        %v6471 = vpop.f32.mrb[0].mxu0
        %v6472 = vadd.f32 %v6023, %v6471
        %v6473 = vpop.f32.mrb[0].mxu0
        %v6474 = vpop.f32.mrb[0].mxu0
        %v6475 = vadd.f32 %v6023, %v6474
        %v6476 = vpop.f32.mrb[0].mxu0
        %6477 = vmatprep.mubr.bf16.mxu0 0
        %6478 = vmatmul.mubr.bf16.gmra.mrb[0].mxu0 %v6047
        %v6479 = vpop.f32.mrb[0].mxu0
        %v6480 = vadd.f32 %v6023, %v6479
        %v6481 = vpop.f32.mrb[0].mxu0
        %v6482 = vpop.f32.mrb[0].mxu0
        %v6483 = vadd.f32 %v6023, %v6482
        %v6484 = vpop.f32.mrb[0].mxu0
        %6485 = vmatprep.mubr.bf16.mxu0 0
        %6486 = vmatmul.mubr.bf16.gmra.mrb[0].mxu0 %v6050
        %v6487 = vpop.f32.mrb[0].mxu0
        %v6488 = vadd.f32 %v6023, %v6487
        %v6489 = vpop.f32.mrb[0].mxu0
        %v6490 = vpop.f32.mrb[0].mxu0
        %v6491 = vadd.f32 %v6023, %v6490
        %v6492 = vpop.f32.mrb[0].mxu0
        %6493 = vmatprep.mubr.bf16.mxu0 0
        %6494 = vmatmul.mubr.bf16.gmra.mrb[0].mxu0 %v6053
        %v6495 = vpop.f32.mrb[0].mxu0
        %v6496 = vadd.f32 %v6023, %v6495
        %v6497 = vpop.f32.mrb[0].mxu0
        %v6498 = vpop.f32.mrb[0].mxu0
        %v6499 = vadd.f32 %v6023, %v6498
        %v6500 = vpop.f32.mrb[0].mxu0
        %6501 = vmatprep.mubr.bf16.mxu0 0
        %6502 = vmatmul.mubr.bf16.gmra.mrb[0].mxu0 %v6056
        %v6503 = vpop.f32.mrb[0].mxu0
        %v6504 = vadd.f32 %v6023, %v6503
        %v6505 = vpop.f32.mrb[0].mxu0
        %v6506 = vpop.f32.mrb[0].mxu0
        %v6507 = vadd.f32 %v6023, %v6506
        %v6508 = vpop.f32.mrb[0].mxu0
        %6509 = vmatprep.mubr.bf16.mxu0 0
        %6510 = vmatmul.mubr.bf16.gmra.mrb[0].mxu0 %v6059
        %v6511 = vpop.f32.mrb[0].mxu0
        %v6512 = vadd.f32 %v6023, %v6511
        %v6513 = vpop.f32.mrb[0].mxu0
        %v6514 = vpop.f32.mrb[0].mxu0
        %v6515 = vadd.f32 %v6023, %v6514
        %v6516 = vpop.f32.mrb[0].mxu0
        %6517 = vmatprep.mubr.bf16.mxu0 0
        %6518 = vmatmul.mubr.bf16.gmra.mrb[0].mxu0 %v6062
        %v6519 = vpop.f32.mrb[0].mxu0
        %v6520 = vadd.f32 %v6023, %v6519
        %v6521 = vpop.f32.mrb[0].mxu0
        %v6522 = vpop.f32.mrb[0].mxu0
        %v6523 = vadd.f32 %v6023, %v6522
        %v6524 = vpop.f32.mrb[0].mxu0
        %6525 = vmatprep.mubr.bf16.mxu0 0
        %6526 = vmatmul.mubr.bf16.gmra.mrb[0].mxu0 %v6065
        %v6527 = vpop.f32.mrb[0].mxu0
        %v6528 = vadd.f32 %v6023, %v6527
        %v6529 = vpop.f32.mrb[0].mxu0
        %v6530 = vpop.f32.mrb[0].mxu0
        %v6531 = vadd.f32 %v6023, %v6530
        %v6532 = vpop.f32.mrb[0].mxu0
        %6533 = vmatprep.mubr.bf16.mxu0 0
        %6534 = vmatmul.mubr.bf16.gmra.mrb[0].mxu0 %v6068
        %v6535 = vpop.f32.mrb[0].mxu0
        %v6536 = vadd.f32 %v6023, %v6535
        %v6537 = vpop.f32.mrb[0].mxu0
        %v6538 = vpop.f32.mrb[0].mxu0
        %v6539 = vadd.f32 %v6023, %v6538
        %v6540 = vpop.f32.mrb[0].mxu0
        %6541 = vmatprep.mubr.bf16.mxu0 0
        %6542 = vmatmul.mubr.bf16.gmra.mrb[0].mxu0 %v6071
        %v6543 = vpop.f32.mrb[0].mxu0
        %v6544 = vadd.f32 %v6023, %v6543
        %v6545 = vpop.f32.mrb[0].mxu0
        %v6546 = vpop.f32.mrb[0].mxu0
        %v6547 = vadd.f32 %v6023, %v6546
        %v6548 = vpop.f32.mrb[0].mxu0
        %6549 = vmatprep.mubr.bf16.mxu0 0
        %6550 = vmatmul.mubr.bf16.gmra.mrb[0].mxu0 %v6074
        %v6551 = vpop.f32.mrb[0].mxu0
        %v6552 = vadd.f32 %v6023, %v6551
        %v6553 = vpop.f32.mrb[0].mxu0
        %v6554 = vpop.f32.mrb[0].mxu0
        %v6555 = vadd.f32 %v6023, %v6554
        %v6556 = vpop.f32.mrb[0].mxu0
        %6557 = vmatprep.mubr.bf16.mxu0 0
        %6558 = vmatmul.mubr.bf16.gmra.mrb[0].mxu0 %v6077
        %v6559 = vpop.f32.mrb[0].mxu0
        %v6560 = vadd.f32 %v6023, %v6559
        %v6561 = vpop.f32.mrb[0].mxu0
        %v6562 = vpop.f32.mrb[0].mxu0
        %v6563 = vadd.f32 %v6023, %v6562
        %v6564 = vpop.f32.mrb[0].mxu0
        %6565 = vmatprep.mubr.bf16.mxu0 0
        %6566 = vmatmul.mubr.bf16.gmra.mrb[0].mxu0 %v6080
        %v6567 = vpop.f32.mrb[0].mxu0
        %v6568 = vadd.f32 %v6023, %v6567
        %v6569 = vpop.f32.mrb[0].mxu0
        %v6570 = vpop.f32.mrb[0].mxu0
        %v6571 = vadd.f32 %v6023, %v6570
        %v6572 = vpop.f32.mrb[0].mxu0
        %6573 = vmatprep.mubr.bf16.mxu0 0
        %6574 = vmatmul.mubr.bf16.gmra.mrb[0].mxu0 %v6083
        %v6575 = vpop.f32.mrb[0].mxu0
        %v6576 = vadd.f32 %v6023, %v6575
        %v6577 = vpop.f32.mrb[0].mxu0
        %v6578 = vpop.f32.mrb[0].mxu0
        %v6579 = vadd.f32 %v6023, %v6578
        %v6580 = vpop.f32.mrb[0].mxu0
        %6581 = vmatprep.mubr.bf16.mxu0 0
        %6582 = vmatmul.mubr.bf16.gmra.mrb[0].mxu0 %v6086
        %v6583 = vpop.f32.mrb[0].mxu0
        %v6584 = vadd.f32 %v6023, %v6583
        %v6585 = vpop.f32.mrb[0].mxu0
        %v6586 = vpop.f32.mrb[0].mxu0
        %v6587 = vadd.f32 %v6023, %v6586
        %v6588 = vpop.f32.mrb[0].mxu0
        %6589 = vmatprep.mubr.bf16.mxu0 0
        %6590 = vmatmul.mubr.bf16.gmra.mrb[0].mxu0 %v6089
        %v6591 = vpop.f32.mrb[0].mxu0
        %v6592 = vadd.f32 %v6023, %v6591
        %v6593 = vpop.f32.mrb[0].mxu0
        %v6594 = vpop.f32.mrb[0].mxu0
        %v6595 = vadd.f32 %v6023, %v6594
        %v6596 = vpop.f32.mrb[0].mxu0
        %6597 = vmatprep.mubr.bf16.mxu0 0
        %6598 = vmatmul.mubr.bf16.gmra.mrb[0].mxu0 %v6092
        %v6599 = vpop.f32.mrb[0].mxu0
        %v6600 = vadd.f32 %v6023, %v6599
        %v6601 = vpop.f32.mrb[0].mxu0
        %v6602 = vpop.f32.mrb[0].mxu0
        %v6603 = vadd.f32 %v6023, %v6602
        %v6604 = vpop.f32.mrb[0].mxu0
        %6605 = vmatprep.mubr.bf16.mxu0 0
        %6606 = vmatmul.mubr.bf16.gmra.mrb[0].mxu0 %v6095
        %v6607 = vpop.f32.mrb[0].mxu0
        %v6608 = vadd.f32 %v6023, %v6607
        %v6609 = vpop.f32.mrb[0].mxu0
        %v6610 = vpop.f32.mrb[0].mxu0
        %v6611 = vadd.f32 %v6023, %v6610
        %v6612 = vpop.f32.mrb[0].mxu0
        %6613 = vmatprep.mubr.bf16.mxu0 0
        %6614 = vmatmul.mubr.bf16.gmra.mrb[0].mxu0 %v6098
        %v6615 = vpop.f32.mrb[0].mxu0
        %v6616 = vadd.f32 %v6023, %v6615
        %v6617 = vpop.f32.mrb[0].mxu0
        %v6618 = vpop.f32.mrb[0].mxu0
        %v6619 = vadd.f32 %v6023, %v6618
        %v6620 = vpop.f32.mrb[0].mxu0
        %6621 = vmatprep.mubr.bf16.mxu0 0
        %6622 = vmatmul.mubr.bf16.gmra.mrb[0].mxu0 %v6101
        %v6623 = vpop.f32.mrb[0].mxu0
        %v6624 = vadd.f32 %v6023, %v6623
        %v6625 = vpop.f32.mrb[0].mxu0
        %v6626 = vpop.f32.mrb[0].mxu0
        %v6627 = vadd.f32 %v6023, %v6626
        %v6628 = vpop.f32.mrb[0].mxu0
        %6629 = vmatprep.mubr.bf16.mxu0 0
        %6630 = vmatmul.mubr.bf16.gmra.mrb[0].mxu0 %v6104
        %v6631 = vpop.f32.mrb[0].mxu0
        %v6632 = vadd.f32 %v6023, %v6631
        %v6633 = vpop.f32.mrb[0].mxu0
        %v6634 = vpop.f32.mrb[0].mxu0
        %v6635 = vadd.f32 %v6023, %v6634
        %v6636 = vpop.f32.mrb[0].mxu0
        %6637 = vmatprep.mubr.bf16.mxu0 0
        %6638 = vmatmul.mubr.bf16.gmra.mrb[0].mxu0 %v6107
        %v6639 = vpop.f32.mrb[0].mxu0
        %v6640 = vadd.f32 %v6023, %v6639
        %v6641 = vpop.f32.mrb[0].mxu0
        %v6642 = vpop.f32.mrb[0].mxu0
        %v6643 = vadd.f32 %v6023, %v6642
        %v6644 = vpop.f32.mrb[0].mxu0
        %6645 = vmatprep.mubr.bf16.mxu0 0
        %6646 = vmatmul.mubr.bf16.gmra.mrb[0].mxu0 %v6110
        %v6647 = vpop.f32.mrb[0].mxu0
        %v6648 = vadd.f32 %v6023, %v6647
        %v6649 = vpop.f32.mrb[0].mxu0
        %v6650 = vpop.f32.mrb[0].mxu0
        %v6651 = vadd.f32 %v6023, %v6650
        %v6652 = vpop.f32.mrb[0].mxu0
        %6653 = vmatprep.mubr.bf16.mxu0 0
        %6654 = vmatmul.mubr.bf16.gmra.mrb[0].mxu0 %v6113
        %v6655 = vpop.f32.mrb[0].mxu0
        %v6656 = vadd.f32 %v6023, %v6655
        %v6657 = vpop.f32.mrb[0].mxu0
        %v6658 = vpop.f32.mrb[0].mxu0
        %v6659 = vadd.f32 %v6023, %v6658
        %v6660 = vpop.f32.mrb[0].mxu0
        %6661 = vmatprep.mubr.bf16.mxu0 0
        %6662 = vmatmul.mubr.bf16.gmra.mrb[0].mxu0 %v6116
        %v6663 = vpop.f32.mrb[0].mxu0
        %v6664 = vadd.f32 %v6023, %v6663
        %v6665 = vpop.f32.mrb[0].mxu0
        %v6666 = vpop.f32.mrb[0].mxu0
        %v6667 = vadd.f32 %v6023, %v6666
        %v6668 = vpop.f32.mrb[0].mxu0
        %6669 = vmatprep.mubr.bf16.mxu0 0
        %6670 = vmatmul.mubr.bf16.gmra.mrb[0].mxu0 %v6119
        %v6671 = vpop.f32.mrb[0].mxu0
        %v6672 = vadd.f32 %v6023, %v6671
        %v6673 = vpop.f32.mrb[0].mxu0
        %v6674 = vpop.f32.mrb[0].mxu0
        %v6675 = vadd.f32 %v6023, %v6674
        %v6676 = vpop.f32.mrb[0].mxu0
        %6677 = vmatprep.mubr.bf16.mxu0 0
        %6678 = vmatmul.mubr.bf16.gmra.mrb[0].mxu0 %v6122
        %v6679 = vpop.f32.mrb[0].mxu0
        %v6680 = vadd.f32 %v6023, %v6679
        %v6681 = vpop.f32.mrb[0].mxu0
        %v6682 = vpop.f32.mrb[0].mxu0
        %v6683 = vadd.f32 %v6023, %v6682
        %v6684 = vpop.f32.mrb[0].mxu0
        %6685 = vmatprep.mubr.bf16.mxu0 0
        %6686 = vmatmul.mubr.bf16.gmra.mrb[0].mxu0 %v6125
        %v6687 = vpop.f32.mrb[0].mxu0
        %v6688 = vadd.f32 %v6023, %v6687
        %v6689 = vpop.f32.mrb[0].mxu0
        %v6690 = vpop.f32.mrb[0].mxu0
        %v6691 = vadd.f32 %v6023, %v6690
        %v6692 = vpop.f32.mrb[0].mxu0
        %6693 = vmatprep.mubr.bf16.mxu0 0
        %6694 = vmatmul.mubr.bf16.gmra.mrb[0].mxu0 %v6128
        %v6695 = vpop.f32.mrb[0].mxu0
        %v6696 = vadd.f32 %v6023, %v6695
        %v6697 = vpop.f32.mrb[0].mxu0
        %v6698 = vpop.f32.mrb[0].mxu0
        %v6699 = vadd.f32 %v6023, %v6698
        %v6700 = vpop.f32.mrb[0].mxu0
        %6701 = vmatprep.mubr.bf16.mxu0 0
        %6702 = vmatmul.mubr.bf16.gmra.mrb[0].mxu0 %v6131
        %v6703 = vpop.f32.mrb[0].mxu0
        %v6704 = vadd.f32 %v6023, %v6703
        %v6705 = vpop.f32.mrb[0].mxu0
        %v6706 = vpop.f32.mrb[0].mxu0
        %v6707 = vadd.f32 %v6023, %v6706
        %v6708 = vpop.f32.mrb[0].mxu0
        %6709 = vmatprep.mubr.bf16.mxu0 0
        %6710 = vmatmul.mubr.bf16.gmra.mrb[0].mxu0 %v6134
        %v6711 = vpop.f32.mrb[0].mxu0
        %v6712 = vadd.f32 %v6023, %v6711
        %v6713 = vpop.f32.mrb[0].mxu0
        %v6714 = vpop.f32.mrb[0].mxu0
        %v6715 = vadd.f32 %v6023, %v6714
        %v6716 = vpop.f32.mrb[0].mxu0
        %6717 = vmatprep.mubr.bf16.mxu0 0
        %6718 = vmatmul.mubr.bf16.gmra.mrb[0].mxu0 %v6137
        %v6719 = vpop.f32.mrb[0].mxu0
        %v6720 = vadd.f32 %v6023, %v6719
        %v6721 = vpop.f32.mrb[0].mxu0
        %v6722 = vpop.f32.mrb[0].mxu0
        %v6723 = vadd.f32 %v6023, %v6722
        %v6724 = vpop.f32.mrb[0].mxu0
        %6725 = vmatprep.mubr.bf16.mxu0 0
        %6726 = vmatmul.mubr.bf16.gmra.mrb[0].mxu0 %v6140
        %v6727 = vpop.f32.mrb[0].mxu0
        %v6728 = vadd.f32 %v6023, %v6727
        %v6729 = vpop.f32.mrb[0].mxu0
        %v6730 = vpop.f32.mrb[0].mxu0
        %v6731 = vadd.f32 %v6023, %v6730
        %v6732 = vpop.f32.mrb[0].mxu0
        %6733 = vmatprep.mubr.bf16.mxu0 0
        %6734 = vmatmul.mubr.bf16.gmra.mrb[0].mxu0 %v6143
        %v6735 = vpop.f32.mrb[0].mxu0
        %v6736 = vadd.f32 %v6023, %v6735
        %v6737 = vpop.f32.mrb[0].mxu0
        %v6738 = vpop.f32.mrb[0].mxu0
        %v6739 = vadd.f32 %v6023, %v6738
        %v6740 = vpop.f32.mrb[0].mxu0
        %6741 = vmatprep.mubr.bf16.mxu0 0
        %6742 = vmatmul.mubr.bf16.gmra.mrb[0].mxu0 %v6146
        %v6743 = vpop.f32.mrb[0].mxu0
        %v6744 = vadd.f32 %v6023, %v6743
        %v6745 = vpop.f32.mrb[0].mxu0
        %v6746 = vpop.f32.mrb[0].mxu0
        %v6747 = vadd.f32 %v6023, %v6746
        %v6748 = vpop.f32.mrb[0].mxu0
        %6749 = vmatprep.mubr.bf16.mxu0 0
        %6750 = vmatmul.mubr.bf16.gmra.mrb[0].mxu0 %v6149
        %v6751 = vpop.f32.mrb[0].mxu0
        %v6752 = vadd.f32 %v6023, %v6751
        %v6753 = vpop.f32.mrb[0].mxu0
        %v6754 = vpop.f32.mrb[0].mxu0
        %v6755 = vadd.f32 %v6023, %v6754
        %v6756 = vpop.f32.mrb[0].mxu0
        %6757 = vmatprep.mubr.bf16.mxu0 0
        %6758 = vmatmul.mubr.bf16.gmra.mrb[0].mxu0 %v6152
        %v6759 = vpop.f32.mrb[0].mxu0
        %v6760 = vadd.f32 %v6023, %v6759
        %v6761 = vpop.f32.mrb[0].mxu0
        %v6762 = vpop.f32.mrb[0].mxu0
        %v6763 = vadd.f32 %v6023, %v6762
        %v6764 = vpop.f32.mrb[0].mxu0
        %6765 = vmatprep.mubr.bf16.mxu0 0
        %6766 = vmatmul.mubr.bf16.gmra.mrb[0].mxu0 %v6155
        %v6767 = vpop.f32.mrb[0].mxu0
        %v6768 = vadd.f32 %v6023, %v6767
        %v6769 = vpop.f32.mrb[0].mxu0
        %v6770 = vpop.f32.mrb[0].mxu0
        %v6771 = vadd.f32 %v6023, %v6770
        %v6772 = vpop.f32.mrb[0].mxu0
        %6773 = vmatprep.mubr.bf16.mxu0 0
        %6774 = vmatmul.mubr.bf16.gmra.mrb[0].mxu0 %v6158
        %v6775 = vpop.f32.mrb[0].mxu0
        %v6776 = vadd.f32 %v6023, %v6775
        %v6777 = vpop.f32.mrb[0].mxu0
        %v6778 = vpop.f32.mrb[0].mxu0
        %v6779 = vadd.f32 %v6023, %v6778
        %v6780 = vpop.f32.mrb[0].mxu0
        %6781 = vmatprep.mubr.bf16.mxu0 0
        %6782 = vmatmul.mubr.bf16.gmra.mrb[0].mxu0 %v6161
        %v6783 = vpop.f32.mrb[0].mxu0
        %v6784 = vadd.f32 %v6023, %v6783
        %v6785 = vpop.f32.mrb[0].mxu0
        %v6786 = vpop.f32.mrb[0].mxu0
        %v6787 = vadd.f32 %v6023, %v6786
        %v6788 = vpop.f32.mrb[0].mxu0
        %6789 = vmatprep.mubr.bf16.mxu0 0
        %6790 = vmatmul.mubr.bf16.gmra.mrb[0].mxu0 %v6164
        %v6791 = vpop.f32.mrb[0].mxu0
        %v6792 = vadd.f32 %v6023, %v6791
        %v6793 = vpop.f32.mrb[0].mxu0
        %v6794 = vpop.f32.mrb[0].mxu0
        %v6795 = vadd.f32 %v6023, %v6794
        %v6796 = vpop.f32.mrb[0].mxu0
        %6797 = vmatprep.mubr.bf16.mxu0 0
        %6798 = vmatmul.mubr.bf16.gmra.mrb[0].mxu0 %v6167
        %v6799 = vpop.f32.mrb[0].mxu0
        %v6800 = vadd.f32 %v6023, %v6799
        %v6801 = vpop.f32.mrb[0].mxu0
        %v6802 = vpop.f32.mrb[0].mxu0
        %v6803 = vadd.f32 %v6023, %v6802
        %v6804 = vpop.f32.mrb[0].mxu0
        %6805 = vmatprep.mubr.bf16.mxu0 0
        %6806 = vmatmul.mubr.bf16.gmra.mrb[0].mxu0 %v6170
        %v6807 = vpop.f32.mrb[0].mxu0
        %v6808 = vadd.f32 %v6023, %v6807
        %v6809 = vpop.f32.mrb[0].mxu0
        %v6810 = vpop.f32.mrb[0].mxu0
        %v6811 = vadd.f32 %v6023, %v6810
        %v6812 = vpop.f32.mrb[0].mxu0
        %6813 = vmatprep.mubr.bf16.mxu0 0
        %6814 = vmatmul.mubr.bf16.gmra.mrb[0].mxu0 %v6173
        %v6815 = vpop.f32.mrb[0].mxu0
        %v6816 = vadd.f32 %v6023, %v6815
        %v6817 = vpop.f32.mrb[0].mxu0
        %v6818 = vpop.f32.mrb[0].mxu0
        %v6819 = vadd.f32 %v6023, %v6818
        %v6820 = vpop.f32.mrb[0].mxu0
        %6821 = vmatprep.mubr.bf16.mxu0 0
        %6822 = vmatmul.mubr.bf16.gmra.mrb[0].mxu0 %v6176
        %v6823 = vpop.f32.mrb[0].mxu0
        %v6824 = vadd.f32 %v6023, %v6823
        %v6825 = vpop.f32.mrb[0].mxu0
        %v6826 = vpop.f32.mrb[0].mxu0
        %v6827 = vadd.f32 %v6023, %v6826
        %v6828 = vpop.f32.mrb[0].mxu0
        %6829 = vmatprep.mubr.bf16.mxu0 0
        %6830 = vmatmul.mubr.bf16.gmra.mrb[0].mxu0 %v6179
        %v6831 = vpop.f32.mrb[0].mxu0
        %v6832 = vadd.f32 %v6023, %v6831
        %v6833 = vpop.f32.mrb[0].mxu0
        %v6834 = vpop.f32.mrb[0].mxu0
        %v6835 = vadd.f32 %v6023, %v6834
        %v6836 = vpop.f32.mrb[0].mxu0
        %6837 = vmatprep.mubr.bf16.mxu0 0
        %6838 = vmatmul.mubr.bf16.gmra.mrb[0].mxu0 %v6182
        %v6839 = vpop.f32.mrb[0].mxu0
        %v6840 = vadd.f32 %v6023, %v6839
        %v6841 = vpop.f32.mrb[0].mxu0
        %v6842 = vpop.f32.mrb[0].mxu0
        %v6843 = vadd.f32 %v6023, %v6842
        %v6844 = vpop.f32.mrb[0].mxu0
        %6845 = vmatprep.mubr.bf16.mxu0 0
        %6846 = vmatmul.mubr.bf16.gmra.mrb[0].mxu0 %v6185
        %v6847 = vpop.f32.mrb[0].mxu0
        %v6848 = vadd.f32 %v6023, %v6847
        %v6849 = vpop.f32.mrb[0].mxu0
        %v6850 = vpop.f32.mrb[0].mxu0
        %v6851 = vadd.f32 %v6023, %v6850
        %v6852 = vpop.f32.mrb[0].mxu0
        %6853 = vmatprep.mubr.bf16.mxu0 0
        %6854 = vmatmul.mubr.bf16.gmra.mrb[0].mxu0 %v6188
        %v6855 = vpop.f32.mrb[0].mxu0
        %v6856 = vadd.f32 %v6023, %v6855
        %v6857 = vpop.f32.mrb[0].mxu0
        %v6858 = vpop.f32.mrb[0].mxu0
        %v6859 = vadd.f32 %v6023, %v6858
        %v6860 = vpop.f32.mrb[0].mxu0
        %6861 = vmatprep.mubr.bf16.mxu0 0
        %6862 = vmatmul.mubr.bf16.gmra.mrb[0].mxu0 %v6191
        %v6863 = vpop.f32.mrb[0].mxu0
        %v6864 = vadd.f32 %v6023, %v6863
        %v6865 = vpop.f32.mrb[0].mxu0
        %v6866 = vpop.f32.mrb[0].mxu0
        %v6867 = vadd.f32 %v6023, %v6866
        %v6868 = vpop.f32.mrb[0].mxu0
        %6869 = vmatprep.mubr.bf16.mxu0 0
        %6870 = vmatmul.mubr.bf16.gmra.mrb[0].mxu0 %v6194
        %v6871 = vpop.f32.mrb[0].mxu0
        %v6872 = vadd.f32 %v6023, %v6871
        %v6873 = vpop.f32.mrb[0].mxu0
        %v6874 = vpop.f32.mrb[0].mxu0
        %v6875 = vadd.f32 %v6023, %v6874
        %v6876 = vpop.f32.mrb[0].mxu0
        %6877 = vmatprep.mubr.bf16.mxu0 0
        %6878 = vmatmul.mubr.bf16.gmra.mrb[0].mxu0 %v6197
        %v6879 = vpop.f32.mrb[0].mxu0
        %v6880 = vadd.f32 %v6023, %v6879
        %v6881 = vpop.f32.mrb[0].mxu0
        %v6882 = vpop.f32.mrb[0].mxu0
        %v6883 = vadd.f32 %v6023, %v6882
        %v6884 = vpop.f32.mrb[0].mxu0
        %6885 = vmatprep.mubr.bf16.mxu0 0
        %6886 = vmatmul.mubr.bf16.gmra.mrb[0].mxu0 %v6200
        %v6887 = vpop.f32.mrb[0].mxu0
        %v6888 = vadd.f32 %v6023, %v6887
        %v6889 = vpop.f32.mrb[0].mxu0
        %v6890 = vpop.f32.mrb[0].mxu0
        %v6891 = vadd.f32 %v6023, %v6890
        %v6892 = vpop.f32.mrb[0].mxu0
        %6893 = vmatprep.mubr.bf16.mxu0 0
        %6894 = vmatmul.mubr.bf16.gmra.mrb[0].mxu0 %v6203
        %v6895 = vpop.f32.mrb[0].mxu0
        %v6896 = vadd.f32 %v6023, %v6895
        %v6897 = vpop.f32.mrb[0].mxu0
        %v6898 = vpop.f32.mrb[0].mxu0
        %v6899 = vadd.f32 %v6023, %v6898
        %v6900 = vpop.f32.mrb[0].mxu0
        %6901 = vmatprep.mubr.bf16.mxu0 0
        %6902 = vmatmul.mubr.bf16.gmra.mrb[0].mxu0 %v6206
        %v6903 = vpop.f32.mrb[0].mxu0
        %v6904 = vadd.f32 %v6023, %v6903
        %v6905 = vpop.f32.mrb[0].mxu0
        %v6906 = vpop.f32.mrb[0].mxu0
        %v6907 = vadd.f32 %v6023, %v6906
        %v6908 = vpop.f32.mrb[0].mxu0
        %6909 = vmatprep.mubr.bf16.mxu0 0
        %6910 = vmatmul.mubr.bf16.gmra.mrb[0].mxu0 %v6209
        %v6911 = vpop.f32.mrb[0].mxu0
        %v6912 = vadd.f32 %v6023, %v6911
        %v6913 = vpop.f32.mrb[0].mxu0
        %v6914 = vpop.f32.mrb[0].mxu0
        %v6915 = vadd.f32 %v6023, %v6914
        %v6916 = vpop.f32.mrb[0].mxu0
        %6917 = vmatprep.mubr.bf16.mxu0 0
        %6918 = vmatmul.mubr.bf16.gmra.mrb[0].mxu0 %v6212
        %v6919 = vpop.f32.mrb[0].mxu0
        %v6920 = vadd.f32 %v6023, %v6919
        %v6921 = vpop.f32.mrb[0].mxu0
        %v6922 = vpop.f32.mrb[0].mxu0
        %v6923 = vadd.f32 %v6023, %v6922
        %v6924 = vpop.f32.mrb[0].mxu0
        %6925 = vmatprep.mubr.bf16.mxu0 0
        %6926 = vmatmul.mubr.bf16.gmra.mrb[0].mxu0 %v6215
        %v6927 = vpop.f32.mrb[0].mxu0
        %v6928 = vadd.f32 %v6023, %v6927
        %v6929 = vpop.f32.mrb[0].mxu0
        %v6930 = vpop.f32.mrb[0].mxu0
        %v6931 = vadd.f32 %v6023, %v6930
        %v6932 = vpop.f32.mrb[0].mxu0
        %6933 = vmatprep.mubr.bf16.mxu0 0
        %6934 = vmatmul.mubr.bf16.gmra.mrb[0].mxu0 %v6218
        %v6935 = vpop.f32.mrb[0].mxu0
        %v6936 = vadd.f32 %v6023, %v6935
        %v6937 = vpop.f32.mrb[0].mxu0
        %v6938 = vpop.f32.mrb[0].mxu0
        %v6939 = vadd.f32 %v6023, %v6938
        %v6940 = vpop.f32.mrb[0].mxu0
        %6941 = vmatprep.mubr.bf16.mxu0 0
        %6942 = vmatmul.mubr.bf16.gmra.mrb[0].mxu0 %v6221
        %v6943 = vpop.f32.mrb[0].mxu0
        %v6944 = vadd.f32 %v6023, %v6943
        %v6945 = vpop.f32.mrb[0].mxu0
        %v6946 = vpop.f32.mrb[0].mxu0
        %v6947 = vadd.f32 %v6023, %v6946
        %v6948 = vpop.f32.mrb[0].mxu0
        %6949 = vmatprep.mubr.bf16.mxu0 0
        %6950 = vmatmul.mubr.bf16.gmra.mrb[0].mxu0 %v6224
        %v6951 = vpop.f32.mrb[0].mxu0
        %v6952 = vadd.f32 %v6023, %v6951
        %v6953 = vpop.f32.mrb[0].mxu0
        %v6954 = vpop.f32.mrb[0].mxu0
        %v6955 = vadd.f32 %v6023, %v6954
        %v6956 = vpop.f32.mrb[0].mxu0
        %6957 = vmatprep.mubr.bf16.mxu0 0
        %6958 = vmatmul.mubr.bf16.gmra.mrb[0].mxu0 %v6227
        %v6959 = vpop.f32.mrb[0].mxu0
        %v6960 = vadd.f32 %v6023, %v6959
        %v6961 = vpop.f32.mrb[0].mxu0
        %v6962 = vpop.f32.mrb[0].mxu0
        %v6963 = vadd.f32 %v6023, %v6962
        %v6964 = vpop.f32.mrb[0].mxu0
        %6965 = vmatprep.mubr.bf16.mxu0 0
        %6966 = vmatmul.mubr.bf16.gmra.mrb[0].mxu0 %v6230
        %v6967 = vpop.f32.mrb[0].mxu0
        %v6968 = vadd.f32 %v6023, %v6967
        %v6969 = vpop.f32.mrb[0].mxu0
        %v6970 = vpop.f32.mrb[0].mxu0
        %v6971 = vadd.f32 %v6023, %v6970
        %v6972 = vpop.f32.mrb[0].mxu0
        %6973 = vmatprep.mubr.bf16.mxu0 0
        %6974 = vmatmul.mubr.bf16.gmra.mrb[0].mxu0 %v6233
        %v6975 = vpop.f32.mrb[0].mxu0
        %v6976 = vadd.f32 %v6023, %v6975
        %v6977 = vpop.f32.mrb[0].mxu0
        %v6978 = vpop.f32.mrb[0].mxu0
        %v6979 = vadd.f32 %v6023, %v6978
        %v6980 = vpop.f32.mrb[0].mxu0
        %6981 = vmatprep.mubr.bf16.mxu0 0
        %6982 = vmatmul.mubr.bf16.gmra.mrb[0].mxu0 %v6236
        %v6983 = vpop.f32.mrb[0].mxu0
        %v6984 = vadd.f32 %v6023, %v6983
        %v6985 = vpop.f32.mrb[0].mxu0
        %v6986 = vpop.f32.mrb[0].mxu0
        %v6987 = vadd.f32 %v6023, %v6986
        %v6988 = vpop.f32.mrb[0].mxu0
        %6989 = vmatprep.mubr.bf16.mxu0 0
        %6990 = vmatmul.mubr.bf16.gmra.mrb[0].mxu0 %v6239
        %v6991 = vpop.f32.mrb[0].mxu0
        %v6992 = vadd.f32 %v6023, %v6991
        %v6993 = vpop.f32.mrb[0].mxu0
        %v6994 = vpop.f32.mrb[0].mxu0
        %v6995 = vadd.f32 %v6023, %v6994
        %v6996 = vpop.f32.mrb[0].mxu0
        %6997 = vmatprep.mubr.bf16.mxu0 0
        %6998 = vmatmul.mubr.bf16.gmra.mrb[0].mxu0 %v6242
        %v6999 = vpop.f32.mrb[0].mxu0
        %v7000 = vadd.f32 %v6023, %v6999
        %v7001 = vpop.f32.mrb[0].mxu0
        %v7002 = vpop.f32.mrb[0].mxu0
        %v7003 = vadd.f32 %v6023, %v7002
        %v7004 = vpop.f32.mrb[0].mxu0
        %7005 = vmatprep.mubr.bf16.mxu0 0
        %7006 = vmatmul.mubr.bf16.gmra.mrb[0].mxu0 %v6245
        %v7007 = vpop.f32.mrb[0].mxu0
        %v7008 = vadd.f32 %v6023, %v7007
        %v7009 = vpop.f32.mrb[0].mxu0
        %v7010 = vpop.f32.mrb[0].mxu0
        %v7011 = vadd.f32 %v6023, %v7010
        %v7012 = vpop.f32.mrb[0].mxu0
        %7013 = vmatprep.mubr.bf16.mxu0 0
        %7014 = vmatmul.mubr.bf16.gmra.mrb[0].mxu0 %v6248
        %v7015 = vpop.f32.mrb[0].mxu0
        %v7016 = vadd.f32 %v6023, %v7015
        %v7017 = vpop.f32.mrb[0].mxu0
        %v7018 = vpop.f32.mrb[0].mxu0
        %v7019 = vadd.f32 %v6023, %v7018
        %v7020 = vpop.f32.mrb[0].mxu0
        %7021 = vmatprep.mubr.bf16.mxu0 0
        %7022 = vmatmul.mubr.bf16.gmra.mrb[0].mxu0 %v6251
        %v7023 = vpop.f32.mrb[0].mxu0
        %v7024 = vadd.f32 %v6023, %v7023
        %v7025 = vpop.f32.mrb[0].mxu0
        %v7026 = vpop.f32.mrb[0].mxu0
        %v7027 = vadd.f32 %v6023, %v7026
        %v7028 = vpop.f32.mrb[0].mxu0
        %7029 = vmatprep.mubr.bf16.mxu0 0
        %7030 = vmatmul.mubr.bf16.gmra.mrb[0].mxu0 %v6254
        %v7031 = vpop.f32.mrb[0].mxu0
        %v7032 = vadd.f32 %v6023, %v7031
        %v7033 = vpop.f32.mrb[0].mxu0
        %v7034 = vpop.f32.mrb[0].mxu0
        %v7035 = vadd.f32 %v6023, %v7034
        %v7036 = vpop.f32.mrb[0].mxu0
        %7037 = vmatprep.mubr.bf16.mxu0 0
        %7038 = vmatmul.mubr.bf16.gmra.mrb[0].mxu0 %v6257
        %v7039 = vpop.f32.mrb[0].mxu0
        %v7040 = vadd.f32 %v6023, %v7039
        %v7041 = vpop.f32.mrb[0].mxu0
        %v7042 = vpop.f32.mrb[0].mxu0
        %v7043 = vadd.f32 %v6023, %v7042
        %v7044 = vpop.f32.mrb[0].mxu0
        %7045 = vmatprep.mubr.bf16.mxu0 0
        %7046 = vmatmul.mubr.bf16.gmra.mrb[0].mxu0 %v6260
        %v7047 = vpop.f32.mrb[0].mxu0
        %v7048 = vadd.f32 %v6023, %v7047
        %v7049 = vpop.f32.mrb[0].mxu0
        %v7050 = vpop.f32.mrb[0].mxu0
        %v7051 = vadd.f32 %v6023, %v7050
        %v7052 = vpop.f32.mrb[0].mxu0
        %7053 = vmatprep.mubr.bf16.mxu0 0
        %7054 = vmatmul.mubr.bf16.gmra.mrb[0].mxu0 %v6263
        %v7055 = vpop.f32.mrb[0].mxu0
        %v7056 = vadd.f32 %v6023, %v7055
        %v7057 = vpop.f32.mrb[0].mxu0
        %v7058 = vpop.f32.mrb[0].mxu0
        %v7059 = vadd.f32 %v6023, %v7058
        %v7060 = vpop.f32.mrb[0].mxu0
        %7061 = vmatprep.mubr.bf16.mxu0 0
        %7062 = vmatmul.mubr.bf16.gmra.mrb[0].mxu0 %v6266
        %v7063 = vpop.f32.mrb[0].mxu0
        %v7064 = vadd.f32 %v6023, %v7063
        %v7065 = vpop.f32.mrb[0].mxu0
        %v7066 = vpop.f32.mrb[0].mxu0
        %v7067 = vadd.f32 %v6023, %v7066
        %v7068 = vpop.f32.mrb[0].mxu0
        %7069 = vmatprep.mubr.bf16.mxu0 0
        %7070 = vmatmul.mubr.bf16.gmra.mrb[0].mxu0 %v6269
        %v7071 = vpop.f32.mrb[0].mxu0
        %v7072 = vadd.f32 %v6023, %v7071
        %v7073 = vpop.f32.mrb[0].mxu0
        %v7074 = vpop.f32.mrb[0].mxu0
        %v7075 = vadd.f32 %v6023, %v7074
        %v7076 = vpop.f32.mrb[0].mxu0
        %7077 = vmatprep.mubr.bf16.mxu0 0
        %7078 = vmatmul.mubr.bf16.gmra.mrb[0].mxu0 %v6272
        %v7079 = vpop.f32.mrb[0].mxu0
        %v7080 = vadd.f32 %v6023, %v7079
        %v7081 = vpop.f32.mrb[0].mxu0
        %v7082 = vpop.f32.mrb[0].mxu0
        %v7083 = vadd.f32 %v6023, %v7082
        %v7084 = vpop.f32.mrb[0].mxu0
        %7085 = vmatprep.mubr.bf16.mxu0 0
        %7086 = vmatmul.mubr.bf16.gmra.mrb[0].mxu0 %v6275
        %v7087 = vpop.f32.mrb[0].mxu0
        %v7088 = vadd.f32 %v6023, %v7087
        %v7089 = vpop.f32.mrb[0].mxu0
        %v7090 = vpop.f32.mrb[0].mxu0
        %v7091 = vadd.f32 %v6023, %v7090
        %v7092 = vpop.f32.mrb[0].mxu0
        %7093 = vmatprep.mubr.bf16.mxu0 0
        %7094 = vmatmul.mubr.bf16.gmra.mrb[0].mxu0 %v6278
        %v7095 = vpop.f32.mrb[0].mxu0
        %v7096 = vadd.f32 %v6023, %v7095
        %v7097 = vpop.f32.mrb[0].mxu0
        %v7098 = vpop.f32.mrb[0].mxu0
        %v7099 = vadd.f32 %v6023, %v7098
        %v7100 = vpop.f32.mrb[0].mxu0
        %7101 = vmatprep.mubr.bf16.mxu0 0
        %7102 = vmatmul.mubr.bf16.gmra.mrb[0].mxu0 %v6281
        %v7103 = vpop.f32.mrb[0].mxu0
        %v7104 = vadd.f32 %v6023, %v7103
        %v7105 = vpop.f32.mrb[0].mxu0
        %v7106 = vpop.f32.mrb[0].mxu0
        %v7107 = vadd.f32 %v6023, %v7106
        %v7108 = vpop.f32.mrb[0].mxu0
        %7109 = vmatprep.mubr.bf16.mxu0 0
        %7110 = vmatmul.mubr.bf16.gmra.mrb[0].mxu0 %v6284
        %v7111 = vpop.f32.mrb[0].mxu0
        %v7112 = vadd.f32 %v6023, %v7111
        %v7113 = vpop.f32.mrb[0].mxu0
        %v7114 = vpop.f32.mrb[0].mxu0
        %v7115 = vadd.f32 %v6023, %v7114
        %v7116 = vpop.f32.mrb[0].mxu0
        %7117 = vmatprep.mubr.bf16.mxu0 0
        %7118 = vmatmul.mubr.bf16.gmra.mrb[0].mxu0 %v6287
        %v7119 = vpop.f32.mrb[0].mxu0
        %v7120 = vadd.f32 %v6023, %v7119
        %v7121 = vpop.f32.mrb[0].mxu0
        %v7122 = vpop.f32.mrb[0].mxu0
        %v7123 = vadd.f32 %v6023, %v7122
        %v7124 = vpop.f32.mrb[0].mxu0
        %7125 = vmatprep.mubr.bf16.mxu0 0
        %7126 = vmatmul.mubr.bf16.gmra.mrb[0].mxu0 %v6290
        %v7127 = vpop.f32.mrb[0].mxu0
        %v7128 = vadd.f32 %v6023, %v7127
        %v7129 = vpop.f32.mrb[0].mxu0
        %v7130 = vpop.f32.mrb[0].mxu0
        %v7131 = vadd.f32 %v6023, %v7130
        %v7132 = vpop.f32.mrb[0].mxu0
        %7133 = vmatprep.mubr.bf16.mxu0 0
        %7134 = vmatmul.mubr.bf16.gmra.mrb[0].mxu0 %v6293
        %v7135 = vpop.f32.mrb[0].mxu0
        %v7136 = vadd.f32 %v6023, %v7135
        %v7137 = vpop.f32.mrb[0].mxu0
        %v7138 = vpop.f32.mrb[0].mxu0
        %v7139 = vadd.f32 %v6023, %v7138
        %v7140 = vpop.f32.mrb[0].mxu0
        %7141 = vmatprep.mubr.bf16.mxu0 0
        %7142 = vmatmul.mubr.bf16.gmra.mrb[0].mxu0 %v6296
        %v7143 = vpop.f32.mrb[0].mxu0
        %v7144 = vadd.f32 %v6023, %v7143
        %v7145 = vpop.f32.mrb[0].mxu0
        %v7146 = vpop.f32.mrb[0].mxu0
        %v7147 = vadd.f32 %v6023, %v7146
        %v7148 = vpop.f32.mrb[0].mxu0
        %7149 = vmatprep.mubr.bf16.mxu0 0
        %7150 = vmatmul.mubr.bf16.gmra.mrb[0].mxu0 %v6299
        %v7151 = vpop.f32.mrb[0].mxu0
        %v7152 = vadd.f32 %v6023, %v7151
        %v7153 = vpop.f32.mrb[0].mxu0
        %v7154 = vpop.f32.mrb[0].mxu0
        %v7155 = vadd.f32 %v6023, %v7154
        %v7156 = vpop.f32.mrb[0].mxu0
        %7157 = vmatprep.mubr.bf16.mxu0 0
        %7158 = vmatmul.mubr.bf16.gmra.mrb[0].mxu0 %v6302
        %v7159 = vpop.f32.mrb[0].mxu0
        %v7160 = vadd.f32 %v6023, %v7159
        %v7161 = vpop.f32.mrb[0].mxu0
        %v7162 = vpop.f32.mrb[0].mxu0
        %v7163 = vadd.f32 %v6023, %v7162
        %v7164 = vpop.f32.mrb[0].mxu0
        %7165 = vmatprep.mubr.bf16.mxu0 0
        %7166 = vmatmul.mubr.bf16.gmra.mrb[0].mxu0 %v6305
        %v7167 = vpop.f32.mrb[0].mxu0
        %v7168 = vadd.f32 %v6023, %v7167
        %v7169 = vpop.f32.mrb[0].mxu0
        %v7170 = vpop.f32.mrb[0].mxu0
        %v7171 = vadd.f32 %v6023, %v7170
        %v7172 = vpop.f32.mrb[0].mxu0
        %7173 = vmatprep.mubr.bf16.mxu0 0
        %7174 = vmatmul.mubr.bf16.gmra.mrb[0].mxu0 %v6308
        %v7175 = vpop.f32.mrb[0].mxu0
        %v7176 = vadd.f32 %v6023, %v7175
        %v7177 = vpop.f32.mrb[0].mxu0
        %v7178 = vpop.f32.mrb[0].mxu0
        %v7179 = vadd.f32 %v6023, %v7178
        %v7180 = vpop.f32.mrb[0].mxu0
        %7181 = vmatprep.mubr.bf16.mxu0 0
        %7182 = vmatmul.mubr.bf16.gmra.mrb[0].mxu0 %v6311
        %v7183 = vpop.f32.mrb[0].mxu0
        %v7184 = vadd.f32 %v6023, %v7183
        %v7185 = vpop.f32.mrb[0].mxu0
        %v7186 = vpop.f32.mrb[0].mxu0
        %v7187 = vadd.f32 %v6023, %v7186
        %v7188 = vpop.f32.mrb[0].mxu0
        %7189 = vmatprep.mubr.bf16.mxu0 0
        %7190 = vmatmul.mubr.bf16.gmra.mrb[0].mxu0 %v6314
        %v7191 = vpop.f32.mrb[0].mxu0
        %v7192 = vadd.f32 %v6023, %v7191
        %v7193 = vpop.f32.mrb[0].mxu0
        %v7194 = vpop.f32.mrb[0].mxu0
        %v7195 = vadd.f32 %v6023, %v7194
        %v7196 = vpop.f32.mrb[0].mxu0
        %7197 = vmatprep.mubr.bf16.mxu0 0
        %7198 = vmatmul.mubr.bf16.gmra.mrb[0].mxu0 %v6317
        %v7199 = vpop.f32.mrb[0].mxu0
        %v7200 = vadd.f32 %v6023, %v7199
        %v7201 = vpop.f32.mrb[0].mxu0
        %v7202 = vpop.f32.mrb[0].mxu0
        %v7203 = vadd.f32 %v6023, %v7202
        %v7204 = vpop.f32.mrb[0].mxu0
        %7205 = vmatprep.mubr.bf16.mxu0 0
        %7206 = vmatmul.mubr.bf16.gmra.mrb[0].mxu0 %v6320
        %v7207 = vpop.f32.mrb[0].mxu0
        %v7208 = vadd.f32 %v6023, %v7207
        %v7209 = vpop.f32.mrb[0].mxu0
        %v7210 = vpop.f32.mrb[0].mxu0
        %v7211 = vadd.f32 %v6023, %v7210
        %v7212 = vpop.f32.mrb[0].mxu0
        %7213 = vmatprep.mubr.bf16.mxu0 0
        %7214 = vmatmul.mubr.bf16.gmra.mrb[0].mxu0 %v6323
        %v7215 = vpop.f32.mrb[0].mxu0
        %v7216 = vadd.f32 %v6023, %v7215
        %v7217 = vpop.f32.mrb[0].mxu0
        %v7218 = vpop.f32.mrb[0].mxu0
        %v7219 = vadd.f32 %v6023, %v7218
        %v7220 = vpop.f32.mrb[0].mxu0
        %7221 = vmatprep.mubr.bf16.mxu0 0
        %7222 = vmatmul.mubr.bf16.gmra.mrb[0].mxu0 %v6326
        %v7223 = vpop.f32.mrb[0].mxu0
        %v7224 = vadd.f32 %v6023, %v7223
        %v7225 = vpop.f32.mrb[0].mxu0
        %v7226 = vpop.f32.mrb[0].mxu0
        %v7227 = vadd.f32 %v6023, %v7226
        %v7228 = vpop.f32.mrb[0].mxu0
        %7229 = vmatprep.mubr.bf16.mxu0 0
        %7230 = vmatmul.mubr.bf16.gmra.mrb[0].mxu0 %v6329
        %v7231 = vpop.f32.mrb[0].mxu0
        %v7232 = vadd.f32 %v6023, %v7231
        %v7233 = vpop.f32.mrb[0].mxu0
        %v7234 = vpop.f32.mrb[0].mxu0
        %v7235 = vadd.f32 %v6023, %v7234
        %v7236 = vpop.f32.mrb[0].mxu0
        %7237 = vmatprep.mubr.bf16.mxu0 0
        %7238 = vmatmul.mubr.bf16.gmra.mrb[0].mxu0 %v6332
        %v7239 = vpop.f32.mrb[0].mxu0
        %v7240 = vadd.f32 %v6023, %v7239
        %v7241 = vpop.f32.mrb[0].mxu0
        %v7242 = vpop.f32.mrb[0].mxu0
        %v7243 = vadd.f32 %v6023, %v7242
        %v7244 = vpop.f32.mrb[0].mxu0
        %7245 = vmatprep.mubr.bf16.mxu0 0
        %7246 = vmatmul.mubr.bf16.gmra.mrb[0].mxu0 %v6335
        %v7247 = vpop.f32.mrb[0].mxu0
        %v7248 = vadd.f32 %v6023, %v7247
        %v7249 = vpop.f32.mrb[0].mxu0
        %v7250 = vpop.f32.mrb[0].mxu0
        %v7251 = vadd.f32 %v6023, %v7250
        %v7252 = vpop.f32.mrb[0].mxu0
        %7253 = vmatprep.mubr.bf16.mxu0 0
        %7254 = vmatmul.mubr.bf16.gmra.mrb[0].mxu0 %v6338
        %v7255 = vpop.f32.mrb[0].mxu0
        %v7256 = vadd.f32 %v6023, %v7255
        %v7257 = vpop.f32.mrb[0].mxu0
        %v7258 = vpop.f32.mrb[0].mxu0
        %v7259 = vadd.f32 %v6023, %v7258
        %v7260 = vpop.f32.mrb[0].mxu0
        %7261 = vmatprep.mubr.bf16.mxu0 0
        %7262 = vmatmul.mubr.bf16.gmra.mrb[0].mxu0 %v6341
        %v7263 = vpop.f32.mrb[0].mxu0
        %v7264 = vadd.f32 %v6023, %v7263
        %v7265 = vpop.f32.mrb[0].mxu0
        %v7266 = vpop.f32.mrb[0].mxu0
        %v7267 = vadd.f32 %v6023, %v7266
        %v7268 = vpop.f32.mrb[0].mxu0
        %7269 = vmatprep.mubr.bf16.mxu0 0
        %7270 = vmatmul.mubr.bf16.gmra.mrb[0].mxu0 %v6344
        %v7271 = vpop.f32.mrb[0].mxu0
        %v7272 = vadd.f32 %v6023, %v7271
        %v7273 = vpop.f32.mrb[0].mxu0
        %v7274 = vpop.f32.mrb[0].mxu0
        %v7275 = vadd.f32 %v6023, %v7274
        %v7276 = vpop.f32.mrb[0].mxu0
        %7277 = vmatprep.mubr.bf16.mxu0 0
        %7278 = vmatmul.mubr.bf16.gmra.mrb[0].mxu0 %v6347
        %v7279 = vpop.f32.mrb[0].mxu0
        %v7280 = vadd.f32 %v6023, %v7279
        %v7281 = vpop.f32.mrb[0].mxu0
        %v7282 = vpop.f32.mrb[0].mxu0
        %v7283 = vadd.f32 %v6023, %v7282
        %v7284 = vpop.f32.mrb[0].mxu0
        %7285 = vmatprep.mubr.bf16.mxu0 0
        %7286 = vmatmul.mubr.bf16.gmra.mrb[0].mxu0 %v6350
        %v7287 = vpop.f32.mrb[0].mxu0
        %v7288 = vadd.f32 %v6023, %v7287
        %v7289 = vpop.f32.mrb[0].mxu0
        %v7290 = vpop.f32.mrb[0].mxu0
        %v7291 = vadd.f32 %v6023, %v7290
        %v7292 = vpop.f32.mrb[0].mxu0
        %7293 = vmatprep.mubr.bf16.mxu0 0
        %7294 = vmatmul.mubr.bf16.gmra.mrb[0].mxu0 %v6353
        %v7295 = vpop.f32.mrb[0].mxu0
        %v7296 = vadd.f32 %v6023, %v7295
        %v7297 = vpop.f32.mrb[0].mxu0
        %v7298 = vpop.f32.mrb[0].mxu0
        %v7299 = vadd.f32 %v6023, %v7298
        %v7300 = vpop.f32.mrb[0].mxu0
        %7301 = vmatprep.mubr.bf16.mxu0 0
        %7302 = vmatmul.mubr.bf16.gmra.mrb[0].mxu0 %v6356
        %v7303 = vpop.f32.mrb[0].mxu0
        %v7304 = vadd.f32 %v6023, %v7303
        %v7305 = vpop.f32.mrb[0].mxu0
        %v7306 = vpop.f32.mrb[0].mxu0
        %v7307 = vadd.f32 %v6023, %v7306
        %v7308 = vpop.f32.mrb[0].mxu0
        %7309 = vmatprep.mubr.bf16.mxu0 0
        %7310 = vmatmul.mubr.bf16.gmra.mrb[0].mxu0 %v6359
        %v7311 = vpop.f32.mrb[0].mxu0
        %v7312 = vadd.f32 %v6023, %v7311
        %v7313 = vpop.f32.mrb[0].mxu0
        %v7314 = vpop.f32.mrb[0].mxu0
        %v7315 = vadd.f32 %v6023, %v7314
        %v7316 = vpop.f32.mrb[0].mxu0
        %7317 = vmatprep.mubr.bf16.mxu0 0
        %7318 = vmatmul.mubr.bf16.gmra.mrb[0].mxu0 %v6362
        %v7319 = vpop.f32.mrb[0].mxu0
        %v7320 = vadd.f32 %v6023, %v7319
        %v7321 = vpop.f32.mrb[0].mxu0
        %v7322 = vpop.f32.mrb[0].mxu0
        %v7323 = vadd.f32 %v6023, %v7322
        %v7324 = vpop.f32.mrb[0].mxu0
        %7325 = vmatprep.mubr.bf16.mxu0 0
        %7326 = vmatmul.mubr.bf16.gmra.mrb[0].mxu0 %v6365
        %v7327 = vpop.f32.mrb[0].mxu0
        %v7328 = vadd.f32 %v6023, %v7327
        %v7329 = vpop.f32.mrb[0].mxu0
        %v7330 = vpop.f32.mrb[0].mxu0
        %v7331 = vadd.f32 %v6023, %v7330
        %v7332 = vpop.f32.mrb[0].mxu0
        %7333 = vmatprep.mubr.bf16.mxu0 0
        %7334 = vmatmul.mubr.bf16.gmra.mrb[0].mxu0 %v6368
        %v7335 = vpop.f32.mrb[0].mxu0
        %v7336 = vadd.f32 %v6023, %v7335
        %v7337 = vpop.f32.mrb[0].mxu0
        %v7338 = vpop.f32.mrb[0].mxu0
        %v7339 = vadd.f32 %v6023, %v7338
        %v7340 = vpop.f32.mrb[0].mxu0
        %7341 = vmatprep.mubr.bf16.mxu0 0
        %7342 = vmatmul.mubr.bf16.gmra.mrb[0].mxu0 %v6371
        %v7343 = vpop.f32.mrb[0].mxu0
        %v7344 = vadd.f32 %v6023, %v7343
        %v7345 = vpop.f32.mrb[0].mxu0
        %v7346 = vpop.f32.mrb[0].mxu0
        %v7347 = vadd.f32 %v6023, %v7346
        %v7348 = vpop.f32.mrb[0].mxu0
        %7349 = vmatprep.mubr.bf16.mxu0 0
        %7350 = vmatmul.mubr.bf16.gmra.mrb[0].mxu0 %v6374
        %v7351 = vpop.f32.mrb[0].mxu0
        %v7352 = vadd.f32 %v6023, %v7351
        %v7353 = vpop.f32.mrb[0].mxu0
        %v7354 = vpop.f32.mrb[0].mxu0
        %v7355 = vadd.f32 %v6023, %v7354
        %v7356 = vpop.f32.mrb[0].mxu0
        %7357 = vmatprep.mubr.bf16.mxu0 0
        %7358 = vmatmul.mubr.bf16.gmra.mrb[0].mxu0 %v6377
        %v7359 = vpop.f32.mrb[0].mxu0
        %v7360 = vadd.f32 %v6023, %v7359
        %v7361 = vpop.f32.mrb[0].mxu0
        %v7362 = vpop.f32.mrb[0].mxu0
        %v7363 = vadd.f32 %v6023, %v7362
        %v7364 = vpop.f32.mrb[0].mxu0
        %7365 = vmatprep.mubr.bf16.mxu0 0
        %7366 = vmatmul.mubr.bf16.gmra.mrb[0].mxu0 %v6380
        %v7367 = vpop.f32.mrb[0].mxu0
        %v7368 = vadd.f32 %v6023, %v7367
        %v7369 = vpop.f32.mrb[0].mxu0
        %v7370 = vpop.f32.mrb[0].mxu0
        %v7371 = vadd.f32 %v6023, %v7370
        %v7372 = vpop.f32.mrb[0].mxu0
        %7373 = vmatprep.mubr.bf16.mxu0 0
        %7374 = vmatmul.mubr.bf16.gmra.mrb[0].mxu0 %v6383
        %v7375 = vpop.f32.mrb[0].mxu0
        %v7376 = vadd.f32 %v6023, %v7375
        %v7377 = vpop.f32.mrb[0].mxu0
        %v7378 = vpop.f32.mrb[0].mxu0
        %v7379 = vadd.f32 %v6023, %v7378
        %v7380 = vpop.f32.mrb[0].mxu0
        %7381 = vmatprep.mubr.bf16.mxu0 0
        %7382 = vmatmul.mubr.bf16.gmra.mrb[0].mxu0 %v6386
        %v7383 = vpop.f32.mrb[0].mxu0
        %v7384 = vadd.f32 %v6023, %v7383
        %v7385 = vpop.f32.mrb[0].mxu0
        %v7386 = vpop.f32.mrb[0].mxu0
        %v7387 = vadd.f32 %v6023, %v7386
        %v7388 = vpop.f32.mrb[0].mxu0
        %7389 = vmatprep.mubr.bf16.mxu0 0
        %7390 = vmatmul.mubr.bf16.gmra.mrb[0].mxu0 %v6389
        %v7391 = vpop.f32.mrb[0].mxu0
        %v7392 = vadd.f32 %v6023, %v7391
        %v7393 = vpop.f32.mrb[0].mxu0
        %v7394 = vpop.f32.mrb[0].mxu0
        %v7395 = vadd.f32 %v6023, %v7394
        %v7396 = vpop.f32.mrb[0].mxu0
        %7397 = vmatprep.mubr.bf16.mxu0 0
        %7398 = vmatmul.mubr.bf16.gmra.mrb[0].mxu0 %v6392
        %v7399 = vpop.f32.mrb[0].mxu0
        %v7400 = vadd.f32 %v6023, %v7399
        %v7401 = vpop.f32.mrb[0].mxu0
        %v7402 = vpop.f32.mrb[0].mxu0
        %v7403 = vadd.f32 %v6023, %v7402
        %v7404 = vpop.f32.mrb[0].mxu0
        %7405 = vmatprep.mubr.bf16.mxu0 0
        %7406 = vmatmul.mubr.bf16.gmra.mrb[0].mxu0 %v6395
        %v7407 = vpop.f32.mrb[0].mxu0
        %v7408 = vadd.f32 %v6023, %v7407
        %v7409 = vpop.f32.mrb[0].mxu0
        %v7410 = vpop.f32.mrb[0].mxu0
        %v7411 = vadd.f32 %v6023, %v7410
        %v7412 = vpop.f32.mrb[0].mxu0
        %7413 = vmatprep.mubr.bf16.mxu0 0
        %7414 = vmatmul.mubr.bf16.gmra.mrb[0].mxu0 %v6398
        %v7415 = vpop.f32.mrb[0].mxu0
        %v7416 = vadd.f32 %v6023, %v7415
        %v7417 = vpop.f32.mrb[0].mxu0
        %v7418 = vpop.f32.mrb[0].mxu0
        %v7419 = vadd.f32 %v6023, %v7418
        %v7420 = vpop.f32.mrb[0].mxu0
        %7421 = vmatprep.mubr.bf16.mxu0 0
        %7422 = vmatmul.mubr.bf16.gmra.mrb[0].mxu0 %v6401
        %v7423 = vpop.f32.mrb[0].mxu0
        %v7424 = vadd.f32 %v6023, %v7423
        %v7425 = vpop.f32.mrb[0].mxu0
        %v7426 = vpop.f32.mrb[0].mxu0
        %v7427 = vadd.f32 %v6023, %v7426
        %v7428 = vpop.f32.mrb[0].mxu0
        %7429 = vmatprep.mubr.bf16.mxu0 0
        %7430 = vmatmul.mubr.bf16.gmra.mrb[0].mxu0 %v6404
        %v7431 = vpop.f32.mrb[0].mxu0
        %v7432 = vadd.f32 %v6023, %v7431
        %v7433 = vpop.f32.mrb[0].mxu0
        %v7434 = vpop.f32.mrb[0].mxu0
        %v7435 = vadd.f32 %v6023, %v7434
        %v7436 = vpop.f32.mrb[0].mxu0
        %7437 = vmatprep.mubr.bf16.mxu0 0
        %7438 = vmatmul.mubr.bf16.gmra.mrb[0].mxu0 %v6407
        %v7439 = vpop.f32.mrb[0].mxu0
        %v7440 = vadd.f32 %v6023, %v7439
        %v7441 = vpop.f32.mrb[0].mxu0
        %v7442 = vpop.f32.mrb[0].mxu0
        %v7443 = vadd.f32 %v6023, %v7442
        %v7444 = vpop.f32.mrb[0].mxu0
        %7445 = vmatprep.mubr.bf16.mxu0 0
        %7446 = vmatmul.mubr.bf16.gmra.mrb[0].mxu0 %v6410
        %v7447 = vpop.f32.mrb[0].mxu0
        %v7448 = vadd.f32 %v6023, %v7447
        %v7449 = vpop.f32.mrb[0].mxu0
        %v7450 = vpop.f32.mrb[0].mxu0
        %v7451 = vadd.f32 %v6023, %v7450
        %v7452 = vpop.f32.mrb[0].mxu0
        %7453 = vmatprep.mubr.bf16.mxu0 0
        %7454 = vmatmul.mubr.bf16.gmra.mrb[0].mxu0 %v6413
        %v7455 = vpop.f32.mrb[0].mxu0
        %v7456 = vadd.f32 %v6023, %v7455
        %v7457 = vpop.f32.mrb[0].mxu0
        %v7458 = vpop.f32.mrb[0].mxu0
        %v7459 = vadd.f32 %v6023, %v7458
        %v7460 = vpop.f32.mrb[0].mxu0
        %7461 = vmatprep.mubr.bf16.mxu0 0
        %7462 = vmatmul.mubr.bf16.gmra.mrb[0].mxu0 %v6416
        %v7463 = vpop.f32.mrb[0].mxu0
        %v7464 = vadd.f32 %v6023, %v7463
        %v7465 = vpop.f32.mrb[0].mxu0
        %v7466 = vpop.f32.mrb[0].mxu0
        %v7467 = vadd.f32 %v6023, %v7466
        %v7468 = vpop.f32.mrb[0].mxu0
        %7469 = vmatprep.mubr.bf16.mxu0 0
        %7470 = vmatmul.mubr.bf16.gmra.mrb[0].mxu0 %v6419
        %v7471 = vpop.f32.mrb[0].mxu0
        %v7472 = vadd.f32 %v6023, %v7471
        %v7473 = vpop.f32.mrb[0].mxu0
        %v7474 = vpop.f32.mrb[0].mxu0
        %v7475 = vadd.f32 %v6023, %v7474
        %v7476 = vpop.f32.mrb[0].mxu0
        %7477 = vdwg.mxu0
        %v7478 = vld [vmem:[%s1384] sm:$0xff]
        %v7479 = vld [vmem:[%s1384 + $0x8] sm:$0xff]
        %v7480 = vld [vmem:[%s1384 + $0x10] sm:$0xff]
        %v7481 = vld [vmem:[%s1384 + $0x18] sm:$0xff]
        %v7482 = vld [vmem:[%s1384 + $0x20] sm:$0xff]
        %v7483 = vld [vmem:[%s1384 + $0x28] sm:$0xff]
        %v7484 = vld [vmem:[%s1384 + $0x30] sm:$0xff]
        %v7485 = vld [vmem:[%s1384 + $0x38] sm:$0xff]
        %v7486 = vld [vmem:[%s1384 + $0x40] sm:$0xff]
        %v7487 = vld [vmem:[%s1384 + $0x48] sm:$0xff]
        %v7488 = vld [vmem:[%s1384 + $0x50] sm:$0xff]
        %v7489 = vld [vmem:[%s1384 + $0x58] sm:$0xff]
        %v7490 = vld [vmem:[%s1384 + $0x60] sm:$0xff]
        %v7491 = vld [vmem:[%s1384 + $0x68] sm:$0xff]
        %v7492 = vld [vmem:[%s1384 + $0x70] sm:$0xff]
        %v7493 = vld [vmem:[%s1384 + $0x78] sm:$0xff]
        %v7494 = vld [vmem:[%s1384 + $0x80] sm:$0xff]
        %v7495 = vld [vmem:[%s1384 + $0x88] sm:$0xff]
        %v7496 = vld [vmem:[%s1384 + $0x90] sm:$0xff]
        %v7497 = vld [vmem:[%s1384 + $0x98] sm:$0xff]
        %v7498 = vld [vmem:[%s1384 + $0xa0] sm:$0xff]
        %v7499 = vld [vmem:[%s1384 + $0xa8] sm:$0xff]
        %v7500 = vld [vmem:[%s1384 + $0xb0] sm:$0xff]
        %v7501 = vld [vmem:[%s1384 + $0xb8] sm:$0xff]
        %v7502 = vld [vmem:[%s1384 + $0xc0] sm:$0xff]
        %v7503 = vld [vmem:[%s1384 + $0xc8] sm:$0xff]
        %v7504 = vld [vmem:[%s1384 + $0xd0] sm:$0xff]
        %v7505 = vld [vmem:[%s1384 + $0xd8] sm:$0xff]
        %v7506 = vld [vmem:[%s1384 + $0xe0] sm:$0xff]
        %v7507 = vld [vmem:[%s1384 + $0xe8] sm:$0xff]
        %v7508 = vld [vmem:[%s1384 + $0xf0] sm:$0xff]
        %v7509 = vld [vmem:[%s1384 + $0xf8] sm:$0xff]
        %v7510 = vld [vmem:[%s1384 + $0x100] sm:$0xff]
        %v7511 = vld [vmem:[%s1384 + $0x108] sm:$0xff]
        %v7512 = vld [vmem:[%s1384 + $0x110] sm:$0xff]
        %v7513 = vld [vmem:[%s1384 + $0x118] sm:$0xff]
        %v7514 = vld [vmem:[%s1384 + $0x120] sm:$0xff]
        %v7515 = vld [vmem:[%s1384 + $0x128] sm:$0xff]
        %v7516 = vld [vmem:[%s1384 + $0x130] sm:$0xff]
        %v7517 = vld [vmem:[%s1384 + $0x138] sm:$0xff]
        %v7518 = vld [vmem:[%s1384 + $0x140] sm:$0xff]
        %v7519 = vld [vmem:[%s1384 + $0x148] sm:$0xff]
        %v7520 = vld [vmem:[%s1384 + $0x150] sm:$0xff]
        %v7521 = vld [vmem:[%s1384 + $0x158] sm:$0xff]
        %v7522 = vld [vmem:[%s1384 + $0x160] sm:$0xff]
        %v7523 = vld [vmem:[%s1384 + $0x168] sm:$0xff]
        %v7524 = vld [vmem:[%s1384 + $0x170] sm:$0xff]
        %v7525 = vld [vmem:[%s1384 + $0x178] sm:$0xff]
        %v7526 = vld [vmem:[%s1384 + $0x180] sm:$0xff]
        %v7527 = vld [vmem:[%s1384 + $0x188] sm:$0xff]
        %v7528 = vld [vmem:[%s1384 + $0x190] sm:$0xff]
        %v7529 = vld [vmem:[%s1384 + $0x198] sm:$0xff]
        %v7530 = vld [vmem:[%s1384 + $0x1a0] sm:$0xff]
        %v7531 = vld [vmem:[%s1384 + $0x1a8] sm:$0xff]
        %v7532 = vld [vmem:[%s1384 + $0x1b0] sm:$0xff]
        %v7533 = vld [vmem:[%s1384 + $0x1b8] sm:$0xff]
        %v7534 = vld [vmem:[%s1384 + $0x1c0] sm:$0xff]
        %v7535 = vld [vmem:[%s1384 + $0x1c8] sm:$0xff]
        %v7536 = vld [vmem:[%s1384 + $0x1d0] sm:$0xff]
        %v7537 = vld [vmem:[%s1384 + $0x1d8] sm:$0xff]
        %v7538 = vld [vmem:[%s1384 + $0x1e0] sm:$0xff]
        %v7539 = vld [vmem:[%s1384 + $0x1e8] sm:$0xff]
        %v7540 = vld [vmem:[%s1384 + $0x1f0] sm:$0xff]
        %v7541 = vld [vmem:[%s1384 + $0x1f8] sm:$0xff]
        %v7542 = vadd.f32 %v7478, 1e-09
        %v7543 = vadd.f32 %v7479, 1e-09
        %v7544 = vadd.f32 %v7480, 1e-09
        %v7545 = vadd.f32 %v7481, 1e-09
        %v7546 = vadd.f32 %v7482, 1e-09
        %v7547 = vadd.f32 %v7483, 1e-09
        %v7548 = vadd.f32 %v7484, 1e-09
        %v7549 = vadd.f32 %v7485, 1e-09
        %v7550 = vadd.f32 %v7486, 1e-09
        %v7551 = vadd.f32 %v7487, 1e-09
        %v7552 = vadd.f32 %v7488, 1e-09
        %v7553 = vadd.f32 %v7489, 1e-09
        %v7554 = vadd.f32 %v7490, 1e-09
        %v7555 = vadd.f32 %v7491, 1e-09
        %v7556 = vadd.f32 %v7492, 1e-09
        %v7557 = vadd.f32 %v7493, 1e-09
        %v7558 = vadd.f32 %v7494, 1e-09
        %v7559 = vadd.f32 %v7495, 1e-09
        %v7560 = vadd.f32 %v7496, 1e-09
        %v7561 = vadd.f32 %v7497, 1e-09
        %v7562 = vadd.f32 %v7498, 1e-09
        %v7563 = vadd.f32 %v7499, 1e-09
        %v7564 = vadd.f32 %v7500, 1e-09
        %v7565 = vadd.f32 %v7501, 1e-09
        %v7566 = vadd.f32 %v7502, 1e-09
        %v7567 = vadd.f32 %v7503, 1e-09
        %v7568 = vadd.f32 %v7504, 1e-09
        %v7569 = vadd.f32 %v7505, 1e-09
        %v7570 = vadd.f32 %v7506, 1e-09
        %v7571 = vadd.f32 %v7507, 1e-09
        %v7572 = vadd.f32 %v7508, 1e-09
        %v7573 = vadd.f32 %v7509, 1e-09
        %v7574 = vadd.f32 %v7510, 1e-09
        %v7575 = vadd.f32 %v7511, 1e-09
        %v7576 = vadd.f32 %v7512, 1e-09
        %v7577 = vadd.f32 %v7513, 1e-09
        %v7578 = vadd.f32 %v7514, 1e-09
        %v7579 = vadd.f32 %v7515, 1e-09
        %v7580 = vadd.f32 %v7516, 1e-09
        %v7581 = vadd.f32 %v7517, 1e-09
        %v7582 = vadd.f32 %v7518, 1e-09
        %v7583 = vadd.f32 %v7519, 1e-09
        %v7584 = vadd.f32 %v7520, 1e-09
        %v7585 = vadd.f32 %v7521, 1e-09
        %v7586 = vadd.f32 %v7522, 1e-09
        %v7587 = vadd.f32 %v7523, 1e-09
        %v7588 = vadd.f32 %v7524, 1e-09
        %v7589 = vadd.f32 %v7525, 1e-09
        %v7590 = vadd.f32 %v7526, 1e-09
        %v7591 = vadd.f32 %v7527, 1e-09
        %v7592 = vadd.f32 %v7528, 1e-09
        %v7593 = vadd.f32 %v7529, 1e-09
        %v7594 = vadd.f32 %v7530, 1e-09
        %v7595 = vadd.f32 %v7531, 1e-09
        %v7596 = vadd.f32 %v7532, 1e-09
        %v7597 = vadd.f32 %v7533, 1e-09
        %v7598 = vadd.f32 %v7534, 1e-09
        %v7599 = vadd.f32 %v7535, 1e-09
        %v7600 = vadd.f32 %v7536, 1e-09
        %v7601 = vadd.f32 %v7537, 1e-09
        %v7602 = vadd.f32 %v7538, 1e-09
        %v7603 = vadd.f32 %v7539, 1e-09
        %v7604 = vadd.f32 %v7540, 1e-09
        %v7605 = vadd.f32 %v7541, 1e-09
        %7670 = vrot.lane.b32.xlu0 %v7542, 127
        %v7671 = vpop.permute.xlu0 %7670
        %7672 = vrot.lane.b32.xlu0 %v7543, 127
        %v7673 = vpop.permute.xlu0 %7672
        %7674 = vrot.lane.b32.xlu0 %v7544, 127
        %v7675 = vpop.permute.xlu0 %7674
        %7676 = vrot.lane.b32.xlu0 %v7545, 127
        %v7677 = vpop.permute.xlu0 %7676
        %7678 = vrot.lane.b32.xlu0 %v7546, 127
        %v7679 = vpop.permute.xlu0 %7678
        %7680 = vrot.lane.b32.xlu0 %v7547, 127
        %v7681 = vpop.permute.xlu0 %7680
        %7682 = vrot.lane.b32.xlu0 %v7548, 127
        %v7683 = vpop.permute.xlu0 %7682
        %7684 = vrot.lane.b32.xlu0 %v7549, 127
        %v7685 = vpop.permute.xlu0 %7684
        %7686 = vrot.lane.b32.xlu0 %v7550, 127
        %v7687 = vpop.permute.xlu0 %7686
        %7688 = vrot.lane.b32.xlu0 %v7551, 127
        %v7689 = vpop.permute.xlu0 %7688
        %7690 = vrot.lane.b32.xlu0 %v7552, 127
        %v7691 = vpop.permute.xlu0 %7690
        %7692 = vrot.lane.b32.xlu0 %v7553, 127
        %v7693 = vpop.permute.xlu0 %7692
        %7694 = vrot.lane.b32.xlu0 %v7554, 127
        %v7695 = vpop.permute.xlu0 %7694
        %7696 = vrot.lane.b32.xlu0 %v7555, 127
        %v7697 = vpop.permute.xlu0 %7696
        %7698 = vrot.lane.b32.xlu0 %v7556, 127
        %v7699 = vpop.permute.xlu0 %7698
        %7700 = vrot.lane.b32.xlu0 %v7557, 127
        %v7701 = vpop.permute.xlu0 %7700
        %7702 = vrot.lane.b32.xlu0 %v7558, 127
        %v7703 = vpop.permute.xlu0 %7702
        %7704 = vrot.lane.b32.xlu0 %v7559, 127
        %v7705 = vpop.permute.xlu0 %7704
        %7706 = vrot.lane.b32.xlu0 %v7560, 127
        %v7707 = vpop.permute.xlu0 %7706
        %7708 = vrot.lane.b32.xlu0 %v7561, 127
        %v7709 = vpop.permute.xlu0 %7708
        %7710 = vrot.lane.b32.xlu0 %v7562, 127
        %v7711 = vpop.permute.xlu0 %7710
        %7712 = vrot.lane.b32.xlu0 %v7563, 127
        %v7713 = vpop.permute.xlu0 %7712
        %7714 = vrot.lane.b32.xlu0 %v7564, 127
        %v7715 = vpop.permute.xlu0 %7714
        %7716 = vrot.lane.b32.xlu0 %v7565, 127
        %v7717 = vpop.permute.xlu0 %7716
        %7718 = vrot.lane.b32.xlu0 %v7566, 127
        %v7719 = vpop.permute.xlu0 %7718
        %7720 = vrot.lane.b32.xlu0 %v7567, 127
        %v7721 = vpop.permute.xlu0 %7720
        %7722 = vrot.lane.b32.xlu0 %v7568, 127
        %v7723 = vpop.permute.xlu0 %7722
        %7724 = vrot.lane.b32.xlu0 %v7569, 127
        %v7725 = vpop.permute.xlu0 %7724
        %7726 = vrot.lane.b32.xlu0 %v7570, 127
        %v7727 = vpop.permute.xlu0 %7726
        %7728 = vrot.lane.b32.xlu0 %v7571, 127
        %v7729 = vpop.permute.xlu0 %7728
        %7730 = vrot.lane.b32.xlu0 %v7572, 127
        %v7731 = vpop.permute.xlu0 %7730
        %7732 = vrot.lane.b32.xlu0 %v7573, 127
        %v7733 = vpop.permute.xlu0 %7732
        %7734 = vrot.lane.b32.xlu0 %v7574, 127
        %v7735 = vpop.permute.xlu0 %7734
        %7736 = vrot.lane.b32.xlu0 %v7575, 127
        %v7737 = vpop.permute.xlu0 %7736
        %7738 = vrot.lane.b32.xlu0 %v7576, 127
        %v7739 = vpop.permute.xlu0 %7738
        %7740 = vrot.lane.b32.xlu0 %v7577, 127
        %v7741 = vpop.permute.xlu0 %7740
        %7742 = vrot.lane.b32.xlu0 %v7578, 127
        %v7743 = vpop.permute.xlu0 %7742
        %7744 = vrot.lane.b32.xlu0 %v7579, 127
        %v7745 = vpop.permute.xlu0 %7744
        %7746 = vrot.lane.b32.xlu0 %v7580, 127
        %v7747 = vpop.permute.xlu0 %7746
        %7748 = vrot.lane.b32.xlu0 %v7581, 127
        %v7749 = vpop.permute.xlu0 %7748
        %7750 = vrot.lane.b32.xlu0 %v7582, 127
        %v7751 = vpop.permute.xlu0 %7750
        %7752 = vrot.lane.b32.xlu0 %v7583, 127
        %v7753 = vpop.permute.xlu0 %7752
        %7754 = vrot.lane.b32.xlu0 %v7584, 127
        %v7755 = vpop.permute.xlu0 %7754
        %7756 = vrot.lane.b32.xlu0 %v7585, 127
        %v7757 = vpop.permute.xlu0 %7756
        %7758 = vrot.lane.b32.xlu0 %v7586, 127
        %v7759 = vpop.permute.xlu0 %7758
        %7760 = vrot.lane.b32.xlu0 %v7587, 127
        %v7761 = vpop.permute.xlu0 %7760
        %7762 = vrot.lane.b32.xlu0 %v7588, 127
        %v7763 = vpop.permute.xlu0 %7762
        %7764 = vrot.lane.b32.xlu0 %v7589, 127
        %v7765 = vpop.permute.xlu0 %7764
        %7766 = vrot.lane.b32.xlu0 %v7590, 127
        %v7767 = vpop.permute.xlu0 %7766
        %7768 = vrot.lane.b32.xlu0 %v7591, 127
        %v7769 = vpop.permute.xlu0 %7768
        %7770 = vrot.lane.b32.xlu0 %v7592, 127
        %v7771 = vpop.permute.xlu0 %7770
        %7772 = vrot.lane.b32.xlu0 %v7593, 127
        %v7773 = vpop.permute.xlu0 %7772
        %7774 = vrot.lane.b32.xlu0 %v7594, 127
        %v7775 = vpop.permute.xlu0 %7774
        %7776 = vrot.lane.b32.xlu0 %v7595, 127
        %v7777 = vpop.permute.xlu0 %7776
        %7778 = vrot.lane.b32.xlu0 %v7596, 127
        %v7779 = vpop.permute.xlu0 %7778
        %7780 = vrot.lane.b32.xlu0 %v7597, 127
        %v7781 = vpop.permute.xlu0 %7780
        %7782 = vrot.lane.b32.xlu0 %v7598, 127
        %v7783 = vpop.permute.xlu0 %7782
        %7784 = vrot.lane.b32.xlu0 %v7599, 127
        %v7785 = vpop.permute.xlu0 %7784
        %7786 = vrot.lane.b32.xlu0 %v7600, 127
        %v7787 = vpop.permute.xlu0 %7786
        %7788 = vrot.lane.b32.xlu0 %v7601, 127
        %v7789 = vpop.permute.xlu0 %7788
        %7790 = vrot.lane.b32.xlu0 %v7602, 127
        %v7791 = vpop.permute.xlu0 %7790
        %7792 = vrot.lane.b32.xlu0 %v7603, 127
        %v7793 = vpop.permute.xlu0 %7792
        %7794 = vrot.lane.b32.xlu0 %v7604, 127
        %v7795 = vpop.permute.xlu0 %7794
        %7796 = vrot.lane.b32.xlu0 %v7605, 127
        %v7797 = vpop.permute.xlu0 %7796
        %v7862 = vadd.f32 %v7542, %v7671
        %v7863 = vadd.f32 %v7543, %v7673
        %v7864 = vadd.f32 %v7544, %v7675
        %v7865 = vadd.f32 %v7545, %v7677
        %v7866 = vadd.f32 %v7546, %v7679
        %v7867 = vadd.f32 %v7547, %v7681
        %v7868 = vadd.f32 %v7548, %v7683
        %v7869 = vadd.f32 %v7549, %v7685
        %v7870 = vadd.f32 %v7550, %v7687
        %v7871 = vadd.f32 %v7551, %v7689
        %v7872 = vadd.f32 %v7552, %v7691
        %v7873 = vadd.f32 %v7553, %v7693
        %v7874 = vadd.f32 %v7554, %v7695
        %v7875 = vadd.f32 %v7555, %v7697
        %v7876 = vadd.f32 %v7556, %v7699
        %v7877 = vadd.f32 %v7557, %v7701
        %v7878 = vadd.f32 %v7558, %v7703
        %v7879 = vadd.f32 %v7559, %v7705
        %v7880 = vadd.f32 %v7560, %v7707
        %v7881 = vadd.f32 %v7561, %v7709
        %v7882 = vadd.f32 %v7562, %v7711
        %v7883 = vadd.f32 %v7563, %v7713
        %v7884 = vadd.f32 %v7564, %v7715
        %v7885 = vadd.f32 %v7565, %v7717
        %v7886 = vadd.f32 %v7566, %v7719
        %v7887 = vadd.f32 %v7567, %v7721
        %v7888 = vadd.f32 %v7568, %v7723
        %v7889 = vadd.f32 %v7569, %v7725
        %v7890 = vadd.f32 %v7570, %v7727
        %v7891 = vadd.f32 %v7571, %v7729
        %v7892 = vadd.f32 %v7572, %v7731
        %v7893 = vadd.f32 %v7573, %v7733
        %v7894 = vadd.f32 %v7574, %v7735
        %v7895 = vadd.f32 %v7575, %v7737
        %v7896 = vadd.f32 %v7576, %v7739
        %v7897 = vadd.f32 %v7577, %v7741
        %v7898 = vadd.f32 %v7578, %v7743
        %v7899 = vadd.f32 %v7579, %v7745
        %v7900 = vadd.f32 %v7580, %v7747
        %v7901 = vadd.f32 %v7581, %v7749
        %v7902 = vadd.f32 %v7582, %v7751
        %v7903 = vadd.f32 %v7583, %v7753
        %v7904 = vadd.f32 %v7584, %v7755
        %v7905 = vadd.f32 %v7585, %v7757
        %v7906 = vadd.f32 %v7586, %v7759
        %v7907 = vadd.f32 %v7587, %v7761
        %v7908 = vadd.f32 %v7588, %v7763
        %v7909 = vadd.f32 %v7589, %v7765
        %v7910 = vadd.f32 %v7590, %v7767
        %v7911 = vadd.f32 %v7591, %v7769
        %v7912 = vadd.f32 %v7592, %v7771
        %v7913 = vadd.f32 %v7593, %v7773
        %v7914 = vadd.f32 %v7594, %v7775
        %v7915 = vadd.f32 %v7595, %v7777
        %v7916 = vadd.f32 %v7596, %v7779
        %v7917 = vadd.f32 %v7597, %v7781
        %v7918 = vadd.f32 %v7598, %v7783
        %v7919 = vadd.f32 %v7599, %v7785
        %v7920 = vadd.f32 %v7600, %v7787
        %v7921 = vadd.f32 %v7601, %v7789
        %v7922 = vadd.f32 %v7602, %v7791
        %v7923 = vadd.f32 %v7603, %v7793
        %v7924 = vadd.f32 %v7604, %v7795
        %v7925 = vadd.f32 %v7605, %v7797
        %7926 = vrot.lane.b32.xlu0 %v7542, 126
        %v7927 = vpop.permute.xlu0 %7926
        %7928 = vrot.lane.b32.xlu0 %v7543, 126
        %v7929 = vpop.permute.xlu0 %7928
        %7930 = vrot.lane.b32.xlu0 %v7544, 126
        %v7931 = vpop.permute.xlu0 %7930
        %7932 = vrot.lane.b32.xlu0 %v7545, 126
        %v7933 = vpop.permute.xlu0 %7932
        %7934 = vrot.lane.b32.xlu0 %v7546, 126
        %v7935 = vpop.permute.xlu0 %7934
        %7936 = vrot.lane.b32.xlu0 %v7547, 126
        %v7937 = vpop.permute.xlu0 %7936
        %7938 = vrot.lane.b32.xlu0 %v7548, 126
        %v7939 = vpop.permute.xlu0 %7938
        %7940 = vrot.lane.b32.xlu0 %v7549, 126
        %v7941 = vpop.permute.xlu0 %7940
        %7942 = vrot.lane.b32.xlu0 %v7550, 126
        %v7943 = vpop.permute.xlu0 %7942
        %7944 = vrot.lane.b32.xlu0 %v7551, 126
        %v7945 = vpop.permute.xlu0 %7944
        %7946 = vrot.lane.b32.xlu0 %v7552, 126
        %v7947 = vpop.permute.xlu0 %7946
        %7948 = vrot.lane.b32.xlu0 %v7553, 126
        %v7949 = vpop.permute.xlu0 %7948
        %7950 = vrot.lane.b32.xlu0 %v7554, 126
        %v7951 = vpop.permute.xlu0 %7950
        %7952 = vrot.lane.b32.xlu0 %v7555, 126
        %v7953 = vpop.permute.xlu0 %7952
        %7954 = vrot.lane.b32.xlu0 %v7556, 126
        %v7955 = vpop.permute.xlu0 %7954
        %7956 = vrot.lane.b32.xlu0 %v7557, 126
        %v7957 = vpop.permute.xlu0 %7956
        %7958 = vrot.lane.b32.xlu0 %v7558, 126
        %v7959 = vpop.permute.xlu0 %7958
        %7960 = vrot.lane.b32.xlu0 %v7559, 126
        %v7961 = vpop.permute.xlu0 %7960
        %7962 = vrot.lane.b32.xlu0 %v7560, 126
        %v7963 = vpop.permute.xlu0 %7962
        %7964 = vrot.lane.b32.xlu0 %v7561, 126
        %v7965 = vpop.permute.xlu0 %7964
        %7966 = vrot.lane.b32.xlu0 %v7562, 126
        %v7967 = vpop.permute.xlu0 %7966
        %7968 = vrot.lane.b32.xlu0 %v7563, 126
        %v7969 = vpop.permute.xlu0 %7968
        %7970 = vrot.lane.b32.xlu0 %v7564, 126
        %v7971 = vpop.permute.xlu0 %7970
        %7972 = vrot.lane.b32.xlu0 %v7565, 126
        %v7973 = vpop.permute.xlu0 %7972
        %7974 = vrot.lane.b32.xlu0 %v7566, 126
        %v7975 = vpop.permute.xlu0 %7974
        %7976 = vrot.lane.b32.xlu0 %v7567, 126
        %v7977 = vpop.permute.xlu0 %7976
        %7978 = vrot.lane.b32.xlu0 %v7568, 126
        %v7979 = vpop.permute.xlu0 %7978
        %7980 = vrot.lane.b32.xlu0 %v7569, 126
        %v7981 = vpop.permute.xlu0 %7980
        %7982 = vrot.lane.b32.xlu0 %v7570, 126
        %v7983 = vpop.permute.xlu0 %7982
        %7984 = vrot.lane.b32.xlu0 %v7571, 126
        %v7985 = vpop.permute.xlu0 %7984
        %7986 = vrot.lane.b32.xlu0 %v7572, 126
        %v7987 = vpop.permute.xlu0 %7986
        %7988 = vrot.lane.b32.xlu0 %v7573, 126
        %v7989 = vpop.permute.xlu0 %7988
        %7990 = vrot.lane.b32.xlu0 %v7574, 126
        %v7991 = vpop.permute.xlu0 %7990
        %7992 = vrot.lane.b32.xlu0 %v7575, 126
        %v7993 = vpop.permute.xlu0 %7992
        %7994 = vrot.lane.b32.xlu0 %v7576, 126
        %v7995 = vpop.permute.xlu0 %7994
        %7996 = vrot.lane.b32.xlu0 %v7577, 126
        %v7997 = vpop.permute.xlu0 %7996
        %7998 = vrot.lane.b32.xlu0 %v7578, 126
        %v7999 = vpop.permute.xlu0 %7998
        %8000 = vrot.lane.b32.xlu0 %v7579, 126
        %v8001 = vpop.permute.xlu0 %8000
        %8002 = vrot.lane.b32.xlu0 %v7580, 126
        %v8003 = vpop.permute.xlu0 %8002
        %8004 = vrot.lane.b32.xlu0 %v7581, 126
        %v8005 = vpop.permute.xlu0 %8004
        %8006 = vrot.lane.b32.xlu0 %v7582, 126
        %v8007 = vpop.permute.xlu0 %8006
        %8008 = vrot.lane.b32.xlu0 %v7583, 126
        %v8009 = vpop.permute.xlu0 %8008
        %8010 = vrot.lane.b32.xlu0 %v7584, 126
        %v8011 = vpop.permute.xlu0 %8010
        %8012 = vrot.lane.b32.xlu0 %v7585, 126
        %v8013 = vpop.permute.xlu0 %8012
        %8014 = vrot.lane.b32.xlu0 %v7586, 126
        %v8015 = vpop.permute.xlu0 %8014
        %8016 = vrot.lane.b32.xlu0 %v7587, 126
        %v8017 = vpop.permute.xlu0 %8016
        %8018 = vrot.lane.b32.xlu0 %v7588, 126
        %v8019 = vpop.permute.xlu0 %8018
        %8020 = vrot.lane.b32.xlu0 %v7589, 126
        %v8021 = vpop.permute.xlu0 %8020
        %8022 = vrot.lane.b32.xlu0 %v7590, 126
        %v8023 = vpop.permute.xlu0 %8022
        %8024 = vrot.lane.b32.xlu0 %v7591, 126
        %v8025 = vpop.permute.xlu0 %8024
        %8026 = vrot.lane.b32.xlu0 %v7592, 126
        %v8027 = vpop.permute.xlu0 %8026
        %8028 = vrot.lane.b32.xlu0 %v7593, 126
        %v8029 = vpop.permute.xlu0 %8028
        %8030 = vrot.lane.b32.xlu0 %v7594, 126
        %v8031 = vpop.permute.xlu0 %8030
        %8032 = vrot.lane.b32.xlu0 %v7595, 126
        %v8033 = vpop.permute.xlu0 %8032
        %8034 = vrot.lane.b32.xlu0 %v7596, 126
        %v8035 = vpop.permute.xlu0 %8034
        %8036 = vrot.lane.b32.xlu0 %v7597, 126
        %v8037 = vpop.permute.xlu0 %8036
        %8038 = vrot.lane.b32.xlu0 %v7598, 126
        %v8039 = vpop.permute.xlu0 %8038
        %8040 = vrot.lane.b32.xlu0 %v7599, 126
        %v8041 = vpop.permute.xlu0 %8040
        %8042 = vrot.lane.b32.xlu0 %v7600, 126
        %v8043 = vpop.permute.xlu0 %8042
        %8044 = vrot.lane.b32.xlu0 %v7601, 126
        %v8045 = vpop.permute.xlu0 %8044
        %8046 = vrot.lane.b32.xlu0 %v7602, 126
        %v8047 = vpop.permute.xlu0 %8046
        %8048 = vrot.lane.b32.xlu0 %v7603, 126
        %v8049 = vpop.permute.xlu0 %8048
        %8050 = vrot.lane.b32.xlu0 %v7604, 126
        %v8051 = vpop.permute.xlu0 %8050
        %8052 = vrot.lane.b32.xlu0 %v7605, 126
        %v8053 = vpop.permute.xlu0 %8052
        %v8118 = vadd.f32 %v7862, %v7927
        %v8119 = vadd.f32 %v7863, %v7929
        %v8120 = vadd.f32 %v7864, %v7931
        %v8121 = vadd.f32 %v7865, %v7933
        %v8122 = vadd.f32 %v7866, %v7935
        %v8123 = vadd.f32 %v7867, %v7937
        %v8124 = vadd.f32 %v7868, %v7939
        %v8125 = vadd.f32 %v7869, %v7941
        %v8126 = vadd.f32 %v7870, %v7943
        %v8127 = vadd.f32 %v7871, %v7945
        %v8128 = vadd.f32 %v7872, %v7947
        %v8129 = vadd.f32 %v7873, %v7949
        %v8130 = vadd.f32 %v7874, %v7951
        %v8131 = vadd.f32 %v7875, %v7953
        %v8132 = vadd.f32 %v7876, %v7955
        %v8133 = vadd.f32 %v7877, %v7957
        %v8134 = vadd.f32 %v7878, %v7959
        %v8135 = vadd.f32 %v7879, %v7961
        %v8136 = vadd.f32 %v7880, %v7963
        %v8137 = vadd.f32 %v7881, %v7965
        %v8138 = vadd.f32 %v7882, %v7967
        %v8139 = vadd.f32 %v7883, %v7969
        %v8140 = vadd.f32 %v7884, %v7971
        %v8141 = vadd.f32 %v7885, %v7973
        %v8142 = vadd.f32 %v7886, %v7975
        %v8143 = vadd.f32 %v7887, %v7977
        %v8144 = vadd.f32 %v7888, %v7979
        %v8145 = vadd.f32 %v7889, %v7981
        %v8146 = vadd.f32 %v7890, %v7983
        %v8147 = vadd.f32 %v7891, %v7985
        %v8148 = vadd.f32 %v7892, %v7987
        %v8149 = vadd.f32 %v7893, %v7989
        %v8150 = vadd.f32 %v7894, %v7991
        %v8151 = vadd.f32 %v7895, %v7993
        %v8152 = vadd.f32 %v7896, %v7995
        %v8153 = vadd.f32 %v7897, %v7997
        %v8154 = vadd.f32 %v7898, %v7999
        %v8155 = vadd.f32 %v7899, %v8001
        %v8156 = vadd.f32 %v7900, %v8003
        %v8157 = vadd.f32 %v7901, %v8005
        %v8158 = vadd.f32 %v7902, %v8007
        %v8159 = vadd.f32 %v7903, %v8009
        %v8160 = vadd.f32 %v7904, %v8011
        %v8161 = vadd.f32 %v7905, %v8013
        %v8162 = vadd.f32 %v7906, %v8015
        %v8163 = vadd.f32 %v7907, %v8017
        %v8164 = vadd.f32 %v7908, %v8019
        %v8165 = vadd.f32 %v7909, %v8021
        %v8166 = vadd.f32 %v7910, %v8023
        %v8167 = vadd.f32 %v7911, %v8025
        %v8168 = vadd.f32 %v7912, %v8027
        %v8169 = vadd.f32 %v7913, %v8029
        %v8170 = vadd.f32 %v7914, %v8031
        %v8171 = vadd.f32 %v7915, %v8033
        %v8172 = vadd.f32 %v7916, %v8035
        %v8173 = vadd.f32 %v7917, %v8037
        %v8174 = vadd.f32 %v7918, %v8039
        %v8175 = vadd.f32 %v7919, %v8041
        %v8176 = vadd.f32 %v7920, %v8043
        %v8177 = vadd.f32 %v7921, %v8045
        %v8178 = vadd.f32 %v7922, %v8047
        %v8179 = vadd.f32 %v7923, %v8049
        %v8180 = vadd.f32 %v7924, %v8051
        %v8181 = vadd.f32 %v7925, %v8053
        %8182 = vrot.lane.b32.xlu0 %v7542, 125
        %v8183 = vpop.permute.xlu0 %8182
        %8184 = vrot.lane.b32.xlu0 %v7543, 125
        %v8185 = vpop.permute.xlu0 %8184
        %8186 = vrot.lane.b32.xlu0 %v7544, 125
        %v8187 = vpop.permute.xlu0 %8186
        %8188 = vrot.lane.b32.xlu0 %v7545, 125
        %v8189 = vpop.permute.xlu0 %8188
        %8190 = vrot.lane.b32.xlu0 %v7546, 125
        %v8191 = vpop.permute.xlu0 %8190
        %8192 = vrot.lane.b32.xlu0 %v7547, 125
        %v8193 = vpop.permute.xlu0 %8192
        %8194 = vrot.lane.b32.xlu0 %v7548, 125
        %v8195 = vpop.permute.xlu0 %8194
        %8196 = vrot.lane.b32.xlu0 %v7549, 125
        %v8197 = vpop.permute.xlu0 %8196
        %8198 = vrot.lane.b32.xlu0 %v7550, 125
        %v8199 = vpop.permute.xlu0 %8198
        %8200 = vrot.lane.b32.xlu0 %v7551, 125
        %v8201 = vpop.permute.xlu0 %8200
        %8202 = vrot.lane.b32.xlu0 %v7552, 125
        %v8203 = vpop.permute.xlu0 %8202
        %8204 = vrot.lane.b32.xlu0 %v7553, 125
        %v8205 = vpop.permute.xlu0 %8204
        %8206 = vrot.lane.b32.xlu0 %v7554, 125
        %v8207 = vpop.permute.xlu0 %8206
        %8208 = vrot.lane.b32.xlu0 %v7555, 125
        %v8209 = vpop.permute.xlu0 %8208
        %8210 = vrot.lane.b32.xlu0 %v7556, 125
        %v8211 = vpop.permute.xlu0 %8210
        %8212 = vrot.lane.b32.xlu0 %v7557, 125
        %v8213 = vpop.permute.xlu0 %8212
        %8214 = vrot.lane.b32.xlu0 %v7558, 125
        %v8215 = vpop.permute.xlu0 %8214
        %8216 = vrot.lane.b32.xlu0 %v7559, 125
        %v8217 = vpop.permute.xlu0 %8216
        %8218 = vrot.lane.b32.xlu0 %v7560, 125
        %v8219 = vpop.permute.xlu0 %8218
        %8220 = vrot.lane.b32.xlu0 %v7561, 125
        %v8221 = vpop.permute.xlu0 %8220
        %8222 = vrot.lane.b32.xlu0 %v7562, 125
        %v8223 = vpop.permute.xlu0 %8222
        %8224 = vrot.lane.b32.xlu0 %v7563, 125
        %v8225 = vpop.permute.xlu0 %8224
        %8226 = vrot.lane.b32.xlu0 %v7564, 125
        %v8227 = vpop.permute.xlu0 %8226
        %8228 = vrot.lane.b32.xlu0 %v7565, 125
        %v8229 = vpop.permute.xlu0 %8228
        %8230 = vrot.lane.b32.xlu0 %v7566, 125
        %v8231 = vpop.permute.xlu0 %8230
        %8232 = vrot.lane.b32.xlu0 %v7567, 125
        %v8233 = vpop.permute.xlu0 %8232
        %8234 = vrot.lane.b32.xlu0 %v7568, 125
        %v8235 = vpop.permute.xlu0 %8234
        %8236 = vrot.lane.b32.xlu0 %v7569, 125
        %v8237 = vpop.permute.xlu0 %8236
        %8238 = vrot.lane.b32.xlu0 %v7570, 125
        %v8239 = vpop.permute.xlu0 %8238
        %8240 = vrot.lane.b32.xlu0 %v7571, 125
        %v8241 = vpop.permute.xlu0 %8240
        %8242 = vrot.lane.b32.xlu0 %v7572, 125
        %v8243 = vpop.permute.xlu0 %8242
        %8244 = vrot.lane.b32.xlu0 %v7573, 125
        %v8245 = vpop.permute.xlu0 %8244
        %8246 = vrot.lane.b32.xlu0 %v7574, 125
        %v8247 = vpop.permute.xlu0 %8246
        %8248 = vrot.lane.b32.xlu0 %v7575, 125
        %v8249 = vpop.permute.xlu0 %8248
        %8250 = vrot.lane.b32.xlu0 %v7576, 125
        %v8251 = vpop.permute.xlu0 %8250
        %8252 = vrot.lane.b32.xlu0 %v7577, 125
        %v8253 = vpop.permute.xlu0 %8252
        %8254 = vrot.lane.b32.xlu0 %v7578, 125
        %v8255 = vpop.permute.xlu0 %8254
        %8256 = vrot.lane.b32.xlu0 %v7579, 125
        %v8257 = vpop.permute.xlu0 %8256
        %8258 = vrot.lane.b32.xlu0 %v7580, 125
        %v8259 = vpop.permute.xlu0 %8258
        %8260 = vrot.lane.b32.xlu0 %v7581, 125
        %v8261 = vpop.permute.xlu0 %8260
        %8262 = vrot.lane.b32.xlu0 %v7582, 125
        %v8263 = vpop.permute.xlu0 %8262
        %8264 = vrot.lane.b32.xlu0 %v7583, 125
        %v8265 = vpop.permute.xlu0 %8264
        %8266 = vrot.lane.b32.xlu0 %v7584, 125
        %v8267 = vpop.permute.xlu0 %8266
        %8268 = vrot.lane.b32.xlu0 %v7585, 125
        %v8269 = vpop.permute.xlu0 %8268
        %8270 = vrot.lane.b32.xlu0 %v7586, 125
        %v8271 = vpop.permute.xlu0 %8270
        %8272 = vrot.lane.b32.xlu0 %v7587, 125
        %v8273 = vpop.permute.xlu0 %8272
        %8274 = vrot.lane.b32.xlu0 %v7588, 125
        %v8275 = vpop.permute.xlu0 %8274
        %8276 = vrot.lane.b32.xlu0 %v7589, 125
        %v8277 = vpop.permute.xlu0 %8276
        %8278 = vrot.lane.b32.xlu0 %v7590, 125
        %v8279 = vpop.permute.xlu0 %8278
        %8280 = vrot.lane.b32.xlu0 %v7591, 125
        %v8281 = vpop.permute.xlu0 %8280
        %8282 = vrot.lane.b32.xlu0 %v7592, 125
        %v8283 = vpop.permute.xlu0 %8282
        %8284 = vrot.lane.b32.xlu0 %v7593, 125
        %v8285 = vpop.permute.xlu0 %8284
        %8286 = vrot.lane.b32.xlu0 %v7594, 125
        %v8287 = vpop.permute.xlu0 %8286
        %8288 = vrot.lane.b32.xlu0 %v7595, 125
        %v8289 = vpop.permute.xlu0 %8288
        %8290 = vrot.lane.b32.xlu0 %v7596, 125
        %v8291 = vpop.permute.xlu0 %8290
        %8292 = vrot.lane.b32.xlu0 %v7597, 125
        %v8293 = vpop.permute.xlu0 %8292
        %8294 = vrot.lane.b32.xlu0 %v7598, 125
        %v8295 = vpop.permute.xlu0 %8294
        %8296 = vrot.lane.b32.xlu0 %v7599, 125
        %v8297 = vpop.permute.xlu0 %8296
        %8298 = vrot.lane.b32.xlu0 %v7600, 125
        %v8299 = vpop.permute.xlu0 %8298
        %8300 = vrot.lane.b32.xlu0 %v7601, 125
        %v8301 = vpop.permute.xlu0 %8300
        %8302 = vrot.lane.b32.xlu0 %v7602, 125
        %v8303 = vpop.permute.xlu0 %8302
        %8304 = vrot.lane.b32.xlu0 %v7603, 125
        %v8305 = vpop.permute.xlu0 %8304
        %8306 = vrot.lane.b32.xlu0 %v7604, 125
        %v8307 = vpop.permute.xlu0 %8306
        %8308 = vrot.lane.b32.xlu0 %v7605, 125
        %v8309 = vpop.permute.xlu0 %8308
        %v8374 = vadd.f32 %v8118, %v8183
        %v8375 = vadd.f32 %v8119, %v8185
        %v8376 = vadd.f32 %v8120, %v8187
        %v8377 = vadd.f32 %v8121, %v8189
        %v8378 = vadd.f32 %v8122, %v8191
        %v8379 = vadd.f32 %v8123, %v8193
        %v8380 = vadd.f32 %v8124, %v8195
        %v8381 = vadd.f32 %v8125, %v8197
        %v8382 = vadd.f32 %v8126, %v8199
        %v8383 = vadd.f32 %v8127, %v8201
        %v8384 = vadd.f32 %v8128, %v8203
        %v8385 = vadd.f32 %v8129, %v8205
        %v8386 = vadd.f32 %v8130, %v8207
        %v8387 = vadd.f32 %v8131, %v8209
        %v8388 = vadd.f32 %v8132, %v8211
        %v8389 = vadd.f32 %v8133, %v8213
        %v8390 = vadd.f32 %v8134, %v8215
        %v8391 = vadd.f32 %v8135, %v8217
        %v8392 = vadd.f32 %v8136, %v8219
        %v8393 = vadd.f32 %v8137, %v8221
        %v8394 = vadd.f32 %v8138, %v8223
        %v8395 = vadd.f32 %v8139, %v8225
        %v8396 = vadd.f32 %v8140, %v8227
        %v8397 = vadd.f32 %v8141, %v8229
        %v8398 = vadd.f32 %v8142, %v8231
        %v8399 = vadd.f32 %v8143, %v8233
        %v8400 = vadd.f32 %v8144, %v8235
        %v8401 = vadd.f32 %v8145, %v8237
        %v8402 = vadd.f32 %v8146, %v8239
        %v8403 = vadd.f32 %v8147, %v8241
        %v8404 = vadd.f32 %v8148, %v8243
        %v8405 = vadd.f32 %v8149, %v8245
        %v8406 = vadd.f32 %v8150, %v8247
        %v8407 = vadd.f32 %v8151, %v8249
        %v8408 = vadd.f32 %v8152, %v8251
        %v8409 = vadd.f32 %v8153, %v8253
        %v8410 = vadd.f32 %v8154, %v8255
        %v8411 = vadd.f32 %v8155, %v8257
        %v8412 = vadd.f32 %v8156, %v8259
        %v8413 = vadd.f32 %v8157, %v8261
        %v8414 = vadd.f32 %v8158, %v8263
        %v8415 = vadd.f32 %v8159, %v8265
        %v8416 = vadd.f32 %v8160, %v8267
        %v8417 = vadd.f32 %v8161, %v8269
        %v8418 = vadd.f32 %v8162, %v8271
        %v8419 = vadd.f32 %v8163, %v8273
        %v8420 = vadd.f32 %v8164, %v8275
        %v8421 = vadd.f32 %v8165, %v8277
        %v8422 = vadd.f32 %v8166, %v8279
        %v8423 = vadd.f32 %v8167, %v8281
        %v8424 = vadd.f32 %v8168, %v8283
        %v8425 = vadd.f32 %v8169, %v8285
        %v8426 = vadd.f32 %v8170, %v8287
        %v8427 = vadd.f32 %v8171, %v8289
        %v8428 = vadd.f32 %v8172, %v8291
        %v8429 = vadd.f32 %v8173, %v8293
        %v8430 = vadd.f32 %v8174, %v8295
        %v8431 = vadd.f32 %v8175, %v8297
        %v8432 = vadd.f32 %v8176, %v8299
        %v8433 = vadd.f32 %v8177, %v8301
        %v8434 = vadd.f32 %v8178, %v8303
        %v8435 = vadd.f32 %v8179, %v8305
        %v8436 = vadd.f32 %v8180, %v8307
        %v8437 = vadd.f32 %v8181, %v8309
        %v8438 = vrcp.pop %v8374
        %v8439 = vrcp.pop %v8375
        %v8440 = vrcp.pop %v8376
        %v8441 = vrcp.pop %v8377
        %v8442 = vrcp.pop %v8378
        %v8443 = vrcp.pop %v8379
        %v8444 = vrcp.pop %v8380
        %v8445 = vrcp.pop %v8381
        %v8446 = vrcp.pop %v8382
        %v8447 = vrcp.pop %v8383
        %v8448 = vrcp.pop %v8384
        %v8449 = vrcp.pop %v8385
        %v8450 = vrcp.pop %v8386
        %v8451 = vrcp.pop %v8387
        %v8452 = vrcp.pop %v8388
        %v8453 = vrcp.pop %v8389
        %v8454 = vrcp.pop %v8390
        %v8455 = vrcp.pop %v8391
        %v8456 = vrcp.pop %v8392
        %v8457 = vrcp.pop %v8393
        %v8458 = vrcp.pop %v8394
        %v8459 = vrcp.pop %v8395
        %v8460 = vrcp.pop %v8396
        %v8461 = vrcp.pop %v8397
        %v8462 = vrcp.pop %v8398
        %v8463 = vrcp.pop %v8399
        %v8464 = vrcp.pop %v8400
        %v8465 = vrcp.pop %v8401
        %v8466 = vrcp.pop %v8402
        %v8467 = vrcp.pop %v8403
        %v8468 = vrcp.pop %v8404
        %v8469 = vrcp.pop %v8405
        %v8470 = vrcp.pop %v8406
        %v8471 = vrcp.pop %v8407
        %v8472 = vrcp.pop %v8408
        %v8473 = vrcp.pop %v8409
        %v8474 = vrcp.pop %v8410
        %v8475 = vrcp.pop %v8411
        %v8476 = vrcp.pop %v8412
        %v8477 = vrcp.pop %v8413
        %v8478 = vrcp.pop %v8414
        %v8479 = vrcp.pop %v8415
        %v8480 = vrcp.pop %v8416
        %v8481 = vrcp.pop %v8417
        %v8482 = vrcp.pop %v8418
        %v8483 = vrcp.pop %v8419
        %v8484 = vrcp.pop %v8420
        %v8485 = vrcp.pop %v8421
        %v8486 = vrcp.pop %v8422
        %v8487 = vrcp.pop %v8423
        %v8488 = vrcp.pop %v8424
        %v8489 = vrcp.pop %v8425
        %v8490 = vrcp.pop %v8426
        %v8491 = vrcp.pop %v8427
        %v8492 = vrcp.pop %v8428
        %v8493 = vrcp.pop %v8429
        %v8494 = vrcp.pop %v8430
        %v8495 = vrcp.pop %v8431
        %v8496 = vrcp.pop %v8432
        %v8497 = vrcp.pop %v8433
        %v8498 = vrcp.pop %v8434
        %v8499 = vrcp.pop %v8435
        %v8500 = vrcp.pop %v8436
        %v8501 = vrcp.pop %v8437
        %8566 = vrot.lane.b32.xlu0 %v8438, 3
        %v8567 = vpop.permute.xlu0 %8566
        %8568 = vrot.lane.b32.xlu0 %v8439, 3
        %v8569 = vpop.permute.xlu0 %8568
        %8570 = vrot.lane.b32.xlu0 %v8440, 3
        %v8571 = vpop.permute.xlu0 %8570
        %8572 = vrot.lane.b32.xlu0 %v8441, 3
        %v8573 = vpop.permute.xlu0 %8572
        %8574 = vrot.lane.b32.xlu0 %v8442, 3
        %v8575 = vpop.permute.xlu0 %8574
        %8576 = vrot.lane.b32.xlu0 %v8443, 3
        %v8577 = vpop.permute.xlu0 %8576
        %8578 = vrot.lane.b32.xlu0 %v8444, 3
        %v8579 = vpop.permute.xlu0 %8578
        %8580 = vrot.lane.b32.xlu0 %v8445, 3
        %v8581 = vpop.permute.xlu0 %8580
        %8582 = vrot.lane.b32.xlu0 %v8446, 3
        %v8583 = vpop.permute.xlu0 %8582
        %8584 = vrot.lane.b32.xlu0 %v8447, 3
        %v8585 = vpop.permute.xlu0 %8584
        %8586 = vrot.lane.b32.xlu0 %v8448, 3
        %v8587 = vpop.permute.xlu0 %8586
        %8588 = vrot.lane.b32.xlu0 %v8449, 3
        %v8589 = vpop.permute.xlu0 %8588
        %8590 = vrot.lane.b32.xlu0 %v8450, 3
        %v8591 = vpop.permute.xlu0 %8590
        %8592 = vrot.lane.b32.xlu0 %v8451, 3
        %v8593 = vpop.permute.xlu0 %8592
        %8594 = vrot.lane.b32.xlu0 %v8452, 3
        %v8595 = vpop.permute.xlu0 %8594
        %8596 = vrot.lane.b32.xlu0 %v8453, 3
        %v8597 = vpop.permute.xlu0 %8596
        %8598 = vrot.lane.b32.xlu0 %v8454, 3
        %v8599 = vpop.permute.xlu0 %8598
        %8600 = vrot.lane.b32.xlu0 %v8455, 3
        %v8601 = vpop.permute.xlu0 %8600
        %8602 = vrot.lane.b32.xlu0 %v8456, 3
        %v8603 = vpop.permute.xlu0 %8602
        %8604 = vrot.lane.b32.xlu0 %v8457, 3
        %v8605 = vpop.permute.xlu0 %8604
        %8606 = vrot.lane.b32.xlu0 %v8458, 3
        %v8607 = vpop.permute.xlu0 %8606
        %8608 = vrot.lane.b32.xlu0 %v8459, 3
        %v8609 = vpop.permute.xlu0 %8608
        %8610 = vrot.lane.b32.xlu0 %v8460, 3
        %v8611 = vpop.permute.xlu0 %8610
        %8612 = vrot.lane.b32.xlu0 %v8461, 3
        %v8613 = vpop.permute.xlu0 %8612
        %8614 = vrot.lane.b32.xlu0 %v8462, 3
        %v8615 = vpop.permute.xlu0 %8614
        %8616 = vrot.lane.b32.xlu0 %v8463, 3
        %v8617 = vpop.permute.xlu0 %8616
        %8618 = vrot.lane.b32.xlu0 %v8464, 3
        %v8619 = vpop.permute.xlu0 %8618
        %8620 = vrot.lane.b32.xlu0 %v8465, 3
        %v8621 = vpop.permute.xlu0 %8620
        %8622 = vrot.lane.b32.xlu0 %v8466, 3
        %v8623 = vpop.permute.xlu0 %8622
        %8624 = vrot.lane.b32.xlu0 %v8467, 3
        %v8625 = vpop.permute.xlu0 %8624
        %8626 = vrot.lane.b32.xlu0 %v8468, 3
        %v8627 = vpop.permute.xlu0 %8626
        %8628 = vrot.lane.b32.xlu0 %v8469, 3
        %v8629 = vpop.permute.xlu0 %8628
        %8630 = vrot.lane.b32.xlu0 %v8470, 3
        %v8631 = vpop.permute.xlu0 %8630
        %8632 = vrot.lane.b32.xlu0 %v8471, 3
        %v8633 = vpop.permute.xlu0 %8632
        %8634 = vrot.lane.b32.xlu0 %v8472, 3
        %v8635 = vpop.permute.xlu0 %8634
        %8636 = vrot.lane.b32.xlu0 %v8473, 3
        %v8637 = vpop.permute.xlu0 %8636
        %8638 = vrot.lane.b32.xlu0 %v8474, 3
        %v8639 = vpop.permute.xlu0 %8638
        %8640 = vrot.lane.b32.xlu0 %v8475, 3
        %v8641 = vpop.permute.xlu0 %8640
        %8642 = vrot.lane.b32.xlu0 %v8476, 3
        %v8643 = vpop.permute.xlu0 %8642
        %8644 = vrot.lane.b32.xlu0 %v8477, 3
        %v8645 = vpop.permute.xlu0 %8644
        %8646 = vrot.lane.b32.xlu0 %v8478, 3
        %v8647 = vpop.permute.xlu0 %8646
        %8648 = vrot.lane.b32.xlu0 %v8479, 3
        %v8649 = vpop.permute.xlu0 %8648
        %8650 = vrot.lane.b32.xlu0 %v8480, 3
        %v8651 = vpop.permute.xlu0 %8650
        %8652 = vrot.lane.b32.xlu0 %v8481, 3
        %v8653 = vpop.permute.xlu0 %8652
        %8654 = vrot.lane.b32.xlu0 %v8482, 3
        %v8655 = vpop.permute.xlu0 %8654
        %8656 = vrot.lane.b32.xlu0 %v8483, 3
        %v8657 = vpop.permute.xlu0 %8656
        %8658 = vrot.lane.b32.xlu0 %v8484, 3
        %v8659 = vpop.permute.xlu0 %8658
        %8660 = vrot.lane.b32.xlu0 %v8485, 3
        %v8661 = vpop.permute.xlu0 %8660
        %8662 = vrot.lane.b32.xlu0 %v8486, 3
        %v8663 = vpop.permute.xlu0 %8662
        %8664 = vrot.lane.b32.xlu0 %v8487, 3
        %v8665 = vpop.permute.xlu0 %8664
        %8666 = vrot.lane.b32.xlu0 %v8488, 3
        %v8667 = vpop.permute.xlu0 %8666
        %8668 = vrot.lane.b32.xlu0 %v8489, 3
        %v8669 = vpop.permute.xlu0 %8668
        %8670 = vrot.lane.b32.xlu0 %v8490, 3
        %v8671 = vpop.permute.xlu0 %8670
        %8672 = vrot.lane.b32.xlu0 %v8491, 3
        %v8673 = vpop.permute.xlu0 %8672
        %8674 = vrot.lane.b32.xlu0 %v8492, 3
        %v8675 = vpop.permute.xlu0 %8674
        %8676 = vrot.lane.b32.xlu0 %v8493, 3
        %v8677 = vpop.permute.xlu0 %8676
        %8678 = vrot.lane.b32.xlu0 %v8494, 3
        %v8679 = vpop.permute.xlu0 %8678
        %8680 = vrot.lane.b32.xlu0 %v8495, 3
        %v8681 = vpop.permute.xlu0 %8680
        %8682 = vrot.lane.b32.xlu0 %v8496, 3
        %v8683 = vpop.permute.xlu0 %8682
        %8684 = vrot.lane.b32.xlu0 %v8497, 3
        %v8685 = vpop.permute.xlu0 %8684
        %8686 = vrot.lane.b32.xlu0 %v8498, 3
        %v8687 = vpop.permute.xlu0 %8686
        %8688 = vrot.lane.b32.xlu0 %v8499, 3
        %v8689 = vpop.permute.xlu0 %8688
        %8690 = vrot.lane.b32.xlu0 %v8500, 3
        %v8691 = vpop.permute.xlu0 %8690
        %8692 = vrot.lane.b32.xlu0 %v8501, 3
        %v8693 = vpop.permute.xlu0 %8692
        %v8758 = vmul.f32 %v7542, %v8567
        %v8759 = vmul.f32 %v7543, %v8569
        %v8760 = vmul.f32 %v7544, %v8571
        %v8761 = vmul.f32 %v7545, %v8573
        %v8762 = vmul.f32 %v7546, %v8575
        %v8763 = vmul.f32 %v7547, %v8577
        %v8764 = vmul.f32 %v7548, %v8579
        %v8765 = vmul.f32 %v7549, %v8581
        %v8766 = vmul.f32 %v7550, %v8583
        %v8767 = vmul.f32 %v7551, %v8585
        %v8768 = vmul.f32 %v7552, %v8587
        %v8769 = vmul.f32 %v7553, %v8589
        %v8770 = vmul.f32 %v7554, %v8591
        %v8771 = vmul.f32 %v7555, %v8593
        %v8772 = vmul.f32 %v7556, %v8595
        %v8773 = vmul.f32 %v7557, %v8597
        %v8774 = vmul.f32 %v7558, %v8599
        %v8775 = vmul.f32 %v7559, %v8601
        %v8776 = vmul.f32 %v7560, %v8603
        %v8777 = vmul.f32 %v7561, %v8605
        %v8778 = vmul.f32 %v7562, %v8607
        %v8779 = vmul.f32 %v7563, %v8609
        %v8780 = vmul.f32 %v7564, %v8611
        %v8781 = vmul.f32 %v7565, %v8613
        %v8782 = vmul.f32 %v7566, %v8615
        %v8783 = vmul.f32 %v7567, %v8617
        %v8784 = vmul.f32 %v7568, %v8619
        %v8785 = vmul.f32 %v7569, %v8621
        %v8786 = vmul.f32 %v7570, %v8623
        %v8787 = vmul.f32 %v7571, %v8625
        %v8788 = vmul.f32 %v7572, %v8627
        %v8789 = vmul.f32 %v7573, %v8629
        %v8790 = vmul.f32 %v7574, %v8631
        %v8791 = vmul.f32 %v7575, %v8633
        %v8792 = vmul.f32 %v7576, %v8635
        %v8793 = vmul.f32 %v7577, %v8637
        %v8794 = vmul.f32 %v7578, %v8639
        %v8795 = vmul.f32 %v7579, %v8641
        %v8796 = vmul.f32 %v7580, %v8643
        %v8797 = vmul.f32 %v7581, %v8645
        %v8798 = vmul.f32 %v7582, %v8647
        %v8799 = vmul.f32 %v7583, %v8649
        %v8800 = vmul.f32 %v7584, %v8651
        %v8801 = vmul.f32 %v7585, %v8653
        %v8802 = vmul.f32 %v7586, %v8655
        %v8803 = vmul.f32 %v7587, %v8657
        %v8804 = vmul.f32 %v7588, %v8659
        %v8805 = vmul.f32 %v7589, %v8661
        %v8806 = vmul.f32 %v7590, %v8663
        %v8807 = vmul.f32 %v7591, %v8665
        %v8808 = vmul.f32 %v7592, %v8667
        %v8809 = vmul.f32 %v7593, %v8669
        %v8810 = vmul.f32 %v7594, %v8671
        %v8811 = vmul.f32 %v7595, %v8673
        %v8812 = vmul.f32 %v7596, %v8675
        %v8813 = vmul.f32 %v7597, %v8677
        %v8814 = vmul.f32 %v7598, %v8679
        %v8815 = vmul.f32 %v7599, %v8681
        %v8816 = vmul.f32 %v7600, %v8683
        %v8817 = vmul.f32 %v7601, %v8685
        %v8818 = vmul.f32 %v7602, %v8687
        %v8819 = vmul.f32 %v7603, %v8689
        %v8820 = vmul.f32 %v7604, %v8691
        %v8821 = vmul.f32 %v7605, %v8693
        %8823 = vset.pattern.permute.xlu0 3
        %8824 = vperm.xlu0 %8823, %v8758
        %v8825 = vpop.permute.xlu0 %8824
        %8828 = vset.pattern.permute.xlu0 3
        %8829 = vperm.xlu0 %8828, %v8759
        %v8830 = vpop.permute.xlu0 %8829
        %8833 = vset.pattern.permute.xlu0 3
        %8834 = vperm.xlu0 %8833, %v8760
        %v8835 = vpop.permute.xlu0 %8834
        %8838 = vset.pattern.permute.xlu0 3
        %8839 = vperm.xlu0 %8838, %v8761
        %v8840 = vpop.permute.xlu0 %8839
        %8843 = vset.pattern.permute.xlu0 3
        %8844 = vperm.xlu0 %8843, %v8762
        %v8845 = vpop.permute.xlu0 %8844
        %8848 = vset.pattern.permute.xlu0 3
        %8849 = vperm.xlu0 %8848, %v8763
        %v8850 = vpop.permute.xlu0 %8849
        %8853 = vset.pattern.permute.xlu0 3
        %8854 = vperm.xlu0 %8853, %v8764
        %v8855 = vpop.permute.xlu0 %8854
        %8858 = vset.pattern.permute.xlu0 3
        %8859 = vperm.xlu0 %8858, %v8765
        %v8860 = vpop.permute.xlu0 %8859
        %8863 = vset.pattern.permute.xlu0 3
        %8864 = vperm.xlu0 %8863, %v8766
        %v8865 = vpop.permute.xlu0 %8864
        %8868 = vset.pattern.permute.xlu0 3
        %8869 = vperm.xlu0 %8868, %v8767
        %v8870 = vpop.permute.xlu0 %8869
        %8873 = vset.pattern.permute.xlu0 3
        %8874 = vperm.xlu0 %8873, %v8768
        %v8875 = vpop.permute.xlu0 %8874
        %8878 = vset.pattern.permute.xlu0 3
        %8879 = vperm.xlu0 %8878, %v8769
        %v8880 = vpop.permute.xlu0 %8879
        %8883 = vset.pattern.permute.xlu0 3
        %8884 = vperm.xlu0 %8883, %v8770
        %v8885 = vpop.permute.xlu0 %8884
        %8888 = vset.pattern.permute.xlu0 3
        %8889 = vperm.xlu0 %8888, %v8771
        %v8890 = vpop.permute.xlu0 %8889
        %8893 = vset.pattern.permute.xlu0 3
        %8894 = vperm.xlu0 %8893, %v8772
        %v8895 = vpop.permute.xlu0 %8894
        %8898 = vset.pattern.permute.xlu0 3
        %8899 = vperm.xlu0 %8898, %v8773
        %v8900 = vpop.permute.xlu0 %8899
        %8903 = vset.pattern.permute.xlu0 3
        %8904 = vperm.xlu0 %8903, %v8774
        %v8905 = vpop.permute.xlu0 %8904
        %8908 = vset.pattern.permute.xlu0 3
        %8909 = vperm.xlu0 %8908, %v8775
        %v8910 = vpop.permute.xlu0 %8909
        %8913 = vset.pattern.permute.xlu0 3
        %8914 = vperm.xlu0 %8913, %v8776
        %v8915 = vpop.permute.xlu0 %8914
        %8918 = vset.pattern.permute.xlu0 3
        %8919 = vperm.xlu0 %8918, %v8777
        %v8920 = vpop.permute.xlu0 %8919
        %8923 = vset.pattern.permute.xlu0 3
        %8924 = vperm.xlu0 %8923, %v8778
        %v8925 = vpop.permute.xlu0 %8924
        %8928 = vset.pattern.permute.xlu0 3
        %8929 = vperm.xlu0 %8928, %v8779
        %v8930 = vpop.permute.xlu0 %8929
        %8933 = vset.pattern.permute.xlu0 3
        %8934 = vperm.xlu0 %8933, %v8780
        %v8935 = vpop.permute.xlu0 %8934
        %8938 = vset.pattern.permute.xlu0 3
        %8939 = vperm.xlu0 %8938, %v8781
        %v8940 = vpop.permute.xlu0 %8939
        %8943 = vset.pattern.permute.xlu0 3
        %8944 = vperm.xlu0 %8943, %v8782
        %v8945 = vpop.permute.xlu0 %8944
        %8948 = vset.pattern.permute.xlu0 3
        %8949 = vperm.xlu0 %8948, %v8783
        %v8950 = vpop.permute.xlu0 %8949
        %8953 = vset.pattern.permute.xlu0 3
        %8954 = vperm.xlu0 %8953, %v8784
        %v8955 = vpop.permute.xlu0 %8954
        %8958 = vset.pattern.permute.xlu0 3
        %8959 = vperm.xlu0 %8958, %v8785
        %v8960 = vpop.permute.xlu0 %8959
        %8963 = vset.pattern.permute.xlu0 3
        %8964 = vperm.xlu0 %8963, %v8786
        %v8965 = vpop.permute.xlu0 %8964
        %8968 = vset.pattern.permute.xlu0 3
        %8969 = vperm.xlu0 %8968, %v8787
        %v8970 = vpop.permute.xlu0 %8969
        %8973 = vset.pattern.permute.xlu0 3
        %8974 = vperm.xlu0 %8973, %v8788
        %v8975 = vpop.permute.xlu0 %8974
        %8978 = vset.pattern.permute.xlu0 3
        %8979 = vperm.xlu0 %8978, %v8789
        %v8980 = vpop.permute.xlu0 %8979
        %8983 = vset.pattern.permute.xlu0 3
        %8984 = vperm.xlu0 %8983, %v8790
        %v8985 = vpop.permute.xlu0 %8984
        %8988 = vset.pattern.permute.xlu0 3
        %8989 = vperm.xlu0 %8988, %v8791
        %v8990 = vpop.permute.xlu0 %8989
        %8993 = vset.pattern.permute.xlu0 3
        %8994 = vperm.xlu0 %8993, %v8792
        %v8995 = vpop.permute.xlu0 %8994
        %8998 = vset.pattern.permute.xlu0 3
        %8999 = vperm.xlu0 %8998, %v8793
        %v9000 = vpop.permute.xlu0 %8999
        %9003 = vset.pattern.permute.xlu0 3
        %9004 = vperm.xlu0 %9003, %v8794
        %v9005 = vpop.permute.xlu0 %9004
        %9008 = vset.pattern.permute.xlu0 3
        %9009 = vperm.xlu0 %9008, %v8795
        %v9010 = vpop.permute.xlu0 %9009
        %9013 = vset.pattern.permute.xlu0 3
        %9014 = vperm.xlu0 %9013, %v8796
        %v9015 = vpop.permute.xlu0 %9014
        %9018 = vset.pattern.permute.xlu0 3
        %9019 = vperm.xlu0 %9018, %v8797
        %v9020 = vpop.permute.xlu0 %9019
        %9023 = vset.pattern.permute.xlu0 3
        %9024 = vperm.xlu0 %9023, %v8798
        %v9025 = vpop.permute.xlu0 %9024
        %9028 = vset.pattern.permute.xlu0 3
        %9029 = vperm.xlu0 %9028, %v8799
        %v9030 = vpop.permute.xlu0 %9029
        %9033 = vset.pattern.permute.xlu0 3
        %9034 = vperm.xlu0 %9033, %v8800
        %v9035 = vpop.permute.xlu0 %9034
        %9038 = vset.pattern.permute.xlu0 3
        %9039 = vperm.xlu0 %9038, %v8801
        %v9040 = vpop.permute.xlu0 %9039
        %9043 = vset.pattern.permute.xlu0 3
        %9044 = vperm.xlu0 %9043, %v8802
        %v9045 = vpop.permute.xlu0 %9044
        %9048 = vset.pattern.permute.xlu0 3
        %9049 = vperm.xlu0 %9048, %v8803
        %v9050 = vpop.permute.xlu0 %9049
        %9053 = vset.pattern.permute.xlu0 3
        %9054 = vperm.xlu0 %9053, %v8804
        %v9055 = vpop.permute.xlu0 %9054
        %9058 = vset.pattern.permute.xlu0 3
        %9059 = vperm.xlu0 %9058, %v8805
        %v9060 = vpop.permute.xlu0 %9059
        %9063 = vset.pattern.permute.xlu0 3
        %9064 = vperm.xlu0 %9063, %v8806
        %v9065 = vpop.permute.xlu0 %9064
        %9068 = vset.pattern.permute.xlu0 3
        %9069 = vperm.xlu0 %9068, %v8807
        %v9070 = vpop.permute.xlu0 %9069
        %9073 = vset.pattern.permute.xlu0 3
        %9074 = vperm.xlu0 %9073, %v8808
        %v9075 = vpop.permute.xlu0 %9074
        %9078 = vset.pattern.permute.xlu0 3
        %9079 = vperm.xlu0 %9078, %v8809
        %v9080 = vpop.permute.xlu0 %9079
        %9083 = vset.pattern.permute.xlu0 3
        %9084 = vperm.xlu0 %9083, %v8810
        %v9085 = vpop.permute.xlu0 %9084
        %9088 = vset.pattern.permute.xlu0 3
        %9089 = vperm.xlu0 %9088, %v8811
        %v9090 = vpop.permute.xlu0 %9089
        %9093 = vset.pattern.permute.xlu0 3
        %9094 = vperm.xlu0 %9093, %v8812
        %v9095 = vpop.permute.xlu0 %9094
        %9098 = vset.pattern.permute.xlu0 3
        %9099 = vperm.xlu0 %9098, %v8813
        %v9100 = vpop.permute.xlu0 %9099
        %9103 = vset.pattern.permute.xlu0 3
        %9104 = vperm.xlu0 %9103, %v8814
        %v9105 = vpop.permute.xlu0 %9104
        %9108 = vset.pattern.permute.xlu0 3
        %9109 = vperm.xlu0 %9108, %v8815
        %v9110 = vpop.permute.xlu0 %9109
        %9113 = vset.pattern.permute.xlu0 3
        %9114 = vperm.xlu0 %9113, %v8816
        %v9115 = vpop.permute.xlu0 %9114
        %9118 = vset.pattern.permute.xlu0 3
        %9119 = vperm.xlu0 %9118, %v8817
        %v9120 = vpop.permute.xlu0 %9119
        %9123 = vset.pattern.permute.xlu0 3
        %9124 = vperm.xlu0 %9123, %v8818
        %v9125 = vpop.permute.xlu0 %9124
        %9128 = vset.pattern.permute.xlu0 3
        %9129 = vperm.xlu0 %9128, %v8819
        %v9130 = vpop.permute.xlu0 %9129
        %9133 = vset.pattern.permute.xlu0 3
        %9134 = vperm.xlu0 %9133, %v8820
        %v9135 = vpop.permute.xlu0 %9134
        %9138 = vset.pattern.permute.xlu0 3
        %9139 = vperm.xlu0 %9138, %v8821
        %v9140 = vpop.permute.xlu0 %9139
        %v9142 = vmul.f32 %v6456, %v8825
        %v9143 = vmul.f32 %v6459, %v8830
        %v9144 = vmul.f32 %v6464, %v8835
        %v9145 = vmul.f32 %v6467, %v8840
        %v9146 = vmul.f32 %v6472, %v8845
        %v9147 = vmul.f32 %v6475, %v8850
        %v9148 = vmul.f32 %v6480, %v8855
        %v9149 = vmul.f32 %v6483, %v8860
        %v9150 = vmul.f32 %v6488, %v8865
        %v9151 = vmul.f32 %v6491, %v8870
        %v9152 = vmul.f32 %v6496, %v8875
        %v9153 = vmul.f32 %v6499, %v8880
        %v9154 = vmul.f32 %v6504, %v8885
        %v9155 = vmul.f32 %v6507, %v8890
        %v9156 = vmul.f32 %v6512, %v8895
        %v9157 = vmul.f32 %v6515, %v8900
        %v9158 = vmul.f32 %v6520, %v8905
        %v9159 = vmul.f32 %v6523, %v8910
        %v9160 = vmul.f32 %v6528, %v8915
        %v9161 = vmul.f32 %v6531, %v8920
        %v9162 = vmul.f32 %v6536, %v8925
        %v9163 = vmul.f32 %v6539, %v8930
        %v9164 = vmul.f32 %v6544, %v8935
        %v9165 = vmul.f32 %v6547, %v8940
        %v9166 = vmul.f32 %v6552, %v8945
        %v9167 = vmul.f32 %v6555, %v8950
        %v9168 = vmul.f32 %v6560, %v8955
        %v9169 = vmul.f32 %v6563, %v8960
        %v9170 = vmul.f32 %v6568, %v8965
        %v9171 = vmul.f32 %v6571, %v8970
        %v9172 = vmul.f32 %v6576, %v8975
        %v9173 = vmul.f32 %v6579, %v8980
        %v9174 = vmul.f32 %v6584, %v8985
        %v9175 = vmul.f32 %v6587, %v8990
        %v9176 = vmul.f32 %v6592, %v8995
        %v9177 = vmul.f32 %v6595, %v9000
        %v9178 = vmul.f32 %v6600, %v9005
        %v9179 = vmul.f32 %v6603, %v9010
        %v9180 = vmul.f32 %v6608, %v9015
        %v9181 = vmul.f32 %v6611, %v9020
        %v9182 = vmul.f32 %v6616, %v9025
        %v9183 = vmul.f32 %v6619, %v9030
        %v9184 = vmul.f32 %v6624, %v9035
        %v9185 = vmul.f32 %v6627, %v9040
        %v9186 = vmul.f32 %v6632, %v9045
        %v9187 = vmul.f32 %v6635, %v9050
        %v9188 = vmul.f32 %v6640, %v9055
        %v9189 = vmul.f32 %v6643, %v9060
        %v9190 = vmul.f32 %v6648, %v9065
        %v9191 = vmul.f32 %v6651, %v9070
        %v9192 = vmul.f32 %v6656, %v9075
        %v9193 = vmul.f32 %v6659, %v9080
        %v9194 = vmul.f32 %v6664, %v9085
        %v9195 = vmul.f32 %v6667, %v9090
        %v9196 = vmul.f32 %v6672, %v9095
        %v9197 = vmul.f32 %v6675, %v9100
        %v9198 = vmul.f32 %v6680, %v9105
        %v9199 = vmul.f32 %v6683, %v9110
        %v9200 = vmul.f32 %v6688, %v9115
        %v9201 = vmul.f32 %v6691, %v9120
        %v9202 = vmul.f32 %v6696, %v9125
        %v9203 = vmul.f32 %v6699, %v9130
        %v9204 = vmul.f32 %v6704, %v9135
        %v9205 = vmul.f32 %v6707, %v9140
        %9206 = vrot.lane.b32.xlu0 %v8438, 2
        %v9207 = vpop.permute.xlu0 %9206
        %9208 = vrot.lane.b32.xlu0 %v8439, 2
        %v9209 = vpop.permute.xlu0 %9208
        %9210 = vrot.lane.b32.xlu0 %v8440, 2
        %v9211 = vpop.permute.xlu0 %9210
        %9212 = vrot.lane.b32.xlu0 %v8441, 2
        %v9213 = vpop.permute.xlu0 %9212
        %9214 = vrot.lane.b32.xlu0 %v8442, 2
        %v9215 = vpop.permute.xlu0 %9214
        %9216 = vrot.lane.b32.xlu0 %v8443, 2
        %v9217 = vpop.permute.xlu0 %9216
        %9218 = vrot.lane.b32.xlu0 %v8444, 2
        %v9219 = vpop.permute.xlu0 %9218
        %9220 = vrot.lane.b32.xlu0 %v8445, 2
        %v9221 = vpop.permute.xlu0 %9220
        %9222 = vrot.lane.b32.xlu0 %v8446, 2
        %v9223 = vpop.permute.xlu0 %9222
        %9224 = vrot.lane.b32.xlu0 %v8447, 2
        %v9225 = vpop.permute.xlu0 %9224
        %9226 = vrot.lane.b32.xlu0 %v8448, 2
        %v9227 = vpop.permute.xlu0 %9226
        %9228 = vrot.lane.b32.xlu0 %v8449, 2
        %v9229 = vpop.permute.xlu0 %9228
        %9230 = vrot.lane.b32.xlu0 %v8450, 2
        %v9231 = vpop.permute.xlu0 %9230
        %9232 = vrot.lane.b32.xlu0 %v8451, 2
        %v9233 = vpop.permute.xlu0 %9232
        %9234 = vrot.lane.b32.xlu0 %v8452, 2
        %v9235 = vpop.permute.xlu0 %9234
        %9236 = vrot.lane.b32.xlu0 %v8453, 2
        %v9237 = vpop.permute.xlu0 %9236
        %9238 = vrot.lane.b32.xlu0 %v8454, 2
        %v9239 = vpop.permute.xlu0 %9238
        %9240 = vrot.lane.b32.xlu0 %v8455, 2
        %v9241 = vpop.permute.xlu0 %9240
        %9242 = vrot.lane.b32.xlu0 %v8456, 2
        %v9243 = vpop.permute.xlu0 %9242
        %9244 = vrot.lane.b32.xlu0 %v8457, 2
        %v9245 = vpop.permute.xlu0 %9244
        %9246 = vrot.lane.b32.xlu0 %v8458, 2
        %v9247 = vpop.permute.xlu0 %9246
        %9248 = vrot.lane.b32.xlu0 %v8459, 2
        %v9249 = vpop.permute.xlu0 %9248
        %9250 = vrot.lane.b32.xlu0 %v8460, 2
        %v9251 = vpop.permute.xlu0 %9250
        %9252 = vrot.lane.b32.xlu0 %v8461, 2
        %v9253 = vpop.permute.xlu0 %9252
        %9254 = vrot.lane.b32.xlu0 %v8462, 2
        %v9255 = vpop.permute.xlu0 %9254
        %9256 = vrot.lane.b32.xlu0 %v8463, 2
        %v9257 = vpop.permute.xlu0 %9256
        %9258 = vrot.lane.b32.xlu0 %v8464, 2
        %v9259 = vpop.permute.xlu0 %9258
        %9260 = vrot.lane.b32.xlu0 %v8465, 2
        %v9261 = vpop.permute.xlu0 %9260
        %9262 = vrot.lane.b32.xlu0 %v8466, 2
        %v9263 = vpop.permute.xlu0 %9262
        %9264 = vrot.lane.b32.xlu0 %v8467, 2
        %v9265 = vpop.permute.xlu0 %9264
        %9266 = vrot.lane.b32.xlu0 %v8468, 2
        %v9267 = vpop.permute.xlu0 %9266
        %9268 = vrot.lane.b32.xlu0 %v8469, 2
        %v9269 = vpop.permute.xlu0 %9268
        %9270 = vrot.lane.b32.xlu0 %v8470, 2
        %v9271 = vpop.permute.xlu0 %9270
        %9272 = vrot.lane.b32.xlu0 %v8471, 2
        %v9273 = vpop.permute.xlu0 %9272
        %9274 = vrot.lane.b32.xlu0 %v8472, 2
        %v9275 = vpop.permute.xlu0 %9274
        %9276 = vrot.lane.b32.xlu0 %v8473, 2
        %v9277 = vpop.permute.xlu0 %9276
        %9278 = vrot.lane.b32.xlu0 %v8474, 2
        %v9279 = vpop.permute.xlu0 %9278
        %9280 = vrot.lane.b32.xlu0 %v8475, 2
        %v9281 = vpop.permute.xlu0 %9280
        %9282 = vrot.lane.b32.xlu0 %v8476, 2
        %v9283 = vpop.permute.xlu0 %9282
        %9284 = vrot.lane.b32.xlu0 %v8477, 2
        %v9285 = vpop.permute.xlu0 %9284
        %9286 = vrot.lane.b32.xlu0 %v8478, 2
        %v9287 = vpop.permute.xlu0 %9286
        %9288 = vrot.lane.b32.xlu0 %v8479, 2
        %v9289 = vpop.permute.xlu0 %9288
        %9290 = vrot.lane.b32.xlu0 %v8480, 2
        %v9291 = vpop.permute.xlu0 %9290
        %9292 = vrot.lane.b32.xlu0 %v8481, 2
        %v9293 = vpop.permute.xlu0 %9292
        %9294 = vrot.lane.b32.xlu0 %v8482, 2
        %v9295 = vpop.permute.xlu0 %9294
        %9296 = vrot.lane.b32.xlu0 %v8483, 2
        %v9297 = vpop.permute.xlu0 %9296
        %9298 = vrot.lane.b32.xlu0 %v8484, 2
        %v9299 = vpop.permute.xlu0 %9298
        %9300 = vrot.lane.b32.xlu0 %v8485, 2
        %v9301 = vpop.permute.xlu0 %9300
        %9302 = vrot.lane.b32.xlu0 %v8486, 2
        %v9303 = vpop.permute.xlu0 %9302
        %9304 = vrot.lane.b32.xlu0 %v8487, 2
        %v9305 = vpop.permute.xlu0 %9304
        %9306 = vrot.lane.b32.xlu0 %v8488, 2
        %v9307 = vpop.permute.xlu0 %9306
        %9308 = vrot.lane.b32.xlu0 %v8489, 2
        %v9309 = vpop.permute.xlu0 %9308
        %9310 = vrot.lane.b32.xlu0 %v8490, 2
        %v9311 = vpop.permute.xlu0 %9310
        %9312 = vrot.lane.b32.xlu0 %v8491, 2
        %v9313 = vpop.permute.xlu0 %9312
        %9314 = vrot.lane.b32.xlu0 %v8492, 2
        %v9315 = vpop.permute.xlu0 %9314
        %9316 = vrot.lane.b32.xlu0 %v8493, 2
        %v9317 = vpop.permute.xlu0 %9316
        %9318 = vrot.lane.b32.xlu0 %v8494, 2
        %v9319 = vpop.permute.xlu0 %9318
        %9320 = vrot.lane.b32.xlu0 %v8495, 2
        %v9321 = vpop.permute.xlu0 %9320
        %9322 = vrot.lane.b32.xlu0 %v8496, 2
        %v9323 = vpop.permute.xlu0 %9322
        %9324 = vrot.lane.b32.xlu0 %v8497, 2
        %v9325 = vpop.permute.xlu0 %9324
        %9326 = vrot.lane.b32.xlu0 %v8498, 2
        %v9327 = vpop.permute.xlu0 %9326
        %9328 = vrot.lane.b32.xlu0 %v8499, 2
        %v9329 = vpop.permute.xlu0 %9328
        %9330 = vrot.lane.b32.xlu0 %v8500, 2
        %v9331 = vpop.permute.xlu0 %9330
        %9332 = vrot.lane.b32.xlu0 %v8501, 2
        %v9333 = vpop.permute.xlu0 %9332
        %v9398 = vmul.f32 %v7542, %v9207
        %v9399 = vmul.f32 %v7543, %v9209
        %v9400 = vmul.f32 %v7544, %v9211
        %v9401 = vmul.f32 %v7545, %v9213
        %v9402 = vmul.f32 %v7546, %v9215
        %v9403 = vmul.f32 %v7547, %v9217
        %v9404 = vmul.f32 %v7548, %v9219
        %v9405 = vmul.f32 %v7549, %v9221
        %v9406 = vmul.f32 %v7550, %v9223
        %v9407 = vmul.f32 %v7551, %v9225
        %v9408 = vmul.f32 %v7552, %v9227
        %v9409 = vmul.f32 %v7553, %v9229
        %v9410 = vmul.f32 %v7554, %v9231
        %v9411 = vmul.f32 %v7555, %v9233
        %v9412 = vmul.f32 %v7556, %v9235
        %v9413 = vmul.f32 %v7557, %v9237
        %v9414 = vmul.f32 %v7558, %v9239
        %v9415 = vmul.f32 %v7559, %v9241
        %v9416 = vmul.f32 %v7560, %v9243
        %v9417 = vmul.f32 %v7561, %v9245
        %v9418 = vmul.f32 %v7562, %v9247
        %v9419 = vmul.f32 %v7563, %v9249
        %v9420 = vmul.f32 %v7564, %v9251
        %v9421 = vmul.f32 %v7565, %v9253
        %v9422 = vmul.f32 %v7566, %v9255
        %v9423 = vmul.f32 %v7567, %v9257
        %v9424 = vmul.f32 %v7568, %v9259
        %v9425 = vmul.f32 %v7569, %v9261
        %v9426 = vmul.f32 %v7570, %v9263
        %v9427 = vmul.f32 %v7571, %v9265
        %v9428 = vmul.f32 %v7572, %v9267
        %v9429 = vmul.f32 %v7573, %v9269
        %v9430 = vmul.f32 %v7574, %v9271
        %v9431 = vmul.f32 %v7575, %v9273
        %v9432 = vmul.f32 %v7576, %v9275
        %v9433 = vmul.f32 %v7577, %v9277
        %v9434 = vmul.f32 %v7578, %v9279
        %v9435 = vmul.f32 %v7579, %v9281
        %v9436 = vmul.f32 %v7580, %v9283
        %v9437 = vmul.f32 %v7581, %v9285
        %v9438 = vmul.f32 %v7582, %v9287
        %v9439 = vmul.f32 %v7583, %v9289
        %v9440 = vmul.f32 %v7584, %v9291
        %v9441 = vmul.f32 %v7585, %v9293
        %v9442 = vmul.f32 %v7586, %v9295
        %v9443 = vmul.f32 %v7587, %v9297
        %v9444 = vmul.f32 %v7588, %v9299
        %v9445 = vmul.f32 %v7589, %v9301
        %v9446 = vmul.f32 %v7590, %v9303
        %v9447 = vmul.f32 %v7591, %v9305
        %v9448 = vmul.f32 %v7592, %v9307
        %v9449 = vmul.f32 %v7593, %v9309
        %v9450 = vmul.f32 %v7594, %v9311
        %v9451 = vmul.f32 %v7595, %v9313
        %v9452 = vmul.f32 %v7596, %v9315
        %v9453 = vmul.f32 %v7597, %v9317
        %v9454 = vmul.f32 %v7598, %v9319
        %v9455 = vmul.f32 %v7599, %v9321
        %v9456 = vmul.f32 %v7600, %v9323
        %v9457 = vmul.f32 %v7601, %v9325
        %v9458 = vmul.f32 %v7602, %v9327
        %v9459 = vmul.f32 %v7603, %v9329
        %v9460 = vmul.f32 %v7604, %v9331
        %v9461 = vmul.f32 %v7605, %v9333
        %9463 = vset.pattern.permute.xlu0 2
        %9464 = vperm.xlu0 %9463, %v9398
        %v9465 = vpop.permute.xlu0 %9464
        %9468 = vset.pattern.permute.xlu0 2
        %9469 = vperm.xlu0 %9468, %v9399
        %v9470 = vpop.permute.xlu0 %9469
        %9473 = vset.pattern.permute.xlu0 2
        %9474 = vperm.xlu0 %9473, %v9400
        %v9475 = vpop.permute.xlu0 %9474
        %9478 = vset.pattern.permute.xlu0 2
        %9479 = vperm.xlu0 %9478, %v9401
        %v9480 = vpop.permute.xlu0 %9479
        %9483 = vset.pattern.permute.xlu0 2
        %9484 = vperm.xlu0 %9483, %v9402
        %v9485 = vpop.permute.xlu0 %9484
        %9488 = vset.pattern.permute.xlu0 2
        %9489 = vperm.xlu0 %9488, %v9403
        %v9490 = vpop.permute.xlu0 %9489
        %9493 = vset.pattern.permute.xlu0 2
        %9494 = vperm.xlu0 %9493, %v9404
        %v9495 = vpop.permute.xlu0 %9494
        %9498 = vset.pattern.permute.xlu0 2
        %9499 = vperm.xlu0 %9498, %v9405
        %v9500 = vpop.permute.xlu0 %9499
        %9503 = vset.pattern.permute.xlu0 2
        %9504 = vperm.xlu0 %9503, %v9406
        %v9505 = vpop.permute.xlu0 %9504
        %9508 = vset.pattern.permute.xlu0 2
        %9509 = vperm.xlu0 %9508, %v9407
        %v9510 = vpop.permute.xlu0 %9509
        %9513 = vset.pattern.permute.xlu0 2
        %9514 = vperm.xlu0 %9513, %v9408
        %v9515 = vpop.permute.xlu0 %9514
        %9518 = vset.pattern.permute.xlu0 2
        %9519 = vperm.xlu0 %9518, %v9409
        %v9520 = vpop.permute.xlu0 %9519
        %9523 = vset.pattern.permute.xlu0 2
        %9524 = vperm.xlu0 %9523, %v9410
        %v9525 = vpop.permute.xlu0 %9524
        %9528 = vset.pattern.permute.xlu0 2
        %9529 = vperm.xlu0 %9528, %v9411
        %v9530 = vpop.permute.xlu0 %9529
        %9533 = vset.pattern.permute.xlu0 2
        %9534 = vperm.xlu0 %9533, %v9412
        %v9535 = vpop.permute.xlu0 %9534
        %9538 = vset.pattern.permute.xlu0 2
        %9539 = vperm.xlu0 %9538, %v9413
        %v9540 = vpop.permute.xlu0 %9539
        %9543 = vset.pattern.permute.xlu0 2
        %9544 = vperm.xlu0 %9543, %v9414
        %v9545 = vpop.permute.xlu0 %9544
        %9548 = vset.pattern.permute.xlu0 2
        %9549 = vperm.xlu0 %9548, %v9415
        %v9550 = vpop.permute.xlu0 %9549
        %9553 = vset.pattern.permute.xlu0 2
        %9554 = vperm.xlu0 %9553, %v9416
        %v9555 = vpop.permute.xlu0 %9554
        %9558 = vset.pattern.permute.xlu0 2
        %9559 = vperm.xlu0 %9558, %v9417
        %v9560 = vpop.permute.xlu0 %9559
        %9563 = vset.pattern.permute.xlu0 2
        %9564 = vperm.xlu0 %9563, %v9418
        %v9565 = vpop.permute.xlu0 %9564
        %9568 = vset.pattern.permute.xlu0 2
        %9569 = vperm.xlu0 %9568, %v9419
        %v9570 = vpop.permute.xlu0 %9569
        %9573 = vset.pattern.permute.xlu0 2
        %9574 = vperm.xlu0 %9573, %v9420
        %v9575 = vpop.permute.xlu0 %9574
        %9578 = vset.pattern.permute.xlu0 2
        %9579 = vperm.xlu0 %9578, %v9421
        %v9580 = vpop.permute.xlu0 %9579
        %9583 = vset.pattern.permute.xlu0 2
        %9584 = vperm.xlu0 %9583, %v9422
        %v9585 = vpop.permute.xlu0 %9584
        %9588 = vset.pattern.permute.xlu0 2
        %9589 = vperm.xlu0 %9588, %v9423
        %v9590 = vpop.permute.xlu0 %9589
        %9593 = vset.pattern.permute.xlu0 2
        %9594 = vperm.xlu0 %9593, %v9424
        %v9595 = vpop.permute.xlu0 %9594
        %9598 = vset.pattern.permute.xlu0 2
        %9599 = vperm.xlu0 %9598, %v9425
        %v9600 = vpop.permute.xlu0 %9599
        %9603 = vset.pattern.permute.xlu0 2
        %9604 = vperm.xlu0 %9603, %v9426
        %v9605 = vpop.permute.xlu0 %9604
        %9608 = vset.pattern.permute.xlu0 2
        %9609 = vperm.xlu0 %9608, %v9427
        %v9610 = vpop.permute.xlu0 %9609
        %9613 = vset.pattern.permute.xlu0 2
        %9614 = vperm.xlu0 %9613, %v9428
        %v9615 = vpop.permute.xlu0 %9614
        %9618 = vset.pattern.permute.xlu0 2
        %9619 = vperm.xlu0 %9618, %v9429
        %v9620 = vpop.permute.xlu0 %9619
        %9623 = vset.pattern.permute.xlu0 2
        %9624 = vperm.xlu0 %9623, %v9430
        %v9625 = vpop.permute.xlu0 %9624
        %9628 = vset.pattern.permute.xlu0 2
        %9629 = vperm.xlu0 %9628, %v9431
        %v9630 = vpop.permute.xlu0 %9629
        %9633 = vset.pattern.permute.xlu0 2
        %9634 = vperm.xlu0 %9633, %v9432
        %v9635 = vpop.permute.xlu0 %9634
        %9638 = vset.pattern.permute.xlu0 2
        %9639 = vperm.xlu0 %9638, %v9433
        %v9640 = vpop.permute.xlu0 %9639
        %9643 = vset.pattern.permute.xlu0 2
        %9644 = vperm.xlu0 %9643, %v9434
        %v9645 = vpop.permute.xlu0 %9644
        %9648 = vset.pattern.permute.xlu0 2
        %9649 = vperm.xlu0 %9648, %v9435
        %v9650 = vpop.permute.xlu0 %9649
        %9653 = vset.pattern.permute.xlu0 2
        %9654 = vperm.xlu0 %9653, %v9436
        %v9655 = vpop.permute.xlu0 %9654
        %9658 = vset.pattern.permute.xlu0 2
        %9659 = vperm.xlu0 %9658, %v9437
        %v9660 = vpop.permute.xlu0 %9659
        %9663 = vset.pattern.permute.xlu0 2
        %9664 = vperm.xlu0 %9663, %v9438
        %v9665 = vpop.permute.xlu0 %9664
        %9668 = vset.pattern.permute.xlu0 2
        %9669 = vperm.xlu0 %9668, %v9439
        %v9670 = vpop.permute.xlu0 %9669
        %9673 = vset.pattern.permute.xlu0 2
        %9674 = vperm.xlu0 %9673, %v9440
        %v9675 = vpop.permute.xlu0 %9674
        %9678 = vset.pattern.permute.xlu0 2
        %9679 = vperm.xlu0 %9678, %v9441
        %v9680 = vpop.permute.xlu0 %9679
        %9683 = vset.pattern.permute.xlu0 2
        %9684 = vperm.xlu0 %9683, %v9442
        %v9685 = vpop.permute.xlu0 %9684
        %9688 = vset.pattern.permute.xlu0 2
        %9689 = vperm.xlu0 %9688, %v9443
        %v9690 = vpop.permute.xlu0 %9689
        %9693 = vset.pattern.permute.xlu0 2
        %9694 = vperm.xlu0 %9693, %v9444
        %v9695 = vpop.permute.xlu0 %9694
        %9698 = vset.pattern.permute.xlu0 2
        %9699 = vperm.xlu0 %9698, %v9445
        %v9700 = vpop.permute.xlu0 %9699
        %9703 = vset.pattern.permute.xlu0 2
        %9704 = vperm.xlu0 %9703, %v9446
        %v9705 = vpop.permute.xlu0 %9704
        %9708 = vset.pattern.permute.xlu0 2
        %9709 = vperm.xlu0 %9708, %v9447
        %v9710 = vpop.permute.xlu0 %9709
        %9713 = vset.pattern.permute.xlu0 2
        %9714 = vperm.xlu0 %9713, %v9448
        %v9715 = vpop.permute.xlu0 %9714
        %9718 = vset.pattern.permute.xlu0 2
        %9719 = vperm.xlu0 %9718, %v9449
        %v9720 = vpop.permute.xlu0 %9719
        %9723 = vset.pattern.permute.xlu0 2
        %9724 = vperm.xlu0 %9723, %v9450
        %v9725 = vpop.permute.xlu0 %9724
        %9728 = vset.pattern.permute.xlu0 2
        %9729 = vperm.xlu0 %9728, %v9451
        %v9730 = vpop.permute.xlu0 %9729
        %9733 = vset.pattern.permute.xlu0 2
        %9734 = vperm.xlu0 %9733, %v9452
        %v9735 = vpop.permute.xlu0 %9734
        %9738 = vset.pattern.permute.xlu0 2
        %9739 = vperm.xlu0 %9738, %v9453
        %v9740 = vpop.permute.xlu0 %9739
        %9743 = vset.pattern.permute.xlu0 2
        %9744 = vperm.xlu0 %9743, %v9454
        %v9745 = vpop.permute.xlu0 %9744
        %9748 = vset.pattern.permute.xlu0 2
        %9749 = vperm.xlu0 %9748, %v9455
        %v9750 = vpop.permute.xlu0 %9749
        %9753 = vset.pattern.permute.xlu0 2
        %9754 = vperm.xlu0 %9753, %v9456
        %v9755 = vpop.permute.xlu0 %9754
        %9758 = vset.pattern.permute.xlu0 2
        %9759 = vperm.xlu0 %9758, %v9457
        %v9760 = vpop.permute.xlu0 %9759
        %9763 = vset.pattern.permute.xlu0 2
        %9764 = vperm.xlu0 %9763, %v9458
        %v9765 = vpop.permute.xlu0 %9764
        %9768 = vset.pattern.permute.xlu0 2
        %9769 = vperm.xlu0 %9768, %v9459
        %v9770 = vpop.permute.xlu0 %9769
        %9773 = vset.pattern.permute.xlu0 2
        %9774 = vperm.xlu0 %9773, %v9460
        %v9775 = vpop.permute.xlu0 %9774
        %9778 = vset.pattern.permute.xlu0 2
        %9779 = vperm.xlu0 %9778, %v9461
        %v9780 = vpop.permute.xlu0 %9779
        %v9782 = vmul.f32 %v6712, %v9465
        %v9783 = vmul.f32 %v6715, %v9470
        %v9784 = vmul.f32 %v6720, %v9475
        %v9785 = vmul.f32 %v6723, %v9480
        %v9786 = vmul.f32 %v6728, %v9485
        %v9787 = vmul.f32 %v6731, %v9490
        %v9788 = vmul.f32 %v6736, %v9495
        %v9789 = vmul.f32 %v6739, %v9500
        %v9790 = vmul.f32 %v6744, %v9505
        %v9791 = vmul.f32 %v6747, %v9510
        %v9792 = vmul.f32 %v6752, %v9515
        %v9793 = vmul.f32 %v6755, %v9520
        %v9794 = vmul.f32 %v6760, %v9525
        %v9795 = vmul.f32 %v6763, %v9530
        %v9796 = vmul.f32 %v6768, %v9535
        %v9797 = vmul.f32 %v6771, %v9540
        %v9798 = vmul.f32 %v6776, %v9545
        %v9799 = vmul.f32 %v6779, %v9550
        %v9800 = vmul.f32 %v6784, %v9555
        %v9801 = vmul.f32 %v6787, %v9560
        %v9802 = vmul.f32 %v6792, %v9565
        %v9803 = vmul.f32 %v6795, %v9570
        %v9804 = vmul.f32 %v6800, %v9575
        %v9805 = vmul.f32 %v6803, %v9580
        %v9806 = vmul.f32 %v6808, %v9585
        %v9807 = vmul.f32 %v6811, %v9590
        %v9808 = vmul.f32 %v6816, %v9595
        %v9809 = vmul.f32 %v6819, %v9600
        %v9810 = vmul.f32 %v6824, %v9605
        %v9811 = vmul.f32 %v6827, %v9610
        %v9812 = vmul.f32 %v6832, %v9615
        %v9813 = vmul.f32 %v6835, %v9620
        %v9814 = vmul.f32 %v6840, %v9625
        %v9815 = vmul.f32 %v6843, %v9630
        %v9816 = vmul.f32 %v6848, %v9635
        %v9817 = vmul.f32 %v6851, %v9640
        %v9818 = vmul.f32 %v6856, %v9645
        %v9819 = vmul.f32 %v6859, %v9650
        %v9820 = vmul.f32 %v6864, %v9655
        %v9821 = vmul.f32 %v6867, %v9660
        %v9822 = vmul.f32 %v6872, %v9665
        %v9823 = vmul.f32 %v6875, %v9670
        %v9824 = vmul.f32 %v6880, %v9675
        %v9825 = vmul.f32 %v6883, %v9680
        %v9826 = vmul.f32 %v6888, %v9685
        %v9827 = vmul.f32 %v6891, %v9690
        %v9828 = vmul.f32 %v6896, %v9695
        %v9829 = vmul.f32 %v6899, %v9700
        %v9830 = vmul.f32 %v6904, %v9705
        %v9831 = vmul.f32 %v6907, %v9710
        %v9832 = vmul.f32 %v6912, %v9715
        %v9833 = vmul.f32 %v6915, %v9720
        %v9834 = vmul.f32 %v6920, %v9725
        %v9835 = vmul.f32 %v6923, %v9730
        %v9836 = vmul.f32 %v6928, %v9735
        %v9837 = vmul.f32 %v6931, %v9740
        %v9838 = vmul.f32 %v6936, %v9745
        %v9839 = vmul.f32 %v6939, %v9750
        %v9840 = vmul.f32 %v6944, %v9755
        %v9841 = vmul.f32 %v6947, %v9760
        %v9842 = vmul.f32 %v6952, %v9765
        %v9843 = vmul.f32 %v6955, %v9770
        %v9844 = vmul.f32 %v6960, %v9775
        %v9845 = vmul.f32 %v6963, %v9780
        %v9846 = vadd.f32 %v9142, %v9782
        %v9847 = vadd.f32 %v9143, %v9783
        %v9848 = vadd.f32 %v9144, %v9784
        %v9849 = vadd.f32 %v9145, %v9785
        %v9850 = vadd.f32 %v9146, %v9786
        %v9851 = vadd.f32 %v9147, %v9787
        %v9852 = vadd.f32 %v9148, %v9788
        %v9853 = vadd.f32 %v9149, %v9789
        %v9854 = vadd.f32 %v9150, %v9790
        %v9855 = vadd.f32 %v9151, %v9791
        %v9856 = vadd.f32 %v9152, %v9792
        %v9857 = vadd.f32 %v9153, %v9793
        %v9858 = vadd.f32 %v9154, %v9794
        %v9859 = vadd.f32 %v9155, %v9795
        %v9860 = vadd.f32 %v9156, %v9796
        %v9861 = vadd.f32 %v9157, %v9797
        %v9862 = vadd.f32 %v9158, %v9798
        %v9863 = vadd.f32 %v9159, %v9799
        %v9864 = vadd.f32 %v9160, %v9800
        %v9865 = vadd.f32 %v9161, %v9801
        %v9866 = vadd.f32 %v9162, %v9802
        %v9867 = vadd.f32 %v9163, %v9803
        %v9868 = vadd.f32 %v9164, %v9804
        %v9869 = vadd.f32 %v9165, %v9805
        %v9870 = vadd.f32 %v9166, %v9806
        %v9871 = vadd.f32 %v9167, %v9807
        %v9872 = vadd.f32 %v9168, %v9808
        %v9873 = vadd.f32 %v9169, %v9809
        %v9874 = vadd.f32 %v9170, %v9810
        %v9875 = vadd.f32 %v9171, %v9811
        %v9876 = vadd.f32 %v9172, %v9812
        %v9877 = vadd.f32 %v9173, %v9813
        %v9878 = vadd.f32 %v9174, %v9814
        %v9879 = vadd.f32 %v9175, %v9815
        %v9880 = vadd.f32 %v9176, %v9816
        %v9881 = vadd.f32 %v9177, %v9817
        %v9882 = vadd.f32 %v9178, %v9818
        %v9883 = vadd.f32 %v9179, %v9819
        %v9884 = vadd.f32 %v9180, %v9820
        %v9885 = vadd.f32 %v9181, %v9821
        %v9886 = vadd.f32 %v9182, %v9822
        %v9887 = vadd.f32 %v9183, %v9823
        %v9888 = vadd.f32 %v9184, %v9824
        %v9889 = vadd.f32 %v9185, %v9825
        %v9890 = vadd.f32 %v9186, %v9826
        %v9891 = vadd.f32 %v9187, %v9827
        %v9892 = vadd.f32 %v9188, %v9828
        %v9893 = vadd.f32 %v9189, %v9829
        %v9894 = vadd.f32 %v9190, %v9830
        %v9895 = vadd.f32 %v9191, %v9831
        %v9896 = vadd.f32 %v9192, %v9832
        %v9897 = vadd.f32 %v9193, %v9833
        %v9898 = vadd.f32 %v9194, %v9834
        %v9899 = vadd.f32 %v9195, %v9835
        %v9900 = vadd.f32 %v9196, %v9836
        %v9901 = vadd.f32 %v9197, %v9837
        %v9902 = vadd.f32 %v9198, %v9838
        %v9903 = vadd.f32 %v9199, %v9839
        %v9904 = vadd.f32 %v9200, %v9840
        %v9905 = vadd.f32 %v9201, %v9841
        %v9906 = vadd.f32 %v9202, %v9842
        %v9907 = vadd.f32 %v9203, %v9843
        %v9908 = vadd.f32 %v9204, %v9844
        %v9909 = vadd.f32 %v9205, %v9845
        %9910 = vrot.lane.b32.xlu0 %v8438, 1
        %v9911 = vpop.permute.xlu0 %9910
        %9912 = vrot.lane.b32.xlu0 %v8439, 1
        %v9913 = vpop.permute.xlu0 %9912
        %9914 = vrot.lane.b32.xlu0 %v8440, 1
        %v9915 = vpop.permute.xlu0 %9914
        %9916 = vrot.lane.b32.xlu0 %v8441, 1
        %v9917 = vpop.permute.xlu0 %9916
        %9918 = vrot.lane.b32.xlu0 %v8442, 1
        %v9919 = vpop.permute.xlu0 %9918
        %9920 = vrot.lane.b32.xlu0 %v8443, 1
        %v9921 = vpop.permute.xlu0 %9920
        %9922 = vrot.lane.b32.xlu0 %v8444, 1
        %v9923 = vpop.permute.xlu0 %9922
        %9924 = vrot.lane.b32.xlu0 %v8445, 1
        %v9925 = vpop.permute.xlu0 %9924
        %9926 = vrot.lane.b32.xlu0 %v8446, 1
        %v9927 = vpop.permute.xlu0 %9926
        %9928 = vrot.lane.b32.xlu0 %v8447, 1
        %v9929 = vpop.permute.xlu0 %9928
        %9930 = vrot.lane.b32.xlu0 %v8448, 1
        %v9931 = vpop.permute.xlu0 %9930
        %9932 = vrot.lane.b32.xlu0 %v8449, 1
        %v9933 = vpop.permute.xlu0 %9932
        %9934 = vrot.lane.b32.xlu0 %v8450, 1
        %v9935 = vpop.permute.xlu0 %9934
        %9936 = vrot.lane.b32.xlu0 %v8451, 1
        %v9937 = vpop.permute.xlu0 %9936
        %9938 = vrot.lane.b32.xlu0 %v8452, 1
        %v9939 = vpop.permute.xlu0 %9938
        %9940 = vrot.lane.b32.xlu0 %v8453, 1
        %v9941 = vpop.permute.xlu0 %9940
        %9942 = vrot.lane.b32.xlu0 %v8454, 1
        %v9943 = vpop.permute.xlu0 %9942
        %9944 = vrot.lane.b32.xlu0 %v8455, 1
        %v9945 = vpop.permute.xlu0 %9944
        %9946 = vrot.lane.b32.xlu0 %v8456, 1
        %v9947 = vpop.permute.xlu0 %9946
        %9948 = vrot.lane.b32.xlu0 %v8457, 1
        %v9949 = vpop.permute.xlu0 %9948
        %9950 = vrot.lane.b32.xlu0 %v8458, 1
        %v9951 = vpop.permute.xlu0 %9950
        %9952 = vrot.lane.b32.xlu0 %v8459, 1
        %v9953 = vpop.permute.xlu0 %9952
        %9954 = vrot.lane.b32.xlu0 %v8460, 1
        %v9955 = vpop.permute.xlu0 %9954
        %9956 = vrot.lane.b32.xlu0 %v8461, 1
        %v9957 = vpop.permute.xlu0 %9956
        %9958 = vrot.lane.b32.xlu0 %v8462, 1
        %v9959 = vpop.permute.xlu0 %9958
        %9960 = vrot.lane.b32.xlu0 %v8463, 1
        %v9961 = vpop.permute.xlu0 %9960
        %9962 = vrot.lane.b32.xlu0 %v8464, 1
        %v9963 = vpop.permute.xlu0 %9962
        %9964 = vrot.lane.b32.xlu0 %v8465, 1
        %v9965 = vpop.permute.xlu0 %9964
        %9966 = vrot.lane.b32.xlu0 %v8466, 1
        %v9967 = vpop.permute.xlu0 %9966
        %9968 = vrot.lane.b32.xlu0 %v8467, 1
        %v9969 = vpop.permute.xlu0 %9968
        %9970 = vrot.lane.b32.xlu0 %v8468, 1
        %v9971 = vpop.permute.xlu0 %9970
        %9972 = vrot.lane.b32.xlu0 %v8469, 1
        %v9973 = vpop.permute.xlu0 %9972
        %9974 = vrot.lane.b32.xlu0 %v8470, 1
        %v9975 = vpop.permute.xlu0 %9974
        %9976 = vrot.lane.b32.xlu0 %v8471, 1
        %v9977 = vpop.permute.xlu0 %9976
        %9978 = vrot.lane.b32.xlu0 %v8472, 1
        %v9979 = vpop.permute.xlu0 %9978
        %9980 = vrot.lane.b32.xlu0 %v8473, 1
        %v9981 = vpop.permute.xlu0 %9980
        %9982 = vrot.lane.b32.xlu0 %v8474, 1
        %v9983 = vpop.permute.xlu0 %9982
        %9984 = vrot.lane.b32.xlu0 %v8475, 1
        %v9985 = vpop.permute.xlu0 %9984
        %9986 = vrot.lane.b32.xlu0 %v8476, 1
        %v9987 = vpop.permute.xlu0 %9986
        %9988 = vrot.lane.b32.xlu0 %v8477, 1
        %v9989 = vpop.permute.xlu0 %9988
        %9990 = vrot.lane.b32.xlu0 %v8478, 1
        %v9991 = vpop.permute.xlu0 %9990
        %9992 = vrot.lane.b32.xlu0 %v8479, 1
        %v9993 = vpop.permute.xlu0 %9992
        %9994 = vrot.lane.b32.xlu0 %v8480, 1
        %v9995 = vpop.permute.xlu0 %9994
        %9996 = vrot.lane.b32.xlu0 %v8481, 1
        %v9997 = vpop.permute.xlu0 %9996
        %9998 = vrot.lane.b32.xlu0 %v8482, 1
        %v9999 = vpop.permute.xlu0 %9998
        %10000 = vrot.lane.b32.xlu0 %v8483, 1
        %v10001 = vpop.permute.xlu0 %10000
        %10002 = vrot.lane.b32.xlu0 %v8484, 1
        %v10003 = vpop.permute.xlu0 %10002
        %10004 = vrot.lane.b32.xlu0 %v8485, 1
        %v10005 = vpop.permute.xlu0 %10004
        %10006 = vrot.lane.b32.xlu0 %v8486, 1
        %v10007 = vpop.permute.xlu0 %10006
        %10008 = vrot.lane.b32.xlu0 %v8487, 1
        %v10009 = vpop.permute.xlu0 %10008
        %10010 = vrot.lane.b32.xlu0 %v8488, 1
        %v10011 = vpop.permute.xlu0 %10010
        %10012 = vrot.lane.b32.xlu0 %v8489, 1
        %v10013 = vpop.permute.xlu0 %10012
        %10014 = vrot.lane.b32.xlu0 %v8490, 1
        %v10015 = vpop.permute.xlu0 %10014
        %10016 = vrot.lane.b32.xlu0 %v8491, 1
        %v10017 = vpop.permute.xlu0 %10016
        %10018 = vrot.lane.b32.xlu0 %v8492, 1
        %v10019 = vpop.permute.xlu0 %10018
        %10020 = vrot.lane.b32.xlu0 %v8493, 1
        %v10021 = vpop.permute.xlu0 %10020
        %10022 = vrot.lane.b32.xlu0 %v8494, 1
        %v10023 = vpop.permute.xlu0 %10022
        %10024 = vrot.lane.b32.xlu0 %v8495, 1
        %v10025 = vpop.permute.xlu0 %10024
        %10026 = vrot.lane.b32.xlu0 %v8496, 1
        %v10027 = vpop.permute.xlu0 %10026
        %10028 = vrot.lane.b32.xlu0 %v8497, 1
        %v10029 = vpop.permute.xlu0 %10028
        %10030 = vrot.lane.b32.xlu0 %v8498, 1
        %v10031 = vpop.permute.xlu0 %10030
        %10032 = vrot.lane.b32.xlu0 %v8499, 1
        %v10033 = vpop.permute.xlu0 %10032
        %10034 = vrot.lane.b32.xlu0 %v8500, 1
        %v10035 = vpop.permute.xlu0 %10034
        %10036 = vrot.lane.b32.xlu0 %v8501, 1
        %v10037 = vpop.permute.xlu0 %10036
        %v10102 = vmul.f32 %v7542, %v9911
        %v10103 = vmul.f32 %v7543, %v9913
        %v10104 = vmul.f32 %v7544, %v9915
        %v10105 = vmul.f32 %v7545, %v9917
        %v10106 = vmul.f32 %v7546, %v9919
        %v10107 = vmul.f32 %v7547, %v9921
        %v10108 = vmul.f32 %v7548, %v9923
        %v10109 = vmul.f32 %v7549, %v9925
        %v10110 = vmul.f32 %v7550, %v9927
        %v10111 = vmul.f32 %v7551, %v9929
        %v10112 = vmul.f32 %v7552, %v9931
        %v10113 = vmul.f32 %v7553, %v9933
        %v10114 = vmul.f32 %v7554, %v9935
        %v10115 = vmul.f32 %v7555, %v9937
        %v10116 = vmul.f32 %v7556, %v9939
        %v10117 = vmul.f32 %v7557, %v9941
        %v10118 = vmul.f32 %v7558, %v9943
        %v10119 = vmul.f32 %v7559, %v9945
        %v10120 = vmul.f32 %v7560, %v9947
        %v10121 = vmul.f32 %v7561, %v9949
        %v10122 = vmul.f32 %v7562, %v9951
        %v10123 = vmul.f32 %v7563, %v9953
        %v10124 = vmul.f32 %v7564, %v9955
        %v10125 = vmul.f32 %v7565, %v9957
        %v10126 = vmul.f32 %v7566, %v9959
        %v10127 = vmul.f32 %v7567, %v9961
        %v10128 = vmul.f32 %v7568, %v9963
        %v10129 = vmul.f32 %v7569, %v9965
        %v10130 = vmul.f32 %v7570, %v9967
        %v10131 = vmul.f32 %v7571, %v9969
        %v10132 = vmul.f32 %v7572, %v9971
        %v10133 = vmul.f32 %v7573, %v9973
        %v10134 = vmul.f32 %v7574, %v9975
        %v10135 = vmul.f32 %v7575, %v9977
        %v10136 = vmul.f32 %v7576, %v9979
        %v10137 = vmul.f32 %v7577, %v9981
        %v10138 = vmul.f32 %v7578, %v9983
        %v10139 = vmul.f32 %v7579, %v9985
        %v10140 = vmul.f32 %v7580, %v9987
        %v10141 = vmul.f32 %v7581, %v9989
        %v10142 = vmul.f32 %v7582, %v9991
        %v10143 = vmul.f32 %v7583, %v9993
        %v10144 = vmul.f32 %v7584, %v9995
        %v10145 = vmul.f32 %v7585, %v9997
        %v10146 = vmul.f32 %v7586, %v9999
        %v10147 = vmul.f32 %v7587, %v10001
        %v10148 = vmul.f32 %v7588, %v10003
        %v10149 = vmul.f32 %v7589, %v10005
        %v10150 = vmul.f32 %v7590, %v10007
        %v10151 = vmul.f32 %v7591, %v10009
        %v10152 = vmul.f32 %v7592, %v10011
        %v10153 = vmul.f32 %v7593, %v10013
        %v10154 = vmul.f32 %v7594, %v10015
        %v10155 = vmul.f32 %v7595, %v10017
        %v10156 = vmul.f32 %v7596, %v10019
        %v10157 = vmul.f32 %v7597, %v10021
        %v10158 = vmul.f32 %v7598, %v10023
        %v10159 = vmul.f32 %v7599, %v10025
        %v10160 = vmul.f32 %v7600, %v10027
        %v10161 = vmul.f32 %v7601, %v10029
        %v10162 = vmul.f32 %v7602, %v10031
        %v10163 = vmul.f32 %v7603, %v10033
        %v10164 = vmul.f32 %v7604, %v10035
        %v10165 = vmul.f32 %v7605, %v10037
        %10167 = vset.pattern.permute.xlu0 1
        %10168 = vperm.xlu0 %10167, %v10102
        %v10169 = vpop.permute.xlu0 %10168
        %10172 = vset.pattern.permute.xlu0 1
        %10173 = vperm.xlu0 %10172, %v10103
        %v10174 = vpop.permute.xlu0 %10173
        %10177 = vset.pattern.permute.xlu0 1
        %10178 = vperm.xlu0 %10177, %v10104
        %v10179 = vpop.permute.xlu0 %10178
        %10182 = vset.pattern.permute.xlu0 1
        %10183 = vperm.xlu0 %10182, %v10105
        %v10184 = vpop.permute.xlu0 %10183
        %10187 = vset.pattern.permute.xlu0 1
        %10188 = vperm.xlu0 %10187, %v10106
        %v10189 = vpop.permute.xlu0 %10188
        %10192 = vset.pattern.permute.xlu0 1
        %10193 = vperm.xlu0 %10192, %v10107
        %v10194 = vpop.permute.xlu0 %10193
        %10197 = vset.pattern.permute.xlu0 1
        %10198 = vperm.xlu0 %10197, %v10108
        %v10199 = vpop.permute.xlu0 %10198
        %10202 = vset.pattern.permute.xlu0 1
        %10203 = vperm.xlu0 %10202, %v10109
        %v10204 = vpop.permute.xlu0 %10203
        %10207 = vset.pattern.permute.xlu0 1
        %10208 = vperm.xlu0 %10207, %v10110
        %v10209 = vpop.permute.xlu0 %10208
        %10212 = vset.pattern.permute.xlu0 1
        %10213 = vperm.xlu0 %10212, %v10111
        %v10214 = vpop.permute.xlu0 %10213
        %10217 = vset.pattern.permute.xlu0 1
        %10218 = vperm.xlu0 %10217, %v10112
        %v10219 = vpop.permute.xlu0 %10218
        %10222 = vset.pattern.permute.xlu0 1
        %10223 = vperm.xlu0 %10222, %v10113
        %v10224 = vpop.permute.xlu0 %10223
        %10227 = vset.pattern.permute.xlu0 1
        %10228 = vperm.xlu0 %10227, %v10114
        %v10229 = vpop.permute.xlu0 %10228
        %10232 = vset.pattern.permute.xlu0 1
        %10233 = vperm.xlu0 %10232, %v10115
        %v10234 = vpop.permute.xlu0 %10233
        %10237 = vset.pattern.permute.xlu0 1
        %10238 = vperm.xlu0 %10237, %v10116
        %v10239 = vpop.permute.xlu0 %10238
        %10242 = vset.pattern.permute.xlu0 1
        %10243 = vperm.xlu0 %10242, %v10117
        %v10244 = vpop.permute.xlu0 %10243
        %10247 = vset.pattern.permute.xlu0 1
        %10248 = vperm.xlu0 %10247, %v10118
        %v10249 = vpop.permute.xlu0 %10248
        %10252 = vset.pattern.permute.xlu0 1
        %10253 = vperm.xlu0 %10252, %v10119
        %v10254 = vpop.permute.xlu0 %10253
        %10257 = vset.pattern.permute.xlu0 1
        %10258 = vperm.xlu0 %10257, %v10120
        %v10259 = vpop.permute.xlu0 %10258
        %10262 = vset.pattern.permute.xlu0 1
        %10263 = vperm.xlu0 %10262, %v10121
        %v10264 = vpop.permute.xlu0 %10263
        %10267 = vset.pattern.permute.xlu0 1
        %10268 = vperm.xlu0 %10267, %v10122
        %v10269 = vpop.permute.xlu0 %10268
        %10272 = vset.pattern.permute.xlu0 1
        %10273 = vperm.xlu0 %10272, %v10123
        %v10274 = vpop.permute.xlu0 %10273
        %10277 = vset.pattern.permute.xlu0 1
        %10278 = vperm.xlu0 %10277, %v10124
        %v10279 = vpop.permute.xlu0 %10278
        %10282 = vset.pattern.permute.xlu0 1
        %10283 = vperm.xlu0 %10282, %v10125
        %v10284 = vpop.permute.xlu0 %10283
        %10287 = vset.pattern.permute.xlu0 1
        %10288 = vperm.xlu0 %10287, %v10126
        %v10289 = vpop.permute.xlu0 %10288
        %10292 = vset.pattern.permute.xlu0 1
        %10293 = vperm.xlu0 %10292, %v10127
        %v10294 = vpop.permute.xlu0 %10293
        %10297 = vset.pattern.permute.xlu0 1
        %10298 = vperm.xlu0 %10297, %v10128
        %v10299 = vpop.permute.xlu0 %10298
        %10302 = vset.pattern.permute.xlu0 1
        %10303 = vperm.xlu0 %10302, %v10129
        %v10304 = vpop.permute.xlu0 %10303
        %10307 = vset.pattern.permute.xlu0 1
        %10308 = vperm.xlu0 %10307, %v10130
        %v10309 = vpop.permute.xlu0 %10308
        %10312 = vset.pattern.permute.xlu0 1
        %10313 = vperm.xlu0 %10312, %v10131
        %v10314 = vpop.permute.xlu0 %10313
        %10317 = vset.pattern.permute.xlu0 1
        %10318 = vperm.xlu0 %10317, %v10132
        %v10319 = vpop.permute.xlu0 %10318
        %10322 = vset.pattern.permute.xlu0 1
        %10323 = vperm.xlu0 %10322, %v10133
        %v10324 = vpop.permute.xlu0 %10323
        %10327 = vset.pattern.permute.xlu0 1
        %10328 = vperm.xlu0 %10327, %v10134
        %v10329 = vpop.permute.xlu0 %10328
        %10332 = vset.pattern.permute.xlu0 1
        %10333 = vperm.xlu0 %10332, %v10135
        %v10334 = vpop.permute.xlu0 %10333
        %10337 = vset.pattern.permute.xlu0 1
        %10338 = vperm.xlu0 %10337, %v10136
        %v10339 = vpop.permute.xlu0 %10338
        %10342 = vset.pattern.permute.xlu0 1
        %10343 = vperm.xlu0 %10342, %v10137
        %v10344 = vpop.permute.xlu0 %10343
        %10347 = vset.pattern.permute.xlu0 1
        %10348 = vperm.xlu0 %10347, %v10138
        %v10349 = vpop.permute.xlu0 %10348
        %10352 = vset.pattern.permute.xlu0 1
        %10353 = vperm.xlu0 %10352, %v10139
        %v10354 = vpop.permute.xlu0 %10353
        %10357 = vset.pattern.permute.xlu0 1
        %10358 = vperm.xlu0 %10357, %v10140
        %v10359 = vpop.permute.xlu0 %10358
        %10362 = vset.pattern.permute.xlu0 1
        %10363 = vperm.xlu0 %10362, %v10141
        %v10364 = vpop.permute.xlu0 %10363
        %10367 = vset.pattern.permute.xlu0 1
        %10368 = vperm.xlu0 %10367, %v10142
        %v10369 = vpop.permute.xlu0 %10368
        %10372 = vset.pattern.permute.xlu0 1
        %10373 = vperm.xlu0 %10372, %v10143
        %v10374 = vpop.permute.xlu0 %10373
        %10377 = vset.pattern.permute.xlu0 1
        %10378 = vperm.xlu0 %10377, %v10144
        %v10379 = vpop.permute.xlu0 %10378
        %10382 = vset.pattern.permute.xlu0 1
        %10383 = vperm.xlu0 %10382, %v10145
        %v10384 = vpop.permute.xlu0 %10383
        %10387 = vset.pattern.permute.xlu0 1
        %10388 = vperm.xlu0 %10387, %v10146
        %v10389 = vpop.permute.xlu0 %10388
        %10392 = vset.pattern.permute.xlu0 1
        %10393 = vperm.xlu0 %10392, %v10147
        %v10394 = vpop.permute.xlu0 %10393
        %10397 = vset.pattern.permute.xlu0 1
        %10398 = vperm.xlu0 %10397, %v10148
        %v10399 = vpop.permute.xlu0 %10398
        %10402 = vset.pattern.permute.xlu0 1
        %10403 = vperm.xlu0 %10402, %v10149
        %v10404 = vpop.permute.xlu0 %10403
        %10407 = vset.pattern.permute.xlu0 1
        %10408 = vperm.xlu0 %10407, %v10150
        %v10409 = vpop.permute.xlu0 %10408
        %10412 = vset.pattern.permute.xlu0 1
        %10413 = vperm.xlu0 %10412, %v10151
        %v10414 = vpop.permute.xlu0 %10413
        %10417 = vset.pattern.permute.xlu0 1
        %10418 = vperm.xlu0 %10417, %v10152
        %v10419 = vpop.permute.xlu0 %10418
        %10422 = vset.pattern.permute.xlu0 1
        %10423 = vperm.xlu0 %10422, %v10153
        %v10424 = vpop.permute.xlu0 %10423
        %10427 = vset.pattern.permute.xlu0 1
        %10428 = vperm.xlu0 %10427, %v10154
        %v10429 = vpop.permute.xlu0 %10428
        %10432 = vset.pattern.permute.xlu0 1
        %10433 = vperm.xlu0 %10432, %v10155
        %v10434 = vpop.permute.xlu0 %10433
        %10437 = vset.pattern.permute.xlu0 1
        %10438 = vperm.xlu0 %10437, %v10156
        %v10439 = vpop.permute.xlu0 %10438
        %10442 = vset.pattern.permute.xlu0 1
        %10443 = vperm.xlu0 %10442, %v10157
        %v10444 = vpop.permute.xlu0 %10443
        %10447 = vset.pattern.permute.xlu0 1
        %10448 = vperm.xlu0 %10447, %v10158
        %v10449 = vpop.permute.xlu0 %10448
        %10452 = vset.pattern.permute.xlu0 1
        %10453 = vperm.xlu0 %10452, %v10159
        %v10454 = vpop.permute.xlu0 %10453
        %10457 = vset.pattern.permute.xlu0 1
        %10458 = vperm.xlu0 %10457, %v10160
        %v10459 = vpop.permute.xlu0 %10458
        %10462 = vset.pattern.permute.xlu0 1
        %10463 = vperm.xlu0 %10462, %v10161
        %v10464 = vpop.permute.xlu0 %10463
        %10467 = vset.pattern.permute.xlu0 1
        %10468 = vperm.xlu0 %10467, %v10162
        %v10469 = vpop.permute.xlu0 %10468
        %10472 = vset.pattern.permute.xlu0 1
        %10473 = vperm.xlu0 %10472, %v10163
        %v10474 = vpop.permute.xlu0 %10473
        %10477 = vset.pattern.permute.xlu0 1
        %10478 = vperm.xlu0 %10477, %v10164
        %v10479 = vpop.permute.xlu0 %10478
        %10482 = vset.pattern.permute.xlu0 1
        %10483 = vperm.xlu0 %10482, %v10165
        %v10484 = vpop.permute.xlu0 %10483
        %v10486 = vmul.f32 %v6968, %v10169
        %v10487 = vmul.f32 %v6971, %v10174
        %v10488 = vmul.f32 %v6976, %v10179
        %v10489 = vmul.f32 %v6979, %v10184
        %v10490 = vmul.f32 %v6984, %v10189
        %v10491 = vmul.f32 %v6987, %v10194
        %v10492 = vmul.f32 %v6992, %v10199
        %v10493 = vmul.f32 %v6995, %v10204
        %v10494 = vmul.f32 %v7000, %v10209
        %v10495 = vmul.f32 %v7003, %v10214
        %v10496 = vmul.f32 %v7008, %v10219
        %v10497 = vmul.f32 %v7011, %v10224
        %v10498 = vmul.f32 %v7016, %v10229
        %v10499 = vmul.f32 %v7019, %v10234
        %v10500 = vmul.f32 %v7024, %v10239
        %v10501 = vmul.f32 %v7027, %v10244
        %v10502 = vmul.f32 %v7032, %v10249
        %v10503 = vmul.f32 %v7035, %v10254
        %v10504 = vmul.f32 %v7040, %v10259
        %v10505 = vmul.f32 %v7043, %v10264
        %v10506 = vmul.f32 %v7048, %v10269
        %v10507 = vmul.f32 %v7051, %v10274
        %v10508 = vmul.f32 %v7056, %v10279
        %v10509 = vmul.f32 %v7059, %v10284
        %v10510 = vmul.f32 %v7064, %v10289
        %v10511 = vmul.f32 %v7067, %v10294
        %v10512 = vmul.f32 %v7072, %v10299
        %v10513 = vmul.f32 %v7075, %v10304
        %v10514 = vmul.f32 %v7080, %v10309
        %v10515 = vmul.f32 %v7083, %v10314
        %v10516 = vmul.f32 %v7088, %v10319
        %v10517 = vmul.f32 %v7091, %v10324
        %v10518 = vmul.f32 %v7096, %v10329
        %v10519 = vmul.f32 %v7099, %v10334
        %v10520 = vmul.f32 %v7104, %v10339
        %v10521 = vmul.f32 %v7107, %v10344
        %v10522 = vmul.f32 %v7112, %v10349
        %v10523 = vmul.f32 %v7115, %v10354
        %v10524 = vmul.f32 %v7120, %v10359
        %v10525 = vmul.f32 %v7123, %v10364
        %v10526 = vmul.f32 %v7128, %v10369
        %v10527 = vmul.f32 %v7131, %v10374
        %v10528 = vmul.f32 %v7136, %v10379
        %v10529 = vmul.f32 %v7139, %v10384
        %v10530 = vmul.f32 %v7144, %v10389
        %v10531 = vmul.f32 %v7147, %v10394
        %v10532 = vmul.f32 %v7152, %v10399
        %v10533 = vmul.f32 %v7155, %v10404
        %v10534 = vmul.f32 %v7160, %v10409
        %v10535 = vmul.f32 %v7163, %v10414
        %v10536 = vmul.f32 %v7168, %v10419
        %v10537 = vmul.f32 %v7171, %v10424
        %v10538 = vmul.f32 %v7176, %v10429
        %v10539 = vmul.f32 %v7179, %v10434
        %v10540 = vmul.f32 %v7184, %v10439
        %v10541 = vmul.f32 %v7187, %v10444
        %v10542 = vmul.f32 %v7192, %v10449
        %v10543 = vmul.f32 %v7195, %v10454
        %v10544 = vmul.f32 %v7200, %v10459
        %v10545 = vmul.f32 %v7203, %v10464
        %v10546 = vmul.f32 %v7208, %v10469
        %v10547 = vmul.f32 %v7211, %v10474
        %v10548 = vmul.f32 %v7216, %v10479
        %v10549 = vmul.f32 %v7219, %v10484
        %v10550 = vadd.f32 %v9846, %v10486
        %v10551 = vadd.f32 %v9847, %v10487
        %v10552 = vadd.f32 %v9848, %v10488
        %v10553 = vadd.f32 %v9849, %v10489
        %v10554 = vadd.f32 %v9850, %v10490
        %v10555 = vadd.f32 %v9851, %v10491
        %v10556 = vadd.f32 %v9852, %v10492
        %v10557 = vadd.f32 %v9853, %v10493
        %v10558 = vadd.f32 %v9854, %v10494
        %v10559 = vadd.f32 %v9855, %v10495
        %v10560 = vadd.f32 %v9856, %v10496
        %v10561 = vadd.f32 %v9857, %v10497
        %v10562 = vadd.f32 %v9858, %v10498
        %v10563 = vadd.f32 %v9859, %v10499
        %v10564 = vadd.f32 %v9860, %v10500
        %v10565 = vadd.f32 %v9861, %v10501
        %v10566 = vadd.f32 %v9862, %v10502
        %v10567 = vadd.f32 %v9863, %v10503
        %v10568 = vadd.f32 %v9864, %v10504
        %v10569 = vadd.f32 %v9865, %v10505
        %v10570 = vadd.f32 %v9866, %v10506
        %v10571 = vadd.f32 %v9867, %v10507
        %v10572 = vadd.f32 %v9868, %v10508
        %v10573 = vadd.f32 %v9869, %v10509
        %v10574 = vadd.f32 %v9870, %v10510
        %v10575 = vadd.f32 %v9871, %v10511
        %v10576 = vadd.f32 %v9872, %v10512
        %v10577 = vadd.f32 %v9873, %v10513
        %v10578 = vadd.f32 %v9874, %v10514
        %v10579 = vadd.f32 %v9875, %v10515
        %v10580 = vadd.f32 %v9876, %v10516
        %v10581 = vadd.f32 %v9877, %v10517
        %v10582 = vadd.f32 %v9878, %v10518
        %v10583 = vadd.f32 %v9879, %v10519
        %v10584 = vadd.f32 %v9880, %v10520
        %v10585 = vadd.f32 %v9881, %v10521
        %v10586 = vadd.f32 %v9882, %v10522
        %v10587 = vadd.f32 %v9883, %v10523
        %v10588 = vadd.f32 %v9884, %v10524
        %v10589 = vadd.f32 %v9885, %v10525
        %v10590 = vadd.f32 %v9886, %v10526
        %v10591 = vadd.f32 %v9887, %v10527
        %v10592 = vadd.f32 %v9888, %v10528
        %v10593 = vadd.f32 %v9889, %v10529
        %v10594 = vadd.f32 %v9890, %v10530
        %v10595 = vadd.f32 %v9891, %v10531
        %v10596 = vadd.f32 %v9892, %v10532
        %v10597 = vadd.f32 %v9893, %v10533
        %v10598 = vadd.f32 %v9894, %v10534
        %v10599 = vadd.f32 %v9895, %v10535
        %v10600 = vadd.f32 %v9896, %v10536
        %v10601 = vadd.f32 %v9897, %v10537
        %v10602 = vadd.f32 %v9898, %v10538
        %v10603 = vadd.f32 %v9899, %v10539
        %v10604 = vadd.f32 %v9900, %v10540
        %v10605 = vadd.f32 %v9901, %v10541
        %v10606 = vadd.f32 %v9902, %v10542
        %v10607 = vadd.f32 %v9903, %v10543
        %v10608 = vadd.f32 %v9904, %v10544
        %v10609 = vadd.f32 %v9905, %v10545
        %v10610 = vadd.f32 %v9906, %v10546
        %v10611 = vadd.f32 %v9907, %v10547
        %v10612 = vadd.f32 %v9908, %v10548
        %v10613 = vadd.f32 %v9909, %v10549
        %v10614 = vmul.f32 %v7542, %v8438
        %v10615 = vmul.f32 %v7543, %v8439
        %v10616 = vmul.f32 %v7544, %v8440
        %v10617 = vmul.f32 %v7545, %v8441
        %v10618 = vmul.f32 %v7546, %v8442
        %v10619 = vmul.f32 %v7547, %v8443
        %v10620 = vmul.f32 %v7548, %v8444
        %v10621 = vmul.f32 %v7549, %v8445
        %v10622 = vmul.f32 %v7550, %v8446
        %v10623 = vmul.f32 %v7551, %v8447
        %v10624 = vmul.f32 %v7552, %v8448
        %v10625 = vmul.f32 %v7553, %v8449
        %v10626 = vmul.f32 %v7554, %v8450
        %v10627 = vmul.f32 %v7555, %v8451
        %v10628 = vmul.f32 %v7556, %v8452
        %v10629 = vmul.f32 %v7557, %v8453
        %v10630 = vmul.f32 %v7558, %v8454
        %v10631 = vmul.f32 %v7559, %v8455
        %v10632 = vmul.f32 %v7560, %v8456
        %v10633 = vmul.f32 %v7561, %v8457
        %v10634 = vmul.f32 %v7562, %v8458
        %v10635 = vmul.f32 %v7563, %v8459
        %v10636 = vmul.f32 %v7564, %v8460
        %v10637 = vmul.f32 %v7565, %v8461
        %v10638 = vmul.f32 %v7566, %v8462
        %v10639 = vmul.f32 %v7567, %v8463
        %v10640 = vmul.f32 %v7568, %v8464
        %v10641 = vmul.f32 %v7569, %v8465
        %v10642 = vmul.f32 %v7570, %v8466
        %v10643 = vmul.f32 %v7571, %v8467
        %v10644 = vmul.f32 %v7572, %v8468
        %v10645 = vmul.f32 %v7573, %v8469
        %v10646 = vmul.f32 %v7574, %v8470
        %v10647 = vmul.f32 %v7575, %v8471
        %v10648 = vmul.f32 %v7576, %v8472
        %v10649 = vmul.f32 %v7577, %v8473
        %v10650 = vmul.f32 %v7578, %v8474
        %v10651 = vmul.f32 %v7579, %v8475
        %v10652 = vmul.f32 %v7580, %v8476
        %v10653 = vmul.f32 %v7581, %v8477
        %v10654 = vmul.f32 %v7582, %v8478
        %v10655 = vmul.f32 %v7583, %v8479
        %v10656 = vmul.f32 %v7584, %v8480
        %v10657 = vmul.f32 %v7585, %v8481
        %v10658 = vmul.f32 %v7586, %v8482
        %v10659 = vmul.f32 %v7587, %v8483
        %v10660 = vmul.f32 %v7588, %v8484
        %v10661 = vmul.f32 %v7589, %v8485
        %v10662 = vmul.f32 %v7590, %v8486
        %v10663 = vmul.f32 %v7591, %v8487
        %v10664 = vmul.f32 %v7592, %v8488
        %v10665 = vmul.f32 %v7593, %v8489
        %v10666 = vmul.f32 %v7594, %v8490
        %v10667 = vmul.f32 %v7595, %v8491
        %v10668 = vmul.f32 %v7596, %v8492
        %v10669 = vmul.f32 %v7597, %v8493
        %v10670 = vmul.f32 %v7598, %v8494
        %v10671 = vmul.f32 %v7599, %v8495
        %v10672 = vmul.f32 %v7600, %v8496
        %v10673 = vmul.f32 %v7601, %v8497
        %v10674 = vmul.f32 %v7602, %v8498
        %v10675 = vmul.f32 %v7603, %v8499
        %v10676 = vmul.f32 %v7604, %v8500
        %v10677 = vmul.f32 %v7605, %v8501
        %10679 = vset.pattern.permute.xlu0 0
        %10680 = vperm.xlu0 %10679, %v10614
        %v10681 = vpop.permute.xlu0 %10680
        %10684 = vset.pattern.permute.xlu0 0
        %10685 = vperm.xlu0 %10684, %v10615
        %v10686 = vpop.permute.xlu0 %10685
        %10689 = vset.pattern.permute.xlu0 0
        %10690 = vperm.xlu0 %10689, %v10616
        %v10691 = vpop.permute.xlu0 %10690
        %10694 = vset.pattern.permute.xlu0 0
        %10695 = vperm.xlu0 %10694, %v10617
        %v10696 = vpop.permute.xlu0 %10695
        %10699 = vset.pattern.permute.xlu0 0
        %10700 = vperm.xlu0 %10699, %v10618
        %v10701 = vpop.permute.xlu0 %10700
        %10704 = vset.pattern.permute.xlu0 0
        %10705 = vperm.xlu0 %10704, %v10619
        %v10706 = vpop.permute.xlu0 %10705
        %10709 = vset.pattern.permute.xlu0 0
        %10710 = vperm.xlu0 %10709, %v10620
        %v10711 = vpop.permute.xlu0 %10710
        %10714 = vset.pattern.permute.xlu0 0
        %10715 = vperm.xlu0 %10714, %v10621
        %v10716 = vpop.permute.xlu0 %10715
        %10719 = vset.pattern.permute.xlu0 0
        %10720 = vperm.xlu0 %10719, %v10622
        %v10721 = vpop.permute.xlu0 %10720
        %10724 = vset.pattern.permute.xlu0 0
        %10725 = vperm.xlu0 %10724, %v10623
        %v10726 = vpop.permute.xlu0 %10725
        %10729 = vset.pattern.permute.xlu0 0
        %10730 = vperm.xlu0 %10729, %v10624
        %v10731 = vpop.permute.xlu0 %10730
        %10734 = vset.pattern.permute.xlu0 0
        %10735 = vperm.xlu0 %10734, %v10625
        %v10736 = vpop.permute.xlu0 %10735
        %10739 = vset.pattern.permute.xlu0 0
        %10740 = vperm.xlu0 %10739, %v10626
        %v10741 = vpop.permute.xlu0 %10740
        %10744 = vset.pattern.permute.xlu0 0
        %10745 = vperm.xlu0 %10744, %v10627
        %v10746 = vpop.permute.xlu0 %10745
        %10749 = vset.pattern.permute.xlu0 0
        %10750 = vperm.xlu0 %10749, %v10628
        %v10751 = vpop.permute.xlu0 %10750
        %10754 = vset.pattern.permute.xlu0 0
        %10755 = vperm.xlu0 %10754, %v10629
        %v10756 = vpop.permute.xlu0 %10755
        %10759 = vset.pattern.permute.xlu0 0
        %10760 = vperm.xlu0 %10759, %v10630
        %v10761 = vpop.permute.xlu0 %10760
        %10764 = vset.pattern.permute.xlu0 0
        %10765 = vperm.xlu0 %10764, %v10631
        %v10766 = vpop.permute.xlu0 %10765
        %10769 = vset.pattern.permute.xlu0 0
        %10770 = vperm.xlu0 %10769, %v10632
        %v10771 = vpop.permute.xlu0 %10770
        %10774 = vset.pattern.permute.xlu0 0
        %10775 = vperm.xlu0 %10774, %v10633
        %v10776 = vpop.permute.xlu0 %10775
        %10779 = vset.pattern.permute.xlu0 0
        %10780 = vperm.xlu0 %10779, %v10634
        %v10781 = vpop.permute.xlu0 %10780
        %10784 = vset.pattern.permute.xlu0 0
        %10785 = vperm.xlu0 %10784, %v10635
        %v10786 = vpop.permute.xlu0 %10785
        %10789 = vset.pattern.permute.xlu0 0
        %10790 = vperm.xlu0 %10789, %v10636
        %v10791 = vpop.permute.xlu0 %10790
        %10794 = vset.pattern.permute.xlu0 0
        %10795 = vperm.xlu0 %10794, %v10637
        %v10796 = vpop.permute.xlu0 %10795
        %10799 = vset.pattern.permute.xlu0 0
        %10800 = vperm.xlu0 %10799, %v10638
        %v10801 = vpop.permute.xlu0 %10800
        %10804 = vset.pattern.permute.xlu0 0
        %10805 = vperm.xlu0 %10804, %v10639
        %v10806 = vpop.permute.xlu0 %10805
        %10809 = vset.pattern.permute.xlu0 0
        %10810 = vperm.xlu0 %10809, %v10640
        %v10811 = vpop.permute.xlu0 %10810
        %10814 = vset.pattern.permute.xlu0 0
        %10815 = vperm.xlu0 %10814, %v10641
        %v10816 = vpop.permute.xlu0 %10815
        %10819 = vset.pattern.permute.xlu0 0
        %10820 = vperm.xlu0 %10819, %v10642
        %v10821 = vpop.permute.xlu0 %10820
        %10824 = vset.pattern.permute.xlu0 0
        %10825 = vperm.xlu0 %10824, %v10643
        %v10826 = vpop.permute.xlu0 %10825
        %10829 = vset.pattern.permute.xlu0 0
        %10830 = vperm.xlu0 %10829, %v10644
        %v10831 = vpop.permute.xlu0 %10830
        %10834 = vset.pattern.permute.xlu0 0
        %10835 = vperm.xlu0 %10834, %v10645
        %v10836 = vpop.permute.xlu0 %10835
        %10839 = vset.pattern.permute.xlu0 0
        %10840 = vperm.xlu0 %10839, %v10646
        %v10841 = vpop.permute.xlu0 %10840
        %10844 = vset.pattern.permute.xlu0 0
        %10845 = vperm.xlu0 %10844, %v10647
        %v10846 = vpop.permute.xlu0 %10845
        %10849 = vset.pattern.permute.xlu0 0
        %10850 = vperm.xlu0 %10849, %v10648
        %v10851 = vpop.permute.xlu0 %10850
        %10854 = vset.pattern.permute.xlu0 0
        %10855 = vperm.xlu0 %10854, %v10649
        %v10856 = vpop.permute.xlu0 %10855
        %10859 = vset.pattern.permute.xlu0 0
        %10860 = vperm.xlu0 %10859, %v10650
        %v10861 = vpop.permute.xlu0 %10860
        %10864 = vset.pattern.permute.xlu0 0
        %10865 = vperm.xlu0 %10864, %v10651
        %v10866 = vpop.permute.xlu0 %10865
        %10869 = vset.pattern.permute.xlu0 0
        %10870 = vperm.xlu0 %10869, %v10652
        %v10871 = vpop.permute.xlu0 %10870
        %10874 = vset.pattern.permute.xlu0 0
        %10875 = vperm.xlu0 %10874, %v10653
        %v10876 = vpop.permute.xlu0 %10875
        %10879 = vset.pattern.permute.xlu0 0
        %10880 = vperm.xlu0 %10879, %v10654
        %v10881 = vpop.permute.xlu0 %10880
        %10884 = vset.pattern.permute.xlu0 0
        %10885 = vperm.xlu0 %10884, %v10655
        %v10886 = vpop.permute.xlu0 %10885
        %10889 = vset.pattern.permute.xlu0 0
        %10890 = vperm.xlu0 %10889, %v10656
        %v10891 = vpop.permute.xlu0 %10890
        %10894 = vset.pattern.permute.xlu0 0
        %10895 = vperm.xlu0 %10894, %v10657
        %v10896 = vpop.permute.xlu0 %10895
        %10899 = vset.pattern.permute.xlu0 0
        %10900 = vperm.xlu0 %10899, %v10658
        %v10901 = vpop.permute.xlu0 %10900
        %10904 = vset.pattern.permute.xlu0 0
        %10905 = vperm.xlu0 %10904, %v10659
        %v10906 = vpop.permute.xlu0 %10905
        %10909 = vset.pattern.permute.xlu0 0
        %10910 = vperm.xlu0 %10909, %v10660
        %v10911 = vpop.permute.xlu0 %10910
        %10914 = vset.pattern.permute.xlu0 0
        %10915 = vperm.xlu0 %10914, %v10661
        %v10916 = vpop.permute.xlu0 %10915
        %10919 = vset.pattern.permute.xlu0 0
        %10920 = vperm.xlu0 %10919, %v10662
        %v10921 = vpop.permute.xlu0 %10920
        %10924 = vset.pattern.permute.xlu0 0
        %10925 = vperm.xlu0 %10924, %v10663
        %v10926 = vpop.permute.xlu0 %10925
        %10929 = vset.pattern.permute.xlu0 0
        %10930 = vperm.xlu0 %10929, %v10664
        %v10931 = vpop.permute.xlu0 %10930
        %10934 = vset.pattern.permute.xlu0 0
        %10935 = vperm.xlu0 %10934, %v10665
        %v10936 = vpop.permute.xlu0 %10935
        %10939 = vset.pattern.permute.xlu0 0
        %10940 = vperm.xlu0 %10939, %v10666
        %v10941 = vpop.permute.xlu0 %10940
        %10944 = vset.pattern.permute.xlu0 0
        %10945 = vperm.xlu0 %10944, %v10667
        %v10946 = vpop.permute.xlu0 %10945
        %10949 = vset.pattern.permute.xlu0 0
        %10950 = vperm.xlu0 %10949, %v10668
        %v10951 = vpop.permute.xlu0 %10950
        %10954 = vset.pattern.permute.xlu0 0
        %10955 = vperm.xlu0 %10954, %v10669
        %v10956 = vpop.permute.xlu0 %10955
        %10959 = vset.pattern.permute.xlu0 0
        %10960 = vperm.xlu0 %10959, %v10670
        %v10961 = vpop.permute.xlu0 %10960
        %10964 = vset.pattern.permute.xlu0 0
        %10965 = vperm.xlu0 %10964, %v10671
        %v10966 = vpop.permute.xlu0 %10965
        %10969 = vset.pattern.permute.xlu0 0
        %10970 = vperm.xlu0 %10969, %v10672
        %v10971 = vpop.permute.xlu0 %10970
        %10974 = vset.pattern.permute.xlu0 0
        %10975 = vperm.xlu0 %10974, %v10673
        %v10976 = vpop.permute.xlu0 %10975
        %10979 = vset.pattern.permute.xlu0 0
        %10980 = vperm.xlu0 %10979, %v10674
        %v10981 = vpop.permute.xlu0 %10980
        %10984 = vset.pattern.permute.xlu0 0
        %10985 = vperm.xlu0 %10984, %v10675
        %v10986 = vpop.permute.xlu0 %10985
        %10989 = vset.pattern.permute.xlu0 0
        %10990 = vperm.xlu0 %10989, %v10676
        %v10991 = vpop.permute.xlu0 %10990
        %10994 = vset.pattern.permute.xlu0 0
        %10995 = vperm.xlu0 %10994, %v10677
        %v10996 = vpop.permute.xlu0 %10995
        %v10998 = vmul.f32 %v7224, %v10681
        %v10999 = vmul.f32 %v7227, %v10686
        %v11000 = vmul.f32 %v7232, %v10691
        %v11001 = vmul.f32 %v7235, %v10696
        %v11002 = vmul.f32 %v7240, %v10701
        %v11003 = vmul.f32 %v7243, %v10706
        %v11004 = vmul.f32 %v7248, %v10711
        %v11005 = vmul.f32 %v7251, %v10716
        %v11006 = vmul.f32 %v7256, %v10721
        %v11007 = vmul.f32 %v7259, %v10726
        %v11008 = vmul.f32 %v7264, %v10731
        %v11009 = vmul.f32 %v7267, %v10736
        %v11010 = vmul.f32 %v7272, %v10741
        %v11011 = vmul.f32 %v7275, %v10746
        %v11012 = vmul.f32 %v7280, %v10751
        %v11013 = vmul.f32 %v7283, %v10756
        %v11014 = vmul.f32 %v7288, %v10761
        %v11015 = vmul.f32 %v7291, %v10766
        %v11016 = vmul.f32 %v7296, %v10771
        %v11017 = vmul.f32 %v7299, %v10776
        %v11018 = vmul.f32 %v7304, %v10781
        %v11019 = vmul.f32 %v7307, %v10786
        %v11020 = vmul.f32 %v7312, %v10791
        %v11021 = vmul.f32 %v7315, %v10796
        %v11022 = vmul.f32 %v7320, %v10801
        %v11023 = vmul.f32 %v7323, %v10806
        %v11024 = vmul.f32 %v7328, %v10811
        %v11025 = vmul.f32 %v7331, %v10816
        %v11026 = vmul.f32 %v7336, %v10821
        %v11027 = vmul.f32 %v7339, %v10826
        %v11028 = vmul.f32 %v7344, %v10831
        %v11029 = vmul.f32 %v7347, %v10836
        %v11030 = vmul.f32 %v7352, %v10841
        %v11031 = vmul.f32 %v7355, %v10846
        %v11032 = vmul.f32 %v7360, %v10851
        %v11033 = vmul.f32 %v7363, %v10856
        %v11034 = vmul.f32 %v7368, %v10861
        %v11035 = vmul.f32 %v7371, %v10866
        %v11036 = vmul.f32 %v7376, %v10871
        %v11037 = vmul.f32 %v7379, %v10876
        %v11038 = vmul.f32 %v7384, %v10881
        %v11039 = vmul.f32 %v7387, %v10886
        %v11040 = vmul.f32 %v7392, %v10891
        %v11041 = vmul.f32 %v7395, %v10896
        %v11042 = vmul.f32 %v7400, %v10901
        %v11043 = vmul.f32 %v7403, %v10906
        %v11044 = vmul.f32 %v7408, %v10911
        %v11045 = vmul.f32 %v7411, %v10916
        %v11046 = vmul.f32 %v7416, %v10921
        %v11047 = vmul.f32 %v7419, %v10926
        %v11048 = vmul.f32 %v7424, %v10931
        %v11049 = vmul.f32 %v7427, %v10936
        %v11050 = vmul.f32 %v7432, %v10941
        %v11051 = vmul.f32 %v7435, %v10946
        %v11052 = vmul.f32 %v7440, %v10951
        %v11053 = vmul.f32 %v7443, %v10956
        %v11054 = vmul.f32 %v7448, %v10961
        %v11055 = vmul.f32 %v7451, %v10966
        %v11056 = vmul.f32 %v7456, %v10971
        %v11057 = vmul.f32 %v7459, %v10976
        %v11058 = vmul.f32 %v7464, %v10981
        %v11059 = vmul.f32 %v7467, %v10986
        %v11060 = vmul.f32 %v7472, %v10991
        %v11061 = vmul.f32 %v7475, %v10996
        %v11062 = vadd.f32 %v10550, %v10998
        %v11063 = vadd.f32 %v10551, %v10999
        %v11064 = vadd.f32 %v10552, %v11000
        %v11065 = vadd.f32 %v10553, %v11001
        %v11066 = vadd.f32 %v10554, %v11002
        %v11067 = vadd.f32 %v10555, %v11003
        %v11068 = vadd.f32 %v10556, %v11004
        %v11069 = vadd.f32 %v10557, %v11005
        %v11070 = vadd.f32 %v10558, %v11006
        %v11071 = vadd.f32 %v10559, %v11007
        %v11072 = vadd.f32 %v10560, %v11008
        %v11073 = vadd.f32 %v10561, %v11009
        %v11074 = vadd.f32 %v10562, %v11010
        %v11075 = vadd.f32 %v10563, %v11011
        %v11076 = vadd.f32 %v10564, %v11012
        %v11077 = vadd.f32 %v10565, %v11013
        %v11078 = vadd.f32 %v10566, %v11014
        %v11079 = vadd.f32 %v10567, %v11015
        %v11080 = vadd.f32 %v10568, %v11016
        %v11081 = vadd.f32 %v10569, %v11017
        %v11082 = vadd.f32 %v10570, %v11018
        %v11083 = vadd.f32 %v10571, %v11019
        %v11084 = vadd.f32 %v10572, %v11020
        %v11085 = vadd.f32 %v10573, %v11021
        %v11086 = vadd.f32 %v10574, %v11022
        %v11087 = vadd.f32 %v10575, %v11023
        %v11088 = vadd.f32 %v10576, %v11024
        %v11089 = vadd.f32 %v10577, %v11025
        %v11090 = vadd.f32 %v10578, %v11026
        %v11091 = vadd.f32 %v10579, %v11027
        %v11092 = vadd.f32 %v10580, %v11028
        %v11093 = vadd.f32 %v10581, %v11029
        %v11094 = vadd.f32 %v10582, %v11030
        %v11095 = vadd.f32 %v10583, %v11031
        %v11096 = vadd.f32 %v10584, %v11032
        %v11097 = vadd.f32 %v10585, %v11033
        %v11098 = vadd.f32 %v10586, %v11034
        %v11099 = vadd.f32 %v10587, %v11035
        %v11100 = vadd.f32 %v10588, %v11036
        %v11101 = vadd.f32 %v10589, %v11037
        %v11102 = vadd.f32 %v10590, %v11038
        %v11103 = vadd.f32 %v10591, %v11039
        %v11104 = vadd.f32 %v10592, %v11040
        %v11105 = vadd.f32 %v10593, %v11041
        %v11106 = vadd.f32 %v10594, %v11042
        %v11107 = vadd.f32 %v10595, %v11043
        %v11108 = vadd.f32 %v10596, %v11044
        %v11109 = vadd.f32 %v10597, %v11045
        %v11110 = vadd.f32 %v10598, %v11046
        %v11111 = vadd.f32 %v10599, %v11047
        %v11112 = vadd.f32 %v10600, %v11048
        %v11113 = vadd.f32 %v10601, %v11049
        %v11114 = vadd.f32 %v10602, %v11050
        %v11115 = vadd.f32 %v10603, %v11051
        %v11116 = vadd.f32 %v10604, %v11052
        %v11117 = vadd.f32 %v10605, %v11053
        %v11118 = vadd.f32 %v10606, %v11054
        %v11119 = vadd.f32 %v10607, %v11055
        %v11120 = vadd.f32 %v10608, %v11056
        %v11121 = vadd.f32 %v10609, %v11057
        %v11122 = vadd.f32 %v10610, %v11058
        %v11123 = vadd.f32 %v10611, %v11059
        %v11124 = vadd.f32 %v10612, %v11060
        %v11125 = vadd.f32 %v10613, %v11061
        %11126 = vst [vmem:[%s1390] sm:$0xff] %v11062
        %11127 = vst [vmem:[%s1390 + $0x8] sm:$0xff] %v11063
        %11128 = vst [vmem:[%s1390 + $0x10] sm:$0xff] %v11064
        %11129 = vst [vmem:[%s1390 + $0x18] sm:$0xff] %v11065
        %11130 = vst [vmem:[%s1390 + $0x20] sm:$0xff] %v11066
        %11131 = vst [vmem:[%s1390 + $0x28] sm:$0xff] %v11067
        %11132 = vst [vmem:[%s1390 + $0x30] sm:$0xff] %v11068
        %11133 = vst [vmem:[%s1390 + $0x38] sm:$0xff] %v11069
        %11134 = vst [vmem:[%s1390 + $0x40] sm:$0xff] %v11070
        %11135 = vst [vmem:[%s1390 + $0x48] sm:$0xff] %v11071
        %11136 = vst [vmem:[%s1390 + $0x50] sm:$0xff] %v11072
        %11137 = vst [vmem:[%s1390 + $0x58] sm:$0xff] %v11073
        %11138 = vst [vmem:[%s1390 + $0x60] sm:$0xff] %v11074
        %11139 = vst [vmem:[%s1390 + $0x68] sm:$0xff] %v11075
        %11140 = vst [vmem:[%s1390 + $0x70] sm:$0xff] %v11076
        %11141 = vst [vmem:[%s1390 + $0x78] sm:$0xff] %v11077
        %11142 = vst [vmem:[%s1390 + $0x80] sm:$0xff] %v11078
        %11143 = vst [vmem:[%s1390 + $0x88] sm:$0xff] %v11079
        %11144 = vst [vmem:[%s1390 + $0x90] sm:$0xff] %v11080
        %11145 = vst [vmem:[%s1390 + $0x98] sm:$0xff] %v11081
        %11146 = vst [vmem:[%s1390 + $0xa0] sm:$0xff] %v11082
        %11147 = vst [vmem:[%s1390 + $0xa8] sm:$0xff] %v11083
        %11148 = vst [vmem:[%s1390 + $0xb0] sm:$0xff] %v11084
        %11149 = vst [vmem:[%s1390 + $0xb8] sm:$0xff] %v11085
        %11150 = vst [vmem:[%s1390 + $0xc0] sm:$0xff] %v11086
        %11151 = vst [vmem:[%s1390 + $0xc8] sm:$0xff] %v11087
        %11152 = vst [vmem:[%s1390 + $0xd0] sm:$0xff] %v11088
        %11153 = vst [vmem:[%s1390 + $0xd8] sm:$0xff] %v11089
        %11154 = vst [vmem:[%s1390 + $0xe0] sm:$0xff] %v11090
        %11155 = vst [vmem:[%s1390 + $0xe8] sm:$0xff] %v11091
        %11156 = vst [vmem:[%s1390 + $0xf0] sm:$0xff] %v11092
        %11157 = vst [vmem:[%s1390 + $0xf8] sm:$0xff] %v11093
        %11158 = vst [vmem:[%s1390 + $0x100] sm:$0xff] %v11094
        %11159 = vst [vmem:[%s1390 + $0x108] sm:$0xff] %v11095
        %11160 = vst [vmem:[%s1390 + $0x110] sm:$0xff] %v11096
        %11161 = vst [vmem:[%s1390 + $0x118] sm:$0xff] %v11097
        %11162 = vst [vmem:[%s1390 + $0x120] sm:$0xff] %v11098
        %11163 = vst [vmem:[%s1390 + $0x128] sm:$0xff] %v11099
        %11164 = vst [vmem:[%s1390 + $0x130] sm:$0xff] %v11100
        %11165 = vst [vmem:[%s1390 + $0x138] sm:$0xff] %v11101
        %11166 = vst [vmem:[%s1390 + $0x140] sm:$0xff] %v11102
        %11167 = vst [vmem:[%s1390 + $0x148] sm:$0xff] %v11103
        %11168 = vst [vmem:[%s1390 + $0x150] sm:$0xff] %v11104
        %11169 = vst [vmem:[%s1390 + $0x158] sm:$0xff] %v11105
        %11170 = vst [vmem:[%s1390 + $0x160] sm:$0xff] %v11106
        %11171 = vst [vmem:[%s1390 + $0x168] sm:$0xff] %v11107
        %11172 = vst [vmem:[%s1390 + $0x170] sm:$0xff] %v11108
        %11173 = vst [vmem:[%s1390 + $0x178] sm:$0xff] %v11109
        %11174 = vst [vmem:[%s1390 + $0x180] sm:$0xff] %v11110
        %11175 = vst [vmem:[%s1390 + $0x188] sm:$0xff] %v11111
        %11176 = vst [vmem:[%s1390 + $0x190] sm:$0xff] %v11112
        %11177 = vst [vmem:[%s1390 + $0x198] sm:$0xff] %v11113
        %11178 = vst [vmem:[%s1390 + $0x1a0] sm:$0xff] %v11114
        %11179 = vst [vmem:[%s1390 + $0x1a8] sm:$0xff] %v11115
        %11180 = vst [vmem:[%s1390 + $0x1b0] sm:$0xff] %v11116
        %11181 = vst [vmem:[%s1390 + $0x1b8] sm:$0xff] %v11117
        %11182 = vst [vmem:[%s1390 + $0x1c0] sm:$0xff] %v11118
        %11183 = vst [vmem:[%s1390 + $0x1c8] sm:$0xff] %v11119
        %11184 = vst [vmem:[%s1390 + $0x1d0] sm:$0xff] %v11120
        %11185 = vst [vmem:[%s1390 + $0x1d8] sm:$0xff] %v11121
        %11186 = vst [vmem:[%s1390 + $0x1e0] sm:$0xff] %v11122
        %11187 = vst [vmem:[%s1390 + $0x1e8] sm:$0xff] %v11123
        %11188 = vst [vmem:[%s1390 + $0x1f0] sm:$0xff] %v11124
        %11189 = vst [vmem:[%s1390 + $0x1f8] sm:$0xff] %v11125
        %s11190 = smul.u32 64, %s19
        %p11191 = scmp.lt.s32.totalorder %s11190, 191
        %s11192 = scalar_select %p11191, %s11190, 191
        %s11193 = smul.addr %s11192, 8
        %s11194 = scalar_lea.vmem %s8, %s11193
        // Predicated region
        $region94: #{liif_forward.3} parent=88 // pred_check
          %p11195 = pneg %p215
        $region95: #{liif_forward.3} parent=88 // pred_check_branch
          %11197 = sbr.rel (%p11195) target = $region97
        $region96: #{liif_forward.3} parent=88 // pred_region
          %s11198 = smul.u32 64, %s19
        $region97: #{liif_forward.3} parent=88 // pred_fallthru
          _
      $region89: #{liif_forward.3} parent=5 // pred_fallthru
        _
      %p11199 = scmp.le.s32.totalorder 2, %s14
      // Predicated region
      $region98: #{liif_forward.3} parent=5 // pred_check
        %p11200 = pneg %p11199
      $region99: #{liif_forward.3} parent=5 // pred_check_branch
        %11202 = sbr.rel (%p11200) target = $region101
      $region100: #{liif_forward.3} parent=5 // pred_region
        %s11203 = ssub.s32 %s14, 2
        // Predicated region
        $region102: #{liif_forward.3} parent=100 // pred_check
          %p11204 = pneg %p221
        $region103: #{liif_forward.3} parent=100 // pred_check_branch
          %11206 = sbr.rel (%p11204) target = $region105
        $region104: #{liif_forward.3} parent=100 // pred_region
          %s11207 = smul.u32 64, %s20
          %p11208 = scmp.lt.s32.totalorder %s11207, 191
          %s11209 = scalar_select %p11208, %s11207, 191
          %s11210 = smul.addr %s11209, 8
          %s11211 = scalar_lea.vmem %s8, %s11210
        $region105: #{liif_forward.3} parent=100 // pred_fallthru
          _
      $region101: #{liif_forward.3} parent=5 // pred_fallthru
        _
    $region6: #{liif_forward.3} parent=1 // loop_footer
      %s18 = sadd.s32 1, %s14
    $region7: #{liif_forward.3} parent=1 // loop_footer_branch
      %13 = sbr.rel target = $region3
    $region8: #{liif_forward.3} parent=1 // loop_exit
      _

</llo_original>
